<compile_context>
chip_gen: v7x
topology: tpu7x:2x2x1
jax: 0.10.0
libtpu: 0.0.40
codegen_flags: <defaults>
</compile_context>

<pallas_src>
import functools

import jax
import jax.numpy as jnp
from jax import lax
from jax.experimental import pallas as pl
from jax.experimental.pallas import tpu as pltpu


# ----------------------------- helpers -----------------------------
def _round_up(x, m):
    return ((x + m - 1) // m) * m


def _pad2(x, r, c):
    return jnp.pad(x, ((0, r - x.shape[0]), (0, c - x.shape[1])))


def _bias(b, n, bp):
    b = jnp.pad(b, (0, n - b.shape[0])).astype(jnp.float32)
    return jnp.broadcast_to(b[None, :], (bp, n))


def _split_gru(w_ih, w_hh, b_ih, b_hh, Ep, Hp, Bp):
    """PyTorch GRU params (3H, E)/(3H, H)/(3H,) -> per-gate (in,out) padded/stacked."""
    H = w_hh.shape[1]
    wi = jnp.stack([_pad2(w_ih[g * H:(g + 1) * H, :].T, Ep, Hp) for g in range(3)]
                   ).astype(jnp.bfloat16)                       # (3, Ep, Hp)  [r, z, n]
    wh = jnp.stack([_pad2(w_hh[g * H:(g + 1) * H, :].T, Hp, Hp) for g in range(3)]
                   ).astype(jnp.bfloat16)                       # (3, Hp, Hp)
    b = jnp.stack([
        _bias(b_ih[0:H] + b_hh[0:H], Hp, Bp),                   # b_r  (fused)
        _bias(b_ih[H:2 * H] + b_hh[H:2 * H], Hp, Bp),           # b_z  (fused)
        _bias(b_ih[2 * H:3 * H], Hp, Bp),                       # b_in
        _bias(b_hh[2 * H:3 * H], Hp, Bp),                       # b_hn (inside r*(.))
    ])                                                          # (4, Bp, Hp) f32
    return wi, wh, b


# ----------------------------- GRU cell (PyTorch gate order r, z, n) -----------------------------
def _gru_step(x_b16, h_f32, wi_ref, wh_ref, b_ref):
    """wi_ref: (3,E,H) bf16, wh_ref: (3,H,H) bf16, b_ref: (4,B,H) f32 pre-broadcast."""
    h_b16 = h_f32.astype(jnp.bfloat16)

    def dot(a, w):
        return jnp.dot(a, w, preferred_element_type=jnp.float32)

    r = jax.nn.sigmoid(dot(x_b16, wi_ref[0]) + dot(h_b16, wh_ref[0]) + b_ref[0])
    z = jax.nn.sigmoid(dot(x_b16, wi_ref[1]) + dot(h_b16, wh_ref[1]) + b_ref[1])
    n = jnp.tanh(dot(x_b16, wi_ref[2]) + b_ref[2] + r * (dot(h_b16, wh_ref[2]) + b_ref[3]))
    return (1.0 - z) * n + z * h_f32


# ----------------------------- fused encoder + greedy decoder kernel -----------------------------
def _seq2seq_kernel(src_ref, enc_wi_ref, enc_wh_ref, enc_b_ref,
                    dec_emb_ref, dec_wi_ref, dec_wh_ref, dec_b_ref,
                    wc_ctx_ref, wc_dec_ref, bc_ref, wo_ref, bo_ref,
                    logp_ref, tok_ref, hT_ref,
                    enc_scr, h_scr, tok_scr,
                    *, sos_id, vocab_tgt):
    # src_ref: (S, Bp, Ep) bf16 time-major embedded source
    # enc_scr: (Bp, S, Hp) f32 batch-major encoder outputs (VMEM, persists over grid)
    # h_scr:   (Bp, Hp) f32 decoder hidden carry; tok_scr: (Bp, 1) i32 token carry
    # logp_ref block: (1, Bp, Vp); tok_ref block: (1, Bp, 1); hT_ref: (Bp, Hp) resident
    S = src_ref.shape[0]
    Bp, Hp = hT_ref.shape
    Vp = logp_ref.shape[2]
    t = pl.program_id(0)

    # ---------------- encoder (runs once, at grid step 0) ----------------
    @pl.when(t == 0)
    def _encode():
        h = jnp.zeros((Bp, Hp), jnp.float32)
        # S is small & static: full unroll -> max scheduler visibility + static
        # batch-major stores.  TODO(synk): for long sources use lax.fori_loop(unroll=4).
        for s in range(S):
            h = _gru_step(src_ref[s], h, enc_wi_ref, enc_wh_ref, enc_b_ref)
            enc_scr[:, s:s + 1, :] = h[:, None, :]
        h_scr[...] = h                                            # decoder init hidden
        tok_scr[...] = jnp.full((Bp, 1), sos_id, jnp.int32)       # <sos>

    # ---------------- one greedy decode step (every grid iteration) ----------------
    h_prev = h_scr[...]                                           # (Bp, Hp) f32
    tok = tok_scr[...]                                            # (Bp, 1) i32

    # Embedding lookup as one-hot matmul (fine for small padded vocab).
    # TODO(synk): for realistic vocabularies use a row gather / manual DMA gather.
    onehot = (lax.broadcasted_iota(jnp.int32, (Bp, Vp), 1) == tok).astype(jnp.bfloat16)
    x_t = jnp.dot(onehot, dec_emb_ref[...], preferred_element_type=jnp.float32)
    x_b = x_t.astype(jnp.bfloat16)                                # (Bp, Ep)

    h_new = _gru_step(x_b, h_prev, dec_wi_ref, dec_wh_ref, dec_b_ref)   # (Bp, Hp) f32
    h_b = h_new.astype(jnp.bfloat16)

    # Luong dot attention over encoder outputs — MXU batched matmuls (bf16, f32 acc).
    enc_b16 = enc_scr[...].astype(jnp.bfloat16)                   # (Bp, S, Hp)
    scores = jnp.einsum('bqh,bsh->bqs', h_b[:, None, :], enc_b16,
                        preferred_element_type=jnp.float32)[:, 0, :]     # (Bp, S)
    s_max = jnp.max(scores, axis=-1, keepdims=True)
    e = jnp.exp(scores - s_max)
    denom = jnp.sum(e, axis=-1, keepdims=True)
    attn = e * pl.reciprocal(denom, approx=True)                  # (Bp, S)
    ctx = jnp.einsum('bqs,bsh->bqh', attn[:, None, :].astype(jnp.bfloat16), enc_b16,
                     preferred_element_type=jnp.float32)[:, 0, :]        # (Bp, Hp)

    # combined = tanh(Linear([context; decoder_output]))
    comb = jnp.tanh(
        jnp.dot(ctx.astype(jnp.bfloat16), wc_ctx_ref[...], preferred_element_type=jnp.float32)
        + jnp.dot(h_b, wc_dec_ref[...], preferred_element_type=jnp.float32)
        + bc_ref[...])                                            # (Bp, Hp) f32

    # Output projection (padded vocab columns masked to -inf-ish).
    # TODO(synk): for realistic vocab sizes stream w_out in V-tiles with online logsumexp.
    logits = jnp.dot(comb.astype(jnp.bfloat16), wo_ref[...],
                     preferred_element_type=jnp.float32) + bo_ref[...]   # (Bp, Vp)
    col = lax.broadcasted_iota(jnp.int32, (Bp, Vp), 1)
    logits = jnp.where(col < vocab_tgt, logits, jnp.float32(-1e30))

    # log_softmax (decode_function = F.log_softmax)
    m2 = jnp.max(logits, axis=-1, keepdims=True)
    shifted = logits - m2
    lse = jnp.log(jnp.sum(jnp.exp(shifted), axis=-1, keepdims=True))
    logp_ref[0] = shifted - lse

    # greedy next token = first max index (teacher_forcing_ratio = 0)
    nxt = jnp.min(jnp.where(logits >= m2, col, Vp), axis=-1, keepdims=True).astype(jnp.int32)
    tok_ref[0] = nxt

    # update carries / final hidden (resident output, written back once at the end)
    h_scr[...] = h_new
    tok_scr[...] = nxt
    hT_ref[...] = h_new
    # TODO(synk): eos-based early stopping / ret_dict['length'] & attention maps not modeled.


# ----------------------------- wrapper -----------------------------
def seq2seq_forward(params, src_tokens, *, max_decode_len, sos_id):
    B, S = src_tokens.shape
    E = params["enc_emb"].shape[1]
    H = params["enc_w_hh"].shape[1]
    V_tgt = params["dec_emb"].shape[0]
    T = max_decode_len

    Bp = max(8, _round_up(B, 8))
    Ep = _round_up(E, 128)
    Hp = _round_up(H, 128)
    Vp = _round_up(V_tgt, 128)

    # glue (plain JAX): encoder embedding gather + padding + time-major layout.
    x_emb = jnp.take(params["enc_emb"], src_tokens, axis=0)             # (B, S, E)
    x_emb = jnp.pad(x_emb, ((0, Bp - B), (0, 0), (0, Ep - E)))
    src_tm = jnp.transpose(x_emb, (1, 0, 2)).astype(jnp.bfloat16)       # (S, Bp, Ep)

    enc_wi, enc_wh, enc_b = _split_gru(params["enc_w_ih"], params["enc_w_hh"],
                                       params["enc_b_ih"], params["enc_b_hh"], Ep, Hp, Bp)
    dec_wi, dec_wh, dec_b = _split_gru(params["dec_w_ih"], params["dec_w_hh"],
                                       params["dec_b_ih"], params["dec_b_hh"], Ep, Hp, Bp)

    dec_emb = _pad2(params["dec_emb"], Vp, Ep).astype(jnp.bfloat16)
    # Attention combine Linear(2H -> H): y = [ctx; h] @ W.T + b   (split W by input half)
    wc_ctx = _pad2(params["attn_w"][:, :H].T, Hp, Hp).astype(jnp.bfloat16)
    wc_dec = _pad2(params["attn_w"][:, H:].T, Hp, Hp).astype(jnp.bfloat16)
    b_c = _bias(params["attn_b"], Hp, Bp)
    w_out = _pad2(params["out_w"].T, Hp, Vp).astype(jnp.bfloat16)
    b_out = _bias(params["out_b"], Vp, Bp)

    def full_spec(shape):
        nd = len(shape)
        return pl.BlockSpec(shape, lambda t: (0,) * nd)

    grid_spec = pltpu.PrefetchScalarGridSpec(
        num_scalar_prefetch=0,
        grid=(T,),                                                 # sequential decode steps
        in_specs=[
            full_spec((S, Bp, Ep)),                                # src (time-major, bf16)
            full_spec((3, Ep, Hp)), full_spec((3, Hp, Hp)), full_spec((4, Bp, Hp)),   # enc GRU
            full_spec((Vp, Ep)),                                   # dec embedding
            full_spec((3, Ep, Hp)), full_spec((3, Hp, Hp)), full_spec((4, Bp, Hp)),   # dec GRU
            full_spec((Hp, Hp)), full_spec((Hp, Hp)), full_spec((Bp, Hp)),            # combine
            full_spec((Hp, Vp)), full_spec((Bp, Vp)),              # output projection
        ],
        out_specs=(
            pl.BlockSpec((1, Bp, Vp), lambda t: (t, 0, 0)),        # per-step logp (pipelined)
            pl.BlockSpec((1, Bp, 1), lambda t: (t, 0, 0)),         # per-step greedy token
            pl.BlockSpec((Bp, Hp), lambda t: (0, 0)),              # final hidden (resident)
        ),
        scratch_shapes=[
            pltpu.VMEM((Bp, S, Hp), jnp.float32),                  # encoder outputs (batch-major)
            pltpu.VMEM((Bp, Hp), jnp.float32),                     # hidden carry
            pltpu.VMEM((Bp, 1), jnp.int32),                        # token carry
        ],
    )

    kernel = functools.partial(_seq2seq_kernel, sos_id=int(sos_id), vocab_tgt=V_tgt)

    logp_pad, tok_pad, hT_pad = pl.pallas_call(
        kernel,
        out_shape=(jax.ShapeDtypeStruct((T, Bp, Vp), jnp.float32),
                   jax.ShapeDtypeStruct((T, Bp, 1), jnp.int32),
                   jax.ShapeDtypeStruct((Bp, Hp), jnp.float32)),
        grid_spec=grid_spec,
        compiler_params=pltpu.CompilerParams(
            # TODO(synk): add a leading 'parallel' batch grid axis for v7x (2 TCs).
            dimension_semantics=("arbitrary",),
            vmem_limit_bytes=16 * 1024 * 1024,
        ),
    )(src_tm, enc_wi, enc_wh, enc_b,
      dec_emb, dec_wi, dec_wh, dec_b,
      wc_ctx, wc_dec, b_c, w_out, b_out)

    logp = jnp.transpose(logp_pad[:, :B, :V_tgt], (1, 0, 2))       # (B, T, V_tgt)
    preds = jnp.transpose(tok_pad[:, :B, 0], (1, 0))               # (B, T)
    dec_hT = hT_pad[:B, :H]                                        # (B, H)
    return logp, preds, dec_hT


# ----------------------------- deterministic parameter init (PyTorch-like layout) -----------------------------
def init_params(key, *, src_vocab, tgt_vocab, embed, hidden):
    ks = jax.random.split(key, 14)

    def w(k, shape):
        return (0.1 * jax.random.normal(k, shape)).astype(jnp.float32)

    H = hidden
    return dict(
        enc_emb=w(ks[0], (src_vocab, embed)),
        enc_w_ih=w(ks[1], (3 * H, embed)), enc_w_hh=w(ks[2], (3 * H, H)),
        enc_b_ih=w(ks[3], (3 * H,)), enc_b_hh=w(ks[4], (3 * H,)),
        dec_emb=w(ks[5], (tgt_vocab, embed)),
        dec_w_ih=w(ks[6], (3 * H, embed)), dec_w_hh=w(ks[7], (3 * H, H)),
        dec_b_ih=w(ks[8], (3 * H,)), dec_b_hh=w(ks[9], (3 * H,)),
        attn_w=w(ks[10], (H, 2 * H)), attn_b=w(ks[11], (H,)),
        out_w=w(ks[12], (tgt_vocab, H)), out_b=w(ks[13], (tgt_vocab,)),
    )


if __name__ == "__main__":
    B, S, T = 2, 8, 8            # batch, src seq len, max decode len
    E, H = 16, 32                # embedding_size, hidden_size
    V_SRC, V_TGT = 20, 20        # src / tgt vocab sizes
    SOS_ID = 1

    key = jax.random.PRNGKey(0)
    k_param, k_data = jax.random.split(key)
    params = init_params(k_param, src_vocab=V_SRC, tgt_vocab=V_TGT, embed=E, hidden=H)
    src = jax.random.randint(k_data, (B, S), 0, V_SRC, dtype=jnp.int32)

    logp, preds, dec_h = seq2seq_forward(params, src, max_decode_len=T, sos_id=SOS_ID)
    jax.block_until_ready(logp)

    # sanity: each log_softmax row normalizes to 1; shapes & token range are valid
    row_sums = jnp.sum(jnp.exp(logp), axis=-1)
    assert bool(jnp.all(jnp.abs(row_sums - 1.0) < 1e-3))
    assert logp.shape == (B, T, V_TGT) and preds.shape == (B, T)
    assert bool(jnp.all((preds >= 0) & (preds < V_TGT)))
    assert dec_h.shape == (B, H)

    print("KERNEL_OK")
</pallas_src>

<mosaic_0001>
module attributes {stable_mosaic.version = 11 : i64} {
  func.func @_seq2seq_kernel(%arg0: i32, %arg1: memref<8x8x128xbf16, #tpu.memory_space<vmem>>, %arg2: memref<3x128x128xbf16, #tpu.memory_space<vmem>>, %arg3: memref<3x128x128xbf16, #tpu.memory_space<vmem>>, %arg4: memref<4x8x128xf32, #tpu.memory_space<vmem>>, %arg5: memref<128x128xbf16, #tpu.memory_space<vmem>>, %arg6: memref<3x128x128xbf16, #tpu.memory_space<vmem>>, %arg7: memref<3x128x128xbf16, #tpu.memory_space<vmem>>, %arg8: memref<4x8x128xf32, #tpu.memory_space<vmem>>, %arg9: memref<128x128xbf16, #tpu.memory_space<vmem>>, %arg10: memref<128x128xbf16, #tpu.memory_space<vmem>>, %arg11: memref<8x128xf32, #tpu.memory_space<vmem>>, %arg12: memref<128x128xbf16, #tpu.memory_space<vmem>>, %arg13: memref<8x128xf32, #tpu.memory_space<vmem>>, %arg14: memref<1x8x128xf32, #tpu.memory_space<vmem>>, %arg15: memref<1x8x1xi32, #tpu.memory_space<vmem>>, %arg16: memref<8x128xf32, #tpu.memory_space<vmem>>, %arg17: memref<8x8x128xf32, #tpu.memory_space<vmem>>, %arg18: memref<8x128xf32, #tpu.memory_space<vmem>>, %arg19: memref<8x1xi32, #tpu.memory_space<vmem>>) attributes {dimension_semantics = [#tpu.dimension_semantics<arbitrary>], iteration_bounds = array<i64: 8>, scalar_prefetch = 0 : i64, scratch_operands = 3 : i64, tpu.core_type = #tpu.core_type<tc>, window_params = [{pipeline_mode = #tpu.pipeline_mode<synchronous>, transform_indices = @transform_0, window_bounds = array<i64: 8, 8, 128>}, {pipeline_mode = #tpu.pipeline_mode<synchronous>, transform_indices = @transform_1, window_bounds = array<i64: 3, 128, 128>}, {pipeline_mode = #tpu.pipeline_mode<synchronous>, transform_indices = @transform_2, window_bounds = array<i64: 3, 128, 128>}, {pipeline_mode = #tpu.pipeline_mode<synchronous>, transform_indices = @transform_3, window_bounds = array<i64: 4, 8, 128>}, {pipeline_mode = #tpu.pipeline_mode<synchronous>, transform_indices = @transform_4, window_bounds = array<i64: 128, 128>}, {pipeline_mode = #tpu.pipeline_mode<synchronous>, transform_indices = @transform_5, window_bounds = array<i64: 3, 128, 128>}, {pipeline_mode = #tpu.pipeline_mode<synchronous>, transform_indices = @transform_6, window_bounds = array<i64: 3, 128, 128>}, {pipeline_mode = #tpu.pipeline_mode<synchronous>, transform_indices = @transform_7, window_bounds = array<i64: 4, 8, 128>}, {pipeline_mode = #tpu.pipeline_mode<synchronous>, transform_indices = @transform_8, window_bounds = array<i64: 128, 128>}, {pipeline_mode = #tpu.pipeline_mode<synchronous>, transform_indices = @transform_9, window_bounds = array<i64: 128, 128>}, {pipeline_mode = #tpu.pipeline_mode<synchronous>, transform_indices = @transform_10, window_bounds = array<i64: 8, 128>}, {pipeline_mode = #tpu.pipeline_mode<synchronous>, transform_indices = @transform_11, window_bounds = array<i64: 128, 128>}, {pipeline_mode = #tpu.pipeline_mode<synchronous>, transform_indices = @transform_12, window_bounds = array<i64: 8, 128>}, {transform_indices = @transform_13, window_bounds = array<i64: 1, 8, 128>}, {transform_indices = @transform_14, window_bounds = array<i64: 1, 8, 1>}, {pipeline_mode = #tpu.pipeline_mode<synchronous>, transform_indices = @transform_15, window_bounds = array<i64: 8, 128>}]} {
    %c0_i32 = arith.constant 0 : i32
    %0 = arith.cmpi eq, %arg0, %c0_i32 : i32
    %1 = arith.extui %0 : i1 to i32
    %c0_i32_0 = arith.constant 0 : i32
    %2 = arith.cmpi ne, %1, %c0_i32_0 : i32
    scf.if %2 {
      %cst_78 = arith.constant 0.000000e+00 : f32
      %129 = vector.broadcast %cst_78 : f32 to vector<8x128xf32>
      %c0_79 = arith.constant 0 : index
      %c0_80 = arith.constant 0 : index
      %c0_81 = arith.constant 0 : index
      %130 = vector.load %arg1[%c0_79, %c0_80, %c0_81] : memref<8x8x128xbf16, #tpu.memory_space<vmem>>, vector<1x8x128xbf16>
      %131 = vector.shape_cast %130 : vector<1x8x128xbf16> to vector<8x128xbf16>
      %132 = arith.truncf %129 : vector<8x128xf32> to vector<8x128xbf16>
      %c0_82 = arith.constant 0 : index
      %c0_83 = arith.constant 0 : index
      %c0_84 = arith.constant 0 : index
      %133 = vector.load %arg2[%c0_82, %c0_83, %c0_84] : memref<3x128x128xbf16, #tpu.memory_space<vmem>>, vector<1x128x128xbf16>
      %134 = vector.shape_cast %133 : vector<1x128x128xbf16> to vector<128x128xbf16>
      %cst_85 = arith.constant dense<0.000000e+00> : vector<8x128xf32>
      %135 = tpu.matmul %131, %134, %cst_85 {dimension_numbers = #tpu.dot_dimension_numbers<[1], [0], [0], [1], [0, 0, 1, 1], [], []>} : vector<8x128xbf16>, vector<128x128xbf16>, vector<8x128xf32> -> vector<8x128xf32>
      %c0_86 = arith.constant 0 : index
      %c0_87 = arith.constant 0 : index
      %c0_88 = arith.constant 0 : index
      %136 = vector.load %arg3[%c0_86, %c0_87, %c0_88] : memref<3x128x128xbf16, #tpu.memory_space<vmem>>, vector<1x128x128xbf16>
      %137 = vector.shape_cast %136 : vector<1x128x128xbf16> to vector<128x128xbf16>
      %cst_89 = arith.constant dense<0.000000e+00> : vector<8x128xf32>
      %138 = tpu.matmul %132, %137, %cst_89 {dimension_numbers = #tpu.dot_dimension_numbers<[1], [0], [0], [1], [0, 0, 1, 1], [], []>} : vector<8x128xbf16>, vector<128x128xbf16>, vector<8x128xf32> -> vector<8x128xf32>
      %139 = arith.addf %135, %138 : vector<8x128xf32>
      %c0_90 = arith.constant 0 : index
      %c0_91 = arith.constant 0 : index
      %c0_92 = arith.constant 0 : index
      %140 = vector.load %arg4[%c0_90, %c0_91, %c0_92] : memref<4x8x128xf32, #tpu.memory_space<vmem>>, vector<1x8x128xf32>
      %141 = vector.shape_cast %140 : vector<1x8x128xf32> to vector<8x128xf32>
      %142 = arith.addf %139, %141 : vector<8x128xf32>
      %143 = arith.negf %142 : vector<8x128xf32>
      %144 = math.exp %143 : vector<8x128xf32>
      %cst_93 = arith.constant 1.000000e+00 : f32
      %145 = vector.broadcast %cst_93 : f32 to vector<8x128xf32>
      %146 = arith.addf %145, %144 : vector<8x128xf32>
      %147 = arith.divf %145, %146 : vector<8x128xf32>
      %c1_94 = arith.constant 1 : index
      %c0_95 = arith.constant 0 : index
      %c0_96 = arith.constant 0 : index
      %148 = vector.load %arg2[%c1_94, %c0_95, %c0_96] : memref<3x128x128xbf16, #tpu.memory_space<vmem>>, vector<1x128x128xbf16>
      %149 = vector.shape_cast %148 : vector<1x128x128xbf16> to vector<128x128xbf16>
      %cst_97 = arith.constant dense<0.000000e+00> : vector<8x128xf32>
      %150 = tpu.matmul %131, %149, %cst_97 {dimension_numbers = #tpu.dot_dimension_numbers<[1], [0], [0], [1], [0, 0, 1, 1], [], []>} : vector<8x128xbf16>, vector<128x128xbf16>, vector<8x128xf32> -> vector<8x128xf32>
      %c1_98 = arith.constant 1 : index
      %c0_99 = arith.constant 0 : index
      %c0_100 = arith.constant 0 : index
      %151 = vector.load %arg3[%c1_98, %c0_99, %c0_100] : memref<3x128x128xbf16, #tpu.memory_space<vmem>>, vector<1x128x128xbf16>
      %152 = vector.shape_cast %151 : vector<1x128x128xbf16> to vector<128x128xbf16>
      %cst_101 = arith.constant dense<0.000000e+00> : vector<8x128xf32>
      %153 = tpu.matmul %132, %152, %cst_101 {dimension_numbers = #tpu.dot_dimension_numbers<[1], [0], [0], [1], [0, 0, 1, 1], [], []>} : vector<8x128xbf16>, vector<128x128xbf16>, vector<8x128xf32> -> vector<8x128xf32>
      %154 = arith.addf %150, %153 : vector<8x128xf32>
      %c1_102 = arith.constant 1 : index
      %c0_103 = arith.constant 0 : index
      %c0_104 = arith.constant 0 : index
      %155 = vector.load %arg4[%c1_102, %c0_103, %c0_104] : memref<4x8x128xf32, #tpu.memory_space<vmem>>, vector<1x8x128xf32>
      %156 = vector.shape_cast %155 : vector<1x8x128xf32> to vector<8x128xf32>
      %157 = arith.addf %154, %156 : vector<8x128xf32>
      %158 = arith.negf %157 : vector<8x128xf32>
      %159 = math.exp %158 : vector<8x128xf32>
      %cst_105 = arith.constant 1.000000e+00 : f32
      %160 = vector.broadcast %cst_105 : f32 to vector<8x128xf32>
      %161 = arith.addf %160, %159 : vector<8x128xf32>
      %162 = arith.divf %160, %161 : vector<8x128xf32>
      %c2_106 = arith.constant 2 : index
      %c0_107 = arith.constant 0 : index
      %c0_108 = arith.constant 0 : index
      %163 = vector.load %arg2[%c2_106, %c0_107, %c0_108] : memref<3x128x128xbf16, #tpu.memory_space<vmem>>, vector<1x128x128xbf16>
      %164 = vector.shape_cast %163 : vector<1x128x128xbf16> to vector<128x128xbf16>
      %cst_109 = arith.constant dense<0.000000e+00> : vector<8x128xf32>
      %165 = tpu.matmul %131, %164, %cst_109 {dimension_numbers = #tpu.dot_dimension_numbers<[1], [0], [0], [1], [0, 0, 1, 1], [], []>} : vector<8x128xbf16>, vector<128x128xbf16>, vector<8x128xf32> -> vector<8x128xf32>
      %c2_110 = arith.constant 2 : index
      %c0_111 = arith.constant 0 : index
      %c0_112 = arith.constant 0 : index
      %166 = vector.load %arg4[%c2_110, %c0_111, %c0_112] : memref<4x8x128xf32, #tpu.memory_space<vmem>>, vector<1x8x128xf32>
      %167 = vector.shape_cast %166 : vector<1x8x128xf32> to vector<8x128xf32>
      %168 = arith.addf %165, %167 : vector<8x128xf32>
      %c2_113 = arith.constant 2 : index
      %c0_114 = arith.constant 0 : index
      %c0_115 = arith.constant 0 : index
      %169 = vector.load %arg3[%c2_113, %c0_114, %c0_115] : memref<3x128x128xbf16, #tpu.memory_space<vmem>>, vector<1x128x128xbf16>
      %170 = vector.shape_cast %169 : vector<1x128x128xbf16> to vector<128x128xbf16>
      %cst_116 = arith.constant dense<0.000000e+00> : vector<8x128xf32>
      %171 = tpu.matmul %132, %170, %cst_116 {dimension_numbers = #tpu.dot_dimension_numbers<[1], [0], [0], [1], [0, 0, 1, 1], [], []>} : vector<8x128xbf16>, vector<128x128xbf16>, vector<8x128xf32> -> vector<8x128xf32>
      %c3_117 = arith.constant 3 : index
      %c0_118 = arith.constant 0 : index
      %c0_119 = arith.constant 0 : index
      %172 = vector.load %arg4[%c3_117, %c0_118, %c0_119] : memref<4x8x128xf32, #tpu.memory_space<vmem>>, vector<1x8x128xf32>
      %173 = vector.shape_cast %172 : vector<1x8x128xf32> to vector<8x128xf32>
      %174 = arith.addf %171, %173 : vector<8x128xf32>
      %175 = arith.mulf %147, %174 : vector<8x128xf32>
      %176 = arith.addf %168, %175 : vector<8x128xf32>
      %177 = math.tanh %176 : vector<8x128xf32>
      %cst_120 = arith.constant 1.000000e+00 : f32
      %178 = vector.broadcast %cst_120 : f32 to vector<8x128xf32>
      %179 = arith.subf %178, %162 : vector<8x128xf32>
      %180 = arith.mulf %179, %177 : vector<8x128xf32>
      %181 = arith.mulf %162, %129 : vector<8x128xf32>
      %182 = arith.addf %180, %181 : vector<8x128xf32>
      %183 = vector.shape_cast %182 : vector<8x128xf32> to vector<8x1x128xf32>
      %c0_121 = arith.constant 0 : index
      %c0_122 = arith.constant 0 : index
      %c0_123 = arith.constant 0 : index
      %184 = vector.load %arg17[%c0_121, %c0_122, %c0_123] : memref<8x8x128xf32, #tpu.memory_space<vmem>>, vector<8x1x128xf32>
      tpu.vector_store %arg17[%c0_121, %c0_122, %c0_123], %183 {strides = array<i32>} : memref<8x8x128xf32, #tpu.memory_space<vmem>>, vector<8x1x128xf32>,
      %c1_124 = arith.constant 1 : index
      %c0_125 = arith.constant 0 : index
      %c0_126 = arith.constant 0 : index
      %185 = vector.load %arg1[%c1_124, %c0_125, %c0_126] : memref<8x8x128xbf16, #tpu.memory_space<vmem>>, vector<1x8x128xbf16>
      %186 = vector.shape_cast %185 : vector<1x8x128xbf16> to vector<8x128xbf16>
      %187 = arith.truncf %182 : vector<8x128xf32> to vector<8x128xbf16>
      %c0_127 = arith.constant 0 : index
      %c0_128 = arith.constant 0 : index
      %c0_129 = arith.constant 0 : index
      %188 = vector.load %arg2[%c0_127, %c0_128, %c0_129] : memref<3x128x128xbf16, #tpu.memory_space<vmem>>, vector<1x128x128xbf16>
      %189 = vector.shape_cast %188 : vector<1x128x128xbf16> to vector<128x128xbf16>
      %cst_130 = arith.constant dense<0.000000e+00> : vector<8x128xf32>
      %190 = tpu.matmul %186, %189, %cst_130 {dimension_numbers = #tpu.dot_dimension_numbers<[1], [0], [0], [1], [0, 0, 1, 1], [], []>} : vector<8x128xbf16>, vector<128x128xbf16>, vector<8x128xf32> -> vector<8x128xf32>
      %c0_131 = arith.constant 0 : index
      %c0_132 = arith.constant 0 : index
      %c0_133 = arith.constant 0 : index
      %191 = vector.load %arg3[%c0_131, %c0_132, %c0_133] : memref<3x128x128xbf16, #tpu.memory_space<vmem>>, vector<1x128x128xbf16>
      %192 = vector.shape_cast %191 : vector<1x128x128xbf16> to vector<128x128xbf16>
      %cst_134 = arith.constant dense<0.000000e+00> : vector<8x128xf32>
      %193 = tpu.matmul %187, %192, %cst_134 {dimension_numbers = #tpu.dot_dimension_numbers<[1], [0], [0], [1], [0, 0, 1, 1], [], []>} : vector<8x128xbf16>, vector<128x128xbf16>, vector<8x128xf32> -> vector<8x128xf32>
      %194 = arith.addf %190, %193 : vector<8x128xf32>
      %c0_135 = arith.constant 0 : index
      %c0_136 = arith.constant 0 : index
      %c0_137 = arith.constant 0 : index
      %195 = vector.load %arg4[%c0_135, %c0_136, %c0_137] : memref<4x8x128xf32, #tpu.memory_space<vmem>>, vector<1x8x128xf32>
      %196 = vector.shape_cast %195 : vector<1x8x128xf32> to vector<8x128xf32>
      %197 = arith.addf %194, %196 : vector<8x128xf32>
      %198 = arith.negf %197 : vector<8x128xf32>
      %199 = math.exp %198 : vector<8x128xf32>
      %cst_138 = arith.constant 1.000000e+00 : f32
      %200 = vector.broadcast %cst_138 : f32 to vector<8x128xf32>
      %201 = arith.addf %200, %199 : vector<8x128xf32>
      %202 = arith.divf %200, %201 : vector<8x128xf32>
      %c1_139 = arith.constant 1 : index
      %c0_140 = arith.constant 0 : index
      %c0_141 = arith.constant 0 : index
      %203 = vector.load %arg2[%c1_139, %c0_140, %c0_141] : memref<3x128x128xbf16, #tpu.memory_space<vmem>>, vector<1x128x128xbf16>
      %204 = vector.shape_cast %203 : vector<1x128x128xbf16> to vector<128x128xbf16>
      %cst_142 = arith.constant dense<0.000000e+00> : vector<8x128xf32>
      %205 = tpu.matmul %186, %204, %cst_142 {dimension_numbers = #tpu.dot_dimension_numbers<[1], [0], [0], [1], [0, 0, 1, 1], [], []>} : vector<8x128xbf16>, vector<128x128xbf16>, vector<8x128xf32> -> vector<8x128xf32>
      %c1_143 = arith.constant 1 : index
      %c0_144 = arith.constant 0 : index
      %c0_145 = arith.constant 0 : index
      %206 = vector.load %arg3[%c1_143, %c0_144, %c0_145] : memref<3x128x128xbf16, #tpu.memory_space<vmem>>, vector<1x128x128xbf16>
      %207 = vector.shape_cast %206 : vector<1x128x128xbf16> to vector<128x128xbf16>
      %cst_146 = arith.constant dense<0.000000e+00> : vector<8x128xf32>
      %208 = tpu.matmul %187, %207, %cst_146 {dimension_numbers = #tpu.dot_dimension_numbers<[1], [0], [0], [1], [0, 0, 1, 1], [], []>} : vector<8x128xbf16>, vector<128x128xbf16>, vector<8x128xf32> -> vector<8x128xf32>
      %209 = arith.addf %205, %208 : vector<8x128xf32>
      %c1_147 = arith.constant 1 : index
      %c0_148 = arith.constant 0 : index
      %c0_149 = arith.constant 0 : index
      %210 = vector.load %arg4[%c1_147, %c0_148, %c0_149] : memref<4x8x128xf32, #tpu.memory_space<vmem>>, vector<1x8x128xf32>
      %211 = vector.shape_cast %210 : vector<1x8x128xf32> to vector<8x128xf32>
      %212 = arith.addf %209, %211 : vector<8x128xf32>
      %213 = arith.negf %212 : vector<8x128xf32>
      %214 = math.exp %213 : vector<8x128xf32>
      %cst_150 = arith.constant 1.000000e+00 : f32
      %215 = vector.broadcast %cst_150 : f32 to vector<8x128xf32>
      %216 = arith.addf %215, %214 : vector<8x128xf32>
      %217 = arith.divf %215, %216 : vector<8x128xf32>
      %c2_151 = arith.constant 2 : index
      %c0_152 = arith.constant 0 : index
      %c0_153 = arith.constant 0 : index
      %218 = vector.load %arg2[%c2_151, %c0_152, %c0_153] : memref<3x128x128xbf16, #tpu.memory_space<vmem>>, vector<1x128x128xbf16>
      %219 = vector.shape_cast %218 : vector<1x128x128xbf16> to vector<128x128xbf16>
      %cst_154 = arith.constant dense<0.000000e+00> : vector<8x128xf32>
      %220 = tpu.matmul %186, %219, %cst_154 {dimension_numbers = #tpu.dot_dimension_numbers<[1], [0], [0], [1], [0, 0, 1, 1], [], []>} : vector<8x128xbf16>, vector<128x128xbf16>, vector<8x128xf32> -> vector<8x128xf32>
      %c2_155 = arith.constant 2 : index
      %c0_156 = arith.constant 0 : index
      %c0_157 = arith.constant 0 : index
      %221 = vector.load %arg4[%c2_155, %c0_156, %c0_157] : memref<4x8x128xf32, #tpu.memory_space<vmem>>, vector<1x8x128xf32>
      %222 = vector.shape_cast %221 : vector<1x8x128xf32> to vector<8x128xf32>
      %223 = arith.addf %220, %222 : vector<8x128xf32>
      %c2_158 = arith.constant 2 : index
      %c0_159 = arith.constant 0 : index
      %c0_160 = arith.constant 0 : index
      %224 = vector.load %arg3[%c2_158, %c0_159, %c0_160] : memref<3x128x128xbf16, #tpu.memory_space<vmem>>, vector<1x128x128xbf16>
      %225 = vector.shape_cast %224 : vector<1x128x128xbf16> to vector<128x128xbf16>
      %cst_161 = arith.constant dense<0.000000e+00> : vector<8x128xf32>
      %226 = tpu.matmul %187, %225, %cst_161 {dimension_numbers = #tpu.dot_dimension_numbers<[1], [0], [0], [1], [0, 0, 1, 1], [], []>} : vector<8x128xbf16>, vector<128x128xbf16>, vector<8x128xf32> -> vector<8x128xf32>
      %c3_162 = arith.constant 3 : index
      %c0_163 = arith.constant 0 : index
      %c0_164 = arith.constant 0 : index
      %227 = vector.load %arg4[%c3_162, %c0_163, %c0_164] : memref<4x8x128xf32, #tpu.memory_space<vmem>>, vector<1x8x128xf32>
      %228 = vector.shape_cast %227 : vector<1x8x128xf32> to vector<8x128xf32>
      %229 = arith.addf %226, %228 : vector<8x128xf32>
      %230 = arith.mulf %202, %229 : vector<8x128xf32>
      %231 = arith.addf %223, %230 : vector<8x128xf32>
      %232 = math.tanh %231 : vector<8x128xf32>
      %cst_165 = arith.constant 1.000000e+00 : f32
      %233 = vector.broadcast %cst_165 : f32 to vector<8x128xf32>
      %234 = arith.subf %233, %217 : vector<8x128xf32>
      %235 = arith.mulf %234, %232 : vector<8x128xf32>
      %236 = arith.mulf %217, %182 : vector<8x128xf32>
      %237 = arith.addf %235, %236 : vector<8x128xf32>
      %238 = vector.shape_cast %237 : vector<8x128xf32> to vector<8x1x128xf32>
      %c0_166 = arith.constant 0 : index
      %c1_167 = arith.constant 1 : index
      %c0_168 = arith.constant 0 : index
      %239 = vector.load %arg17[%c0_166, %c1_167, %c0_168] : memref<8x8x128xf32, #tpu.memory_space<vmem>>, vector<8x1x128xf32>
      tpu.vector_store %arg17[%c0_166, %c1_167, %c0_168], %238 {strides = array<i32>} : memref<8x8x128xf32, #tpu.memory_space<vmem>>, vector<8x1x128xf32>,
      %c2_169 = arith.constant 2 : index
      %c0_170 = arith.constant 0 : index
      %c0_171 = arith.constant 0 : index
      %240 = vector.load %arg1[%c2_169, %c0_170, %c0_171] : memref<8x8x128xbf16, #tpu.memory_space<vmem>>, vector<1x8x128xbf16>
      %241 = vector.shape_cast %240 : vector<1x8x128xbf16> to vector<8x128xbf16>
      %242 = arith.truncf %237 : vector<8x128xf32> to vector<8x128xbf16>
      %c0_172 = arith.constant 0 : index
      %c0_173 = arith.constant 0 : index
      %c0_174 = arith.constant 0 : index
      %243 = vector.load %arg2[%c0_172, %c0_173, %c0_174] : memref<3x128x128xbf16, #tpu.memory_space<vmem>>, vector<1x128x128xbf16>
      %244 = vector.shape_cast %243 : vector<1x128x128xbf16> to vector<128x128xbf16>
      %cst_175 = arith.constant dense<0.000000e+00> : vector<8x128xf32>
      %245 = tpu.matmul %241, %244, %cst_175 {dimension_numbers = #tpu.dot_dimension_numbers<[1], [0], [0], [1], [0, 0, 1, 1], [], []>} : vector<8x128xbf16>, vector<128x128xbf16>, vector<8x128xf32> -> vector<8x128xf32>
      %c0_176 = arith.constant 0 : index
      %c0_177 = arith.constant 0 : index
      %c0_178 = arith.constant 0 : index
      %246 = vector.load %arg3[%c0_176, %c0_177, %c0_178] : memref<3x128x128xbf16, #tpu.memory_space<vmem>>, vector<1x128x128xbf16>
      %247 = vector.shape_cast %246 : vector<1x128x128xbf16> to vector<128x128xbf16>
      %cst_179 = arith.constant dense<0.000000e+00> : vector<8x128xf32>
      %248 = tpu.matmul %242, %247, %cst_179 {dimension_numbers = #tpu.dot_dimension_numbers<[1], [0], [0], [1], [0, 0, 1, 1], [], []>} : vector<8x128xbf16>, vector<128x128xbf16>, vector<8x128xf32> -> vector<8x128xf32>
      %249 = arith.addf %245, %248 : vector<8x128xf32>
      %c0_180 = arith.constant 0 : index
      %c0_181 = arith.constant 0 : index
      %c0_182 = arith.constant 0 : index
      %250 = vector.load %arg4[%c0_180, %c0_181, %c0_182] : memref<4x8x128xf32, #tpu.memory_space<vmem>>, vector<1x8x128xf32>
      %251 = vector.shape_cast %250 : vector<1x8x128xf32> to vector<8x128xf32>
      %252 = arith.addf %249, %251 : vector<8x128xf32>
      %253 = arith.negf %252 : vector<8x128xf32>
      %254 = math.exp %253 : vector<8x128xf32>
      %cst_183 = arith.constant 1.000000e+00 : f32
      %255 = vector.broadcast %cst_183 : f32 to vector<8x128xf32>
      %256 = arith.addf %255, %254 : vector<8x128xf32>
      %257 = arith.divf %255, %256 : vector<8x128xf32>
      %c1_184 = arith.constant 1 : index
      %c0_185 = arith.constant 0 : index
      %c0_186 = arith.constant 0 : index
      %258 = vector.load %arg2[%c1_184, %c0_185, %c0_186] : memref<3x128x128xbf16, #tpu.memory_space<vmem>>, vector<1x128x128xbf16>
      %259 = vector.shape_cast %258 : vector<1x128x128xbf16> to vector<128x128xbf16>
      %cst_187 = arith.constant dense<0.000000e+00> : vector<8x128xf32>
      %260 = tpu.matmul %241, %259, %cst_187 {dimension_numbers = #tpu.dot_dimension_numbers<[1], [0], [0], [1], [0, 0, 1, 1], [], []>} : vector<8x128xbf16>, vector<128x128xbf16>, vector<8x128xf32> -> vector<8x128xf32>
      %c1_188 = arith.constant 1 : index
      %c0_189 = arith.constant 0 : index
      %c0_190 = arith.constant 0 : index
      %261 = vector.load %arg3[%c1_188, %c0_189, %c0_190] : memref<3x128x128xbf16, #tpu.memory_space<vmem>>, vector<1x128x128xbf16>
      %262 = vector.shape_cast %261 : vector<1x128x128xbf16> to vector<128x128xbf16>
      %cst_191 = arith.constant dense<0.000000e+00> : vector<8x128xf32>
      %263 = tpu.matmul %242, %262, %cst_191 {dimension_numbers = #tpu.dot_dimension_numbers<[1], [0], [0], [1], [0, 0, 1, 1], [], []>} : vector<8x128xbf16>, vector<128x128xbf16>, vector<8x128xf32> -> vector<8x128xf32>
      %264 = arith.addf %260, %263 : vector<8x128xf32>
      %c1_192 = arith.constant 1 : index
      %c0_193 = arith.constant 0 : index
      %c0_194 = arith.constant 0 : index
      %265 = vector.load %arg4[%c1_192, %c0_193, %c0_194] : memref<4x8x128xf32, #tpu.memory_space<vmem>>, vector<1x8x128xf32>
      %266 = vector.shape_cast %265 : vector<1x8x128xf32> to vector<8x128xf32>
      %267 = arith.addf %264, %266 : vector<8x128xf32>
      %268 = arith.negf %267 : vector<8x128xf32>
      %269 = math.exp %268 : vector<8x128xf32>
      %cst_195 = arith.constant 1.000000e+00 : f32
      %270 = vector.broadcast %cst_195 : f32 to vector<8x128xf32>
      %271 = arith.addf %270, %269 : vector<8x128xf32>
      %272 = arith.divf %270, %271 : vector<8x128xf32>
      %c2_196 = arith.constant 2 : index
      %c0_197 = arith.constant 0 : index
      %c0_198 = arith.constant 0 : index
      %273 = vector.load %arg2[%c2_196, %c0_197, %c0_198] : memref<3x128x128xbf16, #tpu.memory_space<vmem>>, vector<1x128x128xbf16>
      %274 = vector.shape_cast %273 : vector<1x128x128xbf16> to vector<128x128xbf16>
      %cst_199 = arith.constant dense<0.000000e+00> : vector<8x128xf32>
      %275 = tpu.matmul %241, %274, %cst_199 {dimension_numbers = #tpu.dot_dimension_numbers<[1], [0], [0], [1], [0, 0, 1, 1], [], []>} : vector<8x128xbf16>, vector<128x128xbf16>, vector<8x128xf32> -> vector<8x128xf32>
      %c2_200 = arith.constant 2 : index
      %c0_201 = arith.constant 0 : index
      %c0_202 = arith.constant 0 : index
      %276 = vector.load %arg4[%c2_200, %c0_201, %c0_202] : memref<4x8x128xf32, #tpu.memory_space<vmem>>, vector<1x8x128xf32>
      %277 = vector.shape_cast %276 : vector<1x8x128xf32> to vector<8x128xf32>
      %278 = arith.addf %275, %277 : vector<8x128xf32>
      %c2_203 = arith.constant 2 : index
      %c0_204 = arith.constant 0 : index
      %c0_205 = arith.constant 0 : index
      %279 = vector.load %arg3[%c2_203, %c0_204, %c0_205] : memref<3x128x128xbf16, #tpu.memory_space<vmem>>, vector<1x128x128xbf16>
      %280 = vector.shape_cast %279 : vector<1x128x128xbf16> to vector<128x128xbf16>
      %cst_206 = arith.constant dense<0.000000e+00> : vector<8x128xf32>
      %281 = tpu.matmul %242, %280, %cst_206 {dimension_numbers = #tpu.dot_dimension_numbers<[1], [0], [0], [1], [0, 0, 1, 1], [], []>} : vector<8x128xbf16>, vector<128x128xbf16>, vector<8x128xf32> -> vector<8x128xf32>
      %c3_207 = arith.constant 3 : index
      %c0_208 = arith.constant 0 : index
      %c0_209 = arith.constant 0 : index
      %282 = vector.load %arg4[%c3_207, %c0_208, %c0_209] : memref<4x8x128xf32, #tpu.memory_space<vmem>>, vector<1x8x128xf32>
      %283 = vector.shape_cast %282 : vector<1x8x128xf32> to vector<8x128xf32>
      %284 = arith.addf %281, %283 : vector<8x128xf32>
      %285 = arith.mulf %257, %284 : vector<8x128xf32>
      %286 = arith.addf %278, %285 : vector<8x128xf32>
      %287 = math.tanh %286 : vector<8x128xf32>
      %cst_210 = arith.constant 1.000000e+00 : f32
      %288 = vector.broadcast %cst_210 : f32 to vector<8x128xf32>
      %289 = arith.subf %288, %272 : vector<8x128xf32>
      %290 = arith.mulf %289, %287 : vector<8x128xf32>
      %291 = arith.mulf %272, %237 : vector<8x128xf32>
      %292 = arith.addf %290, %291 : vector<8x128xf32>
      %293 = vector.shape_cast %292 : vector<8x128xf32> to vector<8x1x128xf32>
      %c0_211 = arith.constant 0 : index
      %c2_212 = arith.constant 2 : index
      %c0_213 = arith.constant 0 : index
      %294 = vector.load %arg17[%c0_211, %c2_212, %c0_213] : memref<8x8x128xf32, #tpu.memory_space<vmem>>, vector<8x1x128xf32>
      tpu.vector_store %arg17[%c0_211, %c2_212, %c0_213], %293 {strides = array<i32>} : memref<8x8x128xf32, #tpu.memory_space<vmem>>, vector<8x1x128xf32>,
      %c3_214 = arith.constant 3 : index
      %c0_215 = arith.constant 0 : index
      %c0_216 = arith.constant 0 : index
      %295 = vector.load %arg1[%c3_214, %c0_215, %c0_216] : memref<8x8x128xbf16, #tpu.memory_space<vmem>>, vector<1x8x128xbf16>
      %296 = vector.shape_cast %295 : vector<1x8x128xbf16> to vector<8x128xbf16>
      %297 = arith.truncf %292 : vector<8x128xf32> to vector<8x128xbf16>
      %c0_217 = arith.constant 0 : index
      %c0_218 = arith.constant 0 : index
      %c0_219 = arith.constant 0 : index
      %298 = vector.load %arg2[%c0_217, %c0_218, %c0_219] : memref<3x128x128xbf16, #tpu.memory_space<vmem>>, vector<1x128x128xbf16>
      %299 = vector.shape_cast %298 : vector<1x128x128xbf16> to vector<128x128xbf16>
      %cst_220 = arith.constant dense<0.000000e+00> : vector<8x128xf32>
      %300 = tpu.matmul %296, %299, %cst_220 {dimension_numbers = #tpu.dot_dimension_numbers<[1], [0], [0], [1], [0, 0, 1, 1], [], []>} : vector<8x128xbf16>, vector<128x128xbf16>, vector<8x128xf32> -> vector<8x128xf32>
      %c0_221 = arith.constant 0 : index
      %c0_222 = arith.constant 0 : index
      %c0_223 = arith.constant 0 : index
      %301 = vector.load %arg3[%c0_221, %c0_222, %c0_223] : memref<3x128x128xbf16, #tpu.memory_space<vmem>>, vector<1x128x128xbf16>
      %302 = vector.shape_cast %301 : vector<1x128x128xbf16> to vector<128x128xbf16>
      %cst_224 = arith.constant dense<0.000000e+00> : vector<8x128xf32>
      %303 = tpu.matmul %297, %302, %cst_224 {dimension_numbers = #tpu.dot_dimension_numbers<[1], [0], [0], [1], [0, 0, 1, 1], [], []>} : vector<8x128xbf16>, vector<128x128xbf16>, vector<8x128xf32> -> vector<8x128xf32>
      %304 = arith.addf %300, %303 : vector<8x128xf32>
      %c0_225 = arith.constant 0 : index
      %c0_226 = arith.constant 0 : index
      %c0_227 = arith.constant 0 : index
      %305 = vector.load %arg4[%c0_225, %c0_226, %c0_227] : memref<4x8x128xf32, #tpu.memory_space<vmem>>, vector<1x8x128xf32>
      %306 = vector.shape_cast %305 : vector<1x8x128xf32> to vector<8x128xf32>
      %307 = arith.addf %304, %306 : vector<8x128xf32>
      %308 = arith.negf %307 : vector<8x128xf32>
      %309 = math.exp %308 : vector<8x128xf32>
      %cst_228 = arith.constant 1.000000e+00 : f32
      %310 = vector.broadcast %cst_228 : f32 to vector<8x128xf32>
      %311 = arith.addf %310, %309 : vector<8x128xf32>
      %312 = arith.divf %310, %311 : vector<8x128xf32>
      %c1_229 = arith.constant 1 : index
      %c0_230 = arith.constant 0 : index
      %c0_231 = arith.constant 0 : index
      %313 = vector.load %arg2[%c1_229, %c0_230, %c0_231] : memref<3x128x128xbf16, #tpu.memory_space<vmem>>, vector<1x128x128xbf16>
      %314 = vector.shape_cast %313 : vector<1x128x128xbf16> to vector<128x128xbf16>
      %cst_232 = arith.constant dense<0.000000e+00> : vector<8x128xf32>
      %315 = tpu.matmul %296, %314, %cst_232 {dimension_numbers = #tpu.dot_dimension_numbers<[1], [0], [0], [1], [0, 0, 1, 1], [], []>} : vector<8x128xbf16>, vector<128x128xbf16>, vector<8x128xf32> -> vector<8x128xf32>
      %c1_233 = arith.constant 1 : index
      %c0_234 = arith.constant 0 : index
      %c0_235 = arith.constant 0 : index
      %316 = vector.load %arg3[%c1_233, %c0_234, %c0_235] : memref<3x128x128xbf16, #tpu.memory_space<vmem>>, vector<1x128x128xbf16>
      %317 = vector.shape_cast %316 : vector<1x128x128xbf16> to vector<128x128xbf16>
      %cst_236 = arith.constant dense<0.000000e+00> : vector<8x128xf32>
      %318 = tpu.matmul %297, %317, %cst_236 {dimension_numbers = #tpu.dot_dimension_numbers<[1], [0], [0], [1], [0, 0, 1, 1], [], []>} : vector<8x128xbf16>, vector<128x128xbf16>, vector<8x128xf32> -> vector<8x128xf32>
      %319 = arith.addf %315, %318 : vector<8x128xf32>
      %c1_237 = arith.constant 1 : index
      %c0_238 = arith.constant 0 : index
      %c0_239 = arith.constant 0 : index
      %320 = vector.load %arg4[%c1_237, %c0_238, %c0_239] : memref<4x8x128xf32, #tpu.memory_space<vmem>>, vector<1x8x128xf32>
      %321 = vector.shape_cast %320 : vector<1x8x128xf32> to vector<8x128xf32>
      %322 = arith.addf %319, %321 : vector<8x128xf32>
      %323 = arith.negf %322 : vector<8x128xf32>
      %324 = math.exp %323 : vector<8x128xf32>
      %cst_240 = arith.constant 1.000000e+00 : f32
      %325 = vector.broadcast %cst_240 : f32 to vector<8x128xf32>
      %326 = arith.addf %325, %324 : vector<8x128xf32>
      %327 = arith.divf %325, %326 : vector<8x128xf32>
      %c2_241 = arith.constant 2 : index
      %c0_242 = arith.constant 0 : index
      %c0_243 = arith.constant 0 : index
      %328 = vector.load %arg2[%c2_241, %c0_242, %c0_243] : memref<3x128x128xbf16, #tpu.memory_space<vmem>>, vector<1x128x128xbf16>
      %329 = vector.shape_cast %328 : vector<1x128x128xbf16> to vector<128x128xbf16>
      %cst_244 = arith.constant dense<0.000000e+00> : vector<8x128xf32>
      %330 = tpu.matmul %296, %329, %cst_244 {dimension_numbers = #tpu.dot_dimension_numbers<[1], [0], [0], [1], [0, 0, 1, 1], [], []>} : vector<8x128xbf16>, vector<128x128xbf16>, vector<8x128xf32> -> vector<8x128xf32>
      %c2_245 = arith.constant 2 : index
      %c0_246 = arith.constant 0 : index
      %c0_247 = arith.constant 0 : index
      %331 = vector.load %arg4[%c2_245, %c0_246, %c0_247] : memref<4x8x128xf32, #tpu.memory_space<vmem>>, vector<1x8x128xf32>
      %332 = vector.shape_cast %331 : vector<1x8x128xf32> to vector<8x128xf32>
      %333 = arith.addf %330, %332 : vector<8x128xf32>
      %c2_248 = arith.constant 2 : index
      %c0_249 = arith.constant 0 : index
      %c0_250 = arith.constant 0 : index
      %334 = vector.load %arg3[%c2_248, %c0_249, %c0_250] : memref<3x128x128xbf16, #tpu.memory_space<vmem>>, vector<1x128x128xbf16>
      %335 = vector.shape_cast %334 : vector<1x128x128xbf16> to vector<128x128xbf16>
      %cst_251 = arith.constant dense<0.000000e+00> : vector<8x128xf32>
      %336 = tpu.matmul %297, %335, %cst_251 {dimension_numbers = #tpu.dot_dimension_numbers<[1], [0], [0], [1], [0, 0, 1, 1], [], []>} : vector<8x128xbf16>, vector<128x128xbf16>, vector<8x128xf32> -> vector<8x128xf32>
      %c3_252 = arith.constant 3 : index
      %c0_253 = arith.constant 0 : index
      %c0_254 = arith.constant 0 : index
      %337 = vector.load %arg4[%c3_252, %c0_253, %c0_254] : memref<4x8x128xf32, #tpu.memory_space<vmem>>, vector<1x8x128xf32>
      %338 = vector.shape_cast %337 : vector<1x8x128xf32> to vector<8x128xf32>
      %339 = arith.addf %336, %338 : vector<8x128xf32>
      %340 = arith.mulf %312, %339 : vector<8x128xf32>
      %341 = arith.addf %333, %340 : vector<8x128xf32>
      %342 = math.tanh %341 : vector<8x128xf32>
      %cst_255 = arith.constant 1.000000e+00 : f32
      %343 = vector.broadcast %cst_255 : f32 to vector<8x128xf32>
      %344 = arith.subf %343, %327 : vector<8x128xf32>
      %345 = arith.mulf %344, %342 : vector<8x128xf32>
      %346 = arith.mulf %327, %292 : vector<8x128xf32>
      %347 = arith.addf %345, %346 : vector<8x128xf32>
      %348 = vector.shape_cast %347 : vector<8x128xf32> to vector<8x1x128xf32>
      %c0_256 = arith.constant 0 : index
      %c3_257 = arith.constant 3 : index
      %c0_258 = arith.constant 0 : index
      %349 = vector.load %arg17[%c0_256, %c3_257, %c0_258] : memref<8x8x128xf32, #tpu.memory_space<vmem>>, vector<8x1x128xf32>
      tpu.vector_store %arg17[%c0_256, %c3_257, %c0_258], %348 {strides = array<i32>} : memref<8x8x128xf32, #tpu.memory_space<vmem>>, vector<8x1x128xf32>,
      %c4 = arith.constant 4 : index
      %c0_259 = arith.constant 0 : index
      %c0_260 = arith.constant 0 : index
      %350 = vector.load %arg1[%c4, %c0_259, %c0_260] : memref<8x8x128xbf16, #tpu.memory_space<vmem>>, vector<1x8x128xbf16>
      %351 = vector.shape_cast %350 : vector<1x8x128xbf16> to vector<8x128xbf16>
      %352 = arith.truncf %347 : vector<8x128xf32> to vector<8x128xbf16>
      %c0_261 = arith.constant 0 : index
      %c0_262 = arith.constant 0 : index
      %c0_263 = arith.constant 0 : index
      %353 = vector.load %arg2[%c0_261, %c0_262, %c0_263] : memref<3x128x128xbf16, #tpu.memory_space<vmem>>, vector<1x128x128xbf16>
      %354 = vector.shape_cast %353 : vector<1x128x128xbf16> to vector<128x128xbf16>
      %cst_264 = arith.constant dense<0.000000e+00> : vector<8x128xf32>
      %355 = tpu.matmul %351, %354, %cst_264 {dimension_numbers = #tpu.dot_dimension_numbers<[1], [0], [0], [1], [0, 0, 1, 1], [], []>} : vector<8x128xbf16>, vector<128x128xbf16>, vector<8x128xf32> -> vector<8x128xf32>
      %c0_265 = arith.constant 0 : index
      %c0_266 = arith.constant 0 : index
      %c0_267 = arith.constant 0 : index
      %356 = vector.load %arg3[%c0_265, %c0_266, %c0_267] : memref<3x128x128xbf16, #tpu.memory_space<vmem>>, vector<1x128x128xbf16>
      %357 = vector.shape_cast %356 : vector<1x128x128xbf16> to vector<128x128xbf16>
      %cst_268 = arith.constant dense<0.000000e+00> : vector<8x128xf32>
      %358 = tpu.matmul %352, %357, %cst_268 {dimension_numbers = #tpu.dot_dimension_numbers<[1], [0], [0], [1], [0, 0, 1, 1], [], []>} : vector<8x128xbf16>, vector<128x128xbf16>, vector<8x128xf32> -> vector<8x128xf32>
      %359 = arith.addf %355, %358 : vector<8x128xf32>
      %c0_269 = arith.constant 0 : index
      %c0_270 = arith.constant 0 : index
      %c0_271 = arith.constant 0 : index
      %360 = vector.load %arg4[%c0_269, %c0_270, %c0_271] : memref<4x8x128xf32, #tpu.memory_space<vmem>>, vector<1x8x128xf32>
      %361 = vector.shape_cast %360 : vector<1x8x128xf32> to vector<8x128xf32>
      %362 = arith.addf %359, %361 : vector<8x128xf32>
      %363 = arith.negf %362 : vector<8x128xf32>
      %364 = math.exp %363 : vector<8x128xf32>
      %cst_272 = arith.constant 1.000000e+00 : f32
      %365 = vector.broadcast %cst_272 : f32 to vector<8x128xf32>
      %366 = arith.addf %365, %364 : vector<8x128xf32>
      %367 = arith.divf %365, %366 : vector<8x128xf32>
      %c1_273 = arith.constant 1 : index
      %c0_274 = arith.constant 0 : index
      %c0_275 = arith.constant 0 : index
      %368 = vector.load %arg2[%c1_273, %c0_274, %c0_275] : memref<3x128x128xbf16, #tpu.memory_space<vmem>>, vector<1x128x128xbf16>
      %369 = vector.shape_cast %368 : vector<1x128x128xbf16> to vector<128x128xbf16>
      %cst_276 = arith.constant dense<0.000000e+00> : vector<8x128xf32>
      %370 = tpu.matmul %351, %369, %cst_276 {dimension_numbers = #tpu.dot_dimension_numbers<[1], [0], [0], [1], [0, 0, 1, 1], [], []>} : vector<8x128xbf16>, vector<128x128xbf16>, vector<8x128xf32> -> vector<8x128xf32>
      %c1_277 = arith.constant 1 : index
      %c0_278 = arith.constant 0 : index
      %c0_279 = arith.constant 0 : index
      %371 = vector.load %arg3[%c1_277, %c0_278, %c0_279] : memref<3x128x128xbf16, #tpu.memory_space<vmem>>, vector<1x128x128xbf16>
      %372 = vector.shape_cast %371 : vector<1x128x128xbf16> to vector<128x128xbf16>
      %cst_280 = arith.constant dense<0.000000e+00> : vector<8x128xf32>
      %373 = tpu.matmul %352, %372, %cst_280 {dimension_numbers = #tpu.dot_dimension_numbers<[1], [0], [0], [1], [0, 0, 1, 1], [], []>} : vector<8x128xbf16>, vector<128x128xbf16>, vector<8x128xf32> -> vector<8x128xf32>
      %374 = arith.addf %370, %373 : vector<8x128xf32>
      %c1_281 = arith.constant 1 : index
      %c0_282 = arith.constant 0 : index
      %c0_283 = arith.constant 0 : index
      %375 = vector.load %arg4[%c1_281, %c0_282, %c0_283] : memref<4x8x128xf32, #tpu.memory_space<vmem>>, vector<1x8x128xf32>
      %376 = vector.shape_cast %375 : vector<1x8x128xf32> to vector<8x128xf32>
      %377 = arith.addf %374, %376 : vector<8x128xf32>
      %378 = arith.negf %377 : vector<8x128xf32>
      %379 = math.exp %378 : vector<8x128xf32>
      %cst_284 = arith.constant 1.000000e+00 : f32
      %380 = vector.broadcast %cst_284 : f32 to vector<8x128xf32>
      %381 = arith.addf %380, %379 : vector<8x128xf32>
      %382 = arith.divf %380, %381 : vector<8x128xf32>
      %c2_285 = arith.constant 2 : index
      %c0_286 = arith.constant 0 : index
      %c0_287 = arith.constant 0 : index
      %383 = vector.load %arg2[%c2_285, %c0_286, %c0_287] : memref<3x128x128xbf16, #tpu.memory_space<vmem>>, vector<1x128x128xbf16>
      %384 = vector.shape_cast %383 : vector<1x128x128xbf16> to vector<128x128xbf16>
      %cst_288 = arith.constant dense<0.000000e+00> : vector<8x128xf32>
      %385 = tpu.matmul %351, %384, %cst_288 {dimension_numbers = #tpu.dot_dimension_numbers<[1], [0], [0], [1], [0, 0, 1, 1], [], []>} : vector<8x128xbf16>, vector<128x128xbf16>, vector<8x128xf32> -> vector<8x128xf32>
      %c2_289 = arith.constant 2 : index
      %c0_290 = arith.constant 0 : index
      %c0_291 = arith.constant 0 : index
      %386 = vector.load %arg4[%c2_289, %c0_290, %c0_291] : memref<4x8x128xf32, #tpu.memory_space<vmem>>, vector<1x8x128xf32>
      %387 = vector.shape_cast %386 : vector<1x8x128xf32> to vector<8x128xf32>
      %388 = arith.addf %385, %387 : vector<8x128xf32>
      %c2_292 = arith.constant 2 : index
      %c0_293 = arith.constant 0 : index
      %c0_294 = arith.constant 0 : index
      %389 = vector.load %arg3[%c2_292, %c0_293, %c0_294] : memref<3x128x128xbf16, #tpu.memory_space<vmem>>, vector<1x128x128xbf16>
      %390 = vector.shape_cast %389 : vector<1x128x128xbf16> to vector<128x128xbf16>
      %cst_295 = arith.constant dense<0.000000e+00> : vector<8x128xf32>
      %391 = tpu.matmul %352, %390, %cst_295 {dimension_numbers = #tpu.dot_dimension_numbers<[1], [0], [0], [1], [0, 0, 1, 1], [], []>} : vector<8x128xbf16>, vector<128x128xbf16>, vector<8x128xf32> -> vector<8x128xf32>
      %c3_296 = arith.constant 3 : index
      %c0_297 = arith.constant 0 : index
      %c0_298 = arith.constant 0 : index
      %392 = vector.load %arg4[%c3_296, %c0_297, %c0_298] : memref<4x8x128xf32, #tpu.memory_space<vmem>>, vector<1x8x128xf32>
      %393 = vector.shape_cast %392 : vector<1x8x128xf32> to vector<8x128xf32>
      %394 = arith.addf %391, %393 : vector<8x128xf32>
      %395 = arith.mulf %367, %394 : vector<8x128xf32>
      %396 = arith.addf %388, %395 : vector<8x128xf32>
      %397 = math.tanh %396 : vector<8x128xf32>
      %cst_299 = arith.constant 1.000000e+00 : f32
      %398 = vector.broadcast %cst_299 : f32 to vector<8x128xf32>
      %399 = arith.subf %398, %382 : vector<8x128xf32>
      %400 = arith.mulf %399, %397 : vector<8x128xf32>
      %401 = arith.mulf %382, %347 : vector<8x128xf32>
      %402 = arith.addf %400, %401 : vector<8x128xf32>
      %403 = vector.shape_cast %402 : vector<8x128xf32> to vector<8x1x128xf32>
      %c0_300 = arith.constant 0 : index
      %c4_301 = arith.constant 4 : index
      %c0_302 = arith.constant 0 : index
      %404 = vector.load %arg17[%c0_300, %c4_301, %c0_302] : memref<8x8x128xf32, #tpu.memory_space<vmem>>, vector<8x1x128xf32>
      tpu.vector_store %arg17[%c0_300, %c4_301, %c0_302], %403 {strides = array<i32>} : memref<8x8x128xf32, #tpu.memory_space<vmem>>, vector<8x1x128xf32>,
      %c5 = arith.constant 5 : index
      %c0_303 = arith.constant 0 : index
      %c0_304 = arith.constant 0 : index
      %405 = vector.load %arg1[%c5, %c0_303, %c0_304] : memref<8x8x128xbf16, #tpu.memory_space<vmem>>, vector<1x8x128xbf16>
      %406 = vector.shape_cast %405 : vector<1x8x128xbf16> to vector<8x128xbf16>
      %407 = arith.truncf %402 : vector<8x128xf32> to vector<8x128xbf16>
      %c0_305 = arith.constant 0 : index
      %c0_306 = arith.constant 0 : index
      %c0_307 = arith.constant 0 : index
      %408 = vector.load %arg2[%c0_305, %c0_306, %c0_307] : memref<3x128x128xbf16, #tpu.memory_space<vmem>>, vector<1x128x128xbf16>
      %409 = vector.shape_cast %408 : vector<1x128x128xbf16> to vector<128x128xbf16>
      %cst_308 = arith.constant dense<0.000000e+00> : vector<8x128xf32>
      %410 = tpu.matmul %406, %409, %cst_308 {dimension_numbers = #tpu.dot_dimension_numbers<[1], [0], [0], [1], [0, 0, 1, 1], [], []>} : vector<8x128xbf16>, vector<128x128xbf16>, vector<8x128xf32> -> vector<8x128xf32>
      %c0_309 = arith.constant 0 : index
      %c0_310 = arith.constant 0 : index
      %c0_311 = arith.constant 0 : index
      %411 = vector.load %arg3[%c0_309, %c0_310, %c0_311] : memref<3x128x128xbf16, #tpu.memory_space<vmem>>, vector<1x128x128xbf16>
      %412 = vector.shape_cast %411 : vector<1x128x128xbf16> to vector<128x128xbf16>
      %cst_312 = arith.constant dense<0.000000e+00> : vector<8x128xf32>
      %413 = tpu.matmul %407, %412, %cst_312 {dimension_numbers = #tpu.dot_dimension_numbers<[1], [0], [0], [1], [0, 0, 1, 1], [], []>} : vector<8x128xbf16>, vector<128x128xbf16>, vector<8x128xf32> -> vector<8x128xf32>
      %414 = arith.addf %410, %413 : vector<8x128xf32>
      %c0_313 = arith.constant 0 : index
      %c0_314 = arith.constant 0 : index
      %c0_315 = arith.constant 0 : index
      %415 = vector.load %arg4[%c0_313, %c0_314, %c0_315] : memref<4x8x128xf32, #tpu.memory_space<vmem>>, vector<1x8x128xf32>
      %416 = vector.shape_cast %415 : vector<1x8x128xf32> to vector<8x128xf32>
      %417 = arith.addf %414, %416 : vector<8x128xf32>
      %418 = arith.negf %417 : vector<8x128xf32>
      %419 = math.exp %418 : vector<8x128xf32>
      %cst_316 = arith.constant 1.000000e+00 : f32
      %420 = vector.broadcast %cst_316 : f32 to vector<8x128xf32>
      %421 = arith.addf %420, %419 : vector<8x128xf32>
      %422 = arith.divf %420, %421 : vector<8x128xf32>
      %c1_317 = arith.constant 1 : index
      %c0_318 = arith.constant 0 : index
      %c0_319 = arith.constant 0 : index
      %423 = vector.load %arg2[%c1_317, %c0_318, %c0_319] : memref<3x128x128xbf16, #tpu.memory_space<vmem>>, vector<1x128x128xbf16>
      %424 = vector.shape_cast %423 : vector<1x128x128xbf16> to vector<128x128xbf16>
      %cst_320 = arith.constant dense<0.000000e+00> : vector<8x128xf32>
      %425 = tpu.matmul %406, %424, %cst_320 {dimension_numbers = #tpu.dot_dimension_numbers<[1], [0], [0], [1], [0, 0, 1, 1], [], []>} : vector<8x128xbf16>, vector<128x128xbf16>, vector<8x128xf32> -> vector<8x128xf32>
      %c1_321 = arith.constant 1 : index
      %c0_322 = arith.constant 0 : index
      %c0_323 = arith.constant 0 : index
      %426 = vector.load %arg3[%c1_321, %c0_322, %c0_323] : memref<3x128x128xbf16, #tpu.memory_space<vmem>>, vector<1x128x128xbf16>
      %427 = vector.shape_cast %426 : vector<1x128x128xbf16> to vector<128x128xbf16>
      %cst_324 = arith.constant dense<0.000000e+00> : vector<8x128xf32>
      %428 = tpu.matmul %407, %427, %cst_324 {dimension_numbers = #tpu.dot_dimension_numbers<[1], [0], [0], [1], [0, 0, 1, 1], [], []>} : vector<8x128xbf16>, vector<128x128xbf16>, vector<8x128xf32> -> vector<8x128xf32>
      %429 = arith.addf %425, %428 : vector<8x128xf32>
      %c1_325 = arith.constant 1 : index
      %c0_326 = arith.constant 0 : index
      %c0_327 = arith.constant 0 : index
      %430 = vector.load %arg4[%c1_325, %c0_326, %c0_327] : memref<4x8x128xf32, #tpu.memory_space<vmem>>, vector<1x8x128xf32>
      %431 = vector.shape_cast %430 : vector<1x8x128xf32> to vector<8x128xf32>
      %432 = arith.addf %429, %431 : vector<8x128xf32>
      %433 = arith.negf %432 : vector<8x128xf32>
      %434 = math.exp %433 : vector<8x128xf32>
      %cst_328 = arith.constant 1.000000e+00 : f32
      %435 = vector.broadcast %cst_328 : f32 to vector<8x128xf32>
      %436 = arith.addf %435, %434 : vector<8x128xf32>
      %437 = arith.divf %435, %436 : vector<8x128xf32>
      %c2_329 = arith.constant 2 : index
      %c0_330 = arith.constant 0 : index
      %c0_331 = arith.constant 0 : index
      %438 = vector.load %arg2[%c2_329, %c0_330, %c0_331] : memref<3x128x128xbf16, #tpu.memory_space<vmem>>, vector<1x128x128xbf16>
      %439 = vector.shape_cast %438 : vector<1x128x128xbf16> to vector<128x128xbf16>
      %cst_332 = arith.constant dense<0.000000e+00> : vector<8x128xf32>
      %440 = tpu.matmul %406, %439, %cst_332 {dimension_numbers = #tpu.dot_dimension_numbers<[1], [0], [0], [1], [0, 0, 1, 1], [], []>} : vector<8x128xbf16>, vector<128x128xbf16>, vector<8x128xf32> -> vector<8x128xf32>
      %c2_333 = arith.constant 2 : index
      %c0_334 = arith.constant 0 : index
      %c0_335 = arith.constant 0 : index
      %441 = vector.load %arg4[%c2_333, %c0_334, %c0_335] : memref<4x8x128xf32, #tpu.memory_space<vmem>>, vector<1x8x128xf32>
      %442 = vector.shape_cast %441 : vector<1x8x128xf32> to vector<8x128xf32>
      %443 = arith.addf %440, %442 : vector<8x128xf32>
      %c2_336 = arith.constant 2 : index
      %c0_337 = arith.constant 0 : index
      %c0_338 = arith.constant 0 : index
      %444 = vector.load %arg3[%c2_336, %c0_337, %c0_338] : memref<3x128x128xbf16, #tpu.memory_space<vmem>>, vector<1x128x128xbf16>
      %445 = vector.shape_cast %444 : vector<1x128x128xbf16> to vector<128x128xbf16>
      %cst_339 = arith.constant dense<0.000000e+00> : vector<8x128xf32>
      %446 = tpu.matmul %407, %445, %cst_339 {dimension_numbers = #tpu.dot_dimension_numbers<[1], [0], [0], [1], [0, 0, 1, 1], [], []>} : vector<8x128xbf16>, vector<128x128xbf16>, vector<8x128xf32> -> vector<8x128xf32>
      %c3_340 = arith.constant 3 : index
      %c0_341 = arith.constant 0 : index
      %c0_342 = arith.constant 0 : index
      %447 = vector.load %arg4[%c3_340, %c0_341, %c0_342] : memref<4x8x128xf32, #tpu.memory_space<vmem>>, vector<1x8x128xf32>
      %448 = vector.shape_cast %447 : vector<1x8x128xf32> to vector<8x128xf32>
      %449 = arith.addf %446, %448 : vector<8x128xf32>
      %450 = arith.mulf %422, %449 : vector<8x128xf32>
      %451 = arith.addf %443, %450 : vector<8x128xf32>
      %452 = math.tanh %451 : vector<8x128xf32>
      %cst_343 = arith.constant 1.000000e+00 : f32
      %453 = vector.broadcast %cst_343 : f32 to vector<8x128xf32>
      %454 = arith.subf %453, %437 : vector<8x128xf32>
      %455 = arith.mulf %454, %452 : vector<8x128xf32>
      %456 = arith.mulf %437, %402 : vector<8x128xf32>
      %457 = arith.addf %455, %456 : vector<8x128xf32>
      %458 = vector.shape_cast %457 : vector<8x128xf32> to vector<8x1x128xf32>
      %c0_344 = arith.constant 0 : index
      %c5_345 = arith.constant 5 : index
      %c0_346 = arith.constant 0 : index
      %459 = vector.load %arg17[%c0_344, %c5_345, %c0_346] : memref<8x8x128xf32, #tpu.memory_space<vmem>>, vector<8x1x128xf32>
      tpu.vector_store %arg17[%c0_344, %c5_345, %c0_346], %458 {strides = array<i32>} : memref<8x8x128xf32, #tpu.memory_space<vmem>>, vector<8x1x128xf32>,
      %c6 = arith.constant 6 : index
      %c0_347 = arith.constant 0 : index
      %c0_348 = arith.constant 0 : index
      %460 = vector.load %arg1[%c6, %c0_347, %c0_348] : memref<8x8x128xbf16, #tpu.memory_space<vmem>>, vector<1x8x128xbf16>
      %461 = vector.shape_cast %460 : vector<1x8x128xbf16> to vector<8x128xbf16>
      %462 = arith.truncf %457 : vector<8x128xf32> to vector<8x128xbf16>
      %c0_349 = arith.constant 0 : index
      %c0_350 = arith.constant 0 : index
      %c0_351 = arith.constant 0 : index
      %463 = vector.load %arg2[%c0_349, %c0_350, %c0_351] : memref<3x128x128xbf16, #tpu.memory_space<vmem>>, vector<1x128x128xbf16>
      %464 = vector.shape_cast %463 : vector<1x128x128xbf16> to vector<128x128xbf16>
      %cst_352 = arith.constant dense<0.000000e+00> : vector<8x128xf32>
      %465 = tpu.matmul %461, %464, %cst_352 {dimension_numbers = #tpu.dot_dimension_numbers<[1], [0], [0], [1], [0, 0, 1, 1], [], []>} : vector<8x128xbf16>, vector<128x128xbf16>, vector<8x128xf32> -> vector<8x128xf32>
      %c0_353 = arith.constant 0 : index
      %c0_354 = arith.constant 0 : index
      %c0_355 = arith.constant 0 : index
      %466 = vector.load %arg3[%c0_353, %c0_354, %c0_355] : memref<3x128x128xbf16, #tpu.memory_space<vmem>>, vector<1x128x128xbf16>
      %467 = vector.shape_cast %466 : vector<1x128x128xbf16> to vector<128x128xbf16>
      %cst_356 = arith.constant dense<0.000000e+00> : vector<8x128xf32>
      %468 = tpu.matmul %462, %467, %cst_356 {dimension_numbers = #tpu.dot_dimension_numbers<[1], [0], [0], [1], [0, 0, 1, 1], [], []>} : vector<8x128xbf16>, vector<128x128xbf16>, vector<8x128xf32> -> vector<8x128xf32>
      %469 = arith.addf %465, %468 : vector<8x128xf32>
      %c0_357 = arith.constant 0 : index
      %c0_358 = arith.constant 0 : index
      %c0_359 = arith.constant 0 : index
      %470 = vector.load %arg4[%c0_357, %c0_358, %c0_359] : memref<4x8x128xf32, #tpu.memory_space<vmem>>, vector<1x8x128xf32>
      %471 = vector.shape_cast %470 : vector<1x8x128xf32> to vector<8x128xf32>
      %472 = arith.addf %469, %471 : vector<8x128xf32>
      %473 = arith.negf %472 : vector<8x128xf32>
      %474 = math.exp %473 : vector<8x128xf32>
      %cst_360 = arith.constant 1.000000e+00 : f32
      %475 = vector.broadcast %cst_360 : f32 to vector<8x128xf32>
      %476 = arith.addf %475, %474 : vector<8x128xf32>
      %477 = arith.divf %475, %476 : vector<8x128xf32>
      %c1_361 = arith.constant 1 : index
      %c0_362 = arith.constant 0 : index
      %c0_363 = arith.constant 0 : index
      %478 = vector.load %arg2[%c1_361, %c0_362, %c0_363] : memref<3x128x128xbf16, #tpu.memory_space<vmem>>, vector<1x128x128xbf16>
      %479 = vector.shape_cast %478 : vector<1x128x128xbf16> to vector<128x128xbf16>
      %cst_364 = arith.constant dense<0.000000e+00> : vector<8x128xf32>
      %480 = tpu.matmul %461, %479, %cst_364 {dimension_numbers = #tpu.dot_dimension_numbers<[1], [0], [0], [1], [0, 0, 1, 1], [], []>} : vector<8x128xbf16>, vector<128x128xbf16>, vector<8x128xf32> -> vector<8x128xf32>
      %c1_365 = arith.constant 1 : index
      %c0_366 = arith.constant 0 : index
      %c0_367 = arith.constant 0 : index
      %481 = vector.load %arg3[%c1_365, %c0_366, %c0_367] : memref<3x128x128xbf16, #tpu.memory_space<vmem>>, vector<1x128x128xbf16>
      %482 = vector.shape_cast %481 : vector<1x128x128xbf16> to vector<128x128xbf16>
      %cst_368 = arith.constant dense<0.000000e+00> : vector<8x128xf32>
      %483 = tpu.matmul %462, %482, %cst_368 {dimension_numbers = #tpu.dot_dimension_numbers<[1], [0], [0], [1], [0, 0, 1, 1], [], []>} : vector<8x128xbf16>, vector<128x128xbf16>, vector<8x128xf32> -> vector<8x128xf32>
      %484 = arith.addf %480, %483 : vector<8x128xf32>
      %c1_369 = arith.constant 1 : index
      %c0_370 = arith.constant 0 : index
      %c0_371 = arith.constant 0 : index
      %485 = vector.load %arg4[%c1_369, %c0_370, %c0_371] : memref<4x8x128xf32, #tpu.memory_space<vmem>>, vector<1x8x128xf32>
      %486 = vector.shape_cast %485 : vector<1x8x128xf32> to vector<8x128xf32>
      %487 = arith.addf %484, %486 : vector<8x128xf32>
      %488 = arith.negf %487 : vector<8x128xf32>
      %489 = math.exp %488 : vector<8x128xf32>
      %cst_372 = arith.constant 1.000000e+00 : f32
      %490 = vector.broadcast %cst_372 : f32 to vector<8x128xf32>
      %491 = arith.addf %490, %489 : vector<8x128xf32>
      %492 = arith.divf %490, %491 : vector<8x128xf32>
      %c2_373 = arith.constant 2 : index
      %c0_374 = arith.constant 0 : index
      %c0_375 = arith.constant 0 : index
      %493 = vector.load %arg2[%c2_373, %c0_374, %c0_375] : memref<3x128x128xbf16, #tpu.memory_space<vmem>>, vector<1x128x128xbf16>
      %494 = vector.shape_cast %493 : vector<1x128x128xbf16> to vector<128x128xbf16>
      %cst_376 = arith.constant dense<0.000000e+00> : vector<8x128xf32>
      %495 = tpu.matmul %461, %494, %cst_376 {dimension_numbers = #tpu.dot_dimension_numbers<[1], [0], [0], [1], [0, 0, 1, 1], [], []>} : vector<8x128xbf16>, vector<128x128xbf16>, vector<8x128xf32> -> vector<8x128xf32>
      %c2_377 = arith.constant 2 : index
      %c0_378 = arith.constant 0 : index
      %c0_379 = arith.constant 0 : index
      %496 = vector.load %arg4[%c2_377, %c0_378, %c0_379] : memref<4x8x128xf32, #tpu.memory_space<vmem>>, vector<1x8x128xf32>
      %497 = vector.shape_cast %496 : vector<1x8x128xf32> to vector<8x128xf32>
      %498 = arith.addf %495, %497 : vector<8x128xf32>
      %c2_380 = arith.constant 2 : index
      %c0_381 = arith.constant 0 : index
      %c0_382 = arith.constant 0 : index
      %499 = vector.load %arg3[%c2_380, %c0_381, %c0_382] : memref<3x128x128xbf16, #tpu.memory_space<vmem>>, vector<1x128x128xbf16>
      %500 = vector.shape_cast %499 : vector<1x128x128xbf16> to vector<128x128xbf16>
      %cst_383 = arith.constant dense<0.000000e+00> : vector<8x128xf32>
      %501 = tpu.matmul %462, %500, %cst_383 {dimension_numbers = #tpu.dot_dimension_numbers<[1], [0], [0], [1], [0, 0, 1, 1], [], []>} : vector<8x128xbf16>, vector<128x128xbf16>, vector<8x128xf32> -> vector<8x128xf32>
      %c3_384 = arith.constant 3 : index
      %c0_385 = arith.constant 0 : index
      %c0_386 = arith.constant 0 : index
      %502 = vector.load %arg4[%c3_384, %c0_385, %c0_386] : memref<4x8x128xf32, #tpu.memory_space<vmem>>, vector<1x8x128xf32>
      %503 = vector.shape_cast %502 : vector<1x8x128xf32> to vector<8x128xf32>
      %504 = arith.addf %501, %503 : vector<8x128xf32>
      %505 = arith.mulf %477, %504 : vector<8x128xf32>
      %506 = arith.addf %498, %505 : vector<8x128xf32>
      %507 = math.tanh %506 : vector<8x128xf32>
      %cst_387 = arith.constant 1.000000e+00 : f32
      %508 = vector.broadcast %cst_387 : f32 to vector<8x128xf32>
      %509 = arith.subf %508, %492 : vector<8x128xf32>
      %510 = arith.mulf %509, %507 : vector<8x128xf32>
      %511 = arith.mulf %492, %457 : vector<8x128xf32>
      %512 = arith.addf %510, %511 : vector<8x128xf32>
      %513 = vector.shape_cast %512 : vector<8x128xf32> to vector<8x1x128xf32>
      %c0_388 = arith.constant 0 : index
      %c6_389 = arith.constant 6 : index
      %c0_390 = arith.constant 0 : index
      %514 = vector.load %arg17[%c0_388, %c6_389, %c0_390] : memref<8x8x128xf32, #tpu.memory_space<vmem>>, vector<8x1x128xf32>
      tpu.vector_store %arg17[%c0_388, %c6_389, %c0_390], %513 {strides = array<i32>} : memref<8x8x128xf32, #tpu.memory_space<vmem>>, vector<8x1x128xf32>,
      %c7 = arith.constant 7 : index
      %c0_391 = arith.constant 0 : index
      %c0_392 = arith.constant 0 : index
      %515 = vector.load %arg1[%c7, %c0_391, %c0_392] : memref<8x8x128xbf16, #tpu.memory_space<vmem>>, vector<1x8x128xbf16>
      %516 = vector.shape_cast %515 : vector<1x8x128xbf16> to vector<8x128xbf16>
      %517 = arith.truncf %512 : vector<8x128xf32> to vector<8x128xbf16>
      %c0_393 = arith.constant 0 : index
      %c0_394 = arith.constant 0 : index
      %c0_395 = arith.constant 0 : index
      %518 = vector.load %arg2[%c0_393, %c0_394, %c0_395] : memref<3x128x128xbf16, #tpu.memory_space<vmem>>, vector<1x128x128xbf16>
      %519 = vector.shape_cast %518 : vector<1x128x128xbf16> to vector<128x128xbf16>
      %cst_396 = arith.constant dense<0.000000e+00> : vector<8x128xf32>
      %520 = tpu.matmul %516, %519, %cst_396 {dimension_numbers = #tpu.dot_dimension_numbers<[1], [0], [0], [1], [0, 0, 1, 1], [], []>} : vector<8x128xbf16>, vector<128x128xbf16>, vector<8x128xf32> -> vector<8x128xf32>
      %c0_397 = arith.constant 0 : index
      %c0_398 = arith.constant 0 : index
      %c0_399 = arith.constant 0 : index
      %521 = vector.load %arg3[%c0_397, %c0_398, %c0_399] : memref<3x128x128xbf16, #tpu.memory_space<vmem>>, vector<1x128x128xbf16>
      %522 = vector.shape_cast %521 : vector<1x128x128xbf16> to vector<128x128xbf16>
      %cst_400 = arith.constant dense<0.000000e+00> : vector<8x128xf32>
      %523 = tpu.matmul %517, %522, %cst_400 {dimension_numbers = #tpu.dot_dimension_numbers<[1], [0], [0], [1], [0, 0, 1, 1], [], []>} : vector<8x128xbf16>, vector<128x128xbf16>, vector<8x128xf32> -> vector<8x128xf32>
      %524 = arith.addf %520, %523 : vector<8x128xf32>
      %c0_401 = arith.constant 0 : index
      %c0_402 = arith.constant 0 : index
      %c0_403 = arith.constant 0 : index
      %525 = vector.load %arg4[%c0_401, %c0_402, %c0_403] : memref<4x8x128xf32, #tpu.memory_space<vmem>>, vector<1x8x128xf32>
      %526 = vector.shape_cast %525 : vector<1x8x128xf32> to vector<8x128xf32>
      %527 = arith.addf %524, %526 : vector<8x128xf32>
      %528 = arith.negf %527 : vector<8x128xf32>
      %529 = math.exp %528 : vector<8x128xf32>
      %cst_404 = arith.constant 1.000000e+00 : f32
      %530 = vector.broadcast %cst_404 : f32 to vector<8x128xf32>
      %531 = arith.addf %530, %529 : vector<8x128xf32>
      %532 = arith.divf %530, %531 : vector<8x128xf32>
      %c1_405 = arith.constant 1 : index
      %c0_406 = arith.constant 0 : index
      %c0_407 = arith.constant 0 : index
      %533 = vector.load %arg2[%c1_405, %c0_406, %c0_407] : memref<3x128x128xbf16, #tpu.memory_space<vmem>>, vector<1x128x128xbf16>
      %534 = vector.shape_cast %533 : vector<1x128x128xbf16> to vector<128x128xbf16>
      %cst_408 = arith.constant dense<0.000000e+00> : vector<8x128xf32>
      %535 = tpu.matmul %516, %534, %cst_408 {dimension_numbers = #tpu.dot_dimension_numbers<[1], [0], [0], [1], [0, 0, 1, 1], [], []>} : vector<8x128xbf16>, vector<128x128xbf16>, vector<8x128xf32> -> vector<8x128xf32>
      %c1_409 = arith.constant 1 : index
      %c0_410 = arith.constant 0 : index
      %c0_411 = arith.constant 0 : index
      %536 = vector.load %arg3[%c1_409, %c0_410, %c0_411] : memref<3x128x128xbf16, #tpu.memory_space<vmem>>, vector<1x128x128xbf16>
      %537 = vector.shape_cast %536 : vector<1x128x128xbf16> to vector<128x128xbf16>
      %cst_412 = arith.constant dense<0.000000e+00> : vector<8x128xf32>
      %538 = tpu.matmul %517, %537, %cst_412 {dimension_numbers = #tpu.dot_dimension_numbers<[1], [0], [0], [1], [0, 0, 1, 1], [], []>} : vector<8x128xbf16>, vector<128x128xbf16>, vector<8x128xf32> -> vector<8x128xf32>
      %539 = arith.addf %535, %538 : vector<8x128xf32>
      %c1_413 = arith.constant 1 : index
      %c0_414 = arith.constant 0 : index
      %c0_415 = arith.constant 0 : index
      %540 = vector.load %arg4[%c1_413, %c0_414, %c0_415] : memref<4x8x128xf32, #tpu.memory_space<vmem>>, vector<1x8x128xf32>
      %541 = vector.shape_cast %540 : vector<1x8x128xf32> to vector<8x128xf32>
      %542 = arith.addf %539, %541 : vector<8x128xf32>
      %543 = arith.negf %542 : vector<8x128xf32>
      %544 = math.exp %543 : vector<8x128xf32>
      %cst_416 = arith.constant 1.000000e+00 : f32
      %545 = vector.broadcast %cst_416 : f32 to vector<8x128xf32>
      %546 = arith.addf %545, %544 : vector<8x128xf32>
      %547 = arith.divf %545, %546 : vector<8x128xf32>
      %c2_417 = arith.constant 2 : index
      %c0_418 = arith.constant 0 : index
      %c0_419 = arith.constant 0 : index
      %548 = vector.load %arg2[%c2_417, %c0_418, %c0_419] : memref<3x128x128xbf16, #tpu.memory_space<vmem>>, vector<1x128x128xbf16>
      %549 = vector.shape_cast %548 : vector<1x128x128xbf16> to vector<128x128xbf16>
      %cst_420 = arith.constant dense<0.000000e+00> : vector<8x128xf32>
      %550 = tpu.matmul %516, %549, %cst_420 {dimension_numbers = #tpu.dot_dimension_numbers<[1], [0], [0], [1], [0, 0, 1, 1], [], []>} : vector<8x128xbf16>, vector<128x128xbf16>, vector<8x128xf32> -> vector<8x128xf32>
      %c2_421 = arith.constant 2 : index
      %c0_422 = arith.constant 0 : index
      %c0_423 = arith.constant 0 : index
      %551 = vector.load %arg4[%c2_421, %c0_422, %c0_423] : memref<4x8x128xf32, #tpu.memory_space<vmem>>, vector<1x8x128xf32>
      %552 = vector.shape_cast %551 : vector<1x8x128xf32> to vector<8x128xf32>
      %553 = arith.addf %550, %552 : vector<8x128xf32>
      %c2_424 = arith.constant 2 : index
      %c0_425 = arith.constant 0 : index
      %c0_426 = arith.constant 0 : index
      %554 = vector.load %arg3[%c2_424, %c0_425, %c0_426] : memref<3x128x128xbf16, #tpu.memory_space<vmem>>, vector<1x128x128xbf16>
      %555 = vector.shape_cast %554 : vector<1x128x128xbf16> to vector<128x128xbf16>
      %cst_427 = arith.constant dense<0.000000e+00> : vector<8x128xf32>
      %556 = tpu.matmul %517, %555, %cst_427 {dimension_numbers = #tpu.dot_dimension_numbers<[1], [0], [0], [1], [0, 0, 1, 1], [], []>} : vector<8x128xbf16>, vector<128x128xbf16>, vector<8x128xf32> -> vector<8x128xf32>
      %c3_428 = arith.constant 3 : index
      %c0_429 = arith.constant 0 : index
      %c0_430 = arith.constant 0 : index
      %557 = vector.load %arg4[%c3_428, %c0_429, %c0_430] : memref<4x8x128xf32, #tpu.memory_space<vmem>>, vector<1x8x128xf32>
      %558 = vector.shape_cast %557 : vector<1x8x128xf32> to vector<8x128xf32>
      %559 = arith.addf %556, %558 : vector<8x128xf32>
      %560 = arith.mulf %532, %559 : vector<8x128xf32>
      %561 = arith.addf %553, %560 : vector<8x128xf32>
      %562 = math.tanh %561 : vector<8x128xf32>
      %cst_431 = arith.constant 1.000000e+00 : f32
      %563 = vector.broadcast %cst_431 : f32 to vector<8x128xf32>
      %564 = arith.subf %563, %547 : vector<8x128xf32>
      %565 = arith.mulf %564, %562 : vector<8x128xf32>
      %566 = arith.mulf %547, %512 : vector<8x128xf32>
      %567 = arith.addf %565, %566 : vector<8x128xf32>
      %568 = vector.shape_cast %567 : vector<8x128xf32> to vector<8x1x128xf32>
      %c0_432 = arith.constant 0 : index
      %c7_433 = arith.constant 7 : index
      %c0_434 = arith.constant 0 : index
      %569 = vector.load %arg17[%c0_432, %c7_433, %c0_434] : memref<8x8x128xf32, #tpu.memory_space<vmem>>, vector<8x1x128xf32>
      tpu.vector_store %arg17[%c0_432, %c7_433, %c0_434], %568 {strides = array<i32>} : memref<8x8x128xf32, #tpu.memory_space<vmem>>, vector<8x1x128xf32>,
      %c0_435 = arith.constant 0 : index
      %c0_436 = arith.constant 0 : index
      %570 = vector.load %arg18[%c0_435, %c0_436] : memref<8x128xf32, #tpu.memory_space<vmem>>, vector<8x128xf32>
      tpu.vector_store %arg18[%c0_435, %c0_436], %567 {strides = array<i32>} : memref<8x128xf32, #tpu.memory_space<vmem>>, vector<8x128xf32>,
      %c1_i32 = arith.constant 1 : i32
      %571 = vector.broadcast %c1_i32 : i32 to vector<8x1xi32>
      %c0_437 = arith.constant 0 : index
      %c0_438 = arith.constant 0 : index
      %572 = vector.load %arg19[%c0_437, %c0_438] : memref<8x1xi32, #tpu.memory_space<vmem>>, vector<8x1xi32>
      tpu.vector_store %arg19[%c0_437, %c0_438], %571 {strides = array<i32>} : memref<8x1xi32, #tpu.memory_space<vmem>>, vector<8x1xi32>,
    } else {
    }
    %c0 = arith.constant 0 : index
    %c0_1 = arith.constant 0 : index
    %3 = vector.load %arg18[%c0, %c0_1] : memref<8x128xf32, #tpu.memory_space<vmem>>, vector<8x128xf32>
    %c0_2 = arith.constant 0 : index
    %c0_3 = arith.constant 0 : index
    %4 = vector.load %arg19[%c0_2, %c0_3] : memref<8x1xi32, #tpu.memory_space<vmem>>, vector<8x1xi32>
    %5 = tpu.iota {dimensions = array<i32: 1>} : vector<8x128xi32>
    %6 = vector.broadcast %4 : vector<8x1xi32> to vector<8x128xi32>
    %7 = arith.cmpi eq, %5, %6 : vector<8x128xi32>
    %8 = arith.extui %7 : vector<8x128xi1> to vector<8x128xi32>
    %9 = arith.sitofp %8 : vector<8x128xi32> to vector<8x128xf32>
    %10 = arith.truncf %9 : vector<8x128xf32> to vector<8x128xbf16>
    %c0_4 = arith.constant 0 : index
    %c0_5 = arith.constant 0 : index
    %11 = vector.load %arg5[%c0_4, %c0_5] : memref<128x128xbf16, #tpu.memory_space<vmem>>, vector<128x128xbf16>
    %cst = arith.constant dense<0.000000e+00> : vector<8x128xf32>
    %12 = tpu.matmul %10, %11, %cst {dimension_numbers = #tpu.dot_dimension_numbers<[1], [0], [0], [1], [0, 0, 1, 1], [], []>} : vector<8x128xbf16>, vector<128x128xbf16>, vector<8x128xf32> -> vector<8x128xf32>
    %13 = arith.truncf %12 : vector<8x128xf32> to vector<8x128xbf16>
    %14 = arith.truncf %3 : vector<8x128xf32> to vector<8x128xbf16>
    %c0_6 = arith.constant 0 : index
    %c0_7 = arith.constant 0 : index
    %c0_8 = arith.constant 0 : index
    %15 = vector.load %arg6[%c0_6, %c0_7, %c0_8] : memref<3x128x128xbf16, #tpu.memory_space<vmem>>, vector<1x128x128xbf16>
    %16 = vector.shape_cast %15 : vector<1x128x128xbf16> to vector<128x128xbf16>
    %cst_9 = arith.constant dense<0.000000e+00> : vector<8x128xf32>
    %17 = tpu.matmul %13, %16, %cst_9 {dimension_numbers = #tpu.dot_dimension_numbers<[1], [0], [0], [1], [0, 0, 1, 1], [], []>} : vector<8x128xbf16>, vector<128x128xbf16>, vector<8x128xf32> -> vector<8x128xf32>
    %c0_10 = arith.constant 0 : index
    %c0_11 = arith.constant 0 : index
    %c0_12 = arith.constant 0 : index
    %18 = vector.load %arg7[%c0_10, %c0_11, %c0_12] : memref<3x128x128xbf16, #tpu.memory_space<vmem>>, vector<1x128x128xbf16>
    %19 = vector.shape_cast %18 : vector<1x128x128xbf16> to vector<128x128xbf16>
    %cst_13 = arith.constant dense<0.000000e+00> : vector<8x128xf32>
    %20 = tpu.matmul %14, %19, %cst_13 {dimension_numbers = #tpu.dot_dimension_numbers<[1], [0], [0], [1], [0, 0, 1, 1], [], []>} : vector<8x128xbf16>, vector<128x128xbf16>, vector<8x128xf32> -> vector<8x128xf32>
    %21 = arith.addf %17, %20 : vector<8x128xf32>
    %c0_14 = arith.constant 0 : index
    %c0_15 = arith.constant 0 : index
    %c0_16 = arith.constant 0 : index
    %22 = vector.load %arg8[%c0_14, %c0_15, %c0_16] : memref<4x8x128xf32, #tpu.memory_space<vmem>>, vector<1x8x128xf32>
    %23 = vector.shape_cast %22 : vector<1x8x128xf32> to vector<8x128xf32>
    %24 = arith.addf %21, %23 : vector<8x128xf32>
    %25 = arith.negf %24 : vector<8x128xf32>
    %26 = math.exp %25 : vector<8x128xf32>
    %cst_17 = arith.constant 1.000000e+00 : f32
    %27 = vector.broadcast %cst_17 : f32 to vector<8x128xf32>
    %28 = arith.addf %27, %26 : vector<8x128xf32>
    %29 = arith.divf %27, %28 : vector<8x128xf32>
    %c1 = arith.constant 1 : index
    %c0_18 = arith.constant 0 : index
    %c0_19 = arith.constant 0 : index
    %30 = vector.load %arg6[%c1, %c0_18, %c0_19] : memref<3x128x128xbf16, #tpu.memory_space<vmem>>, vector<1x128x128xbf16>
    %31 = vector.shape_cast %30 : vector<1x128x128xbf16> to vector<128x128xbf16>
    %cst_20 = arith.constant dense<0.000000e+00> : vector<8x128xf32>
    %32 = tpu.matmul %13, %31, %cst_20 {dimension_numbers = #tpu.dot_dimension_numbers<[1], [0], [0], [1], [0, 0, 1, 1], [], []>} : vector<8x128xbf16>, vector<128x128xbf16>, vector<8x128xf32> -> vector<8x128xf32>
    %c1_21 = arith.constant 1 : index
    %c0_22 = arith.constant 0 : index
    %c0_23 = arith.constant 0 : index
    %33 = vector.load %arg7[%c1_21, %c0_22, %c0_23] : memref<3x128x128xbf16, #tpu.memory_space<vmem>>, vector<1x128x128xbf16>
    %34 = vector.shape_cast %33 : vector<1x128x128xbf16> to vector<128x128xbf16>
    %cst_24 = arith.constant dense<0.000000e+00> : vector<8x128xf32>
    %35 = tpu.matmul %14, %34, %cst_24 {dimension_numbers = #tpu.dot_dimension_numbers<[1], [0], [0], [1], [0, 0, 1, 1], [], []>} : vector<8x128xbf16>, vector<128x128xbf16>, vector<8x128xf32> -> vector<8x128xf32>
    %36 = arith.addf %32, %35 : vector<8x128xf32>
    %c1_25 = arith.constant 1 : index
    %c0_26 = arith.constant 0 : index
    %c0_27 = arith.constant 0 : index
    %37 = vector.load %arg8[%c1_25, %c0_26, %c0_27] : memref<4x8x128xf32, #tpu.memory_space<vmem>>, vector<1x8x128xf32>
    %38 = vector.shape_cast %37 : vector<1x8x128xf32> to vector<8x128xf32>
    %39 = arith.addf %36, %38 : vector<8x128xf32>
    %40 = arith.negf %39 : vector<8x128xf32>
    %41 = math.exp %40 : vector<8x128xf32>
    %cst_28 = arith.constant 1.000000e+00 : f32
    %42 = vector.broadcast %cst_28 : f32 to vector<8x128xf32>
    %43 = arith.addf %42, %41 : vector<8x128xf32>
    %44 = arith.divf %42, %43 : vector<8x128xf32>
    %c2 = arith.constant 2 : index
    %c0_29 = arith.constant 0 : index
    %c0_30 = arith.constant 0 : index
    %45 = vector.load %arg6[%c2, %c0_29, %c0_30] : memref<3x128x128xbf16, #tpu.memory_space<vmem>>, vector<1x128x128xbf16>
    %46 = vector.shape_cast %45 : vector<1x128x128xbf16> to vector<128x128xbf16>
    %cst_31 = arith.constant dense<0.000000e+00> : vector<8x128xf32>
    %47 = tpu.matmul %13, %46, %cst_31 {dimension_numbers = #tpu.dot_dimension_numbers<[1], [0], [0], [1], [0, 0, 1, 1], [], []>} : vector<8x128xbf16>, vector<128x128xbf16>, vector<8x128xf32> -> vector<8x128xf32>
    %c2_32 = arith.constant 2 : index
    %c0_33 = arith.constant 0 : index
    %c0_34 = arith.constant 0 : index
    %48 = vector.load %arg8[%c2_32, %c0_33, %c0_34] : memref<4x8x128xf32, #tpu.memory_space<vmem>>, vector<1x8x128xf32>
    %49 = vector.shape_cast %48 : vector<1x8x128xf32> to vector<8x128xf32>
    %50 = arith.addf %47, %49 : vector<8x128xf32>
    %c2_35 = arith.constant 2 : index
    %c0_36 = arith.constant 0 : index
    %c0_37 = arith.constant 0 : index
    %51 = vector.load %arg7[%c2_35, %c0_36, %c0_37] : memref<3x128x128xbf16, #tpu.memory_space<vmem>>, vector<1x128x128xbf16>
    %52 = vector.shape_cast %51 : vector<1x128x128xbf16> to vector<128x128xbf16>
    %cst_38 = arith.constant dense<0.000000e+00> : vector<8x128xf32>
    %53 = tpu.matmul %14, %52, %cst_38 {dimension_numbers = #tpu.dot_dimension_numbers<[1], [0], [0], [1], [0, 0, 1, 1], [], []>} : vector<8x128xbf16>, vector<128x128xbf16>, vector<8x128xf32> -> vector<8x128xf32>
    %c3 = arith.constant 3 : index
    %c0_39 = arith.constant 0 : index
    %c0_40 = arith.constant 0 : index
    %54 = vector.load %arg8[%c3, %c0_39, %c0_40] : memref<4x8x128xf32, #tpu.memory_space<vmem>>, vector<1x8x128xf32>
    %55 = vector.shape_cast %54 : vector<1x8x128xf32> to vector<8x128xf32>
    %56 = arith.addf %53, %55 : vector<8x128xf32>
    %57 = arith.mulf %29, %56 : vector<8x128xf32>
    %58 = arith.addf %50, %57 : vector<8x128xf32>
    %59 = math.tanh %58 : vector<8x128xf32>
    %cst_41 = arith.constant 1.000000e+00 : f32
    %60 = vector.broadcast %cst_41 : f32 to vector<8x128xf32>
    %61 = arith.subf %60, %44 : vector<8x128xf32>
    %62 = arith.mulf %61, %59 : vector<8x128xf32>
    %63 = arith.mulf %44, %3 : vector<8x128xf32>
    %64 = arith.addf %62, %63 : vector<8x128xf32>
    %65 = arith.truncf %64 : vector<8x128xf32> to vector<8x128xbf16>
    %c0_42 = arith.constant 0 : index
    %c0_43 = arith.constant 0 : index
    %c0_44 = arith.constant 0 : index
    %66 = vector.load %arg17[%c0_42, %c0_43, %c0_44] : memref<8x8x128xf32, #tpu.memory_space<vmem>>, vector<8x8x128xf32>
    %67 = arith.truncf %66 : vector<8x8x128xf32> to vector<8x8x128xbf16>
    %68 = vector.shape_cast %65 : vector<8x128xbf16> to vector<8x1x128xbf16>
    "tpu.trace_start"() <{level = 10 : i32, message = "bqh,bsh->bqs"}> : () -> ()
    %cst_45 = arith.constant dense<0.000000e+00> : vector<8x1x8xf32>
    %69 = tpu.matmul %68, %67, %cst_45 {dimension_numbers = #tpu.dot_dimension_numbers<[2], [2], [1], [1], [0, 0, 0, 1, 1, 1], [0], [0]>} : vector<8x1x128xbf16>, vector<8x8x128xbf16>, vector<8x1x8xf32> -> vector<8x1x8xf32>
    "tpu.trace_stop"() : () -> ()
    %70 = vector.shape_cast %69 : vector<8x1x8xf32> to vector<8x8xf32>
    %cst_46 = arith.constant dense<0xFF800000> : vector<8xf32>
    %71 = vector.multi_reduction <maximumf>, %70, %cst_46 [1] : vector<8x8xf32> to vector<8xf32>
    %72 = vector.shape_cast %71 : vector<8xf32> to vector<8x1xf32>
    %73 = vector.broadcast %72 : vector<8x1xf32> to vector<8x8xf32>
    %74 = arith.subf %70, %73 : vector<8x8xf32>
    %75 = math.exp %74 : vector<8x8xf32>
    %cst_47 = arith.constant dense<0.000000e+00> : vector<8xf32>
    %76 = vector.multi_reduction <add>, %75, %cst_47 [1] : vector<8x8xf32> to vector<8xf32>
    %77 = vector.shape_cast %76 : vector<8xf32> to vector<8x1xf32>
    %78 = tpu.reciprocal %77 {approx = true} : vector<8x1xf32> -> vector<8x1xf32>
    %79 = vector.broadcast %78 : vector<8x1xf32> to vector<8x8xf32>
    %80 = arith.mulf %75, %79 : vector<8x8xf32>
    %81 = vector.shape_cast %80 : vector<8x8xf32> to vector<8x1x8xf32>
    %82 = arith.truncf %81 : vector<8x1x8xf32> to vector<8x1x8xbf16>
    "tpu.trace_start"() <{level = 10 : i32, message = "bqs,bsh->bqh"}> : () -> ()
    %cst_48 = arith.constant dense<0.000000e+00> : vector<8x1x128xf32>
    %83 = tpu.matmul %82, %67, %cst_48 {dimension_numbers = #tpu.dot_dimension_numbers<[2], [1], [1], [2], [0, 0, 0, 1, 1, 2], [0], [0]>} : vector<8x1x8xbf16>, vector<8x8x128xbf16>, vector<8x1x128xf32> -> vector<8x1x128xf32>
    "tpu.trace_stop"() : () -> ()
    %84 = vector.shape_cast %83 : vector<8x1x128xf32> to vector<8x128xf32>
    %85 = arith.truncf %84 : vector<8x128xf32> to vector<8x128xbf16>
    %c0_49 = arith.constant 0 : index
    %c0_50 = arith.constant 0 : index
    %86 = vector.load %arg9[%c0_49, %c0_50] : memref<128x128xbf16, #tpu.memory_space<vmem>>, vector<128x128xbf16>
    %cst_51 = arith.constant dense<0.000000e+00> : vector<8x128xf32>
    %87 = tpu.matmul %85, %86, %cst_51 {dimension_numbers = #tpu.dot_dimension_numbers<[1], [0], [0], [1], [0, 0, 1, 1], [], []>} : vector<8x128xbf16>, vector<128x128xbf16>, vector<8x128xf32> -> vector<8x128xf32>
    %c0_52 = arith.constant 0 : index
    %c0_53 = arith.constant 0 : index
    %88 = vector.load %arg10[%c0_52, %c0_53] : memref<128x128xbf16, #tpu.memory_space<vmem>>, vector<128x128xbf16>
    %cst_54 = arith.constant dense<0.000000e+00> : vector<8x128xf32>
    %89 = tpu.matmul %65, %88, %cst_54 {dimension_numbers = #tpu.dot_dimension_numbers<[1], [0], [0], [1], [0, 0, 1, 1], [], []>} : vector<8x128xbf16>, vector<128x128xbf16>, vector<8x128xf32> -> vector<8x128xf32>
    %90 = arith.addf %87, %89 : vector<8x128xf32>
    %c0_55 = arith.constant 0 : index
    %c0_56 = arith.constant 0 : index
    %91 = vector.load %arg11[%c0_55, %c0_56] : memref<8x128xf32, #tpu.memory_space<vmem>>, vector<8x128xf32>
    %92 = arith.addf %90, %91 : vector<8x128xf32>
    %93 = math.tanh %92 : vector<8x128xf32>
    %94 = arith.truncf %93 : vector<8x128xf32> to vector<8x128xbf16>
    %c0_57 = arith.constant 0 : index
    %c0_58 = arith.constant 0 : index
    %95 = vector.load %arg12[%c0_57, %c0_58] : memref<128x128xbf16, #tpu.memory_space<vmem>>, vector<128x128xbf16>
    %cst_59 = arith.constant dense<0.000000e+00> : vector<8x128xf32>
    %96 = tpu.matmul %94, %95, %cst_59 {dimension_numbers = #tpu.dot_dimension_numbers<[1], [0], [0], [1], [0, 0, 1, 1], [], []>} : vector<8x128xbf16>, vector<128x128xbf16>, vector<8x128xf32> -> vector<8x128xf32>
    %c0_60 = arith.constant 0 : index
    %c0_61 = arith.constant 0 : index
    %97 = vector.load %arg13[%c0_60, %c0_61] : memref<8x128xf32, #tpu.memory_space<vmem>>, vector<8x128xf32>
    %98 = arith.addf %96, %97 : vector<8x128xf32>
    %99 = tpu.iota {dimensions = array<i32: 1>} : vector<8x128xi32>
    %c20_i32 = arith.constant 20 : i32
    %100 = vector.broadcast %c20_i32 : i32 to vector<8x128xi32>
    %101 = arith.cmpi slt, %99, %100 : vector<8x128xi32>
    %cst_62 = arith.constant -1.000000e+30 : f32
    %102 = vector.broadcast %cst_62 : f32 to vector<8x128xf32>
    %103 = arith.select %101, %98, %102 : vector<8x128xi1>, vector<8x128xf32>
    %cst_63 = arith.constant dense<0xFF800000> : vector<8xf32>
    %104 = vector.multi_reduction <maximumf>, %103, %cst_63 [1] : vector<8x128xf32> to vector<8xf32>
    %105 = vector.shape_cast %104 : vector<8xf32> to vector<8x1xf32>
    %106 = vector.broadcast %105 : vector<8x1xf32> to vector<8x128xf32>
    %107 = arith.subf %103, %106 : vector<8x128xf32>
    %108 = math.exp %107 : vector<8x128xf32>
    %cst_64 = arith.constant dense<0.000000e+00> : vector<8xf32>
    %109 = vector.multi_reduction <add>, %108, %cst_64 [1] : vector<8x128xf32> to vector<8xf32>
    %110 = vector.shape_cast %109 : vector<8xf32> to vector<8x1xf32>
    %111 = math.log %110 : vector<8x1xf32>
    %112 = vector.broadcast %111 : vector<8x1xf32> to vector<8x128xf32>
    %113 = arith.subf %107, %112 : vector<8x128xf32>
    %c0_65 = arith.constant 0 : index
    %c0_66 = arith.constant 0 : index
    %c0_67 = arith.constant 0 : index
    %114 = vector.load %arg14[%c0_65, %c0_66, %c0_67] : memref<1x8x128xf32, #tpu.memory_space<vmem>>, vector<1x8x128xf32>
    %115 = vector.shape_cast %114 : vector<1x8x128xf32> to vector<8x128xf32>
    %116 = vector.shape_cast %113 : vector<8x128xf32> to vector<1x8x128xf32>
    tpu.vector_store %arg14[%c0_65, %c0_66, %c0_67], %116 {strides = array<i32>} : memref<1x8x128xf32, #tpu.memory_space<vmem>>, vector<1x8x128xf32>,
    %117 = vector.broadcast %105 : vector<8x1xf32> to vector<8x128xf32>
    %118 = arith.cmpf oge, %103, %117 : vector<8x128xf32>
    %c128_i32 = arith.constant 128 : i32
    %119 = vector.broadcast %c128_i32 : i32 to vector<8x128xi32>
    %120 = arith.select %118, %99, %119 : vector<8x128xi1>, vector<8x128xi32>
    %cst_68 = arith.constant dense<2147483647> : vector<8xi32>
    %121 = vector.multi_reduction <minsi>, %120, %cst_68 [1] : vector<8x128xi32> to vector<8xi32>
    %122 = vector.shape_cast %121 : vector<8xi32> to vector<8x1xi32>
    %c0_69 = arith.constant 0 : index
    %c0_70 = arith.constant 0 : index
    %c0_71 = arith.constant 0 : index
    %123 = vector.load %arg15[%c0_69, %c0_70, %c0_71] : memref<1x8x1xi32, #tpu.memory_space<vmem>>, vector<1x8x1xi32>
    %124 = vector.shape_cast %123 : vector<1x8x1xi32> to vector<8x1xi32>
    %125 = vector.shape_cast %122 : vector<8x1xi32> to vector<1x8x1xi32>
    tpu.vector_store %arg15[%c0_69, %c0_70, %c0_71], %125 {strides = array<i32>} : memref<1x8x1xi32, #tpu.memory_space<vmem>>, vector<1x8x1xi32>,
    %c0_72 = arith.constant 0 : index
    %c0_73 = arith.constant 0 : index
    %126 = vector.load %arg18[%c0_72, %c0_73] : memref<8x128xf32, #tpu.memory_space<vmem>>, vector<8x128xf32>
    tpu.vector_store %arg18[%c0_72, %c0_73], %64 {strides = array<i32>} : memref<8x128xf32, #tpu.memory_space<vmem>>, vector<8x128xf32>,
    %c0_74 = arith.constant 0 : index
    %c0_75 = arith.constant 0 : index
    %127 = vector.load %arg19[%c0_74, %c0_75] : memref<8x1xi32, #tpu.memory_space<vmem>>, vector<8x1xi32>
    tpu.vector_store %arg19[%c0_74, %c0_75], %122 {strides = array<i32>} : memref<8x1xi32, #tpu.memory_space<vmem>>, vector<8x1xi32>,
    %c0_76 = arith.constant 0 : index
    %c0_77 = arith.constant 0 : index
    %128 = vector.load %arg16[%c0_76, %c0_77] : memref<8x128xf32, #tpu.memory_space<vmem>>, vector<8x128xf32>
    tpu.vector_store %arg16[%c0_76, %c0_77], %64 {strides = array<i32>} : memref<8x128xf32, #tpu.memory_space<vmem>>, vector<8x128xf32>,
    return
  }
  func.func @transform_0(%arg0: i32) -> (i32, i32, i32) {
    %c0_i32 = arith.constant 0 : i32
    %c0_i32_0 = arith.constant 0 : i32
    %c0_i32_1 = arith.constant 0 : i32
    %c0_i32_2 = arith.constant 0 : i32
    return %c0_i32, %c0_i32_0, %c0_i32_1 : i32, i32, i32
  }
  func.func @transform_1(%arg0: i32) -> (i32, i32, i32) {
    %c0_i32 = arith.constant 0 : i32
    %c0_i32_0 = arith.constant 0 : i32
    %c0_i32_1 = arith.constant 0 : i32
    %c0_i32_2 = arith.constant 0 : i32
    return %c0_i32, %c0_i32_0, %c0_i32_1 : i32, i32, i32
  }
  func.func @transform_2(%arg0: i32) -> (i32, i32, i32) {
    %c0_i32 = arith.constant 0 : i32
    %c0_i32_0 = arith.constant 0 : i32
    %c0_i32_1 = arith.constant 0 : i32
    %c0_i32_2 = arith.constant 0 : i32
    return %c0_i32, %c0_i32_0, %c0_i32_1 : i32, i32, i32
  }
  func.func @transform_3(%arg0: i32) -> (i32, i32, i32) {
    %c0_i32 = arith.constant 0 : i32
    %c0_i32_0 = arith.constant 0 : i32
    %c0_i32_1 = arith.constant 0 : i32
    %c0_i32_2 = arith.constant 0 : i32
    return %c0_i32, %c0_i32_0, %c0_i32_1 : i32, i32, i32
  }
  func.func @transform_4(%arg0: i32) -> (i32, i32) {
    %c0_i32 = arith.constant 0 : i32
    %c0_i32_0 = arith.constant 0 : i32
    %c0_i32_1 = arith.constant 0 : i32
    return %c0_i32, %c0_i32_0 : i32, i32
  }
  func.func @transform_5(%arg0: i32) -> (i32, i32, i32) {
    %c0_i32 = arith.constant 0 : i32
    %c0_i32_0 = arith.constant 0 : i32
    %c0_i32_1 = arith.constant 0 : i32
    %c0_i32_2 = arith.constant 0 : i32
    return %c0_i32, %c0_i32_0, %c0_i32_1 : i32, i32, i32
  }
  func.func @transform_6(%arg0: i32) -> (i32, i32, i32) {
    %c0_i32 = arith.constant 0 : i32
    %c0_i32_0 = arith.constant 0 : i32
    %c0_i32_1 = arith.constant 0 : i32
    %c0_i32_2 = arith.constant 0 : i32
    return %c0_i32, %c0_i32_0, %c0_i32_1 : i32, i32, i32
  }
  func.func @transform_7(%arg0: i32) -> (i32, i32, i32) {
    %c0_i32 = arith.constant 0 : i32
    %c0_i32_0 = arith.constant 0 : i32
    %c0_i32_1 = arith.constant 0 : i32
    %c0_i32_2 = arith.constant 0 : i32
    return %c0_i32, %c0_i32_0, %c0_i32_1 : i32, i32, i32
  }
  func.func @transform_8(%arg0: i32) -> (i32, i32) {
    %c0_i32 = arith.constant 0 : i32
    %c0_i32_0 = arith.constant 0 : i32
    %c0_i32_1 = arith.constant 0 : i32
    return %c0_i32, %c0_i32_0 : i32, i32
  }
  func.func @transform_9(%arg0: i32) -> (i32, i32) {
    %c0_i32 = arith.constant 0 : i32
    %c0_i32_0 = arith.constant 0 : i32
    %c0_i32_1 = arith.constant 0 : i32
    return %c0_i32, %c0_i32_0 : i32, i32
  }
  func.func @transform_10(%arg0: i32) -> (i32, i32) {
    %c0_i32 = arith.constant 0 : i32
    %c0_i32_0 = arith.constant 0 : i32
    %c0_i32_1 = arith.constant 0 : i32
    return %c0_i32, %c0_i32_0 : i32, i32
  }
  func.func @transform_11(%arg0: i32) -> (i32, i32) {
    %c0_i32 = arith.constant 0 : i32
    %c0_i32_0 = arith.constant 0 : i32
    %c0_i32_1 = arith.constant 0 : i32
    return %c0_i32, %c0_i32_0 : i32, i32
  }
  func.func @transform_12(%arg0: i32) -> (i32, i32) {
    %c0_i32 = arith.constant 0 : i32
    %c0_i32_0 = arith.constant 0 : i32
    %c0_i32_1 = arith.constant 0 : i32
    return %c0_i32, %c0_i32_0 : i32, i32
  }
  func.func @transform_13(%arg0: i32) -> (i32, i32, i32) {
    %c0_i32 = arith.constant 0 : i32
    %c0_i32_0 = arith.constant 0 : i32
    %c0_i32_1 = arith.constant 0 : i32
    return %arg0, %c0_i32, %c0_i32_0 : i32, i32, i32
  }
  func.func @transform_14(%arg0: i32) -> (i32, i32, i32) {
    %c0_i32 = arith.constant 0 : i32
    %c0_i32_0 = arith.constant 0 : i32
    %c0_i32_1 = arith.constant 0 : i32
    return %arg0, %c0_i32, %c0_i32_0 : i32, i32, i32
  }
  func.func @transform_15(%arg0: i32) -> (i32, i32) {
    %c0_i32 = arith.constant 0 : i32
    %c0_i32_0 = arith.constant 0 : i32
    %c0_i32_1 = arith.constant 0 : i32
    return %c0_i32, %c0_i32_0 : i32, i32
  }
}

</mosaic_0001>

<llo_original>
// kernel: tpu_custom_call.1
$region0: #{tpu_custom_call.1}
  #allocation0 [shape = 'u32[]', space=smem, size = 0x4, offset = 0x4, fixed_abs, tag = 'smem constant byte address 0x4 - core index']
  #allocation1 [shape = 'u32[144,128]{1,0:T(1,128)}', space=vmem, size = 0x12000, scoped, tag = 'internal scratch']
  #allocation2 [shape = 'f32[8,8,128]{2,1,0:T(8,128)}', space=vmem, size = 0x8000, scoped, tag = 'scratch operand']
  #allocation3 [shape = 'f32[8,128]{1,0:T(8,128)}', space=vmem, size = 0x1000, scoped, tag = 'scratch operand']
  #allocation4 [shape = 's32[8,1]{1,0:T(8,128)}', space=vmem, size = 0x1000, scoped, tag = 'scratch operand']
  %s0 = inlined_call_operand.hbm [shape: bf16[8,8,128], index: 0, kind: input, shape index: {}]
  %s1 = inlined_call_operand.hbm [shape: bf16[3,128,128], index: 1, kind: input, shape index: {}]
  %s2 = inlined_call_operand.hbm [shape: bf16[3,128,128], index: 2, kind: input, shape index: {}]
  %s3 = inlined_call_operand.hbm [shape: f32[4,8,128], index: 3, kind: input, shape index: {}]
  %s4 = inlined_call_operand.hbm [shape: bf16[128,128], index: 4, kind: input, shape index: {}]
  %s5 = inlined_call_operand.hbm [shape: bf16[3,128,128], index: 5, kind: input, shape index: {}]
  %s6 = inlined_call_operand.hbm [shape: bf16[3,128,128], index: 6, kind: input, shape index: {}]
  %s7 = inlined_call_operand.hbm [shape: f32[4,8,128], index: 7, kind: input, shape index: {}]
  %s8 = inlined_call_operand.hbm [shape: bf16[128,128], index: 8, kind: input, shape index: {}]
  %s9 = inlined_call_operand.hbm [shape: bf16[128,128], index: 9, kind: input, shape index: {}]
  %s10 = inlined_call_operand.vmem [shape: f32[8,128], index: 10, kind: input, shape index: {}]
  %s11 = inlined_call_operand.hbm [shape: bf16[128,128], index: 11, kind: input, shape index: {}]
  %s12 = inlined_call_operand.vmem [shape: f32[8,128], index: 12, kind: input, shape index: {}]
  %s13 = inlined_call_operand.hbm [shape: f32[8,8,128], index: 13, kind: output, shape index: {0}]
  %s14 = inlined_call_operand.vmem [shape: s32[8,8,1], index: 14, kind: output, shape index: {1}]
  %s15 = inlined_call_operand.hbm [shape: f32[8,128], index: 15, kind: output, shape index: {2}]
  %16 = xla_tuple %s13, %s14, %s15
  %s17 = sld [smem:[#allocation0]]
  $region149: #{tpu_custom_call.1} parent=0
    _
  %s19 = ssub.s32 1, %s17
  %s20 = scalar_select 0, %s19, %s17
  $region1: #{tpu_custom_call.1} parent=0
    #allocation5 [shape = 'u8[16384]{0}', space=vmem, size = 0x4000, scoped, tag = 'input window, operand 0, single buffered']
    #allocation6 [shape = 's32[2]{0}', space=sflag, size = 0x8, scoped, tag = 'scoped memory for tpu_custom_call.1']
    #allocation7 [shape = 's32[2]{0}', space=sflag, size = 0x8, scoped, tag = 'scoped memory for tpu_custom_call.1']
    #allocation8 [shape = 'u8[98304]{0}', space=vmem, size = 0x18000, scoped, tag = 'input window, operand 1, single buffered']
    #allocation9 [shape = 's32[1]{0}', space=sflag, size = 0x4, scoped, tag = 'scoped memory for tpu_custom_call.1']
    #allocation10 [shape = 'u8[98304]{0}', space=vmem, size = 0x18000, scoped, tag = 'input window, operand 2, single buffered']
    #allocation11 [shape = 'u8[16384]{0}', space=vmem, size = 0x4000, scoped, tag = 'input window, operand 3, single buffered']
    #allocation12 [shape = 's32[1]{0}', space=sflag, size = 0x4, scoped, tag = 'scoped memory for tpu_custom_call.1']
    #allocation13 [shape = 'u8[32768]{0}', space=vmem, size = 0x8000, scoped, tag = 'input window, operand 4, single buffered']
    #allocation14 [shape = 'u8[98304]{0}', space=vmem, size = 0x18000, scoped, tag = 'input window, operand 5, single buffered']
    #allocation15 [shape = 's32[1]{0}', space=sflag, size = 0x4, scoped, tag = 'scoped memory for tpu_custom_call.1']
    #allocation16 [shape = 'u8[98304]{0}', space=vmem, size = 0x18000, scoped, tag = 'input window, operand 6, single buffered']
    #allocation17 [shape = 'u8[16384]{0}', space=vmem, size = 0x4000, scoped, tag = 'input window, operand 7, single buffered']
    #allocation18 [shape = 's32[1]{0}', space=sflag, size = 0x4, scoped, tag = 'scoped memory for tpu_custom_call.1']
    #allocation19 [shape = 'u8[32768]{0}', space=vmem, size = 0x8000, scoped, tag = 'input window, operand 8, single buffered']
    #allocation20 [shape = 'u8[32768]{0}', space=vmem, size = 0x8000, scoped, tag = 'input window, operand 9, single buffered']
    #allocation21 [shape = 's32[1]{0}', space=sflag, size = 0x4, scoped, tag = 'scoped memory for tpu_custom_call.1']
    #allocation22 [shape = 'u8[32768]{0}', space=vmem, size = 0x8000, scoped, tag = 'input window, operand 11, single buffered']
    #allocation23 [shape = 'u8[8192]{0}', space=vmem, size = 0x2000, scoped, tag = 'output window, operand 0']
    #allocation24 [shape = 'u8[4096]{0}', space=vmem, size = 0x1000, scoped, tag = 'output window, operand 2, single buffered']
    #allocation25 [shape = 's32[1]{0}', space=sflag, size = 0x4, scoped, tag = 'scoped memory for tpu_custom_call.1']
    %21 = vsyncpa [#allocation6], 0
    %22 = vsyncpa [#allocation9], 0
    %23 = vsyncpa [#allocation12], 0
    %24 = vsyncpa [#allocation15], 0
    %25 = vsyncpa [#allocation18], 0
    %26 = vsyncpa [#allocation21], 0
    %27 = vsyncpa [#allocation7], 0
    %s28 = scalar_lea.sflag [#allocation7], 1
    %29 = vsyncpa %s28, 0
    %30 = vsyncpa [#allocation25], 0
    loop: start=0, step=1, limit=10
    $region2: #{tpu_custom_call.1} parent=1 // loop_pre_header
      _
    $region3: #{tpu_custom_call.1} parent=1 // loop_header
      %s32 = sphi 0, %s36
      %p33 = scmp.ge.s32.totalorder %s32, 10
      %s40 = sphi 0, %s40
      %s42 = sphi 0, %s40
      %s43 = sphi 0, %s42
      %s57 = sphi 0, %s43
      %s61 = sphi 0, %s61
      %s63 = sphi 0, %s61
      %s64 = sphi 0, %s63
      %s78 = sphi 0, %s64
      %s82 = sphi 0, %s82
      %s84 = sphi 0, %s82
      %s85 = sphi 0, %s84
      %s99 = sphi 0, %s85
      %s103 = sphi 0, %s103
      %s105 = sphi 0, %s103
      %s106 = sphi 0, %s105
      %s120 = sphi 0, %s106
      %s124 = sphi 0, %s124
      %s126 = sphi 0, %s124
      %s127 = sphi 0, %s126
      %s141 = sphi 0, %s127
      %s145 = sphi 0, %s145
      %s147 = sphi 0, %s145
      %s148 = sphi 0, %s147
      %s162 = sphi 0, %s148
      %s166 = sphi 0, %s166
      %s168 = sphi 0, %s166
      %s169 = sphi 0, %s168
      %s183 = sphi 0, %s169
      %s187 = sphi 0, %s187
      %s189 = sphi 0, %s187
      %s190 = sphi 0, %s189
      %s204 = sphi 0, %s190
      %s208 = sphi 0, %s208
      %s210 = sphi 0, %s208
      %s211 = sphi 0, %s210
      %s225 = sphi 0, %s211
      %s229 = sphi 0, %s229
      %s231 = sphi 0, %s229
      %s232 = sphi 0, %s231
      %s246 = sphi 0, %s232
      %s250 = sphi 0, %s250
      %s252 = sphi 0, %s250
      %s253 = sphi 0, %s252
      %s267 = sphi 0, %s253
      %s271 = sphi 0, %s271
      %s273 = sphi 0, %s271
      %s274 = sphi 0, %s273
      %s288 = sphi 0, %s274
      %s292 = sphi 0, %s292
      %s294 = sphi 0, %s292
      %s295 = sphi 0, %s294
      %s309 = sphi 0, %s295
      %s315 = sphi 0, %s317
      %s318 = sphi 0, %s315
      %s319 = sphi 0, %s318
      %s335 = sphi 0, %s319
      %s341 = sphi 0, %s343
      %s344 = sphi 0, %s341
      %s345 = sphi 0, %s344
      %s361 = sphi 0, %s345
      %s365 = sphi 0, %s365
      %s367 = sphi 0, %s365
      %s368 = sphi 0, %s367
      %s382 = sphi 0, %s368
    $region4: #{tpu_custom_call.1} parent=1 // loop_header_branch
      %35 = sbr.rel (%p33) target = $region8
    $region5: #{tpu_custom_call.1} parent=1 // loop_body
      %s37 = ssub.s32 %s32, 1
      %s38 = ssub.s32 %s32, 2
      %s39 = sadd.s32 %s32, 1
      %s41 = sadd.s32 %s40, 1
      %p44 = scmp.eq.s32.totalorder %s32, 7
      %p45 = scmp.ne.s32.totalorder %s40, %s42
      %p46 = scmp.eq.s32.totalorder %s32, 0
      %p47 = por %p45, %p46
      %p48 = scmp.ne.s32.totalorder %s40, %s42
      %p49 = scmp.eq.s32.totalorder %s37, 7
      %p50 = por %p48, %p49
      %p51 = scmp.ne.s32.totalorder %s42, %s43
      %p52 = scmp.eq.s32.totalorder %s37, 0
      %p53 = por %p51, %p52
      %p54 = scmp.ne.s32.totalorder %s42, %s43
      %p55 = scmp.eq.s32.totalorder %s38, 7
      %p56 = por %p54, %p55
      %p58 = scmp.ne.s32.totalorder %s43, %s57
      %p59 = scmp.eq.s32.totalorder %s38, 0
      %p60 = por %p58, %p59
      %s62 = sadd.s32 %s61, 1
      %p65 = scmp.eq.s32.totalorder %s32, 7
      %p66 = scmp.ne.s32.totalorder %s61, %s63
      %p67 = scmp.eq.s32.totalorder %s32, 0
      %p68 = por %p66, %p67
      %p69 = scmp.ne.s32.totalorder %s61, %s63
      %p70 = scmp.eq.s32.totalorder %s37, 7
      %p71 = por %p69, %p70
      %p72 = scmp.ne.s32.totalorder %s63, %s64
      %p73 = scmp.eq.s32.totalorder %s37, 0
      %p74 = por %p72, %p73
      %p75 = scmp.ne.s32.totalorder %s63, %s64
      %p76 = scmp.eq.s32.totalorder %s38, 7
      %p77 = por %p75, %p76
      %p79 = scmp.ne.s32.totalorder %s64, %s78
      %p80 = scmp.eq.s32.totalorder %s38, 0
      %p81 = por %p79, %p80
      %s83 = sadd.s32 %s82, 1
      %p86 = scmp.eq.s32.totalorder %s32, 7
      %p87 = scmp.ne.s32.totalorder %s82, %s84
      %p88 = scmp.eq.s32.totalorder %s32, 0
      %p89 = por %p87, %p88
      %p90 = scmp.ne.s32.totalorder %s82, %s84
      %p91 = scmp.eq.s32.totalorder %s37, 7
      %p92 = por %p90, %p91
      %p93 = scmp.ne.s32.totalorder %s84, %s85
      %p94 = scmp.eq.s32.totalorder %s37, 0
      %p95 = por %p93, %p94
      %p96 = scmp.ne.s32.totalorder %s84, %s85
      %p97 = scmp.eq.s32.totalorder %s38, 7
      %p98 = por %p96, %p97
      %p100 = scmp.ne.s32.totalorder %s85, %s99
      %p101 = scmp.eq.s32.totalorder %s38, 0
      %p102 = por %p100, %p101
      %s104 = sadd.s32 %s103, 1
      %p107 = scmp.eq.s32.totalorder %s32, 7
      %p108 = scmp.ne.s32.totalorder %s103, %s105
      %p109 = scmp.eq.s32.totalorder %s32, 0
      %p110 = por %p108, %p109
      %p111 = scmp.ne.s32.totalorder %s103, %s105
      %p112 = scmp.eq.s32.totalorder %s37, 7
      %p113 = por %p111, %p112
      %p114 = scmp.ne.s32.totalorder %s105, %s106
      %p115 = scmp.eq.s32.totalorder %s37, 0
      %p116 = por %p114, %p115
      %p117 = scmp.ne.s32.totalorder %s105, %s106
      %p118 = scmp.eq.s32.totalorder %s38, 7
      %p119 = por %p117, %p118
      %p121 = scmp.ne.s32.totalorder %s106, %s120
      %p122 = scmp.eq.s32.totalorder %s38, 0
      %p123 = por %p121, %p122
      %s125 = sadd.s32 %s124, 1
      %p128 = scmp.eq.s32.totalorder %s32, 7
      %p129 = scmp.ne.s32.totalorder %s124, %s126
      %p130 = scmp.eq.s32.totalorder %s32, 0
      %p131 = por %p129, %p130
      %p132 = scmp.ne.s32.totalorder %s124, %s126
      %p133 = scmp.eq.s32.totalorder %s37, 7
      %p134 = por %p132, %p133
      %p135 = scmp.ne.s32.totalorder %s126, %s127
      %p136 = scmp.eq.s32.totalorder %s37, 0
      %p137 = por %p135, %p136
      %p138 = scmp.ne.s32.totalorder %s126, %s127
      %p139 = scmp.eq.s32.totalorder %s38, 7
      %p140 = por %p138, %p139
      %p142 = scmp.ne.s32.totalorder %s127, %s141
      %p143 = scmp.eq.s32.totalorder %s38, 0
      %p144 = por %p142, %p143
      %s146 = sadd.s32 %s145, 1
      %p149 = scmp.eq.s32.totalorder %s32, 7
      %p150 = scmp.ne.s32.totalorder %s145, %s147
      %p151 = scmp.eq.s32.totalorder %s32, 0
      %p152 = por %p150, %p151
      %p153 = scmp.ne.s32.totalorder %s145, %s147
      %p154 = scmp.eq.s32.totalorder %s37, 7
      %p155 = por %p153, %p154
      %p156 = scmp.ne.s32.totalorder %s147, %s148
      %p157 = scmp.eq.s32.totalorder %s37, 0
      %p158 = por %p156, %p157
      %p159 = scmp.ne.s32.totalorder %s147, %s148
      %p160 = scmp.eq.s32.totalorder %s38, 7
      %p161 = por %p159, %p160
      %p163 = scmp.ne.s32.totalorder %s148, %s162
      %p164 = scmp.eq.s32.totalorder %s38, 0
      %p165 = por %p163, %p164
      %s167 = sadd.s32 %s166, 1
      %p170 = scmp.eq.s32.totalorder %s32, 7
      %p171 = scmp.ne.s32.totalorder %s166, %s168
      %p172 = scmp.eq.s32.totalorder %s32, 0
      %p173 = por %p171, %p172
      %p174 = scmp.ne.s32.totalorder %s166, %s168
      %p175 = scmp.eq.s32.totalorder %s37, 7
      %p176 = por %p174, %p175
      %p177 = scmp.ne.s32.totalorder %s168, %s169
      %p178 = scmp.eq.s32.totalorder %s37, 0
      %p179 = por %p177, %p178
      %p180 = scmp.ne.s32.totalorder %s168, %s169
      %p181 = scmp.eq.s32.totalorder %s38, 7
      %p182 = por %p180, %p181
      %p184 = scmp.ne.s32.totalorder %s169, %s183
      %p185 = scmp.eq.s32.totalorder %s38, 0
      %p186 = por %p184, %p185
      %s188 = sadd.s32 %s187, 1
      %p191 = scmp.eq.s32.totalorder %s32, 7
      %p192 = scmp.ne.s32.totalorder %s187, %s189
      %p193 = scmp.eq.s32.totalorder %s32, 0
      %p194 = por %p192, %p193
      %p195 = scmp.ne.s32.totalorder %s187, %s189
      %p196 = scmp.eq.s32.totalorder %s37, 7
      %p197 = por %p195, %p196
      %p198 = scmp.ne.s32.totalorder %s189, %s190
      %p199 = scmp.eq.s32.totalorder %s37, 0
      %p200 = por %p198, %p199
      %p201 = scmp.ne.s32.totalorder %s189, %s190
      %p202 = scmp.eq.s32.totalorder %s38, 7
      %p203 = por %p201, %p202
      %p205 = scmp.ne.s32.totalorder %s190, %s204
      %p206 = scmp.eq.s32.totalorder %s38, 0
      %p207 = por %p205, %p206
      %s209 = sadd.s32 %s208, 1
      %p212 = scmp.eq.s32.totalorder %s32, 7
      %p213 = scmp.ne.s32.totalorder %s208, %s210
      %p214 = scmp.eq.s32.totalorder %s32, 0
      %p215 = por %p213, %p214
      %p216 = scmp.ne.s32.totalorder %s208, %s210
      %p217 = scmp.eq.s32.totalorder %s37, 7
      %p218 = por %p216, %p217
      %p219 = scmp.ne.s32.totalorder %s210, %s211
      %p220 = scmp.eq.s32.totalorder %s37, 0
      %p221 = por %p219, %p220
      %p222 = scmp.ne.s32.totalorder %s210, %s211
      %p223 = scmp.eq.s32.totalorder %s38, 7
      %p224 = por %p222, %p223
      %p226 = scmp.ne.s32.totalorder %s211, %s225
      %p227 = scmp.eq.s32.totalorder %s38, 0
      %p228 = por %p226, %p227
      %s230 = sadd.s32 %s229, 1
      %p233 = scmp.eq.s32.totalorder %s32, 7
      %p234 = scmp.ne.s32.totalorder %s229, %s231
      %p235 = scmp.eq.s32.totalorder %s32, 0
      %p236 = por %p234, %p235
      %p237 = scmp.ne.s32.totalorder %s229, %s231
      %p238 = scmp.eq.s32.totalorder %s37, 7
      %p239 = por %p237, %p238
      %p240 = scmp.ne.s32.totalorder %s231, %s232
      %p241 = scmp.eq.s32.totalorder %s37, 0
      %p242 = por %p240, %p241
      %p243 = scmp.ne.s32.totalorder %s231, %s232
      %p244 = scmp.eq.s32.totalorder %s38, 7
      %p245 = por %p243, %p244
      %p247 = scmp.ne.s32.totalorder %s232, %s246
      %p248 = scmp.eq.s32.totalorder %s38, 0
      %p249 = por %p247, %p248
      %s251 = sadd.s32 %s250, 1
      %p254 = scmp.eq.s32.totalorder %s32, 7
      %p255 = scmp.ne.s32.totalorder %s250, %s252
      %p256 = scmp.eq.s32.totalorder %s32, 0
      %p257 = por %p255, %p256
      %p258 = scmp.ne.s32.totalorder %s250, %s252
      %p259 = scmp.eq.s32.totalorder %s37, 7
      %p260 = por %p258, %p259
      %p261 = scmp.ne.s32.totalorder %s252, %s253
      %p262 = scmp.eq.s32.totalorder %s37, 0
      %p263 = por %p261, %p262
      %p264 = scmp.ne.s32.totalorder %s252, %s253
      %p265 = scmp.eq.s32.totalorder %s38, 7
      %p266 = por %p264, %p265
      %p268 = scmp.ne.s32.totalorder %s253, %s267
      %p269 = scmp.eq.s32.totalorder %s38, 0
      %p270 = por %p268, %p269
      %s272 = sadd.s32 %s271, 1
      %p275 = scmp.eq.s32.totalorder %s32, 7
      %p276 = scmp.ne.s32.totalorder %s271, %s273
      %p277 = scmp.eq.s32.totalorder %s32, 0
      %p278 = por %p276, %p277
      %p279 = scmp.ne.s32.totalorder %s271, %s273
      %p280 = scmp.eq.s32.totalorder %s37, 7
      %p281 = por %p279, %p280
      %p282 = scmp.ne.s32.totalorder %s273, %s274
      %p283 = scmp.eq.s32.totalorder %s37, 0
      %p284 = por %p282, %p283
      %p285 = scmp.ne.s32.totalorder %s273, %s274
      %p286 = scmp.eq.s32.totalorder %s38, 7
      %p287 = por %p285, %p286
      %p289 = scmp.ne.s32.totalorder %s274, %s288
      %p290 = scmp.eq.s32.totalorder %s38, 0
      %p291 = por %p289, %p290
      %s293 = sadd.s32 %s292, 1
      %p296 = scmp.eq.s32.totalorder %s32, 7
      %p297 = scmp.ne.s32.totalorder %s292, %s294
      %p298 = scmp.eq.s32.totalorder %s32, 0
      %p299 = por %p297, %p298
      %p300 = scmp.ne.s32.totalorder %s292, %s294
      %p301 = scmp.eq.s32.totalorder %s37, 7
      %p302 = por %p300, %p301
      %p303 = scmp.ne.s32.totalorder %s294, %s295
      %p304 = scmp.eq.s32.totalorder %s37, 0
      %p305 = por %p303, %p304
      %p306 = scmp.ne.s32.totalorder %s294, %s295
      %p307 = scmp.eq.s32.totalorder %s38, 7
      %p308 = por %p306, %p307
      %p310 = scmp.ne.s32.totalorder %s295, %s309
      %p311 = scmp.eq.s32.totalorder %s38, 0
      %p312 = por %p310, %p311
      %s313 = ssub.s32 %s32, %s39
      %p314 = scmp.eq.s32.totalorder %s313, 0
      %s316 = sadd.s32 %s315, 1
      %s317 = scalar_select %p314, %s315, %s316
      %p320 = pneg %p314
      %p321 = scmp.eq.s32.totalorder %s32, 7
      %p322 = por %p320, %p321
      %p323 = scmp.ne.s32.totalorder %s315, %s318
      %p324 = scmp.eq.s32.totalorder %s32, 0
      %p325 = por %p323, %p324
      %p326 = scmp.ne.s32.totalorder %s315, %s318
      %p327 = scmp.eq.s32.totalorder %s37, 7
      %p328 = por %p326, %p327
      %p329 = scmp.ne.s32.totalorder %s318, %s319
      %p330 = scmp.eq.s32.totalorder %s37, 0
      %p331 = por %p329, %p330
      %p332 = scmp.ne.s32.totalorder %s318, %s319
      %p333 = scmp.eq.s32.totalorder %s38, 7
      %p334 = por %p332, %p333
      %p336 = scmp.ne.s32.totalorder %s319, %s335
      %p337 = scmp.eq.s32.totalorder %s38, 0
      %p338 = por %p336, %p337
      %s339 = ssub.s32 %s32, %s39
      %p340 = scmp.eq.s32.totalorder %s339, 0
      %s342 = sadd.s32 %s341, 1
      %s343 = scalar_select %p340, %s341, %s342
      %p346 = pneg %p340
      %p347 = scmp.eq.s32.totalorder %s32, 7
      %p348 = por %p346, %p347
      %p349 = scmp.ne.s32.totalorder %s341, %s344
      %p350 = scmp.eq.s32.totalorder %s32, 0
      %p351 = por %p349, %p350
      %p352 = scmp.ne.s32.totalorder %s341, %s344
      %p353 = scmp.eq.s32.totalorder %s37, 7
      %p354 = por %p352, %p353
      %p355 = scmp.ne.s32.totalorder %s344, %s345
      %p356 = scmp.eq.s32.totalorder %s37, 0
      %p357 = por %p355, %p356
      %p358 = scmp.ne.s32.totalorder %s344, %s345
      %p359 = scmp.eq.s32.totalorder %s38, 7
      %p360 = por %p358, %p359
      %p362 = scmp.ne.s32.totalorder %s345, %s361
      %p363 = scmp.eq.s32.totalorder %s38, 0
      %p364 = por %p362, %p363
      %s366 = sadd.s32 %s365, 1
      %p369 = scmp.eq.s32.totalorder %s32, 7
      %p370 = scmp.ne.s32.totalorder %s365, %s367
      %p371 = scmp.eq.s32.totalorder %s32, 0
      %p372 = por %p370, %p371
      %p373 = scmp.ne.s32.totalorder %s365, %s367
      %p374 = scmp.eq.s32.totalorder %s37, 7
      %p375 = por %p373, %p374
      %p376 = scmp.ne.s32.totalorder %s367, %s368
      %p377 = scmp.eq.s32.totalorder %s37, 0
      %p378 = por %p376, %p377
      %p379 = scmp.ne.s32.totalorder %s367, %s368
      %p380 = scmp.eq.s32.totalorder %s38, 7
      %p381 = por %p379, %p380
      %p383 = scmp.ne.s32.totalorder %s368, %s382
      %p384 = scmp.eq.s32.totalorder %s38, 0
      %p385 = por %p383, %p384
      %p386 = scmp.le.s32.totalorder 1, %s32
      %p387 = scmp.lt.s32.totalorder %s32, 9
      %p388 = pnand %p386, %p387
      %p389 = pneg %p388
      // Predicated region
      $region9: #{tpu_custom_call.1} parent=5 // pred_check
        _
      $region10: #{tpu_custom_call.1} parent=5 // pred_check_branch
        %391 = sbr.rel (%p388) target = $region12
      $region11: #{tpu_custom_call.1} parent=5 // pred_region
        %s392 = ssub.s32 %s32, 1
        // Predicated region
        $region13: #{tpu_custom_call.1} parent=11 // pred_check
          %p393 = pneg %p53
        $region14: #{tpu_custom_call.1} parent=11 // pred_check_branch
          %395 = sbr.rel (%p393) target = $region16
        $region15: #{tpu_custom_call.1} parent=11 // pred_region
          %s397 = ssub.s32 512, 512
          %398 = vsyncadd [#allocation6], %s397
          %s399 = sshll.u32 [#allocation5], 4
          %s400 = int_to_ptr.vmem [resolvable:$true] %s399
          %405 = dma.hbm_to_vmem [thread:$0]  %s0, 512, %s400, [#allocation6], 64, 64, 4
        $region16: #{tpu_custom_call.1} parent=11 // pred_fallthru
          _
        // Predicated region
        $region17: #{tpu_custom_call.1} parent=11 // pred_check
          %p406 = pneg %p74
        $region18: #{tpu_custom_call.1} parent=11 // pred_check_branch
          %408 = sbr.rel (%p406) target = $region20
        $region19: #{tpu_custom_call.1} parent=11 // pred_region
          %s410 = ssub.s32 3072, 3072
          %411 = vsyncadd [#allocation9], %s410
          %s412 = sshll.u32 [#allocation8], 4
          %s413 = int_to_ptr.vmem [resolvable:$true] %s412
          %418 = dma.hbm_to_vmem [thread:$0]  %s1, 3072, %s413, [#allocation9], 64, 64, 4
        $region20: #{tpu_custom_call.1} parent=11 // pred_fallthru
          _
        // Predicated region
        $region21: #{tpu_custom_call.1} parent=11 // pred_check
          %p419 = pneg %p95
        $region22: #{tpu_custom_call.1} parent=11 // pred_check_branch
          %421 = sbr.rel (%p419) target = $region24
        $region23: #{tpu_custom_call.1} parent=11 // pred_region
          %s423 = ssub.s32 3072, 3072
          %424 = vsyncadd [#allocation9], %s423
          %s425 = sshll.u32 [#allocation10], 4
          %s426 = int_to_ptr.vmem [resolvable:$true] %s425
          %431 = dma.hbm_to_vmem [thread:$0]  %s2, 3072, %s426, [#allocation9], 64, 64, 4
        $region24: #{tpu_custom_call.1} parent=11 // pred_fallthru
          _
        // Predicated region
        $region25: #{tpu_custom_call.1} parent=11 // pred_check
          %p432 = pneg %p116
        $region26: #{tpu_custom_call.1} parent=11 // pred_check_branch
          %434 = sbr.rel (%p432) target = $region28
        $region27: #{tpu_custom_call.1} parent=11 // pred_region
          %s436 = ssub.s32 512, 512
          %437 = vsyncadd [#allocation12], %s436
          %s438 = sshll.u32 [#allocation11], 4
          %s439 = int_to_ptr.vmem [resolvable:$true] %s438
          %444 = dma.hbm_to_vmem [thread:$0]  %s3, 512, %s439, [#allocation12], 128, 128, 8
        $region28: #{tpu_custom_call.1} parent=11 // pred_fallthru
          _
        // Predicated region
        $region29: #{tpu_custom_call.1} parent=11 // pred_check
          %p445 = pneg %p137
        $region30: #{tpu_custom_call.1} parent=11 // pred_check_branch
          %447 = sbr.rel (%p445) target = $region32
        $region31: #{tpu_custom_call.1} parent=11 // pred_region
          %s449 = ssub.s32 1024, 1024
          %450 = vsyncadd [#allocation12], %s449
          %s451 = sshll.u32 [#allocation13], 4
          %s452 = int_to_ptr.vmem [resolvable:$true] %s451
          %457 = dma.hbm_to_vmem [thread:$0]  %s4, 1024, %s452, [#allocation12], 64, 64, 4
        $region32: #{tpu_custom_call.1} parent=11 // pred_fallthru
          _
        // Predicated region
        $region33: #{tpu_custom_call.1} parent=11 // pred_check
          %p458 = pneg %p158
        $region34: #{tpu_custom_call.1} parent=11 // pred_check_branch
          %460 = sbr.rel (%p458) target = $region36
        $region35: #{tpu_custom_call.1} parent=11 // pred_region
          %s462 = ssub.s32 3072, 3072
          %463 = vsyncadd [#allocation15], %s462
          %s464 = sshll.u32 [#allocation14], 4
          %s465 = int_to_ptr.vmem [resolvable:$true] %s464
          %470 = dma.hbm_to_vmem [thread:$0]  %s5, 3072, %s465, [#allocation15], 64, 64, 4
        $region36: #{tpu_custom_call.1} parent=11 // pred_fallthru
          _
        // Predicated region
        $region37: #{tpu_custom_call.1} parent=11 // pred_check
          %p471 = pneg %p179
        $region38: #{tpu_custom_call.1} parent=11 // pred_check_branch
          %473 = sbr.rel (%p471) target = $region40
        $region39: #{tpu_custom_call.1} parent=11 // pred_region
          %s475 = ssub.s32 3072, 3072
          %476 = vsyncadd [#allocation15], %s475
          %s477 = sshll.u32 [#allocation16], 4
          %s478 = int_to_ptr.vmem [resolvable:$true] %s477
          %483 = dma.hbm_to_vmem [thread:$0]  %s6, 3072, %s478, [#allocation15], 64, 64, 4
        $region40: #{tpu_custom_call.1} parent=11 // pred_fallthru
          _
        // Predicated region
        $region41: #{tpu_custom_call.1} parent=11 // pred_check
          %p484 = pneg %p200
        $region42: #{tpu_custom_call.1} parent=11 // pred_check_branch
          %486 = sbr.rel (%p484) target = $region44
        $region43: #{tpu_custom_call.1} parent=11 // pred_region
          %s488 = ssub.s32 512, 512
          %489 = vsyncadd [#allocation18], %s488
          %s490 = sshll.u32 [#allocation17], 4
          %s491 = int_to_ptr.vmem [resolvable:$true] %s490
          %496 = dma.hbm_to_vmem [thread:$0]  %s7, 512, %s491, [#allocation18], 128, 128, 8
        $region44: #{tpu_custom_call.1} parent=11 // pred_fallthru
          _
        // Predicated region
        $region45: #{tpu_custom_call.1} parent=11 // pred_check
          %p497 = pneg %p221
        $region46: #{tpu_custom_call.1} parent=11 // pred_check_branch
          %499 = sbr.rel (%p497) target = $region48
        $region47: #{tpu_custom_call.1} parent=11 // pred_region
          %s501 = ssub.s32 1024, 1024
          %502 = vsyncadd [#allocation18], %s501
          %s503 = sshll.u32 [#allocation19], 4
          %s504 = int_to_ptr.vmem [resolvable:$true] %s503
          %509 = dma.hbm_to_vmem [thread:$0]  %s8, 1024, %s504, [#allocation18], 64, 64, 4
        $region48: #{tpu_custom_call.1} parent=11 // pred_fallthru
          _
        // Predicated region
        $region49: #{tpu_custom_call.1} parent=11 // pred_check
          %p510 = pneg %p242
        $region50: #{tpu_custom_call.1} parent=11 // pred_check_branch
          %512 = sbr.rel (%p510) target = $region52
        $region51: #{tpu_custom_call.1} parent=11 // pred_region
          %s514 = ssub.s32 1024, 1024
          %515 = vsyncadd [#allocation21], %s514
          %s516 = sshll.u32 [#allocation20], 4
          %s517 = int_to_ptr.vmem [resolvable:$true] %s516
          %522 = dma.hbm_to_vmem [thread:$0]  %s9, 1024, %s517, [#allocation21], 64, 64, 4
        $region52: #{tpu_custom_call.1} parent=11 // pred_fallthru
          _
        // Predicated region
        $region53: #{tpu_custom_call.1} parent=11 // pred_check
          %p523 = pneg %p263
        $region54: #{tpu_custom_call.1} parent=11 // pred_check_branch
          %525 = sbr.rel (%p523) target = $region56
        $region55: #{tpu_custom_call.1} parent=11 // pred_region
          _
        $region56: #{tpu_custom_call.1} parent=11 // pred_fallthru
          _
        // Predicated region
        $region57: #{tpu_custom_call.1} parent=11 // pred_check
          %p526 = pneg %p284
        $region58: #{tpu_custom_call.1} parent=11 // pred_check_branch
          %528 = sbr.rel (%p526) target = $region60
        $region59: #{tpu_custom_call.1} parent=11 // pred_region
          %s530 = ssub.s32 1024, 1024
          %531 = vsyncadd [#allocation21], %s530
          %s532 = sshll.u32 [#allocation22], 4
          %s533 = int_to_ptr.vmem [resolvable:$true] %s532
          %538 = dma.hbm_to_vmem [thread:$0]  %s11, 1024, %s533, [#allocation21], 64, 64, 4
        $region60: #{tpu_custom_call.1} parent=11 // pred_fallthru
          _
        // Predicated region
        $region61: #{tpu_custom_call.1} parent=11 // pred_check
          %p539 = pneg %p305
        $region62: #{tpu_custom_call.1} parent=11 // pred_check_branch
          %541 = sbr.rel (%p539) target = $region64
        $region63: #{tpu_custom_call.1} parent=11 // pred_region
          _
        $region64: #{tpu_custom_call.1} parent=11 // pred_fallthru
          _
      $region12: #{tpu_custom_call.1} parent=5 // pred_fallthru
        _
      %p542 = scmp.lt.s32.totalorder %s32, 8
      // Predicated region
      $region65: #{tpu_custom_call.1} parent=5 // pred_check
        %p543 = pneg %p542
      $region66: #{tpu_custom_call.1} parent=5 // pred_check_branch
        %545 = sbr.rel (%p543) target = $region68
      $region67: #{tpu_custom_call.1} parent=5 // pred_region
        _
      $region68: #{tpu_custom_call.1} parent=5 // pred_fallthru
        _
      %p546 = scmp.le.s32.totalorder 1, %s32
      %p547 = scmp.lt.s32.totalorder %s32, 9
      %p548 = pnand %p546, %p547
      %p549 = pneg %p548
      // Predicated region
      $region69: #{tpu_custom_call.1} parent=5 // pred_check
        _
      $region70: #{tpu_custom_call.1} parent=5 // pred_check_branch
        %551 = sbr.rel (%p548) target = $region72
      $region71: #{tpu_custom_call.1} parent=5 // pred_region
        %s552 = ssub.s32 %s32, 1
        // Predicated region
        $region73: #{tpu_custom_call.1} parent=71 // pred_check
          %p553 = pneg %p53
        $region74: #{tpu_custom_call.1} parent=71 // pred_check_branch
          %555 = sbr.rel (%p553) target = $region76
        $region75: #{tpu_custom_call.1} parent=71 // pred_region
          %556 = dma.done [#allocation6], 512
        $region76: #{tpu_custom_call.1} parent=71 // pred_fallthru
          _
        // Predicated region
        $region77: #{tpu_custom_call.1} parent=71 // pred_check
          %p557 = pneg %p74
        $region78: #{tpu_custom_call.1} parent=71 // pred_check_branch
          %559 = sbr.rel (%p557) target = $region80
        $region79: #{tpu_custom_call.1} parent=71 // pred_region
          %560 = dma.done [#allocation9], 3072
        $region80: #{tpu_custom_call.1} parent=71 // pred_fallthru
          _
        // Predicated region
        $region81: #{tpu_custom_call.1} parent=71 // pred_check
          %p561 = pneg %p95
        $region82: #{tpu_custom_call.1} parent=71 // pred_check_branch
          %563 = sbr.rel (%p561) target = $region84
        $region83: #{tpu_custom_call.1} parent=71 // pred_region
          %564 = dma.done [#allocation9], 3072
        $region84: #{tpu_custom_call.1} parent=71 // pred_fallthru
          _
        // Predicated region
        $region85: #{tpu_custom_call.1} parent=71 // pred_check
          %p565 = pneg %p116
        $region86: #{tpu_custom_call.1} parent=71 // pred_check_branch
          %567 = sbr.rel (%p565) target = $region88
        $region87: #{tpu_custom_call.1} parent=71 // pred_region
          %568 = dma.done [#allocation12], 512
        $region88: #{tpu_custom_call.1} parent=71 // pred_fallthru
          _
        // Predicated region
        $region89: #{tpu_custom_call.1} parent=71 // pred_check
          %p569 = pneg %p137
        $region90: #{tpu_custom_call.1} parent=71 // pred_check_branch
          %571 = sbr.rel (%p569) target = $region92
        $region91: #{tpu_custom_call.1} parent=71 // pred_region
          %572 = dma.done [#allocation12], 1024
        $region92: #{tpu_custom_call.1} parent=71 // pred_fallthru
          _
        // Predicated region
        $region93: #{tpu_custom_call.1} parent=71 // pred_check
          %p573 = pneg %p158
        $region94: #{tpu_custom_call.1} parent=71 // pred_check_branch
          %575 = sbr.rel (%p573) target = $region96
        $region95: #{tpu_custom_call.1} parent=71 // pred_region
          %576 = dma.done [#allocation15], 3072
        $region96: #{tpu_custom_call.1} parent=71 // pred_fallthru
          _
        // Predicated region
        $region97: #{tpu_custom_call.1} parent=71 // pred_check
          %p577 = pneg %p179
        $region98: #{tpu_custom_call.1} parent=71 // pred_check_branch
          %579 = sbr.rel (%p577) target = $region100
        $region99: #{tpu_custom_call.1} parent=71 // pred_region
          %580 = dma.done [#allocation15], 3072
        $region100: #{tpu_custom_call.1} parent=71 // pred_fallthru
          _
        // Predicated region
        $region101: #{tpu_custom_call.1} parent=71 // pred_check
          %p581 = pneg %p200
        $region102: #{tpu_custom_call.1} parent=71 // pred_check_branch
          %583 = sbr.rel (%p581) target = $region104
        $region103: #{tpu_custom_call.1} parent=71 // pred_region
          %584 = dma.done [#allocation18], 512
        $region104: #{tpu_custom_call.1} parent=71 // pred_fallthru
          _
        // Predicated region
        $region105: #{tpu_custom_call.1} parent=71 // pred_check
          %p585 = pneg %p221
        $region106: #{tpu_custom_call.1} parent=71 // pred_check_branch
          %587 = sbr.rel (%p585) target = $region108
        $region107: #{tpu_custom_call.1} parent=71 // pred_region
          %588 = dma.done [#allocation18], 1024
        $region108: #{tpu_custom_call.1} parent=71 // pred_fallthru
          _
        // Predicated region
        $region109: #{tpu_custom_call.1} parent=71 // pred_check
          %p589 = pneg %p242
        $region110: #{tpu_custom_call.1} parent=71 // pred_check_branch
          %591 = sbr.rel (%p589) target = $region112
        $region111: #{tpu_custom_call.1} parent=71 // pred_region
          %592 = dma.done [#allocation21], 1024
        $region112: #{tpu_custom_call.1} parent=71 // pred_fallthru
          _
        // Predicated region
        $region113: #{tpu_custom_call.1} parent=71 // pred_check
          %p593 = pneg %p284
        $region114: #{tpu_custom_call.1} parent=71 // pred_check_branch
          %595 = sbr.rel (%p593) target = $region116
        $region115: #{tpu_custom_call.1} parent=71 // pred_region
          %596 = dma.done [#allocation21], 1024
        $region116: #{tpu_custom_call.1} parent=71 // pred_fallthru
          _
        %p597 = pneg %p53
        %p598 = pneg %p50
        %p599 = pneg %p74
        %p600 = pneg %p71
        %p601 = pneg %p95
        %p602 = pneg %p92
        %p603 = pneg %p116
        %p604 = pneg %p113
        %p605 = pneg %p137
        %p606 = pneg %p134
        %p607 = pneg %p158
        %p608 = pneg %p155
        %p609 = pneg %p179
        %p610 = pneg %p176
        %p611 = pneg %p200
        %p612 = pneg %p197
        %p613 = pneg %p221
        %p614 = pneg %p218
        %p615 = pneg %p242
        %p616 = pneg %p239
        %p617 = pneg %p263
        %p618 = pneg %p260
        %p619 = pneg %p284
        %p620 = pneg %p281
        %p621 = pneg %p305
        %p622 = pneg %p302
        %p623 = pneg %p331
        %p624 = pneg %p328
        %s625 = sand.u32 %s318, 1
        %s626 = scalar_lea.sflag [#allocation7], %s625
        %s627 = sand.u32 %s318, 1
        %s628 = smul.addr %s627, 8
        %s629 = scalar_lea.vmem [#allocation23], %s628
        %p630 = pneg %p357
        %p631 = pneg %p354
        %p632 = scmp.lt.s32.totalorder %s37, 7
        %s633 = scalar_select %p632, %s37, 7
        %s634 = smul.addr %s633, 8
        %s635 = scalar_lea.vmem %s14, %s634
        %p636 = pneg %p378
        %p637 = pneg %p375
        %p638 = scmp.lt.s32.totalorder %s37, 7
        %s639 = scalar_select %p638, %s37, 7
        %s640 = smul.addr %s639, 8
        %s641 = scalar_lea.vmem %s14, %s640
        %p643 = scmp.eq.s32.totalorder %s37, 0
        // Predicated region
        $region117: #{tpu_custom_call.1} parent=71 // pred_check
          %p644 = pneg %p643
        $region118: #{tpu_custom_call.1} parent=71 // pred_check_branch
          %646 = sbr.rel (%p644) target = $region120
        $region119: #{tpu_custom_call.1} parent=71 // pred_region
          %v647 = vld [vmem:[#allocation5] sm:$0xf]
          %v648 = vld [vmem:[#allocation8] sm:$0xf]
          %v649 = vld [vmem:[#allocation8 + $0x4] sm:$0xf]
          %v650 = vld [vmem:[#allocation8 + $0x8] sm:$0xf]
          %v651 = vld [vmem:[#allocation8 + $0xc] sm:$0xf]
          %v652 = vld [vmem:[#allocation8 + $0x10] sm:$0xf]
          %v653 = vld [vmem:[#allocation8 + $0x14] sm:$0xf]
          %v654 = vld [vmem:[#allocation8 + $0x18] sm:$0xf]
          %v655 = vld [vmem:[#allocation8 + $0x1c] sm:$0xf]
          %v656 = vld [vmem:[#allocation8 + $0x20] sm:$0xf]
          %v657 = vld [vmem:[#allocation8 + $0x24] sm:$0xf]
          %v658 = vld [vmem:[#allocation8 + $0x28] sm:$0xf]
          %v659 = vld [vmem:[#allocation8 + $0x2c] sm:$0xf]
          %v660 = vld [vmem:[#allocation8 + $0x30] sm:$0xf]
          %v661 = vld [vmem:[#allocation8 + $0x34] sm:$0xf]
          %v662 = vld [vmem:[#allocation8 + $0x38] sm:$0xf]
          %v663 = vld [vmem:[#allocation8 + $0x3c] sm:$0xf]
          %v664 = vld [vmem:[#allocation10] sm:$0xf]
          %v665 = vld [vmem:[#allocation10 + $0x4] sm:$0xf]
          %v666 = vld [vmem:[#allocation10 + $0x8] sm:$0xf]
          %v667 = vld [vmem:[#allocation10 + $0xc] sm:$0xf]
          %v668 = vld [vmem:[#allocation10 + $0x10] sm:$0xf]
          %v669 = vld [vmem:[#allocation10 + $0x14] sm:$0xf]
          %v670 = vld [vmem:[#allocation10 + $0x18] sm:$0xf]
          %v671 = vld [vmem:[#allocation10 + $0x1c] sm:$0xf]
          %v672 = vld [vmem:[#allocation10 + $0x20] sm:$0xf]
          %v673 = vld [vmem:[#allocation10 + $0x24] sm:$0xf]
          %v674 = vld [vmem:[#allocation10 + $0x28] sm:$0xf]
          %v675 = vld [vmem:[#allocation10 + $0x2c] sm:$0xf]
          %v676 = vld [vmem:[#allocation10 + $0x30] sm:$0xf]
          %v677 = vld [vmem:[#allocation10 + $0x34] sm:$0xf]
          %v678 = vld [vmem:[#allocation10 + $0x38] sm:$0xf]
          %v679 = vld [vmem:[#allocation10 + $0x3c] sm:$0xf]
          %v696 = vunpack.c.l.b16 %v664
          %v697 = vunpack.c.l.b16 %v665
          %v698 = vunpack.c.l.b16 %v666
          %v699 = vunpack.c.l.b16 %v667
          %v700 = vunpack.c.l.b16 %v668
          %v701 = vunpack.c.l.b16 %v669
          %v702 = vunpack.c.l.b16 %v670
          %v703 = vunpack.c.l.b16 %v671
          %v704 = vunpack.c.l.b16 %v672
          %v705 = vunpack.c.l.b16 %v673
          %v706 = vunpack.c.l.b16 %v674
          %v707 = vunpack.c.l.b16 %v675
          %v708 = vunpack.c.l.b16 %v676
          %v709 = vunpack.c.l.b16 %v677
          %v710 = vunpack.c.l.b16 %v678
          %v711 = vunpack.c.l.b16 %v679
          %v712 = vpack.c.b16 %v697, %v696
          %v713 = vpack.c.b16 %v699, %v698
          %v714 = vpack.c.b16 %v701, %v700
          %v715 = vpack.c.b16 %v703, %v702
          %v716 = vpack.c.b16 %v705, %v704
          %v717 = vpack.c.b16 %v707, %v706
          %v718 = vpack.c.b16 %v709, %v708
          %v719 = vpack.c.b16 %v711, %v710
          %728 = vmatprep.subr.bf16.mxu0 0
          %729 = vmatpush1.bf16.msra.mxu0 %v712
          %730 = vmatprep.subr.bf16.mxu0 0
          %731 = vmatpush1.bf16.msra.mxu0 %v713
          %732 = vmatprep.subr.bf16.mxu0 0
          %733 = vmatpush1.bf16.msra.mxu0 %v714
          %734 = vmatprep.subr.bf16.mxu0 0
          %735 = vmatpush1.bf16.msra.mxu0 %v715
          %736 = vmatprep.subr.bf16.mxu0 0
          %737 = vmatpush1.bf16.msra.mxu0 %v716
          %738 = vmatprep.subr.bf16.mxu0 0
          %739 = vmatpush1.bf16.msra.mxu0 %v717
          %740 = vmatprep.subr.bf16.mxu0 0
          %741 = vmatpush1.bf16.msra.mxu0 %v718
          %742 = vmatprep.subr.bf16.mxu0 0
          %743 = vmatpush1.bf16.msra.mxu0 %v719
          %744 = vmatprep.subr.bf16.mxu0 0
          %745 = vmatpush1.bf16.msra.mxu0 0
          %746 = vmatprep.subr.bf16.mxu0 0
          %747 = vmatpush1.bf16.msra.mxu0 0
          %748 = vmatprep.subr.bf16.mxu0 0
          %749 = vmatpush1.bf16.msra.mxu0 0
          %750 = vmatprep.subr.bf16.mxu0 0
          %751 = vmatpush1.bf16.msra.mxu0 0
          %752 = vmatprep.subr.bf16.mxu0 0
          %753 = vmatpush1.bf16.msra.mxu0 0
          %754 = vmatprep.subr.bf16.mxu0 0
          %755 = vmatpush1.bf16.msra.mxu0 0
          %756 = vmatprep.subr.bf16.mxu0 0
          %757 = vmatpush1.bf16.msra.mxu0 0
          %758 = vmatprep.subr.bf16.mxu0 0
          %759 = vmatpush1.bf16.msra.mxu0 0
          %760 = vmatprep.mubr.bf16.mxu0 0
          %761 = vmatmul.mubr.bf16.gmra.mrb[0].mxu0 0
          %v762 = vpop.f32.mrb[0].mxu0
          %v763 = vadd.f32 0.0, %v762
          %v764 = vpop.f32.mrb[0].mxu0
          %v765 = vpop.f32.mrb[0].mxu0
          %v766 = vpop.f32.mrb[0].mxu0
          %767 = vdwg.mxu0
          %v784 = vunpack.c.l.b16 %v648
          %v785 = vunpack.c.l.b16 %v649
          %v786 = vunpack.c.l.b16 %v650
          %v787 = vunpack.c.l.b16 %v651
          %v788 = vunpack.c.l.b16 %v652
          %v789 = vunpack.c.l.b16 %v653
          %v790 = vunpack.c.l.b16 %v654
          %v791 = vunpack.c.l.b16 %v655
          %v792 = vunpack.c.l.b16 %v656
          %v793 = vunpack.c.l.b16 %v657
          %v794 = vunpack.c.l.b16 %v658
          %v795 = vunpack.c.l.b16 %v659
          %v796 = vunpack.c.l.b16 %v660
          %v797 = vunpack.c.l.b16 %v661
          %v798 = vunpack.c.l.b16 %v662
          %v799 = vunpack.c.l.b16 %v663
          %v800 = vpack.c.b16 %v785, %v784
          %v801 = vpack.c.b16 %v787, %v786
          %v802 = vpack.c.b16 %v789, %v788
          %v803 = vpack.c.b16 %v791, %v790
          %v804 = vpack.c.b16 %v793, %v792
          %v805 = vpack.c.b16 %v795, %v794
          %v806 = vpack.c.b16 %v797, %v796
          %v807 = vpack.c.b16 %v799, %v798
          %816 = vmatprep.subr.bf16.mxu0 0
          %817 = vmatpush1.bf16.msra.mxu0 %v800
          %818 = vmatprep.subr.bf16.mxu0 0
          %819 = vmatpush1.bf16.msra.mxu0 %v801
          %820 = vmatprep.subr.bf16.mxu0 0
          %821 = vmatpush1.bf16.msra.mxu0 %v802
          %822 = vmatprep.subr.bf16.mxu0 0
          %823 = vmatpush1.bf16.msra.mxu0 %v803
          %824 = vmatprep.subr.bf16.mxu0 0
          %825 = vmatpush1.bf16.msra.mxu0 %v804
          %826 = vmatprep.subr.bf16.mxu0 0
          %827 = vmatpush1.bf16.msra.mxu0 %v805
          %828 = vmatprep.subr.bf16.mxu0 0
          %829 = vmatpush1.bf16.msra.mxu0 %v806
          %830 = vmatprep.subr.bf16.mxu0 0
          %831 = vmatpush1.bf16.msra.mxu0 %v807
          %832 = vmatprep.subr.bf16.mxu0 0
          %833 = vmatpush1.bf16.msra.mxu0 0
          %834 = vmatprep.subr.bf16.mxu0 0
          %835 = vmatpush1.bf16.msra.mxu0 0
          %836 = vmatprep.subr.bf16.mxu0 0
          %837 = vmatpush1.bf16.msra.mxu0 0
          %838 = vmatprep.subr.bf16.mxu0 0
          %839 = vmatpush1.bf16.msra.mxu0 0
          %840 = vmatprep.subr.bf16.mxu0 0
          %841 = vmatpush1.bf16.msra.mxu0 0
          %842 = vmatprep.subr.bf16.mxu0 0
          %843 = vmatpush1.bf16.msra.mxu0 0
          %844 = vmatprep.subr.bf16.mxu0 0
          %845 = vmatpush1.bf16.msra.mxu0 0
          %846 = vmatprep.subr.bf16.mxu0 0
          %847 = vmatpush1.bf16.msra.mxu0 0
          %848 = vmatprep.mubr.bf16.mxu0 0
          %849 = vmatmul.mubr.bf16.gmra.mrb[0].mxu0 %v647
          %v850 = vpop.f32.mrb[0].mxu0
          %v851 = vadd.f32 %v763, %v850
          %v852 = vpop.f32.mrb[0].mxu0
          %v853 = vpop.f32.mrb[0].mxu0
          %v854 = vpop.f32.mrb[0].mxu0
          %855 = vdwg.mxu0
          %v856 = vld [vmem:[#allocation11] sm:$0xff]
          %v857 = vadd.f32 %v851, %v856
          %v858 = vxor.u32 %v857, 2147483648
          %v859 = vmul.f32 %v858, 1.442695
          %v860 = vpow.pop %v859
          %v861 = vadd.f32 %v860, 1.0
          %v862 = vrcp.pop %v861
          %v863 = vmul.f32 1.0, %v862
          %s864 = scalar_lea.vmem [#allocation8], 64
          %v865 = vld [vmem:[%s864] sm:$0xf]
          %v866 = vld [vmem:[%s864 + $0x4] sm:$0xf]
          %v867 = vld [vmem:[%s864 + $0x8] sm:$0xf]
          %v868 = vld [vmem:[%s864 + $0xc] sm:$0xf]
          %v869 = vld [vmem:[%s864 + $0x10] sm:$0xf]
          %v870 = vld [vmem:[%s864 + $0x14] sm:$0xf]
          %v871 = vld [vmem:[%s864 + $0x18] sm:$0xf]
          %v872 = vld [vmem:[%s864 + $0x1c] sm:$0xf]
          %v873 = vld [vmem:[%s864 + $0x20] sm:$0xf]
          %v874 = vld [vmem:[%s864 + $0x24] sm:$0xf]
          %v875 = vld [vmem:[%s864 + $0x28] sm:$0xf]
          %v876 = vld [vmem:[%s864 + $0x2c] sm:$0xf]
          %v877 = vld [vmem:[%s864 + $0x30] sm:$0xf]
          %v878 = vld [vmem:[%s864 + $0x34] sm:$0xf]
          %v879 = vld [vmem:[%s864 + $0x38] sm:$0xf]
          %v880 = vld [vmem:[%s864 + $0x3c] sm:$0xf]
          %s881 = scalar_lea.vmem [#allocation10], 64
          %v882 = vld [vmem:[%s881] sm:$0xf]
          %v883 = vld [vmem:[%s881 + $0x4] sm:$0xf]
          %v884 = vld [vmem:[%s881 + $0x8] sm:$0xf]
          %v885 = vld [vmem:[%s881 + $0xc] sm:$0xf]
          %v886 = vld [vmem:[%s881 + $0x10] sm:$0xf]
          %v887 = vld [vmem:[%s881 + $0x14] sm:$0xf]
          %v888 = vld [vmem:[%s881 + $0x18] sm:$0xf]
          %v889 = vld [vmem:[%s881 + $0x1c] sm:$0xf]
          %v890 = vld [vmem:[%s881 + $0x20] sm:$0xf]
          %v891 = vld [vmem:[%s881 + $0x24] sm:$0xf]
          %v892 = vld [vmem:[%s881 + $0x28] sm:$0xf]
          %v893 = vld [vmem:[%s881 + $0x2c] sm:$0xf]
          %v894 = vld [vmem:[%s881 + $0x30] sm:$0xf]
          %v895 = vld [vmem:[%s881 + $0x34] sm:$0xf]
          %v896 = vld [vmem:[%s881 + $0x38] sm:$0xf]
          %v897 = vld [vmem:[%s881 + $0x3c] sm:$0xf]
          %v914 = vunpack.c.l.b16 %v882
          %v915 = vunpack.c.l.b16 %v883
          %v916 = vunpack.c.l.b16 %v884
          %v917 = vunpack.c.l.b16 %v885
          %v918 = vunpack.c.l.b16 %v886
          %v919 = vunpack.c.l.b16 %v887
          %v920 = vunpack.c.l.b16 %v888
          %v921 = vunpack.c.l.b16 %v889
          %v922 = vunpack.c.l.b16 %v890
          %v923 = vunpack.c.l.b16 %v891
          %v924 = vunpack.c.l.b16 %v892
          %v925 = vunpack.c.l.b16 %v893
          %v926 = vunpack.c.l.b16 %v894
          %v927 = vunpack.c.l.b16 %v895
          %v928 = vunpack.c.l.b16 %v896
          %v929 = vunpack.c.l.b16 %v897
          %v930 = vpack.c.b16 %v915, %v914
          %v931 = vpack.c.b16 %v917, %v916
          %v932 = vpack.c.b16 %v919, %v918
          %v933 = vpack.c.b16 %v921, %v920
          %v934 = vpack.c.b16 %v923, %v922
          %v935 = vpack.c.b16 %v925, %v924
          %v936 = vpack.c.b16 %v927, %v926
          %v937 = vpack.c.b16 %v929, %v928
          %946 = vmatprep.subr.bf16.mxu0 0
          %947 = vmatpush1.bf16.msra.mxu0 %v930
          %948 = vmatprep.subr.bf16.mxu0 0
          %949 = vmatpush1.bf16.msra.mxu0 %v931
          %950 = vmatprep.subr.bf16.mxu0 0
          %951 = vmatpush1.bf16.msra.mxu0 %v932
          %952 = vmatprep.subr.bf16.mxu0 0
          %953 = vmatpush1.bf16.msra.mxu0 %v933
          %954 = vmatprep.subr.bf16.mxu0 0
          %955 = vmatpush1.bf16.msra.mxu0 %v934
          %956 = vmatprep.subr.bf16.mxu0 0
          %957 = vmatpush1.bf16.msra.mxu0 %v935
          %958 = vmatprep.subr.bf16.mxu0 0
          %959 = vmatpush1.bf16.msra.mxu0 %v936
          %960 = vmatprep.subr.bf16.mxu0 0
          %961 = vmatpush1.bf16.msra.mxu0 %v937
          %962 = vmatprep.subr.bf16.mxu0 0
          %963 = vmatpush1.bf16.msra.mxu0 0
          %964 = vmatprep.subr.bf16.mxu0 0
          %965 = vmatpush1.bf16.msra.mxu0 0
          %966 = vmatprep.subr.bf16.mxu0 0
          %967 = vmatpush1.bf16.msra.mxu0 0
          %968 = vmatprep.subr.bf16.mxu0 0
          %969 = vmatpush1.bf16.msra.mxu0 0
          %970 = vmatprep.subr.bf16.mxu0 0
          %971 = vmatpush1.bf16.msra.mxu0 0
          %972 = vmatprep.subr.bf16.mxu0 0
          %973 = vmatpush1.bf16.msra.mxu0 0
          %974 = vmatprep.subr.bf16.mxu0 0
          %975 = vmatpush1.bf16.msra.mxu0 0
          %976 = vmatprep.subr.bf16.mxu0 0
          %977 = vmatpush1.bf16.msra.mxu0 0
          %978 = vmatprep.mubr.bf16.mxu0 0
          %979 = vmatmul.mubr.bf16.gmra.mrb[0].mxu0 0
          %v980 = vpop.f32.mrb[0].mxu0
          %v981 = vadd.f32 0.0, %v980
          %v982 = vpop.f32.mrb[0].mxu0
          %v983 = vpop.f32.mrb[0].mxu0
          %v984 = vpop.f32.mrb[0].mxu0
          %985 = vdwg.mxu0
          %v1002 = vunpack.c.l.b16 %v865
          %v1003 = vunpack.c.l.b16 %v866
          %v1004 = vunpack.c.l.b16 %v867
          %v1005 = vunpack.c.l.b16 %v868
          %v1006 = vunpack.c.l.b16 %v869
          %v1007 = vunpack.c.l.b16 %v870
          %v1008 = vunpack.c.l.b16 %v871
          %v1009 = vunpack.c.l.b16 %v872
          %v1010 = vunpack.c.l.b16 %v873
          %v1011 = vunpack.c.l.b16 %v874
          %v1012 = vunpack.c.l.b16 %v875
          %v1013 = vunpack.c.l.b16 %v876
          %v1014 = vunpack.c.l.b16 %v877
          %v1015 = vunpack.c.l.b16 %v878
          %v1016 = vunpack.c.l.b16 %v879
          %v1017 = vunpack.c.l.b16 %v880
          %v1018 = vpack.c.b16 %v1003, %v1002
          %v1019 = vpack.c.b16 %v1005, %v1004
          %v1020 = vpack.c.b16 %v1007, %v1006
          %v1021 = vpack.c.b16 %v1009, %v1008
          %v1022 = vpack.c.b16 %v1011, %v1010
          %v1023 = vpack.c.b16 %v1013, %v1012
          %v1024 = vpack.c.b16 %v1015, %v1014
          %v1025 = vpack.c.b16 %v1017, %v1016
          %1034 = vmatprep.subr.bf16.mxu0 0
          %1035 = vmatpush1.bf16.msra.mxu0 %v1018
          %1036 = vmatprep.subr.bf16.mxu0 0
          %1037 = vmatpush1.bf16.msra.mxu0 %v1019
          %1038 = vmatprep.subr.bf16.mxu0 0
          %1039 = vmatpush1.bf16.msra.mxu0 %v1020
          %1040 = vmatprep.subr.bf16.mxu0 0
          %1041 = vmatpush1.bf16.msra.mxu0 %v1021
          %1042 = vmatprep.subr.bf16.mxu0 0
          %1043 = vmatpush1.bf16.msra.mxu0 %v1022
          %1044 = vmatprep.subr.bf16.mxu0 0
          %1045 = vmatpush1.bf16.msra.mxu0 %v1023
          %1046 = vmatprep.subr.bf16.mxu0 0
          %1047 = vmatpush1.bf16.msra.mxu0 %v1024
          %1048 = vmatprep.subr.bf16.mxu0 0
          %1049 = vmatpush1.bf16.msra.mxu0 %v1025
          %1050 = vmatprep.subr.bf16.mxu0 0
          %1051 = vmatpush1.bf16.msra.mxu0 0
          %1052 = vmatprep.subr.bf16.mxu0 0
          %1053 = vmatpush1.bf16.msra.mxu0 0
          %1054 = vmatprep.subr.bf16.mxu0 0
          %1055 = vmatpush1.bf16.msra.mxu0 0
          %1056 = vmatprep.subr.bf16.mxu0 0
          %1057 = vmatpush1.bf16.msra.mxu0 0
          %1058 = vmatprep.subr.bf16.mxu0 0
          %1059 = vmatpush1.bf16.msra.mxu0 0
          %1060 = vmatprep.subr.bf16.mxu0 0
          %1061 = vmatpush1.bf16.msra.mxu0 0
          %1062 = vmatprep.subr.bf16.mxu0 0
          %1063 = vmatpush1.bf16.msra.mxu0 0
          %1064 = vmatprep.subr.bf16.mxu0 0
          %1065 = vmatpush1.bf16.msra.mxu0 0
          %1066 = vmatprep.mubr.bf16.mxu0 0
          %1067 = vmatmul.mubr.bf16.gmra.mrb[0].mxu0 %v647
          %v1068 = vpop.f32.mrb[0].mxu0
          %v1069 = vadd.f32 %v981, %v1068
          %v1070 = vpop.f32.mrb[0].mxu0
          %v1071 = vpop.f32.mrb[0].mxu0
          %v1072 = vpop.f32.mrb[0].mxu0
          %1073 = vdwg.mxu0
          %s1074 = scalar_lea.vmem [#allocation11], 8
          %v1075 = vld [vmem:[%s1074] sm:$0xff]
          %v1076 = vadd.f32 %v1069, %v1075
          %v1077 = vxor.u32 %v1076, 2147483648
          %v1078 = vmul.f32 %v1077, 1.442695
          %v1079 = vpow.pop %v1078
          %v1080 = vadd.f32 %v1079, 1.0
          %v1081 = vrcp.pop %v1080
          %v1082 = vmul.f32 1.0, %v1081
          %s1083 = scalar_lea.vmem [#allocation8], 128
          %v1084 = vld [vmem:[%s1083] sm:$0xf]
          %v1085 = vld [vmem:[%s1083 + $0x4] sm:$0xf]
          %v1086 = vld [vmem:[%s1083 + $0x8] sm:$0xf]
          %v1087 = vld [vmem:[%s1083 + $0xc] sm:$0xf]
          %v1088 = vld [vmem:[%s1083 + $0x10] sm:$0xf]
          %v1089 = vld [vmem:[%s1083 + $0x14] sm:$0xf]
          %v1090 = vld [vmem:[%s1083 + $0x18] sm:$0xf]
          %v1091 = vld [vmem:[%s1083 + $0x1c] sm:$0xf]
          %v1092 = vld [vmem:[%s1083 + $0x20] sm:$0xf]
          %v1093 = vld [vmem:[%s1083 + $0x24] sm:$0xf]
          %v1094 = vld [vmem:[%s1083 + $0x28] sm:$0xf]
          %v1095 = vld [vmem:[%s1083 + $0x2c] sm:$0xf]
          %v1096 = vld [vmem:[%s1083 + $0x30] sm:$0xf]
          %v1097 = vld [vmem:[%s1083 + $0x34] sm:$0xf]
          %v1098 = vld [vmem:[%s1083 + $0x38] sm:$0xf]
          %v1099 = vld [vmem:[%s1083 + $0x3c] sm:$0xf]
          %s1100 = scalar_lea.vmem [#allocation11], 16
          %v1101 = vld [vmem:[%s1100] sm:$0xff]
          %v1118 = vunpack.c.l.b16 %v1084
          %v1119 = vunpack.c.l.b16 %v1085
          %v1120 = vunpack.c.l.b16 %v1086
          %v1121 = vunpack.c.l.b16 %v1087
          %v1122 = vunpack.c.l.b16 %v1088
          %v1123 = vunpack.c.l.b16 %v1089
          %v1124 = vunpack.c.l.b16 %v1090
          %v1125 = vunpack.c.l.b16 %v1091
          %v1126 = vunpack.c.l.b16 %v1092
          %v1127 = vunpack.c.l.b16 %v1093
          %v1128 = vunpack.c.l.b16 %v1094
          %v1129 = vunpack.c.l.b16 %v1095
          %v1130 = vunpack.c.l.b16 %v1096
          %v1131 = vunpack.c.l.b16 %v1097
          %v1132 = vunpack.c.l.b16 %v1098
          %v1133 = vunpack.c.l.b16 %v1099
          %v1134 = vpack.c.b16 %v1119, %v1118
          %v1135 = vpack.c.b16 %v1121, %v1120
          %v1136 = vpack.c.b16 %v1123, %v1122
          %v1137 = vpack.c.b16 %v1125, %v1124
          %v1138 = vpack.c.b16 %v1127, %v1126
          %v1139 = vpack.c.b16 %v1129, %v1128
          %v1140 = vpack.c.b16 %v1131, %v1130
          %v1141 = vpack.c.b16 %v1133, %v1132
          %1150 = vmatprep.subr.bf16.mxu0 0
          %1151 = vmatpush1.bf16.msra.mxu0 %v1134
          %1152 = vmatprep.subr.bf16.mxu0 0
          %1153 = vmatpush1.bf16.msra.mxu0 %v1135
          %1154 = vmatprep.subr.bf16.mxu0 0
          %1155 = vmatpush1.bf16.msra.mxu0 %v1136
          %1156 = vmatprep.subr.bf16.mxu0 0
          %1157 = vmatpush1.bf16.msra.mxu0 %v1137
          %1158 = vmatprep.subr.bf16.mxu0 0
          %1159 = vmatpush1.bf16.msra.mxu0 %v1138
          %1160 = vmatprep.subr.bf16.mxu0 0
          %1161 = vmatpush1.bf16.msra.mxu0 %v1139
          %1162 = vmatprep.subr.bf16.mxu0 0
          %1163 = vmatpush1.bf16.msra.mxu0 %v1140
          %1164 = vmatprep.subr.bf16.mxu0 0
          %1165 = vmatpush1.bf16.msra.mxu0 %v1141
          %1166 = vmatprep.subr.bf16.mxu0 0
          %1167 = vmatpush1.bf16.msra.mxu0 0
          %1168 = vmatprep.subr.bf16.mxu0 0
          %1169 = vmatpush1.bf16.msra.mxu0 0
          %1170 = vmatprep.subr.bf16.mxu0 0
          %1171 = vmatpush1.bf16.msra.mxu0 0
          %1172 = vmatprep.subr.bf16.mxu0 0
          %1173 = vmatpush1.bf16.msra.mxu0 0
          %1174 = vmatprep.subr.bf16.mxu0 0
          %1175 = vmatpush1.bf16.msra.mxu0 0
          %1176 = vmatprep.subr.bf16.mxu0 0
          %1177 = vmatpush1.bf16.msra.mxu0 0
          %1178 = vmatprep.subr.bf16.mxu0 0
          %1179 = vmatpush1.bf16.msra.mxu0 0
          %1180 = vmatprep.subr.bf16.mxu0 0
          %1181 = vmatpush1.bf16.msra.mxu0 0
          %1182 = vmatprep.mubr.bf16.mxu0 0
          %1183 = vmatmul.mubr.bf16.gmra.mrb[0].mxu0 %v647
          %v1184 = vpop.f32.mrb[0].mxu0
          %v1185 = vadd.f32 %v1101, %v1184
          %v1186 = vpop.f32.mrb[0].mxu0
          %v1187 = vpop.f32.mrb[0].mxu0
          %v1188 = vpop.f32.mrb[0].mxu0
          %1189 = vdwg.mxu0
          %s1190 = scalar_lea.vmem [#allocation10], 128
          %v1191 = vld [vmem:[%s1190] sm:$0xf]
          %v1192 = vld [vmem:[%s1190 + $0x4] sm:$0xf]
          %v1193 = vld [vmem:[%s1190 + $0x8] sm:$0xf]
          %v1194 = vld [vmem:[%s1190 + $0xc] sm:$0xf]
          %v1195 = vld [vmem:[%s1190 + $0x10] sm:$0xf]
          %v1196 = vld [vmem:[%s1190 + $0x14] sm:$0xf]
          %v1197 = vld [vmem:[%s1190 + $0x18] sm:$0xf]
          %v1198 = vld [vmem:[%s1190 + $0x1c] sm:$0xf]
          %v1199 = vld [vmem:[%s1190 + $0x20] sm:$0xf]
          %v1200 = vld [vmem:[%s1190 + $0x24] sm:$0xf]
          %v1201 = vld [vmem:[%s1190 + $0x28] sm:$0xf]
          %v1202 = vld [vmem:[%s1190 + $0x2c] sm:$0xf]
          %v1203 = vld [vmem:[%s1190 + $0x30] sm:$0xf]
          %v1204 = vld [vmem:[%s1190 + $0x34] sm:$0xf]
          %v1205 = vld [vmem:[%s1190 + $0x38] sm:$0xf]
          %v1206 = vld [vmem:[%s1190 + $0x3c] sm:$0xf]
          %s1207 = scalar_lea.vmem [#allocation11], 24
          %v1208 = vld [vmem:[%s1207] sm:$0xff]
          %v1225 = vunpack.c.l.b16 %v1191
          %v1226 = vunpack.c.l.b16 %v1192
          %v1227 = vunpack.c.l.b16 %v1193
          %v1228 = vunpack.c.l.b16 %v1194
          %v1229 = vunpack.c.l.b16 %v1195
          %v1230 = vunpack.c.l.b16 %v1196
          %v1231 = vunpack.c.l.b16 %v1197
          %v1232 = vunpack.c.l.b16 %v1198
          %v1233 = vunpack.c.l.b16 %v1199
          %v1234 = vunpack.c.l.b16 %v1200
          %v1235 = vunpack.c.l.b16 %v1201
          %v1236 = vunpack.c.l.b16 %v1202
          %v1237 = vunpack.c.l.b16 %v1203
          %v1238 = vunpack.c.l.b16 %v1204
          %v1239 = vunpack.c.l.b16 %v1205
          %v1240 = vunpack.c.l.b16 %v1206
          %v1241 = vpack.c.b16 %v1226, %v1225
          %v1242 = vpack.c.b16 %v1228, %v1227
          %v1243 = vpack.c.b16 %v1230, %v1229
          %v1244 = vpack.c.b16 %v1232, %v1231
          %v1245 = vpack.c.b16 %v1234, %v1233
          %v1246 = vpack.c.b16 %v1236, %v1235
          %v1247 = vpack.c.b16 %v1238, %v1237
          %v1248 = vpack.c.b16 %v1240, %v1239
          %1257 = vmatprep.subr.bf16.mxu0 0
          %1258 = vmatpush1.bf16.msra.mxu0 %v1241
          %1259 = vmatprep.subr.bf16.mxu0 0
          %1260 = vmatpush1.bf16.msra.mxu0 %v1242
          %1261 = vmatprep.subr.bf16.mxu0 0
          %1262 = vmatpush1.bf16.msra.mxu0 %v1243
          %1263 = vmatprep.subr.bf16.mxu0 0
          %1264 = vmatpush1.bf16.msra.mxu0 %v1244
          %1265 = vmatprep.subr.bf16.mxu0 0
          %1266 = vmatpush1.bf16.msra.mxu0 %v1245
          %1267 = vmatprep.subr.bf16.mxu0 0
          %1268 = vmatpush1.bf16.msra.mxu0 %v1246
          %1269 = vmatprep.subr.bf16.mxu0 0
          %1270 = vmatpush1.bf16.msra.mxu0 %v1247
          %1271 = vmatprep.subr.bf16.mxu0 0
          %1272 = vmatpush1.bf16.msra.mxu0 %v1248
          %1273 = vmatprep.subr.bf16.mxu0 0
          %1274 = vmatpush1.bf16.msra.mxu0 0
          %1275 = vmatprep.subr.bf16.mxu0 0
          %1276 = vmatpush1.bf16.msra.mxu0 0
          %1277 = vmatprep.subr.bf16.mxu0 0
          %1278 = vmatpush1.bf16.msra.mxu0 0
          %1279 = vmatprep.subr.bf16.mxu0 0
          %1280 = vmatpush1.bf16.msra.mxu0 0
          %1281 = vmatprep.subr.bf16.mxu0 0
          %1282 = vmatpush1.bf16.msra.mxu0 0
          %1283 = vmatprep.subr.bf16.mxu0 0
          %1284 = vmatpush1.bf16.msra.mxu0 0
          %1285 = vmatprep.subr.bf16.mxu0 0
          %1286 = vmatpush1.bf16.msra.mxu0 0
          %1287 = vmatprep.subr.bf16.mxu0 0
          %1288 = vmatpush1.bf16.msra.mxu0 0
          %1289 = vmatprep.mubr.bf16.mxu0 0
          %1290 = vmatmul.mubr.bf16.gmra.mrb[0].mxu0 0
          %v1291 = vpop.f32.mrb[0].mxu0
          %v1292 = vadd.f32 %v1208, %v1291
          %v1293 = vpop.f32.mrb[0].mxu0
          %v1294 = vpop.f32.mrb[0].mxu0
          %v1295 = vpop.f32.mrb[0].mxu0
          %1296 = vdwg.mxu0
          %v1297 = vmul.f32 %v863, %v1292
          %v1298 = vadd.f32 %v1185, %v1297
          %v1299 = vtanh.pop %v1298
          %v1300 = vsub.f32 1.0, %v1082
          %v1301 = vmul.f32 %v1300, %v1299
          %v1302 = vmul.f32 %v1082, 0.0
          %v1303 = vadd.f32 %v1301, %v1302
          %v1305 = vcombine.high %v1303, %v1303
          %v1307 = vunpack.c.l.s4 1966171168
          %v1308 = vunpack.c.0.s8 %v1307
          %v1309 = vlaneseq
          %v1310 = vshrl.u32 %v1309, 7
          %v1311 = vsub.s32 %v1308, %v1310
          %v1312 = vrot.slane %v1303, %v1311
          %v1314 = vunpack.c.l.s4 1966171168
          %v1315 = vunpack.c.0.s8 %v1314
          %v1316 = vlaneseq
          %v1317 = vshrl.u32 %v1316, 7
          %v1318 = vsub.s32 %v1315, %v1317
          %v1319 = vrot.slane %v1305, %v1318
          %v1320 = vcombine.high %v1312, %v1312
          %v1321 = vcombine.high %v1319, %v1319
          %v1323 = vunpack.c.l.s4 1966171168
          %v1324 = vunpack.c.0.s8 %v1323
          %v1325 = vlaneseq
          %v1326 = vshrl.u32 %v1325, 7
          %v1327 = vsub.s32 %v1324, %v1326
          %v1328 = vrot.slane %v1312, %v1327
          %v1330 = vunpack.c.l.s4 1966171168
          %v1331 = vunpack.c.0.s8 %v1330
          %v1332 = vlaneseq
          %v1333 = vshrl.u32 %v1332, 7
          %v1334 = vsub.s32 %v1331, %v1333
          %v1335 = vrot.slane %v1319, %v1334
          %v1337 = vunpack.c.l.s4 1966171168
          %v1338 = vunpack.c.0.s8 %v1337
          %v1339 = vlaneseq
          %v1340 = vshrl.u32 %v1339, 7
          %v1341 = vsub.s32 %v1338, %v1340
          %v1342 = vrot.slane %v1320, %v1341
          %v1344 = vunpack.c.l.s4 1966171168
          %v1345 = vunpack.c.0.s8 %v1344
          %v1346 = vlaneseq
          %v1347 = vshrl.u32 %v1346, 7
          %v1348 = vsub.s32 %v1345, %v1347
          %v1349 = vrot.slane %v1321, %v1348
          %v1350 = vcombine.high %v1328, %v1328
          %v1351 = vcombine.high %v1335, %v1335
          %v1352 = vcombine.high %v1342, %v1342
          %v1353 = vcombine.high %v1349, %v1349
          %1362 = vst [vmem:[#allocation2] sm:$0x1] %v1328
          %1363 = vst [vmem:[#allocation2 + $0x8] sm:$0x1] %v1342
          %1364 = vst [vmem:[#allocation2 + $0x10] sm:$0x1] %v1350
          %1365 = vst [vmem:[#allocation2 + $0x18] sm:$0x1] %v1352
          %1366 = vst [vmem:[#allocation2 + $0x20] sm:$0x1] %v1335
          %1367 = vst [vmem:[#allocation2 + $0x28] sm:$0x1] %v1349
          %1368 = vst [vmem:[#allocation2 + $0x30] sm:$0x1] %v1351
          %1369 = vst [vmem:[#allocation2 + $0x38] sm:$0x1] %v1353
          %s1370 = scalar_lea.vmem [#allocation5], 4
          %v1371 = vld [vmem:[%s1370] sm:$0xf]
          %v1372 = vpack.c.bf16 %v1303, %v1303
          %v1373 = vld [vmem:[#allocation8] sm:$0xf]
          %v1374 = vld [vmem:[#allocation8 + $0x4] sm:$0xf]
          %v1375 = vld [vmem:[#allocation8 + $0x8] sm:$0xf]
          %v1376 = vld [vmem:[#allocation8 + $0xc] sm:$0xf]
          %v1377 = vld [vmem:[#allocation8 + $0x10] sm:$0xf]
          %v1378 = vld [vmem:[#allocation8 + $0x14] sm:$0xf]
          %v1379 = vld [vmem:[#allocation8 + $0x18] sm:$0xf]
          %v1380 = vld [vmem:[#allocation8 + $0x1c] sm:$0xf]
          %v1381 = vld [vmem:[#allocation8 + $0x20] sm:$0xf]
          %v1382 = vld [vmem:[#allocation8 + $0x24] sm:$0xf]
          %v1383 = vld [vmem:[#allocation8 + $0x28] sm:$0xf]
          %v1384 = vld [vmem:[#allocation8 + $0x2c] sm:$0xf]
          %v1385 = vld [vmem:[#allocation8 + $0x30] sm:$0xf]
          %v1386 = vld [vmem:[#allocation8 + $0x34] sm:$0xf]
          %v1387 = vld [vmem:[#allocation8 + $0x38] sm:$0xf]
          %v1388 = vld [vmem:[#allocation8 + $0x3c] sm:$0xf]
          %v1389 = vld [vmem:[#allocation10] sm:$0xf]
          %v1390 = vld [vmem:[#allocation10 + $0x4] sm:$0xf]
          %v1391 = vld [vmem:[#allocation10 + $0x8] sm:$0xf]
          %v1392 = vld [vmem:[#allocation10 + $0xc] sm:$0xf]
          %v1393 = vld [vmem:[#allocation10 + $0x10] sm:$0xf]
          %v1394 = vld [vmem:[#allocation10 + $0x14] sm:$0xf]
          %v1395 = vld [vmem:[#allocation10 + $0x18] sm:$0xf]
          %v1396 = vld [vmem:[#allocation10 + $0x1c] sm:$0xf]
          %v1397 = vld [vmem:[#allocation10 + $0x20] sm:$0xf]
          %v1398 = vld [vmem:[#allocation10 + $0x24] sm:$0xf]
          %v1399 = vld [vmem:[#allocation10 + $0x28] sm:$0xf]
          %v1400 = vld [vmem:[#allocation10 + $0x2c] sm:$0xf]
          %v1401 = vld [vmem:[#allocation10 + $0x30] sm:$0xf]
          %v1402 = vld [vmem:[#allocation10 + $0x34] sm:$0xf]
          %v1403 = vld [vmem:[#allocation10 + $0x38] sm:$0xf]
          %v1404 = vld [vmem:[#allocation10 + $0x3c] sm:$0xf]
          %v1421 = vunpack.c.l.b16 %v1389
          %v1422 = vunpack.c.l.b16 %v1390
          %v1423 = vunpack.c.l.b16 %v1391
          %v1424 = vunpack.c.l.b16 %v1392
          %v1425 = vunpack.c.l.b16 %v1393
          %v1426 = vunpack.c.l.b16 %v1394
          %v1427 = vunpack.c.l.b16 %v1395
          %v1428 = vunpack.c.l.b16 %v1396
          %v1429 = vunpack.c.l.b16 %v1397
          %v1430 = vunpack.c.l.b16 %v1398
          %v1431 = vunpack.c.l.b16 %v1399
          %v1432 = vunpack.c.l.b16 %v1400
          %v1433 = vunpack.c.l.b16 %v1401
          %v1434 = vunpack.c.l.b16 %v1402
          %v1435 = vunpack.c.l.b16 %v1403
          %v1436 = vunpack.c.l.b16 %v1404
          %v1437 = vpack.c.b16 %v1422, %v1421
          %v1438 = vpack.c.b16 %v1424, %v1423
          %v1439 = vpack.c.b16 %v1426, %v1425
          %v1440 = vpack.c.b16 %v1428, %v1427
          %v1441 = vpack.c.b16 %v1430, %v1429
          %v1442 = vpack.c.b16 %v1432, %v1431
          %v1443 = vpack.c.b16 %v1434, %v1433
          %v1444 = vpack.c.b16 %v1436, %v1435
          %1453 = vmatprep.subr.bf16.mxu0 0
          %1454 = vmatpush1.bf16.msra.mxu0 %v1437
          %1455 = vmatprep.subr.bf16.mxu0 0
          %1456 = vmatpush1.bf16.msra.mxu0 %v1438
          %1457 = vmatprep.subr.bf16.mxu0 0
          %1458 = vmatpush1.bf16.msra.mxu0 %v1439
          %1459 = vmatprep.subr.bf16.mxu0 0
          %1460 = vmatpush1.bf16.msra.mxu0 %v1440
          %1461 = vmatprep.subr.bf16.mxu0 0
          %1462 = vmatpush1.bf16.msra.mxu0 %v1441
          %1463 = vmatprep.subr.bf16.mxu0 0
          %1464 = vmatpush1.bf16.msra.mxu0 %v1442
          %1465 = vmatprep.subr.bf16.mxu0 0
          %1466 = vmatpush1.bf16.msra.mxu0 %v1443
          %1467 = vmatprep.subr.bf16.mxu0 0
          %1468 = vmatpush1.bf16.msra.mxu0 %v1444
          %1469 = vmatprep.subr.bf16.mxu0 0
          %1470 = vmatpush1.bf16.msra.mxu0 0
          %1471 = vmatprep.subr.bf16.mxu0 0
          %1472 = vmatpush1.bf16.msra.mxu0 0
          %1473 = vmatprep.subr.bf16.mxu0 0
          %1474 = vmatpush1.bf16.msra.mxu0 0
          %1475 = vmatprep.subr.bf16.mxu0 0
          %1476 = vmatpush1.bf16.msra.mxu0 0
          %1477 = vmatprep.subr.bf16.mxu0 0
          %1478 = vmatpush1.bf16.msra.mxu0 0
          %1479 = vmatprep.subr.bf16.mxu0 0
          %1480 = vmatpush1.bf16.msra.mxu0 0
          %1481 = vmatprep.subr.bf16.mxu0 0
          %1482 = vmatpush1.bf16.msra.mxu0 0
          %1483 = vmatprep.subr.bf16.mxu0 0
          %1484 = vmatpush1.bf16.msra.mxu0 0
          %1485 = vmatprep.mubr.bf16.mxu0 0
          %1486 = vmatmul.mubr.bf16.gmra.mrb[0].mxu0 %v1372
          %v1487 = vpop.f32.mrb[0].mxu0
          %v1488 = vadd.f32 0.0, %v1487
          %v1489 = vpop.f32.mrb[0].mxu0
          %v1490 = vpop.f32.mrb[0].mxu0
          %v1491 = vpop.f32.mrb[0].mxu0
          %1492 = vdwg.mxu0
          %v1509 = vunpack.c.l.b16 %v1373
          %v1510 = vunpack.c.l.b16 %v1374
          %v1511 = vunpack.c.l.b16 %v1375
          %v1512 = vunpack.c.l.b16 %v1376
          %v1513 = vunpack.c.l.b16 %v1377
          %v1514 = vunpack.c.l.b16 %v1378
          %v1515 = vunpack.c.l.b16 %v1379
          %v1516 = vunpack.c.l.b16 %v1380
          %v1517 = vunpack.c.l.b16 %v1381
          %v1518 = vunpack.c.l.b16 %v1382
          %v1519 = vunpack.c.l.b16 %v1383
          %v1520 = vunpack.c.l.b16 %v1384
          %v1521 = vunpack.c.l.b16 %v1385
          %v1522 = vunpack.c.l.b16 %v1386
          %v1523 = vunpack.c.l.b16 %v1387
          %v1524 = vunpack.c.l.b16 %v1388
          %v1525 = vpack.c.b16 %v1510, %v1509
          %v1526 = vpack.c.b16 %v1512, %v1511
          %v1527 = vpack.c.b16 %v1514, %v1513
          %v1528 = vpack.c.b16 %v1516, %v1515
          %v1529 = vpack.c.b16 %v1518, %v1517
          %v1530 = vpack.c.b16 %v1520, %v1519
          %v1531 = vpack.c.b16 %v1522, %v1521
          %v1532 = vpack.c.b16 %v1524, %v1523
          %1541 = vmatprep.subr.bf16.mxu0 0
          %1542 = vmatpush1.bf16.msra.mxu0 %v1525
          %1543 = vmatprep.subr.bf16.mxu0 0
          %1544 = vmatpush1.bf16.msra.mxu0 %v1526
          %1545 = vmatprep.subr.bf16.mxu0 0
          %1546 = vmatpush1.bf16.msra.mxu0 %v1527
          %1547 = vmatprep.subr.bf16.mxu0 0
          %1548 = vmatpush1.bf16.msra.mxu0 %v1528
          %1549 = vmatprep.subr.bf16.mxu0 0
          %1550 = vmatpush1.bf16.msra.mxu0 %v1529
          %1551 = vmatprep.subr.bf16.mxu0 0
          %1552 = vmatpush1.bf16.msra.mxu0 %v1530
          %1553 = vmatprep.subr.bf16.mxu0 0
          %1554 = vmatpush1.bf16.msra.mxu0 %v1531
          %1555 = vmatprep.subr.bf16.mxu0 0
          %1556 = vmatpush1.bf16.msra.mxu0 %v1532
          %1557 = vmatprep.subr.bf16.mxu0 0
          %1558 = vmatpush1.bf16.msra.mxu0 0
          %1559 = vmatprep.subr.bf16.mxu0 0
          %1560 = vmatpush1.bf16.msra.mxu0 0
          %1561 = vmatprep.subr.bf16.mxu0 0
          %1562 = vmatpush1.bf16.msra.mxu0 0
          %1563 = vmatprep.subr.bf16.mxu0 0
          %1564 = vmatpush1.bf16.msra.mxu0 0
          %1565 = vmatprep.subr.bf16.mxu0 0
          %1566 = vmatpush1.bf16.msra.mxu0 0
          %1567 = vmatprep.subr.bf16.mxu0 0
          %1568 = vmatpush1.bf16.msra.mxu0 0
          %1569 = vmatprep.subr.bf16.mxu0 0
          %1570 = vmatpush1.bf16.msra.mxu0 0
          %1571 = vmatprep.subr.bf16.mxu0 0
          %1572 = vmatpush1.bf16.msra.mxu0 0
          %1573 = vmatprep.mubr.bf16.mxu0 0
          %1574 = vmatmul.mubr.bf16.gmra.mrb[0].mxu0 %v1371
          %v1575 = vpop.f32.mrb[0].mxu0
          %v1576 = vadd.f32 %v1488, %v1575
          %v1577 = vpop.f32.mrb[0].mxu0
          %v1578 = vpop.f32.mrb[0].mxu0
          %v1579 = vpop.f32.mrb[0].mxu0
          %1580 = vdwg.mxu0
          %v1581 = vld [vmem:[#allocation11] sm:$0xff]
          %v1582 = vadd.f32 %v1576, %v1581
          %v1583 = vxor.u32 %v1582, 2147483648
          %v1584 = vmul.f32 %v1583, 1.442695
          %v1585 = vpow.pop %v1584
          %v1586 = vadd.f32 %v1585, 1.0
          %v1587 = vrcp.pop %v1586
          %v1588 = vmul.f32 1.0, %v1587
          %v1589 = vld [vmem:[%s864] sm:$0xf]
          %v1590 = vld [vmem:[%s864 + $0x4] sm:$0xf]
          %v1591 = vld [vmem:[%s864 + $0x8] sm:$0xf]
          %v1592 = vld [vmem:[%s864 + $0xc] sm:$0xf]
          %v1593 = vld [vmem:[%s864 + $0x10] sm:$0xf]
          %v1594 = vld [vmem:[%s864 + $0x14] sm:$0xf]
          %v1595 = vld [vmem:[%s864 + $0x18] sm:$0xf]
          %v1596 = vld [vmem:[%s864 + $0x1c] sm:$0xf]
          %v1597 = vld [vmem:[%s864 + $0x20] sm:$0xf]
          %v1598 = vld [vmem:[%s864 + $0x24] sm:$0xf]
          %v1599 = vld [vmem:[%s864 + $0x28] sm:$0xf]
          %v1600 = vld [vmem:[%s864 + $0x2c] sm:$0xf]
          %v1601 = vld [vmem:[%s864 + $0x30] sm:$0xf]
          %v1602 = vld [vmem:[%s864 + $0x34] sm:$0xf]
          %v1603 = vld [vmem:[%s864 + $0x38] sm:$0xf]
          %v1604 = vld [vmem:[%s864 + $0x3c] sm:$0xf]
          %v1605 = vld [vmem:[%s881] sm:$0xf]
          %v1606 = vld [vmem:[%s881 + $0x4] sm:$0xf]
          %v1607 = vld [vmem:[%s881 + $0x8] sm:$0xf]
          %v1608 = vld [vmem:[%s881 + $0xc] sm:$0xf]
          %v1609 = vld [vmem:[%s881 + $0x10] sm:$0xf]
          %v1610 = vld [vmem:[%s881 + $0x14] sm:$0xf]
          %v1611 = vld [vmem:[%s881 + $0x18] sm:$0xf]
          %v1612 = vld [vmem:[%s881 + $0x1c] sm:$0xf]
          %v1613 = vld [vmem:[%s881 + $0x20] sm:$0xf]
          %v1614 = vld [vmem:[%s881 + $0x24] sm:$0xf]
          %v1615 = vld [vmem:[%s881 + $0x28] sm:$0xf]
          %v1616 = vld [vmem:[%s881 + $0x2c] sm:$0xf]
          %v1617 = vld [vmem:[%s881 + $0x30] sm:$0xf]
          %v1618 = vld [vmem:[%s881 + $0x34] sm:$0xf]
          %v1619 = vld [vmem:[%s881 + $0x38] sm:$0xf]
          %v1620 = vld [vmem:[%s881 + $0x3c] sm:$0xf]
          %v1637 = vunpack.c.l.b16 %v1605
          %v1638 = vunpack.c.l.b16 %v1606
          %v1639 = vunpack.c.l.b16 %v1607
          %v1640 = vunpack.c.l.b16 %v1608
          %v1641 = vunpack.c.l.b16 %v1609
          %v1642 = vunpack.c.l.b16 %v1610
          %v1643 = vunpack.c.l.b16 %v1611
          %v1644 = vunpack.c.l.b16 %v1612
          %v1645 = vunpack.c.l.b16 %v1613
          %v1646 = vunpack.c.l.b16 %v1614
          %v1647 = vunpack.c.l.b16 %v1615
          %v1648 = vunpack.c.l.b16 %v1616
          %v1649 = vunpack.c.l.b16 %v1617
          %v1650 = vunpack.c.l.b16 %v1618
          %v1651 = vunpack.c.l.b16 %v1619
          %v1652 = vunpack.c.l.b16 %v1620
          %v1653 = vpack.c.b16 %v1638, %v1637
          %v1654 = vpack.c.b16 %v1640, %v1639
          %v1655 = vpack.c.b16 %v1642, %v1641
          %v1656 = vpack.c.b16 %v1644, %v1643
          %v1657 = vpack.c.b16 %v1646, %v1645
          %v1658 = vpack.c.b16 %v1648, %v1647
          %v1659 = vpack.c.b16 %v1650, %v1649
          %v1660 = vpack.c.b16 %v1652, %v1651
          %1669 = vmatprep.subr.bf16.mxu0 0
          %1670 = vmatpush1.bf16.msra.mxu0 %v1653
          %1671 = vmatprep.subr.bf16.mxu0 0
          %1672 = vmatpush1.bf16.msra.mxu0 %v1654
          %1673 = vmatprep.subr.bf16.mxu0 0
          %1674 = vmatpush1.bf16.msra.mxu0 %v1655
          %1675 = vmatprep.subr.bf16.mxu0 0
          %1676 = vmatpush1.bf16.msra.mxu0 %v1656
          %1677 = vmatprep.subr.bf16.mxu0 0
          %1678 = vmatpush1.bf16.msra.mxu0 %v1657
          %1679 = vmatprep.subr.bf16.mxu0 0
          %1680 = vmatpush1.bf16.msra.mxu0 %v1658
          %1681 = vmatprep.subr.bf16.mxu0 0
          %1682 = vmatpush1.bf16.msra.mxu0 %v1659
          %1683 = vmatprep.subr.bf16.mxu0 0
          %1684 = vmatpush1.bf16.msra.mxu0 %v1660
          %1685 = vmatprep.subr.bf16.mxu0 0
          %1686 = vmatpush1.bf16.msra.mxu0 0
          %1687 = vmatprep.subr.bf16.mxu0 0
          %1688 = vmatpush1.bf16.msra.mxu0 0
          %1689 = vmatprep.subr.bf16.mxu0 0
          %1690 = vmatpush1.bf16.msra.mxu0 0
          %1691 = vmatprep.subr.bf16.mxu0 0
          %1692 = vmatpush1.bf16.msra.mxu0 0
          %1693 = vmatprep.subr.bf16.mxu0 0
          %1694 = vmatpush1.bf16.msra.mxu0 0
          %1695 = vmatprep.subr.bf16.mxu0 0
          %1696 = vmatpush1.bf16.msra.mxu0 0
          %1697 = vmatprep.subr.bf16.mxu0 0
          %1698 = vmatpush1.bf16.msra.mxu0 0
          %1699 = vmatprep.subr.bf16.mxu0 0
          %1700 = vmatpush1.bf16.msra.mxu0 0
          %1701 = vmatprep.mubr.bf16.mxu0 0
          %1702 = vmatmul.mubr.bf16.gmra.mrb[0].mxu0 %v1372
          %v1703 = vpop.f32.mrb[0].mxu0
          %v1704 = vadd.f32 0.0, %v1703
          %v1705 = vpop.f32.mrb[0].mxu0
          %v1706 = vpop.f32.mrb[0].mxu0
          %v1707 = vpop.f32.mrb[0].mxu0
          %1708 = vdwg.mxu0
          %v1725 = vunpack.c.l.b16 %v1589
          %v1726 = vunpack.c.l.b16 %v1590
          %v1727 = vunpack.c.l.b16 %v1591
          %v1728 = vunpack.c.l.b16 %v1592
          %v1729 = vunpack.c.l.b16 %v1593
          %v1730 = vunpack.c.l.b16 %v1594
          %v1731 = vunpack.c.l.b16 %v1595
          %v1732 = vunpack.c.l.b16 %v1596
          %v1733 = vunpack.c.l.b16 %v1597
          %v1734 = vunpack.c.l.b16 %v1598
          %v1735 = vunpack.c.l.b16 %v1599
          %v1736 = vunpack.c.l.b16 %v1600
          %v1737 = vunpack.c.l.b16 %v1601
          %v1738 = vunpack.c.l.b16 %v1602
          %v1739 = vunpack.c.l.b16 %v1603
          %v1740 = vunpack.c.l.b16 %v1604
          %v1741 = vpack.c.b16 %v1726, %v1725
          %v1742 = vpack.c.b16 %v1728, %v1727
          %v1743 = vpack.c.b16 %v1730, %v1729
          %v1744 = vpack.c.b16 %v1732, %v1731
          %v1745 = vpack.c.b16 %v1734, %v1733
          %v1746 = vpack.c.b16 %v1736, %v1735
          %v1747 = vpack.c.b16 %v1738, %v1737
          %v1748 = vpack.c.b16 %v1740, %v1739
          %1757 = vmatprep.subr.bf16.mxu0 0
          %1758 = vmatpush1.bf16.msra.mxu0 %v1741
          %1759 = vmatprep.subr.bf16.mxu0 0
          %1760 = vmatpush1.bf16.msra.mxu0 %v1742
          %1761 = vmatprep.subr.bf16.mxu0 0
          %1762 = vmatpush1.bf16.msra.mxu0 %v1743
          %1763 = vmatprep.subr.bf16.mxu0 0
          %1764 = vmatpush1.bf16.msra.mxu0 %v1744
          %1765 = vmatprep.subr.bf16.mxu0 0
          %1766 = vmatpush1.bf16.msra.mxu0 %v1745
          %1767 = vmatprep.subr.bf16.mxu0 0
          %1768 = vmatpush1.bf16.msra.mxu0 %v1746
          %1769 = vmatprep.subr.bf16.mxu0 0
          %1770 = vmatpush1.bf16.msra.mxu0 %v1747
          %1771 = vmatprep.subr.bf16.mxu0 0
          %1772 = vmatpush1.bf16.msra.mxu0 %v1748
          %1773 = vmatprep.subr.bf16.mxu0 0
          %1774 = vmatpush1.bf16.msra.mxu0 0
          %1775 = vmatprep.subr.bf16.mxu0 0
          %1776 = vmatpush1.bf16.msra.mxu0 0
          %1777 = vmatprep.subr.bf16.mxu0 0
          %1778 = vmatpush1.bf16.msra.mxu0 0
          %1779 = vmatprep.subr.bf16.mxu0 0
          %1780 = vmatpush1.bf16.msra.mxu0 0
          %1781 = vmatprep.subr.bf16.mxu0 0
          %1782 = vmatpush1.bf16.msra.mxu0 0
          %1783 = vmatprep.subr.bf16.mxu0 0
          %1784 = vmatpush1.bf16.msra.mxu0 0
          %1785 = vmatprep.subr.bf16.mxu0 0
          %1786 = vmatpush1.bf16.msra.mxu0 0
          %1787 = vmatprep.subr.bf16.mxu0 0
          %1788 = vmatpush1.bf16.msra.mxu0 0
          %1789 = vmatprep.mubr.bf16.mxu0 0
          %1790 = vmatmul.mubr.bf16.gmra.mrb[0].mxu0 %v1371
          %v1791 = vpop.f32.mrb[0].mxu0
          %v1792 = vadd.f32 %v1704, %v1791
          %v1793 = vpop.f32.mrb[0].mxu0
          %v1794 = vpop.f32.mrb[0].mxu0
          %v1795 = vpop.f32.mrb[0].mxu0
          %1796 = vdwg.mxu0
          %v1797 = vld [vmem:[%s1074] sm:$0xff]
          %v1798 = vadd.f32 %v1792, %v1797
          %v1799 = vxor.u32 %v1798, 2147483648
          %v1800 = vmul.f32 %v1799, 1.442695
          %v1801 = vpow.pop %v1800
          %v1802 = vadd.f32 %v1801, 1.0
          %v1803 = vrcp.pop %v1802
          %v1804 = vmul.f32 1.0, %v1803
          %v1805 = vld [vmem:[%s1083] sm:$0xf]
          %v1806 = vld [vmem:[%s1083 + $0x4] sm:$0xf]
          %v1807 = vld [vmem:[%s1083 + $0x8] sm:$0xf]
          %v1808 = vld [vmem:[%s1083 + $0xc] sm:$0xf]
          %v1809 = vld [vmem:[%s1083 + $0x10] sm:$0xf]
          %v1810 = vld [vmem:[%s1083 + $0x14] sm:$0xf]
          %v1811 = vld [vmem:[%s1083 + $0x18] sm:$0xf]
          %v1812 = vld [vmem:[%s1083 + $0x1c] sm:$0xf]
          %v1813 = vld [vmem:[%s1083 + $0x20] sm:$0xf]
          %v1814 = vld [vmem:[%s1083 + $0x24] sm:$0xf]
          %v1815 = vld [vmem:[%s1083 + $0x28] sm:$0xf]
          %v1816 = vld [vmem:[%s1083 + $0x2c] sm:$0xf]
          %v1817 = vld [vmem:[%s1083 + $0x30] sm:$0xf]
          %v1818 = vld [vmem:[%s1083 + $0x34] sm:$0xf]
          %v1819 = vld [vmem:[%s1083 + $0x38] sm:$0xf]
          %v1820 = vld [vmem:[%s1083 + $0x3c] sm:$0xf]
          %v1821 = vld [vmem:[%s1100] sm:$0xff]
          %v1838 = vunpack.c.l.b16 %v1805
          %v1839 = vunpack.c.l.b16 %v1806
          %v1840 = vunpack.c.l.b16 %v1807
          %v1841 = vunpack.c.l.b16 %v1808
          %v1842 = vunpack.c.l.b16 %v1809
          %v1843 = vunpack.c.l.b16 %v1810
          %v1844 = vunpack.c.l.b16 %v1811
          %v1845 = vunpack.c.l.b16 %v1812
          %v1846 = vunpack.c.l.b16 %v1813
          %v1847 = vunpack.c.l.b16 %v1814
          %v1848 = vunpack.c.l.b16 %v1815
          %v1849 = vunpack.c.l.b16 %v1816
          %v1850 = vunpack.c.l.b16 %v1817
          %v1851 = vunpack.c.l.b16 %v1818
          %v1852 = vunpack.c.l.b16 %v1819
          %v1853 = vunpack.c.l.b16 %v1820
          %v1854 = vpack.c.b16 %v1839, %v1838
          %v1855 = vpack.c.b16 %v1841, %v1840
          %v1856 = vpack.c.b16 %v1843, %v1842
          %v1857 = vpack.c.b16 %v1845, %v1844
          %v1858 = vpack.c.b16 %v1847, %v1846
          %v1859 = vpack.c.b16 %v1849, %v1848
          %v1860 = vpack.c.b16 %v1851, %v1850
          %v1861 = vpack.c.b16 %v1853, %v1852
          %1870 = vmatprep.subr.bf16.mxu0 0
          %1871 = vmatpush1.bf16.msra.mxu0 %v1854
          %1872 = vmatprep.subr.bf16.mxu0 0
          %1873 = vmatpush1.bf16.msra.mxu0 %v1855
          %1874 = vmatprep.subr.bf16.mxu0 0
          %1875 = vmatpush1.bf16.msra.mxu0 %v1856
          %1876 = vmatprep.subr.bf16.mxu0 0
          %1877 = vmatpush1.bf16.msra.mxu0 %v1857
          %1878 = vmatprep.subr.bf16.mxu0 0
          %1879 = vmatpush1.bf16.msra.mxu0 %v1858
          %1880 = vmatprep.subr.bf16.mxu0 0
          %1881 = vmatpush1.bf16.msra.mxu0 %v1859
          %1882 = vmatprep.subr.bf16.mxu0 0
          %1883 = vmatpush1.bf16.msra.mxu0 %v1860
          %1884 = vmatprep.subr.bf16.mxu0 0
          %1885 = vmatpush1.bf16.msra.mxu0 %v1861
          %1886 = vmatprep.subr.bf16.mxu0 0
          %1887 = vmatpush1.bf16.msra.mxu0 0
          %1888 = vmatprep.subr.bf16.mxu0 0
          %1889 = vmatpush1.bf16.msra.mxu0 0
          %1890 = vmatprep.subr.bf16.mxu0 0
          %1891 = vmatpush1.bf16.msra.mxu0 0
          %1892 = vmatprep.subr.bf16.mxu0 0
          %1893 = vmatpush1.bf16.msra.mxu0 0
          %1894 = vmatprep.subr.bf16.mxu0 0
          %1895 = vmatpush1.bf16.msra.mxu0 0
          %1896 = vmatprep.subr.bf16.mxu0 0
          %1897 = vmatpush1.bf16.msra.mxu0 0
          %1898 = vmatprep.subr.bf16.mxu0 0
          %1899 = vmatpush1.bf16.msra.mxu0 0
          %1900 = vmatprep.subr.bf16.mxu0 0
          %1901 = vmatpush1.bf16.msra.mxu0 0
          %1902 = vmatprep.mubr.bf16.mxu0 0
          %1903 = vmatmul.mubr.bf16.gmra.mrb[0].mxu0 %v1371
          %v1904 = vpop.f32.mrb[0].mxu0
          %v1905 = vadd.f32 %v1821, %v1904
          %v1906 = vpop.f32.mrb[0].mxu0
          %v1907 = vpop.f32.mrb[0].mxu0
          %v1908 = vpop.f32.mrb[0].mxu0
          %1909 = vdwg.mxu0
          %v1910 = vld [vmem:[%s1190] sm:$0xf]
          %v1911 = vld [vmem:[%s1190 + $0x4] sm:$0xf]
          %v1912 = vld [vmem:[%s1190 + $0x8] sm:$0xf]
          %v1913 = vld [vmem:[%s1190 + $0xc] sm:$0xf]
          %v1914 = vld [vmem:[%s1190 + $0x10] sm:$0xf]
          %v1915 = vld [vmem:[%s1190 + $0x14] sm:$0xf]
          %v1916 = vld [vmem:[%s1190 + $0x18] sm:$0xf]
          %v1917 = vld [vmem:[%s1190 + $0x1c] sm:$0xf]
          %v1918 = vld [vmem:[%s1190 + $0x20] sm:$0xf]
          %v1919 = vld [vmem:[%s1190 + $0x24] sm:$0xf]
          %v1920 = vld [vmem:[%s1190 + $0x28] sm:$0xf]
          %v1921 = vld [vmem:[%s1190 + $0x2c] sm:$0xf]
          %v1922 = vld [vmem:[%s1190 + $0x30] sm:$0xf]
          %v1923 = vld [vmem:[%s1190 + $0x34] sm:$0xf]
          %v1924 = vld [vmem:[%s1190 + $0x38] sm:$0xf]
          %v1925 = vld [vmem:[%s1190 + $0x3c] sm:$0xf]
          %v1926 = vld [vmem:[%s1207] sm:$0xff]
          %v1943 = vunpack.c.l.b16 %v1910
          %v1944 = vunpack.c.l.b16 %v1911
          %v1945 = vunpack.c.l.b16 %v1912
          %v1946 = vunpack.c.l.b16 %v1913
          %v1947 = vunpack.c.l.b16 %v1914
          %v1948 = vunpack.c.l.b16 %v1915
          %v1949 = vunpack.c.l.b16 %v1916
          %v1950 = vunpack.c.l.b16 %v1917
          %v1951 = vunpack.c.l.b16 %v1918
          %v1952 = vunpack.c.l.b16 %v1919
          %v1953 = vunpack.c.l.b16 %v1920
          %v1954 = vunpack.c.l.b16 %v1921
          %v1955 = vunpack.c.l.b16 %v1922
          %v1956 = vunpack.c.l.b16 %v1923
          %v1957 = vunpack.c.l.b16 %v1924
          %v1958 = vunpack.c.l.b16 %v1925
          %v1959 = vpack.c.b16 %v1944, %v1943
          %v1960 = vpack.c.b16 %v1946, %v1945
          %v1961 = vpack.c.b16 %v1948, %v1947
          %v1962 = vpack.c.b16 %v1950, %v1949
          %v1963 = vpack.c.b16 %v1952, %v1951
          %v1964 = vpack.c.b16 %v1954, %v1953
          %v1965 = vpack.c.b16 %v1956, %v1955
          %v1966 = vpack.c.b16 %v1958, %v1957
          %1975 = vmatprep.subr.bf16.mxu0 0
          %1976 = vmatpush1.bf16.msra.mxu0 %v1959
          %1977 = vmatprep.subr.bf16.mxu0 0
          %1978 = vmatpush1.bf16.msra.mxu0 %v1960
          %1979 = vmatprep.subr.bf16.mxu0 0
          %1980 = vmatpush1.bf16.msra.mxu0 %v1961
          %1981 = vmatprep.subr.bf16.mxu0 0
          %1982 = vmatpush1.bf16.msra.mxu0 %v1962
          %1983 = vmatprep.subr.bf16.mxu0 0
          %1984 = vmatpush1.bf16.msra.mxu0 %v1963
          %1985 = vmatprep.subr.bf16.mxu0 0
          %1986 = vmatpush1.bf16.msra.mxu0 %v1964
          %1987 = vmatprep.subr.bf16.mxu0 0
          %1988 = vmatpush1.bf16.msra.mxu0 %v1965
          %1989 = vmatprep.subr.bf16.mxu0 0
          %1990 = vmatpush1.bf16.msra.mxu0 %v1966
          %1991 = vmatprep.subr.bf16.mxu0 0
          %1992 = vmatpush1.bf16.msra.mxu0 0
          %1993 = vmatprep.subr.bf16.mxu0 0
          %1994 = vmatpush1.bf16.msra.mxu0 0
          %1995 = vmatprep.subr.bf16.mxu0 0
          %1996 = vmatpush1.bf16.msra.mxu0 0
          %1997 = vmatprep.subr.bf16.mxu0 0
          %1998 = vmatpush1.bf16.msra.mxu0 0
          %1999 = vmatprep.subr.bf16.mxu0 0
          %2000 = vmatpush1.bf16.msra.mxu0 0
          %2001 = vmatprep.subr.bf16.mxu0 0
          %2002 = vmatpush1.bf16.msra.mxu0 0
          %2003 = vmatprep.subr.bf16.mxu0 0
          %2004 = vmatpush1.bf16.msra.mxu0 0
          %2005 = vmatprep.subr.bf16.mxu0 0
          %2006 = vmatpush1.bf16.msra.mxu0 0
          %2007 = vmatprep.mubr.bf16.mxu0 0
          %2008 = vmatmul.mubr.bf16.gmra.mrb[0].mxu0 %v1372
          %v2009 = vpop.f32.mrb[0].mxu0
          %v2010 = vadd.f32 %v1926, %v2009
          %v2011 = vpop.f32.mrb[0].mxu0
          %v2012 = vpop.f32.mrb[0].mxu0
          %v2013 = vpop.f32.mrb[0].mxu0
          %2014 = vdwg.mxu0
          %v2015 = vmul.f32 %v1588, %v2010
          %v2016 = vadd.f32 %v1905, %v2015
          %v2017 = vtanh.pop %v2016
          %v2018 = vsub.f32 1.0, %v1804
          %v2019 = vmul.f32 %v2018, %v2017
          %v2020 = vmul.f32 %v1804, %v1303
          %v2021 = vadd.f32 %v2019, %v2020
          %v2023 = vcombine.high %v2021, %v2021
          %v2025 = vunpack.c.l.s4 1966171168
          %v2026 = vunpack.c.0.s8 %v2025
          %v2027 = vlaneseq
          %v2028 = vshrl.u32 %v2027, 7
          %v2029 = vsub.s32 %v2026, %v2028
          %v2030 = vrot.slane %v2021, %v2029
          %v2032 = vunpack.c.l.s4 1966171168
          %v2033 = vunpack.c.0.s8 %v2032
          %v2034 = vlaneseq
          %v2035 = vshrl.u32 %v2034, 7
          %v2036 = vsub.s32 %v2033, %v2035
          %v2037 = vrot.slane %v2023, %v2036
          %v2038 = vcombine.high %v2030, %v2030
          %v2039 = vcombine.high %v2037, %v2037
          %v2041 = vunpack.c.l.s4 1966171168
          %v2042 = vunpack.c.0.s8 %v2041
          %v2043 = vlaneseq
          %v2044 = vshrl.u32 %v2043, 7
          %v2045 = vsub.s32 %v2042, %v2044
          %v2046 = vrot.slane %v2030, %v2045
          %v2048 = vunpack.c.l.s4 1966171168
          %v2049 = vunpack.c.0.s8 %v2048
          %v2050 = vlaneseq
          %v2051 = vshrl.u32 %v2050, 7
          %v2052 = vsub.s32 %v2049, %v2051
          %v2053 = vrot.slane %v2037, %v2052
          %v2055 = vunpack.c.l.s4 1966171168
          %v2056 = vunpack.c.0.s8 %v2055
          %v2057 = vlaneseq
          %v2058 = vshrl.u32 %v2057, 7
          %v2059 = vsub.s32 %v2056, %v2058
          %v2060 = vrot.slane %v2038, %v2059
          %v2062 = vunpack.c.l.s4 1966171168
          %v2063 = vunpack.c.0.s8 %v2062
          %v2064 = vlaneseq
          %v2065 = vshrl.u32 %v2064, 7
          %v2066 = vsub.s32 %v2063, %v2065
          %v2067 = vrot.slane %v2039, %v2066
          %v2068 = vcombine.high %v2046, %v2046
          %v2069 = vcombine.high %v2053, %v2053
          %v2070 = vcombine.high %v2060, %v2060
          %v2071 = vcombine.high %v2067, %v2067
          %2080 = vst [vmem:[#allocation2 + $0x1] sm:$0x1] %v2046
          %2081 = vst [vmem:[#allocation2 + $0x9] sm:$0x1] %v2060
          %2082 = vst [vmem:[#allocation2 + $0x11] sm:$0x1] %v2068
          %2083 = vst [vmem:[#allocation2 + $0x19] sm:$0x1] %v2070
          %2084 = vst [vmem:[#allocation2 + $0x21] sm:$0x1] %v2053
          %2085 = vst [vmem:[#allocation2 + $0x29] sm:$0x1] %v2067
          %2086 = vst [vmem:[#allocation2 + $0x31] sm:$0x1] %v2069
          %2087 = vst [vmem:[#allocation2 + $0x39] sm:$0x1] %v2071
          %s2088 = scalar_lea.vmem [#allocation5], 8
          %v2089 = vld [vmem:[%s2088] sm:$0xf]
          %v2090 = vpack.c.bf16 %v2021, %v2021
          %v2091 = vld [vmem:[#allocation8] sm:$0xf]
          %v2092 = vld [vmem:[#allocation8 + $0x4] sm:$0xf]
          %v2093 = vld [vmem:[#allocation8 + $0x8] sm:$0xf]
          %v2094 = vld [vmem:[#allocation8 + $0xc] sm:$0xf]
          %v2095 = vld [vmem:[#allocation8 + $0x10] sm:$0xf]
          %v2096 = vld [vmem:[#allocation8 + $0x14] sm:$0xf]
          %v2097 = vld [vmem:[#allocation8 + $0x18] sm:$0xf]
          %v2098 = vld [vmem:[#allocation8 + $0x1c] sm:$0xf]
          %v2099 = vld [vmem:[#allocation8 + $0x20] sm:$0xf]
          %v2100 = vld [vmem:[#allocation8 + $0x24] sm:$0xf]
          %v2101 = vld [vmem:[#allocation8 + $0x28] sm:$0xf]
          %v2102 = vld [vmem:[#allocation8 + $0x2c] sm:$0xf]
          %v2103 = vld [vmem:[#allocation8 + $0x30] sm:$0xf]
          %v2104 = vld [vmem:[#allocation8 + $0x34] sm:$0xf]
          %v2105 = vld [vmem:[#allocation8 + $0x38] sm:$0xf]
          %v2106 = vld [vmem:[#allocation8 + $0x3c] sm:$0xf]
          %v2107 = vld [vmem:[#allocation10] sm:$0xf]
          %v2108 = vld [vmem:[#allocation10 + $0x4] sm:$0xf]
          %v2109 = vld [vmem:[#allocation10 + $0x8] sm:$0xf]
          %v2110 = vld [vmem:[#allocation10 + $0xc] sm:$0xf]
          %v2111 = vld [vmem:[#allocation10 + $0x10] sm:$0xf]
          %v2112 = vld [vmem:[#allocation10 + $0x14] sm:$0xf]
          %v2113 = vld [vmem:[#allocation10 + $0x18] sm:$0xf]
          %v2114 = vld [vmem:[#allocation10 + $0x1c] sm:$0xf]
          %v2115 = vld [vmem:[#allocation10 + $0x20] sm:$0xf]
          %v2116 = vld [vmem:[#allocation10 + $0x24] sm:$0xf]
          %v2117 = vld [vmem:[#allocation10 + $0x28] sm:$0xf]
          %v2118 = vld [vmem:[#allocation10 + $0x2c] sm:$0xf]
          %v2119 = vld [vmem:[#allocation10 + $0x30] sm:$0xf]
          %v2120 = vld [vmem:[#allocation10 + $0x34] sm:$0xf]
          %v2121 = vld [vmem:[#allocation10 + $0x38] sm:$0xf]
          %v2122 = vld [vmem:[#allocation10 + $0x3c] sm:$0xf]
          %v2139 = vunpack.c.l.b16 %v2107
          %v2140 = vunpack.c.l.b16 %v2108
          %v2141 = vunpack.c.l.b16 %v2109
          %v2142 = vunpack.c.l.b16 %v2110
          %v2143 = vunpack.c.l.b16 %v2111
          %v2144 = vunpack.c.l.b16 %v2112
          %v2145 = vunpack.c.l.b16 %v2113
          %v2146 = vunpack.c.l.b16 %v2114
          %v2147 = vunpack.c.l.b16 %v2115
          %v2148 = vunpack.c.l.b16 %v2116
          %v2149 = vunpack.c.l.b16 %v2117
          %v2150 = vunpack.c.l.b16 %v2118
          %v2151 = vunpack.c.l.b16 %v2119
          %v2152 = vunpack.c.l.b16 %v2120
          %v2153 = vunpack.c.l.b16 %v2121
          %v2154 = vunpack.c.l.b16 %v2122
          %v2155 = vpack.c.b16 %v2140, %v2139
          %v2156 = vpack.c.b16 %v2142, %v2141
          %v2157 = vpack.c.b16 %v2144, %v2143
          %v2158 = vpack.c.b16 %v2146, %v2145
          %v2159 = vpack.c.b16 %v2148, %v2147
          %v2160 = vpack.c.b16 %v2150, %v2149
          %v2161 = vpack.c.b16 %v2152, %v2151
          %v2162 = vpack.c.b16 %v2154, %v2153
          %2171 = vmatprep.subr.bf16.mxu0 0
          %2172 = vmatpush1.bf16.msra.mxu0 %v2155
          %2173 = vmatprep.subr.bf16.mxu0 0
          %2174 = vmatpush1.bf16.msra.mxu0 %v2156
          %2175 = vmatprep.subr.bf16.mxu0 0
          %2176 = vmatpush1.bf16.msra.mxu0 %v2157
          %2177 = vmatprep.subr.bf16.mxu0 0
          %2178 = vmatpush1.bf16.msra.mxu0 %v2158
          %2179 = vmatprep.subr.bf16.mxu0 0
          %2180 = vmatpush1.bf16.msra.mxu0 %v2159
          %2181 = vmatprep.subr.bf16.mxu0 0
          %2182 = vmatpush1.bf16.msra.mxu0 %v2160
          %2183 = vmatprep.subr.bf16.mxu0 0
          %2184 = vmatpush1.bf16.msra.mxu0 %v2161
          %2185 = vmatprep.subr.bf16.mxu0 0
          %2186 = vmatpush1.bf16.msra.mxu0 %v2162
          %2187 = vmatprep.subr.bf16.mxu0 0
          %2188 = vmatpush1.bf16.msra.mxu0 0
          %2189 = vmatprep.subr.bf16.mxu0 0
          %2190 = vmatpush1.bf16.msra.mxu0 0
          %2191 = vmatprep.subr.bf16.mxu0 0
          %2192 = vmatpush1.bf16.msra.mxu0 0
          %2193 = vmatprep.subr.bf16.mxu0 0
          %2194 = vmatpush1.bf16.msra.mxu0 0
          %2195 = vmatprep.subr.bf16.mxu0 0
          %2196 = vmatpush1.bf16.msra.mxu0 0
          %2197 = vmatprep.subr.bf16.mxu0 0
          %2198 = vmatpush1.bf16.msra.mxu0 0
          %2199 = vmatprep.subr.bf16.mxu0 0
          %2200 = vmatpush1.bf16.msra.mxu0 0
          %2201 = vmatprep.subr.bf16.mxu0 0
          %2202 = vmatpush1.bf16.msra.mxu0 0
          %2203 = vmatprep.mubr.bf16.mxu0 0
          %2204 = vmatmul.mubr.bf16.gmra.mrb[0].mxu0 %v2090
          %v2205 = vpop.f32.mrb[0].mxu0
          %v2206 = vadd.f32 0.0, %v2205
          %v2207 = vpop.f32.mrb[0].mxu0
          %v2208 = vpop.f32.mrb[0].mxu0
          %v2209 = vpop.f32.mrb[0].mxu0
          %2210 = vdwg.mxu0
          %v2227 = vunpack.c.l.b16 %v2091
          %v2228 = vunpack.c.l.b16 %v2092
          %v2229 = vunpack.c.l.b16 %v2093
          %v2230 = vunpack.c.l.b16 %v2094
          %v2231 = vunpack.c.l.b16 %v2095
          %v2232 = vunpack.c.l.b16 %v2096
          %v2233 = vunpack.c.l.b16 %v2097
          %v2234 = vunpack.c.l.b16 %v2098
          %v2235 = vunpack.c.l.b16 %v2099
          %v2236 = vunpack.c.l.b16 %v2100
          %v2237 = vunpack.c.l.b16 %v2101
          %v2238 = vunpack.c.l.b16 %v2102
          %v2239 = vunpack.c.l.b16 %v2103
          %v2240 = vunpack.c.l.b16 %v2104
          %v2241 = vunpack.c.l.b16 %v2105
          %v2242 = vunpack.c.l.b16 %v2106
          %v2243 = vpack.c.b16 %v2228, %v2227
          %v2244 = vpack.c.b16 %v2230, %v2229
          %v2245 = vpack.c.b16 %v2232, %v2231
          %v2246 = vpack.c.b16 %v2234, %v2233
          %v2247 = vpack.c.b16 %v2236, %v2235
          %v2248 = vpack.c.b16 %v2238, %v2237
          %v2249 = vpack.c.b16 %v2240, %v2239
          %v2250 = vpack.c.b16 %v2242, %v2241
          %2259 = vmatprep.subr.bf16.mxu0 0
          %2260 = vmatpush1.bf16.msra.mxu0 %v2243
          %2261 = vmatprep.subr.bf16.mxu0 0
          %2262 = vmatpush1.bf16.msra.mxu0 %v2244
          %2263 = vmatprep.subr.bf16.mxu0 0
          %2264 = vmatpush1.bf16.msra.mxu0 %v2245
          %2265 = vmatprep.subr.bf16.mxu0 0
          %2266 = vmatpush1.bf16.msra.mxu0 %v2246
          %2267 = vmatprep.subr.bf16.mxu0 0
          %2268 = vmatpush1.bf16.msra.mxu0 %v2247
          %2269 = vmatprep.subr.bf16.mxu0 0
          %2270 = vmatpush1.bf16.msra.mxu0 %v2248
          %2271 = vmatprep.subr.bf16.mxu0 0
          %2272 = vmatpush1.bf16.msra.mxu0 %v2249
          %2273 = vmatprep.subr.bf16.mxu0 0
          %2274 = vmatpush1.bf16.msra.mxu0 %v2250
          %2275 = vmatprep.subr.bf16.mxu0 0
          %2276 = vmatpush1.bf16.msra.mxu0 0
          %2277 = vmatprep.subr.bf16.mxu0 0
          %2278 = vmatpush1.bf16.msra.mxu0 0
          %2279 = vmatprep.subr.bf16.mxu0 0
          %2280 = vmatpush1.bf16.msra.mxu0 0
          %2281 = vmatprep.subr.bf16.mxu0 0
          %2282 = vmatpush1.bf16.msra.mxu0 0
          %2283 = vmatprep.subr.bf16.mxu0 0
          %2284 = vmatpush1.bf16.msra.mxu0 0
          %2285 = vmatprep.subr.bf16.mxu0 0
          %2286 = vmatpush1.bf16.msra.mxu0 0
          %2287 = vmatprep.subr.bf16.mxu0 0
          %2288 = vmatpush1.bf16.msra.mxu0 0
          %2289 = vmatprep.subr.bf16.mxu0 0
          %2290 = vmatpush1.bf16.msra.mxu0 0
          %2291 = vmatprep.mubr.bf16.mxu0 0
          %2292 = vmatmul.mubr.bf16.gmra.mrb[0].mxu0 %v2089
          %v2293 = vpop.f32.mrb[0].mxu0
          %v2294 = vadd.f32 %v2206, %v2293
          %v2295 = vpop.f32.mrb[0].mxu0
          %v2296 = vpop.f32.mrb[0].mxu0
          %v2297 = vpop.f32.mrb[0].mxu0
          %2298 = vdwg.mxu0
          %v2299 = vld [vmem:[#allocation11] sm:$0xff]
          %v2300 = vadd.f32 %v2294, %v2299
          %v2301 = vxor.u32 %v2300, 2147483648
          %v2302 = vmul.f32 %v2301, 1.442695
          %v2303 = vpow.pop %v2302
          %v2304 = vadd.f32 %v2303, 1.0
          %v2305 = vrcp.pop %v2304
          %v2306 = vmul.f32 1.0, %v2305
          %v2307 = vld [vmem:[%s864] sm:$0xf]
          %v2308 = vld [vmem:[%s864 + $0x4] sm:$0xf]
          %v2309 = vld [vmem:[%s864 + $0x8] sm:$0xf]
          %v2310 = vld [vmem:[%s864 + $0xc] sm:$0xf]
          %v2311 = vld [vmem:[%s864 + $0x10] sm:$0xf]
          %v2312 = vld [vmem:[%s864 + $0x14] sm:$0xf]
          %v2313 = vld [vmem:[%s864 + $0x18] sm:$0xf]
          %v2314 = vld [vmem:[%s864 + $0x1c] sm:$0xf]
          %v2315 = vld [vmem:[%s864 + $0x20] sm:$0xf]
          %v2316 = vld [vmem:[%s864 + $0x24] sm:$0xf]
          %v2317 = vld [vmem:[%s864 + $0x28] sm:$0xf]
          %v2318 = vld [vmem:[%s864 + $0x2c] sm:$0xf]
          %v2319 = vld [vmem:[%s864 + $0x30] sm:$0xf]
          %v2320 = vld [vmem:[%s864 + $0x34] sm:$0xf]
          %v2321 = vld [vmem:[%s864 + $0x38] sm:$0xf]
          %v2322 = vld [vmem:[%s864 + $0x3c] sm:$0xf]
          %v2323 = vld [vmem:[%s881] sm:$0xf]
          %v2324 = vld [vmem:[%s881 + $0x4] sm:$0xf]
          %v2325 = vld [vmem:[%s881 + $0x8] sm:$0xf]
          %v2326 = vld [vmem:[%s881 + $0xc] sm:$0xf]
          %v2327 = vld [vmem:[%s881 + $0x10] sm:$0xf]
          %v2328 = vld [vmem:[%s881 + $0x14] sm:$0xf]
          %v2329 = vld [vmem:[%s881 + $0x18] sm:$0xf]
          %v2330 = vld [vmem:[%s881 + $0x1c] sm:$0xf]
          %v2331 = vld [vmem:[%s881 + $0x20] sm:$0xf]
          %v2332 = vld [vmem:[%s881 + $0x24] sm:$0xf]
          %v2333 = vld [vmem:[%s881 + $0x28] sm:$0xf]
          %v2334 = vld [vmem:[%s881 + $0x2c] sm:$0xf]
          %v2335 = vld [vmem:[%s881 + $0x30] sm:$0xf]
          %v2336 = vld [vmem:[%s881 + $0x34] sm:$0xf]
          %v2337 = vld [vmem:[%s881 + $0x38] sm:$0xf]
          %v2338 = vld [vmem:[%s881 + $0x3c] sm:$0xf]
          %v2355 = vunpack.c.l.b16 %v2323
          %v2356 = vunpack.c.l.b16 %v2324
          %v2357 = vunpack.c.l.b16 %v2325
          %v2358 = vunpack.c.l.b16 %v2326
          %v2359 = vunpack.c.l.b16 %v2327
          %v2360 = vunpack.c.l.b16 %v2328
          %v2361 = vunpack.c.l.b16 %v2329
          %v2362 = vunpack.c.l.b16 %v2330
          %v2363 = vunpack.c.l.b16 %v2331
          %v2364 = vunpack.c.l.b16 %v2332
          %v2365 = vunpack.c.l.b16 %v2333
          %v2366 = vunpack.c.l.b16 %v2334
          %v2367 = vunpack.c.l.b16 %v2335
          %v2368 = vunpack.c.l.b16 %v2336
          %v2369 = vunpack.c.l.b16 %v2337
          %v2370 = vunpack.c.l.b16 %v2338
          %v2371 = vpack.c.b16 %v2356, %v2355
          %v2372 = vpack.c.b16 %v2358, %v2357
          %v2373 = vpack.c.b16 %v2360, %v2359
          %v2374 = vpack.c.b16 %v2362, %v2361
          %v2375 = vpack.c.b16 %v2364, %v2363
          %v2376 = vpack.c.b16 %v2366, %v2365
          %v2377 = vpack.c.b16 %v2368, %v2367
          %v2378 = vpack.c.b16 %v2370, %v2369
          %2387 = vmatprep.subr.bf16.mxu0 0
          %2388 = vmatpush1.bf16.msra.mxu0 %v2371
          %2389 = vmatprep.subr.bf16.mxu0 0
          %2390 = vmatpush1.bf16.msra.mxu0 %v2372
          %2391 = vmatprep.subr.bf16.mxu0 0
          %2392 = vmatpush1.bf16.msra.mxu0 %v2373
          %2393 = vmatprep.subr.bf16.mxu0 0
          %2394 = vmatpush1.bf16.msra.mxu0 %v2374
          %2395 = vmatprep.subr.bf16.mxu0 0
          %2396 = vmatpush1.bf16.msra.mxu0 %v2375
          %2397 = vmatprep.subr.bf16.mxu0 0
          %2398 = vmatpush1.bf16.msra.mxu0 %v2376
          %2399 = vmatprep.subr.bf16.mxu0 0
          %2400 = vmatpush1.bf16.msra.mxu0 %v2377
          %2401 = vmatprep.subr.bf16.mxu0 0
          %2402 = vmatpush1.bf16.msra.mxu0 %v2378
          %2403 = vmatprep.subr.bf16.mxu0 0
          %2404 = vmatpush1.bf16.msra.mxu0 0
          %2405 = vmatprep.subr.bf16.mxu0 0
          %2406 = vmatpush1.bf16.msra.mxu0 0
          %2407 = vmatprep.subr.bf16.mxu0 0
          %2408 = vmatpush1.bf16.msra.mxu0 0
          %2409 = vmatprep.subr.bf16.mxu0 0
          %2410 = vmatpush1.bf16.msra.mxu0 0
          %2411 = vmatprep.subr.bf16.mxu0 0
          %2412 = vmatpush1.bf16.msra.mxu0 0
          %2413 = vmatprep.subr.bf16.mxu0 0
          %2414 = vmatpush1.bf16.msra.mxu0 0
          %2415 = vmatprep.subr.bf16.mxu0 0
          %2416 = vmatpush1.bf16.msra.mxu0 0
          %2417 = vmatprep.subr.bf16.mxu0 0
          %2418 = vmatpush1.bf16.msra.mxu0 0
          %2419 = vmatprep.mubr.bf16.mxu0 0
          %2420 = vmatmul.mubr.bf16.gmra.mrb[0].mxu0 %v2090
          %v2421 = vpop.f32.mrb[0].mxu0
          %v2422 = vadd.f32 0.0, %v2421
          %v2423 = vpop.f32.mrb[0].mxu0
          %v2424 = vpop.f32.mrb[0].mxu0
          %v2425 = vpop.f32.mrb[0].mxu0
          %2426 = vdwg.mxu0
          %v2443 = vunpack.c.l.b16 %v2307
          %v2444 = vunpack.c.l.b16 %v2308
          %v2445 = vunpack.c.l.b16 %v2309
          %v2446 = vunpack.c.l.b16 %v2310
          %v2447 = vunpack.c.l.b16 %v2311
          %v2448 = vunpack.c.l.b16 %v2312
          %v2449 = vunpack.c.l.b16 %v2313
          %v2450 = vunpack.c.l.b16 %v2314
          %v2451 = vunpack.c.l.b16 %v2315
          %v2452 = vunpack.c.l.b16 %v2316
          %v2453 = vunpack.c.l.b16 %v2317
          %v2454 = vunpack.c.l.b16 %v2318
          %v2455 = vunpack.c.l.b16 %v2319
          %v2456 = vunpack.c.l.b16 %v2320
          %v2457 = vunpack.c.l.b16 %v2321
          %v2458 = vunpack.c.l.b16 %v2322
          %v2459 = vpack.c.b16 %v2444, %v2443
          %v2460 = vpack.c.b16 %v2446, %v2445
          %v2461 = vpack.c.b16 %v2448, %v2447
          %v2462 = vpack.c.b16 %v2450, %v2449
          %v2463 = vpack.c.b16 %v2452, %v2451
          %v2464 = vpack.c.b16 %v2454, %v2453
          %v2465 = vpack.c.b16 %v2456, %v2455
          %v2466 = vpack.c.b16 %v2458, %v2457
          %2475 = vmatprep.subr.bf16.mxu0 0
          %2476 = vmatpush1.bf16.msra.mxu0 %v2459
          %2477 = vmatprep.subr.bf16.mxu0 0
          %2478 = vmatpush1.bf16.msra.mxu0 %v2460
          %2479 = vmatprep.subr.bf16.mxu0 0
          %2480 = vmatpush1.bf16.msra.mxu0 %v2461
          %2481 = vmatprep.subr.bf16.mxu0 0
          %2482 = vmatpush1.bf16.msra.mxu0 %v2462
          %2483 = vmatprep.subr.bf16.mxu0 0
          %2484 = vmatpush1.bf16.msra.mxu0 %v2463
          %2485 = vmatprep.subr.bf16.mxu0 0
          %2486 = vmatpush1.bf16.msra.mxu0 %v2464
          %2487 = vmatprep.subr.bf16.mxu0 0
          %2488 = vmatpush1.bf16.msra.mxu0 %v2465
          %2489 = vmatprep.subr.bf16.mxu0 0
          %2490 = vmatpush1.bf16.msra.mxu0 %v2466
          %2491 = vmatprep.subr.bf16.mxu0 0
          %2492 = vmatpush1.bf16.msra.mxu0 0
          %2493 = vmatprep.subr.bf16.mxu0 0
          %2494 = vmatpush1.bf16.msra.mxu0 0
          %2495 = vmatprep.subr.bf16.mxu0 0
          %2496 = vmatpush1.bf16.msra.mxu0 0
          %2497 = vmatprep.subr.bf16.mxu0 0
          %2498 = vmatpush1.bf16.msra.mxu0 0
          %2499 = vmatprep.subr.bf16.mxu0 0
          %2500 = vmatpush1.bf16.msra.mxu0 0
          %2501 = vmatprep.subr.bf16.mxu0 0
          %2502 = vmatpush1.bf16.msra.mxu0 0
          %2503 = vmatprep.subr.bf16.mxu0 0
          %2504 = vmatpush1.bf16.msra.mxu0 0
          %2505 = vmatprep.subr.bf16.mxu0 0
          %2506 = vmatpush1.bf16.msra.mxu0 0
          %2507 = vmatprep.mubr.bf16.mxu0 0
          %2508 = vmatmul.mubr.bf16.gmra.mrb[0].mxu0 %v2089
          %v2509 = vpop.f32.mrb[0].mxu0
          %v2510 = vadd.f32 %v2422, %v2509
          %v2511 = vpop.f32.mrb[0].mxu0
          %v2512 = vpop.f32.mrb[0].mxu0
          %v2513 = vpop.f32.mrb[0].mxu0
          %2514 = vdwg.mxu0
          %v2515 = vld [vmem:[%s1074] sm:$0xff]
          %v2516 = vadd.f32 %v2510, %v2515
          %v2517 = vxor.u32 %v2516, 2147483648
          %v2518 = vmul.f32 %v2517, 1.442695
          %v2519 = vpow.pop %v2518
          %v2520 = vadd.f32 %v2519, 1.0
          %v2521 = vrcp.pop %v2520
          %v2522 = vmul.f32 1.0, %v2521
          %v2523 = vld [vmem:[%s1083] sm:$0xf]
          %v2524 = vld [vmem:[%s1083 + $0x4] sm:$0xf]
          %v2525 = vld [vmem:[%s1083 + $0x8] sm:$0xf]
          %v2526 = vld [vmem:[%s1083 + $0xc] sm:$0xf]
          %v2527 = vld [vmem:[%s1083 + $0x10] sm:$0xf]
          %v2528 = vld [vmem:[%s1083 + $0x14] sm:$0xf]
          %v2529 = vld [vmem:[%s1083 + $0x18] sm:$0xf]
          %v2530 = vld [vmem:[%s1083 + $0x1c] sm:$0xf]
          %v2531 = vld [vmem:[%s1083 + $0x20] sm:$0xf]
          %v2532 = vld [vmem:[%s1083 + $0x24] sm:$0xf]
          %v2533 = vld [vmem:[%s1083 + $0x28] sm:$0xf]
          %v2534 = vld [vmem:[%s1083 + $0x2c] sm:$0xf]
          %v2535 = vld [vmem:[%s1083 + $0x30] sm:$0xf]
          %v2536 = vld [vmem:[%s1083 + $0x34] sm:$0xf]
          %v2537 = vld [vmem:[%s1083 + $0x38] sm:$0xf]
          %v2538 = vld [vmem:[%s1083 + $0x3c] sm:$0xf]
          %v2539 = vld [vmem:[%s1100] sm:$0xff]
          %v2556 = vunpack.c.l.b16 %v2523
          %v2557 = vunpack.c.l.b16 %v2524
          %v2558 = vunpack.c.l.b16 %v2525
          %v2559 = vunpack.c.l.b16 %v2526
          %v2560 = vunpack.c.l.b16 %v2527
          %v2561 = vunpack.c.l.b16 %v2528
          %v2562 = vunpack.c.l.b16 %v2529
          %v2563 = vunpack.c.l.b16 %v2530
          %v2564 = vunpack.c.l.b16 %v2531
          %v2565 = vunpack.c.l.b16 %v2532
          %v2566 = vunpack.c.l.b16 %v2533
          %v2567 = vunpack.c.l.b16 %v2534
          %v2568 = vunpack.c.l.b16 %v2535
          %v2569 = vunpack.c.l.b16 %v2536
          %v2570 = vunpack.c.l.b16 %v2537
          %v2571 = vunpack.c.l.b16 %v2538
          %v2572 = vpack.c.b16 %v2557, %v2556
          %v2573 = vpack.c.b16 %v2559, %v2558
          %v2574 = vpack.c.b16 %v2561, %v2560
          %v2575 = vpack.c.b16 %v2563, %v2562
          %v2576 = vpack.c.b16 %v2565, %v2564
          %v2577 = vpack.c.b16 %v2567, %v2566
          %v2578 = vpack.c.b16 %v2569, %v2568
          %v2579 = vpack.c.b16 %v2571, %v2570
          %2588 = vmatprep.subr.bf16.mxu0 0
          %2589 = vmatpush1.bf16.msra.mxu0 %v2572
          %2590 = vmatprep.subr.bf16.mxu0 0
          %2591 = vmatpush1.bf16.msra.mxu0 %v2573
          %2592 = vmatprep.subr.bf16.mxu0 0
          %2593 = vmatpush1.bf16.msra.mxu0 %v2574
          %2594 = vmatprep.subr.bf16.mxu0 0
          %2595 = vmatpush1.bf16.msra.mxu0 %v2575
          %2596 = vmatprep.subr.bf16.mxu0 0
          %2597 = vmatpush1.bf16.msra.mxu0 %v2576
          %2598 = vmatprep.subr.bf16.mxu0 0
          %2599 = vmatpush1.bf16.msra.mxu0 %v2577
          %2600 = vmatprep.subr.bf16.mxu0 0
          %2601 = vmatpush1.bf16.msra.mxu0 %v2578
          %2602 = vmatprep.subr.bf16.mxu0 0
          %2603 = vmatpush1.bf16.msra.mxu0 %v2579
          %2604 = vmatprep.subr.bf16.mxu0 0
          %2605 = vmatpush1.bf16.msra.mxu0 0
          %2606 = vmatprep.subr.bf16.mxu0 0
          %2607 = vmatpush1.bf16.msra.mxu0 0
          %2608 = vmatprep.subr.bf16.mxu0 0
          %2609 = vmatpush1.bf16.msra.mxu0 0
          %2610 = vmatprep.subr.bf16.mxu0 0
          %2611 = vmatpush1.bf16.msra.mxu0 0
          %2612 = vmatprep.subr.bf16.mxu0 0
          %2613 = vmatpush1.bf16.msra.mxu0 0
          %2614 = vmatprep.subr.bf16.mxu0 0
          %2615 = vmatpush1.bf16.msra.mxu0 0
          %2616 = vmatprep.subr.bf16.mxu0 0
          %2617 = vmatpush1.bf16.msra.mxu0 0
          %2618 = vmatprep.subr.bf16.mxu0 0
          %2619 = vmatpush1.bf16.msra.mxu0 0
          %2620 = vmatprep.mubr.bf16.mxu0 0
          %2621 = vmatmul.mubr.bf16.gmra.mrb[0].mxu0 %v2089
          %v2622 = vpop.f32.mrb[0].mxu0
          %v2623 = vadd.f32 %v2539, %v2622
          %v2624 = vpop.f32.mrb[0].mxu0
          %v2625 = vpop.f32.mrb[0].mxu0
          %v2626 = vpop.f32.mrb[0].mxu0
          %2627 = vdwg.mxu0
          %v2628 = vld [vmem:[%s1190] sm:$0xf]
          %v2629 = vld [vmem:[%s1190 + $0x4] sm:$0xf]
          %v2630 = vld [vmem:[%s1190 + $0x8] sm:$0xf]
          %v2631 = vld [vmem:[%s1190 + $0xc] sm:$0xf]
          %v2632 = vld [vmem:[%s1190 + $0x10] sm:$0xf]
          %v2633 = vld [vmem:[%s1190 + $0x14] sm:$0xf]
          %v2634 = vld [vmem:[%s1190 + $0x18] sm:$0xf]
          %v2635 = vld [vmem:[%s1190 + $0x1c] sm:$0xf]
          %v2636 = vld [vmem:[%s1190 + $0x20] sm:$0xf]
          %v2637 = vld [vmem:[%s1190 + $0x24] sm:$0xf]
          %v2638 = vld [vmem:[%s1190 + $0x28] sm:$0xf]
          %v2639 = vld [vmem:[%s1190 + $0x2c] sm:$0xf]
          %v2640 = vld [vmem:[%s1190 + $0x30] sm:$0xf]
          %v2641 = vld [vmem:[%s1190 + $0x34] sm:$0xf]
          %v2642 = vld [vmem:[%s1190 + $0x38] sm:$0xf]
          %v2643 = vld [vmem:[%s1190 + $0x3c] sm:$0xf]
          %v2644 = vld [vmem:[%s1207] sm:$0xff]
          %v2661 = vunpack.c.l.b16 %v2628
          %v2662 = vunpack.c.l.b16 %v2629
          %v2663 = vunpack.c.l.b16 %v2630
          %v2664 = vunpack.c.l.b16 %v2631
          %v2665 = vunpack.c.l.b16 %v2632
          %v2666 = vunpack.c.l.b16 %v2633
          %v2667 = vunpack.c.l.b16 %v2634
          %v2668 = vunpack.c.l.b16 %v2635
          %v2669 = vunpack.c.l.b16 %v2636
          %v2670 = vunpack.c.l.b16 %v2637
          %v2671 = vunpack.c.l.b16 %v2638
          %v2672 = vunpack.c.l.b16 %v2639
          %v2673 = vunpack.c.l.b16 %v2640
          %v2674 = vunpack.c.l.b16 %v2641
          %v2675 = vunpack.c.l.b16 %v2642
          %v2676 = vunpack.c.l.b16 %v2643
          %v2677 = vpack.c.b16 %v2662, %v2661
          %v2678 = vpack.c.b16 %v2664, %v2663
          %v2679 = vpack.c.b16 %v2666, %v2665
          %v2680 = vpack.c.b16 %v2668, %v2667
          %v2681 = vpack.c.b16 %v2670, %v2669
          %v2682 = vpack.c.b16 %v2672, %v2671
          %v2683 = vpack.c.b16 %v2674, %v2673
          %v2684 = vpack.c.b16 %v2676, %v2675
          %2693 = vmatprep.subr.bf16.mxu0 0
          %2694 = vmatpush1.bf16.msra.mxu0 %v2677
          %2695 = vmatprep.subr.bf16.mxu0 0
          %2696 = vmatpush1.bf16.msra.mxu0 %v2678
          %2697 = vmatprep.subr.bf16.mxu0 0
          %2698 = vmatpush1.bf16.msra.mxu0 %v2679
          %2699 = vmatprep.subr.bf16.mxu0 0
          %2700 = vmatpush1.bf16.msra.mxu0 %v2680
          %2701 = vmatprep.subr.bf16.mxu0 0
          %2702 = vmatpush1.bf16.msra.mxu0 %v2681
          %2703 = vmatprep.subr.bf16.mxu0 0
          %2704 = vmatpush1.bf16.msra.mxu0 %v2682
          %2705 = vmatprep.subr.bf16.mxu0 0
          %2706 = vmatpush1.bf16.msra.mxu0 %v2683
          %2707 = vmatprep.subr.bf16.mxu0 0
          %2708 = vmatpush1.bf16.msra.mxu0 %v2684
          %2709 = vmatprep.subr.bf16.mxu0 0
          %2710 = vmatpush1.bf16.msra.mxu0 0
          %2711 = vmatprep.subr.bf16.mxu0 0
          %2712 = vmatpush1.bf16.msra.mxu0 0
          %2713 = vmatprep.subr.bf16.mxu0 0
          %2714 = vmatpush1.bf16.msra.mxu0 0
          %2715 = vmatprep.subr.bf16.mxu0 0
          %2716 = vmatpush1.bf16.msra.mxu0 0
          %2717 = vmatprep.subr.bf16.mxu0 0
          %2718 = vmatpush1.bf16.msra.mxu0 0
          %2719 = vmatprep.subr.bf16.mxu0 0
          %2720 = vmatpush1.bf16.msra.mxu0 0
          %2721 = vmatprep.subr.bf16.mxu0 0
          %2722 = vmatpush1.bf16.msra.mxu0 0
          %2723 = vmatprep.subr.bf16.mxu0 0
          %2724 = vmatpush1.bf16.msra.mxu0 0
          %2725 = vmatprep.mubr.bf16.mxu0 0
          %2726 = vmatmul.mubr.bf16.gmra.mrb[0].mxu0 %v2090
          %v2727 = vpop.f32.mrb[0].mxu0
          %v2728 = vadd.f32 %v2644, %v2727
          %v2729 = vpop.f32.mrb[0].mxu0
          %v2730 = vpop.f32.mrb[0].mxu0
          %v2731 = vpop.f32.mrb[0].mxu0
          %2732 = vdwg.mxu0
          %v2733 = vmul.f32 %v2306, %v2728
          %v2734 = vadd.f32 %v2623, %v2733
          %v2735 = vtanh.pop %v2734
          %v2736 = vsub.f32 1.0, %v2522
          %v2737 = vmul.f32 %v2736, %v2735
          %v2738 = vmul.f32 %v2522, %v2021
          %v2739 = vadd.f32 %v2737, %v2738
          %v2741 = vcombine.high %v2739, %v2739
          %v2743 = vunpack.c.l.s4 1966171168
          %v2744 = vunpack.c.0.s8 %v2743
          %v2745 = vlaneseq
          %v2746 = vshrl.u32 %v2745, 7
          %v2747 = vsub.s32 %v2744, %v2746
          %v2748 = vrot.slane %v2739, %v2747
          %v2750 = vunpack.c.l.s4 1966171168
          %v2751 = vunpack.c.0.s8 %v2750
          %v2752 = vlaneseq
          %v2753 = vshrl.u32 %v2752, 7
          %v2754 = vsub.s32 %v2751, %v2753
          %v2755 = vrot.slane %v2741, %v2754
          %v2756 = vcombine.high %v2748, %v2748
          %v2757 = vcombine.high %v2755, %v2755
          %v2759 = vunpack.c.l.s4 1966171168
          %v2760 = vunpack.c.0.s8 %v2759
          %v2761 = vlaneseq
          %v2762 = vshrl.u32 %v2761, 7
          %v2763 = vsub.s32 %v2760, %v2762
          %v2764 = vrot.slane %v2748, %v2763
          %v2766 = vunpack.c.l.s4 1966171168
          %v2767 = vunpack.c.0.s8 %v2766
          %v2768 = vlaneseq
          %v2769 = vshrl.u32 %v2768, 7
          %v2770 = vsub.s32 %v2767, %v2769
          %v2771 = vrot.slane %v2755, %v2770
          %v2773 = vunpack.c.l.s4 1966171168
          %v2774 = vunpack.c.0.s8 %v2773
          %v2775 = vlaneseq
          %v2776 = vshrl.u32 %v2775, 7
          %v2777 = vsub.s32 %v2774, %v2776
          %v2778 = vrot.slane %v2756, %v2777
          %v2780 = vunpack.c.l.s4 1966171168
          %v2781 = vunpack.c.0.s8 %v2780
          %v2782 = vlaneseq
          %v2783 = vshrl.u32 %v2782, 7
          %v2784 = vsub.s32 %v2781, %v2783
          %v2785 = vrot.slane %v2757, %v2784
          %v2786 = vcombine.high %v2764, %v2764
          %v2787 = vcombine.high %v2771, %v2771
          %v2788 = vcombine.high %v2778, %v2778
          %v2789 = vcombine.high %v2785, %v2785
          %2798 = vst [vmem:[#allocation2 + $0x2] sm:$0x1] %v2764
          %2799 = vst [vmem:[#allocation2 + $0xa] sm:$0x1] %v2778
          %2800 = vst [vmem:[#allocation2 + $0x12] sm:$0x1] %v2786
          %2801 = vst [vmem:[#allocation2 + $0x1a] sm:$0x1] %v2788
          %2802 = vst [vmem:[#allocation2 + $0x22] sm:$0x1] %v2771
          %2803 = vst [vmem:[#allocation2 + $0x2a] sm:$0x1] %v2785
          %2804 = vst [vmem:[#allocation2 + $0x32] sm:$0x1] %v2787
          %2805 = vst [vmem:[#allocation2 + $0x3a] sm:$0x1] %v2789
          %s2806 = scalar_lea.vmem [#allocation5], 12
          %v2807 = vld [vmem:[%s2806] sm:$0xf]
          %v2808 = vpack.c.bf16 %v2739, %v2739
          %v2809 = vld [vmem:[#allocation8] sm:$0xf]
          %v2810 = vld [vmem:[#allocation8 + $0x4] sm:$0xf]
          %v2811 = vld [vmem:[#allocation8 + $0x8] sm:$0xf]
          %v2812 = vld [vmem:[#allocation8 + $0xc] sm:$0xf]
          %v2813 = vld [vmem:[#allocation8 + $0x10] sm:$0xf]
          %v2814 = vld [vmem:[#allocation8 + $0x14] sm:$0xf]
          %v2815 = vld [vmem:[#allocation8 + $0x18] sm:$0xf]
          %v2816 = vld [vmem:[#allocation8 + $0x1c] sm:$0xf]
          %v2817 = vld [vmem:[#allocation8 + $0x20] sm:$0xf]
          %v2818 = vld [vmem:[#allocation8 + $0x24] sm:$0xf]
          %v2819 = vld [vmem:[#allocation8 + $0x28] sm:$0xf]
          %v2820 = vld [vmem:[#allocation8 + $0x2c] sm:$0xf]
          %v2821 = vld [vmem:[#allocation8 + $0x30] sm:$0xf]
          %v2822 = vld [vmem:[#allocation8 + $0x34] sm:$0xf]
          %v2823 = vld [vmem:[#allocation8 + $0x38] sm:$0xf]
          %v2824 = vld [vmem:[#allocation8 + $0x3c] sm:$0xf]
          %v2825 = vld [vmem:[#allocation10] sm:$0xf]
          %v2826 = vld [vmem:[#allocation10 + $0x4] sm:$0xf]
          %v2827 = vld [vmem:[#allocation10 + $0x8] sm:$0xf]
          %v2828 = vld [vmem:[#allocation10 + $0xc] sm:$0xf]
          %v2829 = vld [vmem:[#allocation10 + $0x10] sm:$0xf]
          %v2830 = vld [vmem:[#allocation10 + $0x14] sm:$0xf]
          %v2831 = vld [vmem:[#allocation10 + $0x18] sm:$0xf]
          %v2832 = vld [vmem:[#allocation10 + $0x1c] sm:$0xf]
          %v2833 = vld [vmem:[#allocation10 + $0x20] sm:$0xf]
          %v2834 = vld [vmem:[#allocation10 + $0x24] sm:$0xf]
          %v2835 = vld [vmem:[#allocation10 + $0x28] sm:$0xf]
          %v2836 = vld [vmem:[#allocation10 + $0x2c] sm:$0xf]
          %v2837 = vld [vmem:[#allocation10 + $0x30] sm:$0xf]
          %v2838 = vld [vmem:[#allocation10 + $0x34] sm:$0xf]
          %v2839 = vld [vmem:[#allocation10 + $0x38] sm:$0xf]
          %v2840 = vld [vmem:[#allocation10 + $0x3c] sm:$0xf]
          %v2857 = vunpack.c.l.b16 %v2825
          %v2858 = vunpack.c.l.b16 %v2826
          %v2859 = vunpack.c.l.b16 %v2827
          %v2860 = vunpack.c.l.b16 %v2828
          %v2861 = vunpack.c.l.b16 %v2829
          %v2862 = vunpack.c.l.b16 %v2830
          %v2863 = vunpack.c.l.b16 %v2831
          %v2864 = vunpack.c.l.b16 %v2832
          %v2865 = vunpack.c.l.b16 %v2833
          %v2866 = vunpack.c.l.b16 %v2834
          %v2867 = vunpack.c.l.b16 %v2835
          %v2868 = vunpack.c.l.b16 %v2836
          %v2869 = vunpack.c.l.b16 %v2837
          %v2870 = vunpack.c.l.b16 %v2838
          %v2871 = vunpack.c.l.b16 %v2839
          %v2872 = vunpack.c.l.b16 %v2840
          %v2873 = vpack.c.b16 %v2858, %v2857
          %v2874 = vpack.c.b16 %v2860, %v2859
          %v2875 = vpack.c.b16 %v2862, %v2861
          %v2876 = vpack.c.b16 %v2864, %v2863
          %v2877 = vpack.c.b16 %v2866, %v2865
          %v2878 = vpack.c.b16 %v2868, %v2867
          %v2879 = vpack.c.b16 %v2870, %v2869
          %v2880 = vpack.c.b16 %v2872, %v2871
          %2889 = vmatprep.subr.bf16.mxu0 0
          %2890 = vmatpush1.bf16.msra.mxu0 %v2873
          %2891 = vmatprep.subr.bf16.mxu0 0
          %2892 = vmatpush1.bf16.msra.mxu0 %v2874
          %2893 = vmatprep.subr.bf16.mxu0 0
          %2894 = vmatpush1.bf16.msra.mxu0 %v2875
          %2895 = vmatprep.subr.bf16.mxu0 0
          %2896 = vmatpush1.bf16.msra.mxu0 %v2876
          %2897 = vmatprep.subr.bf16.mxu0 0
          %2898 = vmatpush1.bf16.msra.mxu0 %v2877
          %2899 = vmatprep.subr.bf16.mxu0 0
          %2900 = vmatpush1.bf16.msra.mxu0 %v2878
          %2901 = vmatprep.subr.bf16.mxu0 0
          %2902 = vmatpush1.bf16.msra.mxu0 %v2879
          %2903 = vmatprep.subr.bf16.mxu0 0
          %2904 = vmatpush1.bf16.msra.mxu0 %v2880
          %2905 = vmatprep.subr.bf16.mxu0 0
          %2906 = vmatpush1.bf16.msra.mxu0 0
          %2907 = vmatprep.subr.bf16.mxu0 0
          %2908 = vmatpush1.bf16.msra.mxu0 0
          %2909 = vmatprep.subr.bf16.mxu0 0
          %2910 = vmatpush1.bf16.msra.mxu0 0
          %2911 = vmatprep.subr.bf16.mxu0 0
          %2912 = vmatpush1.bf16.msra.mxu0 0
          %2913 = vmatprep.subr.bf16.mxu0 0
          %2914 = vmatpush1.bf16.msra.mxu0 0
          %2915 = vmatprep.subr.bf16.mxu0 0
          %2916 = vmatpush1.bf16.msra.mxu0 0
          %2917 = vmatprep.subr.bf16.mxu0 0
          %2918 = vmatpush1.bf16.msra.mxu0 0
          %2919 = vmatprep.subr.bf16.mxu0 0
          %2920 = vmatpush1.bf16.msra.mxu0 0
          %2921 = vmatprep.mubr.bf16.mxu0 0
          %2922 = vmatmul.mubr.bf16.gmra.mrb[0].mxu0 %v2808
          %v2923 = vpop.f32.mrb[0].mxu0
          %v2924 = vadd.f32 0.0, %v2923
          %v2925 = vpop.f32.mrb[0].mxu0
          %v2926 = vpop.f32.mrb[0].mxu0
          %v2927 = vpop.f32.mrb[0].mxu0
          %2928 = vdwg.mxu0
          %v2945 = vunpack.c.l.b16 %v2809
          %v2946 = vunpack.c.l.b16 %v2810
          %v2947 = vunpack.c.l.b16 %v2811
          %v2948 = vunpack.c.l.b16 %v2812
          %v2949 = vunpack.c.l.b16 %v2813
          %v2950 = vunpack.c.l.b16 %v2814
          %v2951 = vunpack.c.l.b16 %v2815
          %v2952 = vunpack.c.l.b16 %v2816
          %v2953 = vunpack.c.l.b16 %v2817
          %v2954 = vunpack.c.l.b16 %v2818
          %v2955 = vunpack.c.l.b16 %v2819
          %v2956 = vunpack.c.l.b16 %v2820
          %v2957 = vunpack.c.l.b16 %v2821
          %v2958 = vunpack.c.l.b16 %v2822
          %v2959 = vunpack.c.l.b16 %v2823
          %v2960 = vunpack.c.l.b16 %v2824
          %v2961 = vpack.c.b16 %v2946, %v2945
          %v2962 = vpack.c.b16 %v2948, %v2947
          %v2963 = vpack.c.b16 %v2950, %v2949
          %v2964 = vpack.c.b16 %v2952, %v2951
          %v2965 = vpack.c.b16 %v2954, %v2953
          %v2966 = vpack.c.b16 %v2956, %v2955
          %v2967 = vpack.c.b16 %v2958, %v2957
          %v2968 = vpack.c.b16 %v2960, %v2959
          %2977 = vmatprep.subr.bf16.mxu0 0
          %2978 = vmatpush1.bf16.msra.mxu0 %v2961
          %2979 = vmatprep.subr.bf16.mxu0 0
          %2980 = vmatpush1.bf16.msra.mxu0 %v2962
          %2981 = vmatprep.subr.bf16.mxu0 0
          %2982 = vmatpush1.bf16.msra.mxu0 %v2963
          %2983 = vmatprep.subr.bf16.mxu0 0
          %2984 = vmatpush1.bf16.msra.mxu0 %v2964
          %2985 = vmatprep.subr.bf16.mxu0 0
          %2986 = vmatpush1.bf16.msra.mxu0 %v2965
          %2987 = vmatprep.subr.bf16.mxu0 0
          %2988 = vmatpush1.bf16.msra.mxu0 %v2966
          %2989 = vmatprep.subr.bf16.mxu0 0
          %2990 = vmatpush1.bf16.msra.mxu0 %v2967
          %2991 = vmatprep.subr.bf16.mxu0 0
          %2992 = vmatpush1.bf16.msra.mxu0 %v2968
          %2993 = vmatprep.subr.bf16.mxu0 0
          %2994 = vmatpush1.bf16.msra.mxu0 0
          %2995 = vmatprep.subr.bf16.mxu0 0
          %2996 = vmatpush1.bf16.msra.mxu0 0
          %2997 = vmatprep.subr.bf16.mxu0 0
          %2998 = vmatpush1.bf16.msra.mxu0 0
          %2999 = vmatprep.subr.bf16.mxu0 0
          %3000 = vmatpush1.bf16.msra.mxu0 0
          %3001 = vmatprep.subr.bf16.mxu0 0
          %3002 = vmatpush1.bf16.msra.mxu0 0
          %3003 = vmatprep.subr.bf16.mxu0 0
          %3004 = vmatpush1.bf16.msra.mxu0 0
          %3005 = vmatprep.subr.bf16.mxu0 0
          %3006 = vmatpush1.bf16.msra.mxu0 0
          %3007 = vmatprep.subr.bf16.mxu0 0
          %3008 = vmatpush1.bf16.msra.mxu0 0
          %3009 = vmatprep.mubr.bf16.mxu0 0
          %3010 = vmatmul.mubr.bf16.gmra.mrb[0].mxu0 %v2807
          %v3011 = vpop.f32.mrb[0].mxu0
          %v3012 = vadd.f32 %v2924, %v3011
          %v3013 = vpop.f32.mrb[0].mxu0
          %v3014 = vpop.f32.mrb[0].mxu0
          %v3015 = vpop.f32.mrb[0].mxu0
          %3016 = vdwg.mxu0
          %v3017 = vld [vmem:[#allocation11] sm:$0xff]
          %v3018 = vadd.f32 %v3012, %v3017
          %v3019 = vxor.u32 %v3018, 2147483648
          %v3020 = vmul.f32 %v3019, 1.442695
          %v3021 = vpow.pop %v3020
          %v3022 = vadd.f32 %v3021, 1.0
          %v3023 = vrcp.pop %v3022
          %v3024 = vmul.f32 1.0, %v3023
          %v3025 = vld [vmem:[%s864] sm:$0xf]
          %v3026 = vld [vmem:[%s864 + $0x4] sm:$0xf]
          %v3027 = vld [vmem:[%s864 + $0x8] sm:$0xf]
          %v3028 = vld [vmem:[%s864 + $0xc] sm:$0xf]
          %v3029 = vld [vmem:[%s864 + $0x10] sm:$0xf]
          %v3030 = vld [vmem:[%s864 + $0x14] sm:$0xf]
          %v3031 = vld [vmem:[%s864 + $0x18] sm:$0xf]
          %v3032 = vld [vmem:[%s864 + $0x1c] sm:$0xf]
          %v3033 = vld [vmem:[%s864 + $0x20] sm:$0xf]
          %v3034 = vld [vmem:[%s864 + $0x24] sm:$0xf]
          %v3035 = vld [vmem:[%s864 + $0x28] sm:$0xf]
          %v3036 = vld [vmem:[%s864 + $0x2c] sm:$0xf]
          %v3037 = vld [vmem:[%s864 + $0x30] sm:$0xf]
          %v3038 = vld [vmem:[%s864 + $0x34] sm:$0xf]
          %v3039 = vld [vmem:[%s864 + $0x38] sm:$0xf]
          %v3040 = vld [vmem:[%s864 + $0x3c] sm:$0xf]
          %v3041 = vld [vmem:[%s881] sm:$0xf]
          %v3042 = vld [vmem:[%s881 + $0x4] sm:$0xf]
          %v3043 = vld [vmem:[%s881 + $0x8] sm:$0xf]
          %v3044 = vld [vmem:[%s881 + $0xc] sm:$0xf]
          %v3045 = vld [vmem:[%s881 + $0x10] sm:$0xf]
          %v3046 = vld [vmem:[%s881 + $0x14] sm:$0xf]
          %v3047 = vld [vmem:[%s881 + $0x18] sm:$0xf]
          %v3048 = vld [vmem:[%s881 + $0x1c] sm:$0xf]
          %v3049 = vld [vmem:[%s881 + $0x20] sm:$0xf]
          %v3050 = vld [vmem:[%s881 + $0x24] sm:$0xf]
          %v3051 = vld [vmem:[%s881 + $0x28] sm:$0xf]
          %v3052 = vld [vmem:[%s881 + $0x2c] sm:$0xf]
          %v3053 = vld [vmem:[%s881 + $0x30] sm:$0xf]
          %v3054 = vld [vmem:[%s881 + $0x34] sm:$0xf]
          %v3055 = vld [vmem:[%s881 + $0x38] sm:$0xf]
          %v3056 = vld [vmem:[%s881 + $0x3c] sm:$0xf]
          %v3073 = vunpack.c.l.b16 %v3041
          %v3074 = vunpack.c.l.b16 %v3042
          %v3075 = vunpack.c.l.b16 %v3043
          %v3076 = vunpack.c.l.b16 %v3044
          %v3077 = vunpack.c.l.b16 %v3045
          %v3078 = vunpack.c.l.b16 %v3046
          %v3079 = vunpack.c.l.b16 %v3047
          %v3080 = vunpack.c.l.b16 %v3048
          %v3081 = vunpack.c.l.b16 %v3049
          %v3082 = vunpack.c.l.b16 %v3050
          %v3083 = vunpack.c.l.b16 %v3051
          %v3084 = vunpack.c.l.b16 %v3052
          %v3085 = vunpack.c.l.b16 %v3053
          %v3086 = vunpack.c.l.b16 %v3054
          %v3087 = vunpack.c.l.b16 %v3055
          %v3088 = vunpack.c.l.b16 %v3056
          %v3089 = vpack.c.b16 %v3074, %v3073
          %v3090 = vpack.c.b16 %v3076, %v3075
          %v3091 = vpack.c.b16 %v3078, %v3077
          %v3092 = vpack.c.b16 %v3080, %v3079
          %v3093 = vpack.c.b16 %v3082, %v3081
          %v3094 = vpack.c.b16 %v3084, %v3083
          %v3095 = vpack.c.b16 %v3086, %v3085
          %v3096 = vpack.c.b16 %v3088, %v3087
          %3105 = vmatprep.subr.bf16.mxu0 0
          %3106 = vmatpush1.bf16.msra.mxu0 %v3089
          %3107 = vmatprep.subr.bf16.mxu0 0
          %3108 = vmatpush1.bf16.msra.mxu0 %v3090
          %3109 = vmatprep.subr.bf16.mxu0 0
          %3110 = vmatpush1.bf16.msra.mxu0 %v3091
          %3111 = vmatprep.subr.bf16.mxu0 0
          %3112 = vmatpush1.bf16.msra.mxu0 %v3092
          %3113 = vmatprep.subr.bf16.mxu0 0
          %3114 = vmatpush1.bf16.msra.mxu0 %v3093
          %3115 = vmatprep.subr.bf16.mxu0 0
          %3116 = vmatpush1.bf16.msra.mxu0 %v3094
          %3117 = vmatprep.subr.bf16.mxu0 0
          %3118 = vmatpush1.bf16.msra.mxu0 %v3095
          %3119 = vmatprep.subr.bf16.mxu0 0
          %3120 = vmatpush1.bf16.msra.mxu0 %v3096
          %3121 = vmatprep.subr.bf16.mxu0 0
          %3122 = vmatpush1.bf16.msra.mxu0 0
          %3123 = vmatprep.subr.bf16.mxu0 0
          %3124 = vmatpush1.bf16.msra.mxu0 0
          %3125 = vmatprep.subr.bf16.mxu0 0
          %3126 = vmatpush1.bf16.msra.mxu0 0
          %3127 = vmatprep.subr.bf16.mxu0 0
          %3128 = vmatpush1.bf16.msra.mxu0 0
          %3129 = vmatprep.subr.bf16.mxu0 0
          %3130 = vmatpush1.bf16.msra.mxu0 0
          %3131 = vmatprep.subr.bf16.mxu0 0
          %3132 = vmatpush1.bf16.msra.mxu0 0
          %3133 = vmatprep.subr.bf16.mxu0 0
          %3134 = vmatpush1.bf16.msra.mxu0 0
          %3135 = vmatprep.subr.bf16.mxu0 0
          %3136 = vmatpush1.bf16.msra.mxu0 0
          %3137 = vmatprep.mubr.bf16.mxu0 0
          %3138 = vmatmul.mubr.bf16.gmra.mrb[0].mxu0 %v2808
          %v3139 = vpop.f32.mrb[0].mxu0
          %v3140 = vadd.f32 0.0, %v3139
          %v3141 = vpop.f32.mrb[0].mxu0
          %v3142 = vpop.f32.mrb[0].mxu0
          %v3143 = vpop.f32.mrb[0].mxu0
          %3144 = vdwg.mxu0
          %v3161 = vunpack.c.l.b16 %v3025
          %v3162 = vunpack.c.l.b16 %v3026
          %v3163 = vunpack.c.l.b16 %v3027
          %v3164 = vunpack.c.l.b16 %v3028
          %v3165 = vunpack.c.l.b16 %v3029
          %v3166 = vunpack.c.l.b16 %v3030
          %v3167 = vunpack.c.l.b16 %v3031
          %v3168 = vunpack.c.l.b16 %v3032
          %v3169 = vunpack.c.l.b16 %v3033
          %v3170 = vunpack.c.l.b16 %v3034
          %v3171 = vunpack.c.l.b16 %v3035
          %v3172 = vunpack.c.l.b16 %v3036
          %v3173 = vunpack.c.l.b16 %v3037
          %v3174 = vunpack.c.l.b16 %v3038
          %v3175 = vunpack.c.l.b16 %v3039
          %v3176 = vunpack.c.l.b16 %v3040
          %v3177 = vpack.c.b16 %v3162, %v3161
          %v3178 = vpack.c.b16 %v3164, %v3163
          %v3179 = vpack.c.b16 %v3166, %v3165
          %v3180 = vpack.c.b16 %v3168, %v3167
          %v3181 = vpack.c.b16 %v3170, %v3169
          %v3182 = vpack.c.b16 %v3172, %v3171
          %v3183 = vpack.c.b16 %v3174, %v3173
          %v3184 = vpack.c.b16 %v3176, %v3175
          %3193 = vmatprep.subr.bf16.mxu0 0
          %3194 = vmatpush1.bf16.msra.mxu0 %v3177
          %3195 = vmatprep.subr.bf16.mxu0 0
          %3196 = vmatpush1.bf16.msra.mxu0 %v3178
          %3197 = vmatprep.subr.bf16.mxu0 0
          %3198 = vmatpush1.bf16.msra.mxu0 %v3179
          %3199 = vmatprep.subr.bf16.mxu0 0
          %3200 = vmatpush1.bf16.msra.mxu0 %v3180
          %3201 = vmatprep.subr.bf16.mxu0 0
          %3202 = vmatpush1.bf16.msra.mxu0 %v3181
          %3203 = vmatprep.subr.bf16.mxu0 0
          %3204 = vmatpush1.bf16.msra.mxu0 %v3182
          %3205 = vmatprep.subr.bf16.mxu0 0
          %3206 = vmatpush1.bf16.msra.mxu0 %v3183
          %3207 = vmatprep.subr.bf16.mxu0 0
          %3208 = vmatpush1.bf16.msra.mxu0 %v3184
          %3209 = vmatprep.subr.bf16.mxu0 0
          %3210 = vmatpush1.bf16.msra.mxu0 0
          %3211 = vmatprep.subr.bf16.mxu0 0
          %3212 = vmatpush1.bf16.msra.mxu0 0
          %3213 = vmatprep.subr.bf16.mxu0 0
          %3214 = vmatpush1.bf16.msra.mxu0 0
          %3215 = vmatprep.subr.bf16.mxu0 0
          %3216 = vmatpush1.bf16.msra.mxu0 0
          %3217 = vmatprep.subr.bf16.mxu0 0
          %3218 = vmatpush1.bf16.msra.mxu0 0
          %3219 = vmatprep.subr.bf16.mxu0 0
          %3220 = vmatpush1.bf16.msra.mxu0 0
          %3221 = vmatprep.subr.bf16.mxu0 0
          %3222 = vmatpush1.bf16.msra.mxu0 0
          %3223 = vmatprep.subr.bf16.mxu0 0
          %3224 = vmatpush1.bf16.msra.mxu0 0
          %3225 = vmatprep.mubr.bf16.mxu0 0
          %3226 = vmatmul.mubr.bf16.gmra.mrb[0].mxu0 %v2807
          %v3227 = vpop.f32.mrb[0].mxu0
          %v3228 = vadd.f32 %v3140, %v3227
          %v3229 = vpop.f32.mrb[0].mxu0
          %v3230 = vpop.f32.mrb[0].mxu0
          %v3231 = vpop.f32.mrb[0].mxu0
          %3232 = vdwg.mxu0
          %v3233 = vld [vmem:[%s1074] sm:$0xff]
          %v3234 = vadd.f32 %v3228, %v3233
          %v3235 = vxor.u32 %v3234, 2147483648
          %v3236 = vmul.f32 %v3235, 1.442695
          %v3237 = vpow.pop %v3236
          %v3238 = vadd.f32 %v3237, 1.0
          %v3239 = vrcp.pop %v3238
          %v3240 = vmul.f32 1.0, %v3239
          %v3241 = vld [vmem:[%s1083] sm:$0xf]
          %v3242 = vld [vmem:[%s1083 + $0x4] sm:$0xf]
          %v3243 = vld [vmem:[%s1083 + $0x8] sm:$0xf]
          %v3244 = vld [vmem:[%s1083 + $0xc] sm:$0xf]
          %v3245 = vld [vmem:[%s1083 + $0x10] sm:$0xf]
          %v3246 = vld [vmem:[%s1083 + $0x14] sm:$0xf]
          %v3247 = vld [vmem:[%s1083 + $0x18] sm:$0xf]
          %v3248 = vld [vmem:[%s1083 + $0x1c] sm:$0xf]
          %v3249 = vld [vmem:[%s1083 + $0x20] sm:$0xf]
          %v3250 = vld [vmem:[%s1083 + $0x24] sm:$0xf]
          %v3251 = vld [vmem:[%s1083 + $0x28] sm:$0xf]
          %v3252 = vld [vmem:[%s1083 + $0x2c] sm:$0xf]
          %v3253 = vld [vmem:[%s1083 + $0x30] sm:$0xf]
          %v3254 = vld [vmem:[%s1083 + $0x34] sm:$0xf]
          %v3255 = vld [vmem:[%s1083 + $0x38] sm:$0xf]
          %v3256 = vld [vmem:[%s1083 + $0x3c] sm:$0xf]
          %v3257 = vld [vmem:[%s1100] sm:$0xff]
          %v3274 = vunpack.c.l.b16 %v3241
          %v3275 = vunpack.c.l.b16 %v3242
          %v3276 = vunpack.c.l.b16 %v3243
          %v3277 = vunpack.c.l.b16 %v3244
          %v3278 = vunpack.c.l.b16 %v3245
          %v3279 = vunpack.c.l.b16 %v3246
          %v3280 = vunpack.c.l.b16 %v3247
          %v3281 = vunpack.c.l.b16 %v3248
          %v3282 = vunpack.c.l.b16 %v3249
          %v3283 = vunpack.c.l.b16 %v3250
          %v3284 = vunpack.c.l.b16 %v3251
          %v3285 = vunpack.c.l.b16 %v3252
          %v3286 = vunpack.c.l.b16 %v3253
          %v3287 = vunpack.c.l.b16 %v3254
          %v3288 = vunpack.c.l.b16 %v3255
          %v3289 = vunpack.c.l.b16 %v3256
          %v3290 = vpack.c.b16 %v3275, %v3274
          %v3291 = vpack.c.b16 %v3277, %v3276
          %v3292 = vpack.c.b16 %v3279, %v3278
          %v3293 = vpack.c.b16 %v3281, %v3280
          %v3294 = vpack.c.b16 %v3283, %v3282
          %v3295 = vpack.c.b16 %v3285, %v3284
          %v3296 = vpack.c.b16 %v3287, %v3286
          %v3297 = vpack.c.b16 %v3289, %v3288
          %3306 = vmatprep.subr.bf16.mxu0 0
          %3307 = vmatpush1.bf16.msra.mxu0 %v3290
          %3308 = vmatprep.subr.bf16.mxu0 0
          %3309 = vmatpush1.bf16.msra.mxu0 %v3291
          %3310 = vmatprep.subr.bf16.mxu0 0
          %3311 = vmatpush1.bf16.msra.mxu0 %v3292
          %3312 = vmatprep.subr.bf16.mxu0 0
          %3313 = vmatpush1.bf16.msra.mxu0 %v3293
          %3314 = vmatprep.subr.bf16.mxu0 0
          %3315 = vmatpush1.bf16.msra.mxu0 %v3294
          %3316 = vmatprep.subr.bf16.mxu0 0
          %3317 = vmatpush1.bf16.msra.mxu0 %v3295
          %3318 = vmatprep.subr.bf16.mxu0 0
          %3319 = vmatpush1.bf16.msra.mxu0 %v3296
          %3320 = vmatprep.subr.bf16.mxu0 0
          %3321 = vmatpush1.bf16.msra.mxu0 %v3297
          %3322 = vmatprep.subr.bf16.mxu0 0
          %3323 = vmatpush1.bf16.msra.mxu0 0
          %3324 = vmatprep.subr.bf16.mxu0 0
          %3325 = vmatpush1.bf16.msra.mxu0 0
          %3326 = vmatprep.subr.bf16.mxu0 0
          %3327 = vmatpush1.bf16.msra.mxu0 0
          %3328 = vmatprep.subr.bf16.mxu0 0
          %3329 = vmatpush1.bf16.msra.mxu0 0
          %3330 = vmatprep.subr.bf16.mxu0 0
          %3331 = vmatpush1.bf16.msra.mxu0 0
          %3332 = vmatprep.subr.bf16.mxu0 0
          %3333 = vmatpush1.bf16.msra.mxu0 0
          %3334 = vmatprep.subr.bf16.mxu0 0
          %3335 = vmatpush1.bf16.msra.mxu0 0
          %3336 = vmatprep.subr.bf16.mxu0 0
          %3337 = vmatpush1.bf16.msra.mxu0 0
          %3338 = vmatprep.mubr.bf16.mxu0 0
          %3339 = vmatmul.mubr.bf16.gmra.mrb[0].mxu0 %v2807
          %v3340 = vpop.f32.mrb[0].mxu0
          %v3341 = vadd.f32 %v3257, %v3340
          %v3342 = vpop.f32.mrb[0].mxu0
          %v3343 = vpop.f32.mrb[0].mxu0
          %v3344 = vpop.f32.mrb[0].mxu0
          %3345 = vdwg.mxu0
          %v3346 = vld [vmem:[%s1190] sm:$0xf]
          %v3347 = vld [vmem:[%s1190 + $0x4] sm:$0xf]
          %v3348 = vld [vmem:[%s1190 + $0x8] sm:$0xf]
          %v3349 = vld [vmem:[%s1190 + $0xc] sm:$0xf]
          %v3350 = vld [vmem:[%s1190 + $0x10] sm:$0xf]
          %v3351 = vld [vmem:[%s1190 + $0x14] sm:$0xf]
          %v3352 = vld [vmem:[%s1190 + $0x18] sm:$0xf]
          %v3353 = vld [vmem:[%s1190 + $0x1c] sm:$0xf]
          %v3354 = vld [vmem:[%s1190 + $0x20] sm:$0xf]
          %v3355 = vld [vmem:[%s1190 + $0x24] sm:$0xf]
          %v3356 = vld [vmem:[%s1190 + $0x28] sm:$0xf]
          %v3357 = vld [vmem:[%s1190 + $0x2c] sm:$0xf]
          %v3358 = vld [vmem:[%s1190 + $0x30] sm:$0xf]
          %v3359 = vld [vmem:[%s1190 + $0x34] sm:$0xf]
          %v3360 = vld [vmem:[%s1190 + $0x38] sm:$0xf]
          %v3361 = vld [vmem:[%s1190 + $0x3c] sm:$0xf]
          %v3362 = vld [vmem:[%s1207] sm:$0xff]
          %v3379 = vunpack.c.l.b16 %v3346
          %v3380 = vunpack.c.l.b16 %v3347
          %v3381 = vunpack.c.l.b16 %v3348
          %v3382 = vunpack.c.l.b16 %v3349
          %v3383 = vunpack.c.l.b16 %v3350
          %v3384 = vunpack.c.l.b16 %v3351
          %v3385 = vunpack.c.l.b16 %v3352
          %v3386 = vunpack.c.l.b16 %v3353
          %v3387 = vunpack.c.l.b16 %v3354
          %v3388 = vunpack.c.l.b16 %v3355
          %v3389 = vunpack.c.l.b16 %v3356
          %v3390 = vunpack.c.l.b16 %v3357
          %v3391 = vunpack.c.l.b16 %v3358
          %v3392 = vunpack.c.l.b16 %v3359
          %v3393 = vunpack.c.l.b16 %v3360
          %v3394 = vunpack.c.l.b16 %v3361
          %v3395 = vpack.c.b16 %v3380, %v3379
          %v3396 = vpack.c.b16 %v3382, %v3381
          %v3397 = vpack.c.b16 %v3384, %v3383
          %v3398 = vpack.c.b16 %v3386, %v3385
          %v3399 = vpack.c.b16 %v3388, %v3387
          %v3400 = vpack.c.b16 %v3390, %v3389
          %v3401 = vpack.c.b16 %v3392, %v3391
          %v3402 = vpack.c.b16 %v3394, %v3393
          %3411 = vmatprep.subr.bf16.mxu0 0
          %3412 = vmatpush1.bf16.msra.mxu0 %v3395
          %3413 = vmatprep.subr.bf16.mxu0 0
          %3414 = vmatpush1.bf16.msra.mxu0 %v3396
          %3415 = vmatprep.subr.bf16.mxu0 0
          %3416 = vmatpush1.bf16.msra.mxu0 %v3397
          %3417 = vmatprep.subr.bf16.mxu0 0
          %3418 = vmatpush1.bf16.msra.mxu0 %v3398
          %3419 = vmatprep.subr.bf16.mxu0 0
          %3420 = vmatpush1.bf16.msra.mxu0 %v3399
          %3421 = vmatprep.subr.bf16.mxu0 0
          %3422 = vmatpush1.bf16.msra.mxu0 %v3400
          %3423 = vmatprep.subr.bf16.mxu0 0
          %3424 = vmatpush1.bf16.msra.mxu0 %v3401
          %3425 = vmatprep.subr.bf16.mxu0 0
          %3426 = vmatpush1.bf16.msra.mxu0 %v3402
          %3427 = vmatprep.subr.bf16.mxu0 0
          %3428 = vmatpush1.bf16.msra.mxu0 0
          %3429 = vmatprep.subr.bf16.mxu0 0
          %3430 = vmatpush1.bf16.msra.mxu0 0
          %3431 = vmatprep.subr.bf16.mxu0 0
          %3432 = vmatpush1.bf16.msra.mxu0 0
          %3433 = vmatprep.subr.bf16.mxu0 0
          %3434 = vmatpush1.bf16.msra.mxu0 0
          %3435 = vmatprep.subr.bf16.mxu0 0
          %3436 = vmatpush1.bf16.msra.mxu0 0
          %3437 = vmatprep.subr.bf16.mxu0 0
          %3438 = vmatpush1.bf16.msra.mxu0 0
          %3439 = vmatprep.subr.bf16.mxu0 0
          %3440 = vmatpush1.bf16.msra.mxu0 0
          %3441 = vmatprep.subr.bf16.mxu0 0
          %3442 = vmatpush1.bf16.msra.mxu0 0
          %3443 = vmatprep.mubr.bf16.mxu0 0
          %3444 = vmatmul.mubr.bf16.gmra.mrb[0].mxu0 %v2808
          %v3445 = vpop.f32.mrb[0].mxu0
          %v3446 = vadd.f32 %v3362, %v3445
          %v3447 = vpop.f32.mrb[0].mxu0
          %v3448 = vpop.f32.mrb[0].mxu0
          %v3449 = vpop.f32.mrb[0].mxu0
          %3450 = vdwg.mxu0
          %v3451 = vmul.f32 %v3024, %v3446
          %v3452 = vadd.f32 %v3341, %v3451
          %v3453 = vtanh.pop %v3452
          %v3454 = vsub.f32 1.0, %v3240
          %v3455 = vmul.f32 %v3454, %v3453
          %v3456 = vmul.f32 %v3240, %v2739
          %v3457 = vadd.f32 %v3455, %v3456
          %v3459 = vcombine.high %v3457, %v3457
          %v3461 = vunpack.c.l.s4 1966171168
          %v3462 = vunpack.c.0.s8 %v3461
          %v3463 = vlaneseq
          %v3464 = vshrl.u32 %v3463, 7
          %v3465 = vsub.s32 %v3462, %v3464
          %v3466 = vrot.slane %v3457, %v3465
          %v3468 = vunpack.c.l.s4 1966171168
          %v3469 = vunpack.c.0.s8 %v3468
          %v3470 = vlaneseq
          %v3471 = vshrl.u32 %v3470, 7
          %v3472 = vsub.s32 %v3469, %v3471
          %v3473 = vrot.slane %v3459, %v3472
          %v3474 = vcombine.high %v3466, %v3466
          %v3475 = vcombine.high %v3473, %v3473
          %v3477 = vunpack.c.l.s4 1966171168
          %v3478 = vunpack.c.0.s8 %v3477
          %v3479 = vlaneseq
          %v3480 = vshrl.u32 %v3479, 7
          %v3481 = vsub.s32 %v3478, %v3480
          %v3482 = vrot.slane %v3466, %v3481
          %v3484 = vunpack.c.l.s4 1966171168
          %v3485 = vunpack.c.0.s8 %v3484
          %v3486 = vlaneseq
          %v3487 = vshrl.u32 %v3486, 7
          %v3488 = vsub.s32 %v3485, %v3487
          %v3489 = vrot.slane %v3473, %v3488
          %v3491 = vunpack.c.l.s4 1966171168
          %v3492 = vunpack.c.0.s8 %v3491
          %v3493 = vlaneseq
          %v3494 = vshrl.u32 %v3493, 7
          %v3495 = vsub.s32 %v3492, %v3494
          %v3496 = vrot.slane %v3474, %v3495
          %v3498 = vunpack.c.l.s4 1966171168
          %v3499 = vunpack.c.0.s8 %v3498
          %v3500 = vlaneseq
          %v3501 = vshrl.u32 %v3500, 7
          %v3502 = vsub.s32 %v3499, %v3501
          %v3503 = vrot.slane %v3475, %v3502
          %v3504 = vcombine.high %v3482, %v3482
          %v3505 = vcombine.high %v3489, %v3489
          %v3506 = vcombine.high %v3496, %v3496
          %v3507 = vcombine.high %v3503, %v3503
          %3516 = vst [vmem:[#allocation2 + $0x3] sm:$0x1] %v3482
          %3517 = vst [vmem:[#allocation2 + $0xb] sm:$0x1] %v3496
          %3518 = vst [vmem:[#allocation2 + $0x13] sm:$0x1] %v3504
          %3519 = vst [vmem:[#allocation2 + $0x1b] sm:$0x1] %v3506
          %3520 = vst [vmem:[#allocation2 + $0x23] sm:$0x1] %v3489
          %3521 = vst [vmem:[#allocation2 + $0x2b] sm:$0x1] %v3503
          %3522 = vst [vmem:[#allocation2 + $0x33] sm:$0x1] %v3505
          %3523 = vst [vmem:[#allocation2 + $0x3b] sm:$0x1] %v3507
          %s3524 = scalar_lea.vmem [#allocation5], 16
          %v3525 = vld [vmem:[%s3524] sm:$0xf]
          %v3526 = vpack.c.bf16 %v3457, %v3457
          %v3527 = vld [vmem:[#allocation8] sm:$0xf]
          %v3528 = vld [vmem:[#allocation8 + $0x4] sm:$0xf]
          %v3529 = vld [vmem:[#allocation8 + $0x8] sm:$0xf]
          %v3530 = vld [vmem:[#allocation8 + $0xc] sm:$0xf]
          %v3531 = vld [vmem:[#allocation8 + $0x10] sm:$0xf]
          %v3532 = vld [vmem:[#allocation8 + $0x14] sm:$0xf]
          %v3533 = vld [vmem:[#allocation8 + $0x18] sm:$0xf]
          %v3534 = vld [vmem:[#allocation8 + $0x1c] sm:$0xf]
          %v3535 = vld [vmem:[#allocation8 + $0x20] sm:$0xf]
          %v3536 = vld [vmem:[#allocation8 + $0x24] sm:$0xf]
          %v3537 = vld [vmem:[#allocation8 + $0x28] sm:$0xf]
          %v3538 = vld [vmem:[#allocation8 + $0x2c] sm:$0xf]
          %v3539 = vld [vmem:[#allocation8 + $0x30] sm:$0xf]
          %v3540 = vld [vmem:[#allocation8 + $0x34] sm:$0xf]
          %v3541 = vld [vmem:[#allocation8 + $0x38] sm:$0xf]
          %v3542 = vld [vmem:[#allocation8 + $0x3c] sm:$0xf]
          %v3543 = vld [vmem:[#allocation10] sm:$0xf]
          %v3544 = vld [vmem:[#allocation10 + $0x4] sm:$0xf]
          %v3545 = vld [vmem:[#allocation10 + $0x8] sm:$0xf]
          %v3546 = vld [vmem:[#allocation10 + $0xc] sm:$0xf]
          %v3547 = vld [vmem:[#allocation10 + $0x10] sm:$0xf]
          %v3548 = vld [vmem:[#allocation10 + $0x14] sm:$0xf]
          %v3549 = vld [vmem:[#allocation10 + $0x18] sm:$0xf]
          %v3550 = vld [vmem:[#allocation10 + $0x1c] sm:$0xf]
          %v3551 = vld [vmem:[#allocation10 + $0x20] sm:$0xf]
          %v3552 = vld [vmem:[#allocation10 + $0x24] sm:$0xf]
          %v3553 = vld [vmem:[#allocation10 + $0x28] sm:$0xf]
          %v3554 = vld [vmem:[#allocation10 + $0x2c] sm:$0xf]
          %v3555 = vld [vmem:[#allocation10 + $0x30] sm:$0xf]
          %v3556 = vld [vmem:[#allocation10 + $0x34] sm:$0xf]
          %v3557 = vld [vmem:[#allocation10 + $0x38] sm:$0xf]
          %v3558 = vld [vmem:[#allocation10 + $0x3c] sm:$0xf]
          %v3575 = vunpack.c.l.b16 %v3543
          %v3576 = vunpack.c.l.b16 %v3544
          %v3577 = vunpack.c.l.b16 %v3545
          %v3578 = vunpack.c.l.b16 %v3546
          %v3579 = vunpack.c.l.b16 %v3547
          %v3580 = vunpack.c.l.b16 %v3548
          %v3581 = vunpack.c.l.b16 %v3549
          %v3582 = vunpack.c.l.b16 %v3550
          %v3583 = vunpack.c.l.b16 %v3551
          %v3584 = vunpack.c.l.b16 %v3552
          %v3585 = vunpack.c.l.b16 %v3553
          %v3586 = vunpack.c.l.b16 %v3554
          %v3587 = vunpack.c.l.b16 %v3555
          %v3588 = vunpack.c.l.b16 %v3556
          %v3589 = vunpack.c.l.b16 %v3557
          %v3590 = vunpack.c.l.b16 %v3558
          %v3591 = vpack.c.b16 %v3576, %v3575
          %v3592 = vpack.c.b16 %v3578, %v3577
          %v3593 = vpack.c.b16 %v3580, %v3579
          %v3594 = vpack.c.b16 %v3582, %v3581
          %v3595 = vpack.c.b16 %v3584, %v3583
          %v3596 = vpack.c.b16 %v3586, %v3585
          %v3597 = vpack.c.b16 %v3588, %v3587
          %v3598 = vpack.c.b16 %v3590, %v3589
          %3607 = vmatprep.subr.bf16.mxu0 0
          %3608 = vmatpush1.bf16.msra.mxu0 %v3591
          %3609 = vmatprep.subr.bf16.mxu0 0
          %3610 = vmatpush1.bf16.msra.mxu0 %v3592
          %3611 = vmatprep.subr.bf16.mxu0 0
          %3612 = vmatpush1.bf16.msra.mxu0 %v3593
          %3613 = vmatprep.subr.bf16.mxu0 0
          %3614 = vmatpush1.bf16.msra.mxu0 %v3594
          %3615 = vmatprep.subr.bf16.mxu0 0
          %3616 = vmatpush1.bf16.msra.mxu0 %v3595
          %3617 = vmatprep.subr.bf16.mxu0 0
          %3618 = vmatpush1.bf16.msra.mxu0 %v3596
          %3619 = vmatprep.subr.bf16.mxu0 0
          %3620 = vmatpush1.bf16.msra.mxu0 %v3597
          %3621 = vmatprep.subr.bf16.mxu0 0
          %3622 = vmatpush1.bf16.msra.mxu0 %v3598
          %3623 = vmatprep.subr.bf16.mxu0 0
          %3624 = vmatpush1.bf16.msra.mxu0 0
          %3625 = vmatprep.subr.bf16.mxu0 0
          %3626 = vmatpush1.bf16.msra.mxu0 0
          %3627 = vmatprep.subr.bf16.mxu0 0
          %3628 = vmatpush1.bf16.msra.mxu0 0
          %3629 = vmatprep.subr.bf16.mxu0 0
          %3630 = vmatpush1.bf16.msra.mxu0 0
          %3631 = vmatprep.subr.bf16.mxu0 0
          %3632 = vmatpush1.bf16.msra.mxu0 0
          %3633 = vmatprep.subr.bf16.mxu0 0
          %3634 = vmatpush1.bf16.msra.mxu0 0
          %3635 = vmatprep.subr.bf16.mxu0 0
          %3636 = vmatpush1.bf16.msra.mxu0 0
          %3637 = vmatprep.subr.bf16.mxu0 0
          %3638 = vmatpush1.bf16.msra.mxu0 0
          %3639 = vmatprep.mubr.bf16.mxu0 0
          %3640 = vmatmul.mubr.bf16.gmra.mrb[0].mxu0 %v3526
          %v3641 = vpop.f32.mrb[0].mxu0
          %v3642 = vadd.f32 0.0, %v3641
          %v3643 = vpop.f32.mrb[0].mxu0
          %v3644 = vpop.f32.mrb[0].mxu0
          %v3645 = vpop.f32.mrb[0].mxu0
          %3646 = vdwg.mxu0
          %v3663 = vunpack.c.l.b16 %v3527
          %v3664 = vunpack.c.l.b16 %v3528
          %v3665 = vunpack.c.l.b16 %v3529
          %v3666 = vunpack.c.l.b16 %v3530
          %v3667 = vunpack.c.l.b16 %v3531
          %v3668 = vunpack.c.l.b16 %v3532
          %v3669 = vunpack.c.l.b16 %v3533
          %v3670 = vunpack.c.l.b16 %v3534
          %v3671 = vunpack.c.l.b16 %v3535
          %v3672 = vunpack.c.l.b16 %v3536
          %v3673 = vunpack.c.l.b16 %v3537
          %v3674 = vunpack.c.l.b16 %v3538
          %v3675 = vunpack.c.l.b16 %v3539
          %v3676 = vunpack.c.l.b16 %v3540
          %v3677 = vunpack.c.l.b16 %v3541
          %v3678 = vunpack.c.l.b16 %v3542
          %v3679 = vpack.c.b16 %v3664, %v3663
          %v3680 = vpack.c.b16 %v3666, %v3665
          %v3681 = vpack.c.b16 %v3668, %v3667
          %v3682 = vpack.c.b16 %v3670, %v3669
          %v3683 = vpack.c.b16 %v3672, %v3671
          %v3684 = vpack.c.b16 %v3674, %v3673
          %v3685 = vpack.c.b16 %v3676, %v3675
          %v3686 = vpack.c.b16 %v3678, %v3677
          %3695 = vmatprep.subr.bf16.mxu0 0
          %3696 = vmatpush1.bf16.msra.mxu0 %v3679
          %3697 = vmatprep.subr.bf16.mxu0 0
          %3698 = vmatpush1.bf16.msra.mxu0 %v3680
          %3699 = vmatprep.subr.bf16.mxu0 0
          %3700 = vmatpush1.bf16.msra.mxu0 %v3681
          %3701 = vmatprep.subr.bf16.mxu0 0
          %3702 = vmatpush1.bf16.msra.mxu0 %v3682
          %3703 = vmatprep.subr.bf16.mxu0 0
          %3704 = vmatpush1.bf16.msra.mxu0 %v3683
          %3705 = vmatprep.subr.bf16.mxu0 0
          %3706 = vmatpush1.bf16.msra.mxu0 %v3684
          %3707 = vmatprep.subr.bf16.mxu0 0
          %3708 = vmatpush1.bf16.msra.mxu0 %v3685
          %3709 = vmatprep.subr.bf16.mxu0 0
          %3710 = vmatpush1.bf16.msra.mxu0 %v3686
          %3711 = vmatprep.subr.bf16.mxu0 0
          %3712 = vmatpush1.bf16.msra.mxu0 0
          %3713 = vmatprep.subr.bf16.mxu0 0
          %3714 = vmatpush1.bf16.msra.mxu0 0
          %3715 = vmatprep.subr.bf16.mxu0 0
          %3716 = vmatpush1.bf16.msra.mxu0 0
          %3717 = vmatprep.subr.bf16.mxu0 0
          %3718 = vmatpush1.bf16.msra.mxu0 0
          %3719 = vmatprep.subr.bf16.mxu0 0
          %3720 = vmatpush1.bf16.msra.mxu0 0
          %3721 = vmatprep.subr.bf16.mxu0 0
          %3722 = vmatpush1.bf16.msra.mxu0 0
          %3723 = vmatprep.subr.bf16.mxu0 0
          %3724 = vmatpush1.bf16.msra.mxu0 0
          %3725 = vmatprep.subr.bf16.mxu0 0
          %3726 = vmatpush1.bf16.msra.mxu0 0
          %3727 = vmatprep.mubr.bf16.mxu0 0
          %3728 = vmatmul.mubr.bf16.gmra.mrb[0].mxu0 %v3525
          %v3729 = vpop.f32.mrb[0].mxu0
          %v3730 = vadd.f32 %v3642, %v3729
          %v3731 = vpop.f32.mrb[0].mxu0
          %v3732 = vpop.f32.mrb[0].mxu0
          %v3733 = vpop.f32.mrb[0].mxu0
          %3734 = vdwg.mxu0
          %v3735 = vld [vmem:[#allocation11] sm:$0xff]
          %v3736 = vadd.f32 %v3730, %v3735
          %v3737 = vxor.u32 %v3736, 2147483648
          %v3738 = vmul.f32 %v3737, 1.442695
          %v3739 = vpow.pop %v3738
          %v3740 = vadd.f32 %v3739, 1.0
          %v3741 = vrcp.pop %v3740
          %v3742 = vmul.f32 1.0, %v3741
          %v3743 = vld [vmem:[%s864] sm:$0xf]
          %v3744 = vld [vmem:[%s864 + $0x4] sm:$0xf]
          %v3745 = vld [vmem:[%s864 + $0x8] sm:$0xf]
          %v3746 = vld [vmem:[%s864 + $0xc] sm:$0xf]
          %v3747 = vld [vmem:[%s864 + $0x10] sm:$0xf]
          %v3748 = vld [vmem:[%s864 + $0x14] sm:$0xf]
          %v3749 = vld [vmem:[%s864 + $0x18] sm:$0xf]
          %v3750 = vld [vmem:[%s864 + $0x1c] sm:$0xf]
          %v3751 = vld [vmem:[%s864 + $0x20] sm:$0xf]
          %v3752 = vld [vmem:[%s864 + $0x24] sm:$0xf]
          %v3753 = vld [vmem:[%s864 + $0x28] sm:$0xf]
          %v3754 = vld [vmem:[%s864 + $0x2c] sm:$0xf]
          %v3755 = vld [vmem:[%s864 + $0x30] sm:$0xf]
          %v3756 = vld [vmem:[%s864 + $0x34] sm:$0xf]
          %v3757 = vld [vmem:[%s864 + $0x38] sm:$0xf]
          %v3758 = vld [vmem:[%s864 + $0x3c] sm:$0xf]
          %v3759 = vld [vmem:[%s881] sm:$0xf]
          %v3760 = vld [vmem:[%s881 + $0x4] sm:$0xf]
          %v3761 = vld [vmem:[%s881 + $0x8] sm:$0xf]
          %v3762 = vld [vmem:[%s881 + $0xc] sm:$0xf]
          %v3763 = vld [vmem:[%s881 + $0x10] sm:$0xf]
          %v3764 = vld [vmem:[%s881 + $0x14] sm:$0xf]
          %v3765 = vld [vmem:[%s881 + $0x18] sm:$0xf]
          %v3766 = vld [vmem:[%s881 + $0x1c] sm:$0xf]
          %v3767 = vld [vmem:[%s881 + $0x20] sm:$0xf]
          %v3768 = vld [vmem:[%s881 + $0x24] sm:$0xf]
          %v3769 = vld [vmem:[%s881 + $0x28] sm:$0xf]
          %v3770 = vld [vmem:[%s881 + $0x2c] sm:$0xf]
          %v3771 = vld [vmem:[%s881 + $0x30] sm:$0xf]
          %v3772 = vld [vmem:[%s881 + $0x34] sm:$0xf]
          %v3773 = vld [vmem:[%s881 + $0x38] sm:$0xf]
          %v3774 = vld [vmem:[%s881 + $0x3c] sm:$0xf]
          %v3791 = vunpack.c.l.b16 %v3759
          %v3792 = vunpack.c.l.b16 %v3760
          %v3793 = vunpack.c.l.b16 %v3761
          %v3794 = vunpack.c.l.b16 %v3762
          %v3795 = vunpack.c.l.b16 %v3763
          %v3796 = vunpack.c.l.b16 %v3764
          %v3797 = vunpack.c.l.b16 %v3765
          %v3798 = vunpack.c.l.b16 %v3766
          %v3799 = vunpack.c.l.b16 %v3767
          %v3800 = vunpack.c.l.b16 %v3768
          %v3801 = vunpack.c.l.b16 %v3769
          %v3802 = vunpack.c.l.b16 %v3770
          %v3803 = vunpack.c.l.b16 %v3771
          %v3804 = vunpack.c.l.b16 %v3772
          %v3805 = vunpack.c.l.b16 %v3773
          %v3806 = vunpack.c.l.b16 %v3774
          %v3807 = vpack.c.b16 %v3792, %v3791
          %v3808 = vpack.c.b16 %v3794, %v3793
          %v3809 = vpack.c.b16 %v3796, %v3795
          %v3810 = vpack.c.b16 %v3798, %v3797
          %v3811 = vpack.c.b16 %v3800, %v3799
          %v3812 = vpack.c.b16 %v3802, %v3801
          %v3813 = vpack.c.b16 %v3804, %v3803
          %v3814 = vpack.c.b16 %v3806, %v3805
          %3823 = vmatprep.subr.bf16.mxu0 0
          %3824 = vmatpush1.bf16.msra.mxu0 %v3807
          %3825 = vmatprep.subr.bf16.mxu0 0
          %3826 = vmatpush1.bf16.msra.mxu0 %v3808
          %3827 = vmatprep.subr.bf16.mxu0 0
          %3828 = vmatpush1.bf16.msra.mxu0 %v3809
          %3829 = vmatprep.subr.bf16.mxu0 0
          %3830 = vmatpush1.bf16.msra.mxu0 %v3810
          %3831 = vmatprep.subr.bf16.mxu0 0
          %3832 = vmatpush1.bf16.msra.mxu0 %v3811
          %3833 = vmatprep.subr.bf16.mxu0 0
          %3834 = vmatpush1.bf16.msra.mxu0 %v3812
          %3835 = vmatprep.subr.bf16.mxu0 0
          %3836 = vmatpush1.bf16.msra.mxu0 %v3813
          %3837 = vmatprep.subr.bf16.mxu0 0
          %3838 = vmatpush1.bf16.msra.mxu0 %v3814
          %3839 = vmatprep.subr.bf16.mxu0 0
          %3840 = vmatpush1.bf16.msra.mxu0 0
          %3841 = vmatprep.subr.bf16.mxu0 0
          %3842 = vmatpush1.bf16.msra.mxu0 0
          %3843 = vmatprep.subr.bf16.mxu0 0
          %3844 = vmatpush1.bf16.msra.mxu0 0
          %3845 = vmatprep.subr.bf16.mxu0 0
          %3846 = vmatpush1.bf16.msra.mxu0 0
          %3847 = vmatprep.subr.bf16.mxu0 0
          %3848 = vmatpush1.bf16.msra.mxu0 0
          %3849 = vmatprep.subr.bf16.mxu0 0
          %3850 = vmatpush1.bf16.msra.mxu0 0
          %3851 = vmatprep.subr.bf16.mxu0 0
          %3852 = vmatpush1.bf16.msra.mxu0 0
          %3853 = vmatprep.subr.bf16.mxu0 0
          %3854 = vmatpush1.bf16.msra.mxu0 0
          %3855 = vmatprep.mubr.bf16.mxu0 0
          %3856 = vmatmul.mubr.bf16.gmra.mrb[0].mxu0 %v3526
          %v3857 = vpop.f32.mrb[0].mxu0
          %v3858 = vadd.f32 0.0, %v3857
          %v3859 = vpop.f32.mrb[0].mxu0
          %v3860 = vpop.f32.mrb[0].mxu0
          %v3861 = vpop.f32.mrb[0].mxu0
          %3862 = vdwg.mxu0
          %v3879 = vunpack.c.l.b16 %v3743
          %v3880 = vunpack.c.l.b16 %v3744
          %v3881 = vunpack.c.l.b16 %v3745
          %v3882 = vunpack.c.l.b16 %v3746
          %v3883 = vunpack.c.l.b16 %v3747
          %v3884 = vunpack.c.l.b16 %v3748
          %v3885 = vunpack.c.l.b16 %v3749
          %v3886 = vunpack.c.l.b16 %v3750
          %v3887 = vunpack.c.l.b16 %v3751
          %v3888 = vunpack.c.l.b16 %v3752
          %v3889 = vunpack.c.l.b16 %v3753
          %v3890 = vunpack.c.l.b16 %v3754
          %v3891 = vunpack.c.l.b16 %v3755
          %v3892 = vunpack.c.l.b16 %v3756
          %v3893 = vunpack.c.l.b16 %v3757
          %v3894 = vunpack.c.l.b16 %v3758
          %v3895 = vpack.c.b16 %v3880, %v3879
          %v3896 = vpack.c.b16 %v3882, %v3881
          %v3897 = vpack.c.b16 %v3884, %v3883
          %v3898 = vpack.c.b16 %v3886, %v3885
          %v3899 = vpack.c.b16 %v3888, %v3887
          %v3900 = vpack.c.b16 %v3890, %v3889
          %v3901 = vpack.c.b16 %v3892, %v3891
          %v3902 = vpack.c.b16 %v3894, %v3893
          %3911 = vmatprep.subr.bf16.mxu0 0
          %3912 = vmatpush1.bf16.msra.mxu0 %v3895
          %3913 = vmatprep.subr.bf16.mxu0 0
          %3914 = vmatpush1.bf16.msra.mxu0 %v3896
          %3915 = vmatprep.subr.bf16.mxu0 0
          %3916 = vmatpush1.bf16.msra.mxu0 %v3897
          %3917 = vmatprep.subr.bf16.mxu0 0
          %3918 = vmatpush1.bf16.msra.mxu0 %v3898
          %3919 = vmatprep.subr.bf16.mxu0 0
          %3920 = vmatpush1.bf16.msra.mxu0 %v3899
          %3921 = vmatprep.subr.bf16.mxu0 0
          %3922 = vmatpush1.bf16.msra.mxu0 %v3900
          %3923 = vmatprep.subr.bf16.mxu0 0
          %3924 = vmatpush1.bf16.msra.mxu0 %v3901
          %3925 = vmatprep.subr.bf16.mxu0 0
          %3926 = vmatpush1.bf16.msra.mxu0 %v3902
          %3927 = vmatprep.subr.bf16.mxu0 0
          %3928 = vmatpush1.bf16.msra.mxu0 0
          %3929 = vmatprep.subr.bf16.mxu0 0
          %3930 = vmatpush1.bf16.msra.mxu0 0
          %3931 = vmatprep.subr.bf16.mxu0 0
          %3932 = vmatpush1.bf16.msra.mxu0 0
          %3933 = vmatprep.subr.bf16.mxu0 0
          %3934 = vmatpush1.bf16.msra.mxu0 0
          %3935 = vmatprep.subr.bf16.mxu0 0
          %3936 = vmatpush1.bf16.msra.mxu0 0
          %3937 = vmatprep.subr.bf16.mxu0 0
          %3938 = vmatpush1.bf16.msra.mxu0 0
          %3939 = vmatprep.subr.bf16.mxu0 0
          %3940 = vmatpush1.bf16.msra.mxu0 0
          %3941 = vmatprep.subr.bf16.mxu0 0
          %3942 = vmatpush1.bf16.msra.mxu0 0
          %3943 = vmatprep.mubr.bf16.mxu0 0
          %3944 = vmatmul.mubr.bf16.gmra.mrb[0].mxu0 %v3525
          %v3945 = vpop.f32.mrb[0].mxu0
          %v3946 = vadd.f32 %v3858, %v3945
          %v3947 = vpop.f32.mrb[0].mxu0
          %v3948 = vpop.f32.mrb[0].mxu0
          %v3949 = vpop.f32.mrb[0].mxu0
          %3950 = vdwg.mxu0
          %v3951 = vld [vmem:[%s1074] sm:$0xff]
          %v3952 = vadd.f32 %v3946, %v3951
          %v3953 = vxor.u32 %v3952, 2147483648
          %v3954 = vmul.f32 %v3953, 1.442695
          %v3955 = vpow.pop %v3954
          %v3956 = vadd.f32 %v3955, 1.0
          %v3957 = vrcp.pop %v3956
          %v3958 = vmul.f32 1.0, %v3957
          %v3959 = vld [vmem:[%s1083] sm:$0xf]
          %v3960 = vld [vmem:[%s1083 + $0x4] sm:$0xf]
          %v3961 = vld [vmem:[%s1083 + $0x8] sm:$0xf]
          %v3962 = vld [vmem:[%s1083 + $0xc] sm:$0xf]
          %v3963 = vld [vmem:[%s1083 + $0x10] sm:$0xf]
          %v3964 = vld [vmem:[%s1083 + $0x14] sm:$0xf]
          %v3965 = vld [vmem:[%s1083 + $0x18] sm:$0xf]
          %v3966 = vld [vmem:[%s1083 + $0x1c] sm:$0xf]
          %v3967 = vld [vmem:[%s1083 + $0x20] sm:$0xf]
          %v3968 = vld [vmem:[%s1083 + $0x24] sm:$0xf]
          %v3969 = vld [vmem:[%s1083 + $0x28] sm:$0xf]
          %v3970 = vld [vmem:[%s1083 + $0x2c] sm:$0xf]
          %v3971 = vld [vmem:[%s1083 + $0x30] sm:$0xf]
          %v3972 = vld [vmem:[%s1083 + $0x34] sm:$0xf]
          %v3973 = vld [vmem:[%s1083 + $0x38] sm:$0xf]
          %v3974 = vld [vmem:[%s1083 + $0x3c] sm:$0xf]
          %v3975 = vld [vmem:[%s1100] sm:$0xff]
          %v3992 = vunpack.c.l.b16 %v3959
          %v3993 = vunpack.c.l.b16 %v3960
          %v3994 = vunpack.c.l.b16 %v3961
          %v3995 = vunpack.c.l.b16 %v3962
          %v3996 = vunpack.c.l.b16 %v3963
          %v3997 = vunpack.c.l.b16 %v3964
          %v3998 = vunpack.c.l.b16 %v3965
          %v3999 = vunpack.c.l.b16 %v3966
          %v4000 = vunpack.c.l.b16 %v3967
          %v4001 = vunpack.c.l.b16 %v3968
          %v4002 = vunpack.c.l.b16 %v3969
          %v4003 = vunpack.c.l.b16 %v3970
          %v4004 = vunpack.c.l.b16 %v3971
          %v4005 = vunpack.c.l.b16 %v3972
          %v4006 = vunpack.c.l.b16 %v3973
          %v4007 = vunpack.c.l.b16 %v3974
          %v4008 = vpack.c.b16 %v3993, %v3992
          %v4009 = vpack.c.b16 %v3995, %v3994
          %v4010 = vpack.c.b16 %v3997, %v3996
          %v4011 = vpack.c.b16 %v3999, %v3998
          %v4012 = vpack.c.b16 %v4001, %v4000
          %v4013 = vpack.c.b16 %v4003, %v4002
          %v4014 = vpack.c.b16 %v4005, %v4004
          %v4015 = vpack.c.b16 %v4007, %v4006
          %4024 = vmatprep.subr.bf16.mxu0 0
          %4025 = vmatpush1.bf16.msra.mxu0 %v4008
          %4026 = vmatprep.subr.bf16.mxu0 0
          %4027 = vmatpush1.bf16.msra.mxu0 %v4009
          %4028 = vmatprep.subr.bf16.mxu0 0
          %4029 = vmatpush1.bf16.msra.mxu0 %v4010
          %4030 = vmatprep.subr.bf16.mxu0 0
          %4031 = vmatpush1.bf16.msra.mxu0 %v4011
          %4032 = vmatprep.subr.bf16.mxu0 0
          %4033 = vmatpush1.bf16.msra.mxu0 %v4012
          %4034 = vmatprep.subr.bf16.mxu0 0
          %4035 = vmatpush1.bf16.msra.mxu0 %v4013
          %4036 = vmatprep.subr.bf16.mxu0 0
          %4037 = vmatpush1.bf16.msra.mxu0 %v4014
          %4038 = vmatprep.subr.bf16.mxu0 0
          %4039 = vmatpush1.bf16.msra.mxu0 %v4015
          %4040 = vmatprep.subr.bf16.mxu0 0
          %4041 = vmatpush1.bf16.msra.mxu0 0
          %4042 = vmatprep.subr.bf16.mxu0 0
          %4043 = vmatpush1.bf16.msra.mxu0 0
          %4044 = vmatprep.subr.bf16.mxu0 0
          %4045 = vmatpush1.bf16.msra.mxu0 0
          %4046 = vmatprep.subr.bf16.mxu0 0
          %4047 = vmatpush1.bf16.msra.mxu0 0
          %4048 = vmatprep.subr.bf16.mxu0 0
          %4049 = vmatpush1.bf16.msra.mxu0 0
          %4050 = vmatprep.subr.bf16.mxu0 0
          %4051 = vmatpush1.bf16.msra.mxu0 0
          %4052 = vmatprep.subr.bf16.mxu0 0
          %4053 = vmatpush1.bf16.msra.mxu0 0
          %4054 = vmatprep.subr.bf16.mxu0 0
          %4055 = vmatpush1.bf16.msra.mxu0 0
          %4056 = vmatprep.mubr.bf16.mxu0 0
          %4057 = vmatmul.mubr.bf16.gmra.mrb[0].mxu0 %v3525
          %v4058 = vpop.f32.mrb[0].mxu0
          %v4059 = vadd.f32 %v3975, %v4058
          %v4060 = vpop.f32.mrb[0].mxu0
          %v4061 = vpop.f32.mrb[0].mxu0
          %v4062 = vpop.f32.mrb[0].mxu0
          %4063 = vdwg.mxu0
          %v4064 = vld [vmem:[%s1190] sm:$0xf]
          %v4065 = vld [vmem:[%s1190 + $0x4] sm:$0xf]
          %v4066 = vld [vmem:[%s1190 + $0x8] sm:$0xf]
          %v4067 = vld [vmem:[%s1190 + $0xc] sm:$0xf]
          %v4068 = vld [vmem:[%s1190 + $0x10] sm:$0xf]
          %v4069 = vld [vmem:[%s1190 + $0x14] sm:$0xf]
          %v4070 = vld [vmem:[%s1190 + $0x18] sm:$0xf]
          %v4071 = vld [vmem:[%s1190 + $0x1c] sm:$0xf]
          %v4072 = vld [vmem:[%s1190 + $0x20] sm:$0xf]
          %v4073 = vld [vmem:[%s1190 + $0x24] sm:$0xf]
          %v4074 = vld [vmem:[%s1190 + $0x28] sm:$0xf]
          %v4075 = vld [vmem:[%s1190 + $0x2c] sm:$0xf]
          %v4076 = vld [vmem:[%s1190 + $0x30] sm:$0xf]
          %v4077 = vld [vmem:[%s1190 + $0x34] sm:$0xf]
          %v4078 = vld [vmem:[%s1190 + $0x38] sm:$0xf]
          %v4079 = vld [vmem:[%s1190 + $0x3c] sm:$0xf]
          %v4080 = vld [vmem:[%s1207] sm:$0xff]
          %v4097 = vunpack.c.l.b16 %v4064
          %v4098 = vunpack.c.l.b16 %v4065
          %v4099 = vunpack.c.l.b16 %v4066
          %v4100 = vunpack.c.l.b16 %v4067
          %v4101 = vunpack.c.l.b16 %v4068
          %v4102 = vunpack.c.l.b16 %v4069
          %v4103 = vunpack.c.l.b16 %v4070
          %v4104 = vunpack.c.l.b16 %v4071
          %v4105 = vunpack.c.l.b16 %v4072
          %v4106 = vunpack.c.l.b16 %v4073
          %v4107 = vunpack.c.l.b16 %v4074
          %v4108 = vunpack.c.l.b16 %v4075
          %v4109 = vunpack.c.l.b16 %v4076
          %v4110 = vunpack.c.l.b16 %v4077
          %v4111 = vunpack.c.l.b16 %v4078
          %v4112 = vunpack.c.l.b16 %v4079
          %v4113 = vpack.c.b16 %v4098, %v4097
          %v4114 = vpack.c.b16 %v4100, %v4099
          %v4115 = vpack.c.b16 %v4102, %v4101
          %v4116 = vpack.c.b16 %v4104, %v4103
          %v4117 = vpack.c.b16 %v4106, %v4105
          %v4118 = vpack.c.b16 %v4108, %v4107
          %v4119 = vpack.c.b16 %v4110, %v4109
          %v4120 = vpack.c.b16 %v4112, %v4111
          %4129 = vmatprep.subr.bf16.mxu0 0
          %4130 = vmatpush1.bf16.msra.mxu0 %v4113
          %4131 = vmatprep.subr.bf16.mxu0 0
          %4132 = vmatpush1.bf16.msra.mxu0 %v4114
          %4133 = vmatprep.subr.bf16.mxu0 0
          %4134 = vmatpush1.bf16.msra.mxu0 %v4115
          %4135 = vmatprep.subr.bf16.mxu0 0
          %4136 = vmatpush1.bf16.msra.mxu0 %v4116
          %4137 = vmatprep.subr.bf16.mxu0 0
          %4138 = vmatpush1.bf16.msra.mxu0 %v4117
          %4139 = vmatprep.subr.bf16.mxu0 0
          %4140 = vmatpush1.bf16.msra.mxu0 %v4118
          %4141 = vmatprep.subr.bf16.mxu0 0
          %4142 = vmatpush1.bf16.msra.mxu0 %v4119
          %4143 = vmatprep.subr.bf16.mxu0 0
          %4144 = vmatpush1.bf16.msra.mxu0 %v4120
          %4145 = vmatprep.subr.bf16.mxu0 0
          %4146 = vmatpush1.bf16.msra.mxu0 0
          %4147 = vmatprep.subr.bf16.mxu0 0
          %4148 = vmatpush1.bf16.msra.mxu0 0
          %4149 = vmatprep.subr.bf16.mxu0 0
          %4150 = vmatpush1.bf16.msra.mxu0 0
          %4151 = vmatprep.subr.bf16.mxu0 0
          %4152 = vmatpush1.bf16.msra.mxu0 0
          %4153 = vmatprep.subr.bf16.mxu0 0
          %4154 = vmatpush1.bf16.msra.mxu0 0
          %4155 = vmatprep.subr.bf16.mxu0 0
          %4156 = vmatpush1.bf16.msra.mxu0 0
          %4157 = vmatprep.subr.bf16.mxu0 0
          %4158 = vmatpush1.bf16.msra.mxu0 0
          %4159 = vmatprep.subr.bf16.mxu0 0
          %4160 = vmatpush1.bf16.msra.mxu0 0
          %4161 = vmatprep.mubr.bf16.mxu0 0
          %4162 = vmatmul.mubr.bf16.gmra.mrb[0].mxu0 %v3526
          %v4163 = vpop.f32.mrb[0].mxu0
          %v4164 = vadd.f32 %v4080, %v4163
          %v4165 = vpop.f32.mrb[0].mxu0
          %v4166 = vpop.f32.mrb[0].mxu0
          %v4167 = vpop.f32.mrb[0].mxu0
          %4168 = vdwg.mxu0
          %v4169 = vmul.f32 %v3742, %v4164
          %v4170 = vadd.f32 %v4059, %v4169
          %v4171 = vtanh.pop %v4170
          %v4172 = vsub.f32 1.0, %v3958
          %v4173 = vmul.f32 %v4172, %v4171
          %v4174 = vmul.f32 %v3958, %v3457
          %v4175 = vadd.f32 %v4173, %v4174
          %v4177 = vcombine.high %v4175, %v4175
          %v4179 = vunpack.c.l.s4 1966171168
          %v4180 = vunpack.c.0.s8 %v4179
          %v4181 = vlaneseq
          %v4182 = vshrl.u32 %v4181, 7
          %v4183 = vsub.s32 %v4180, %v4182
          %v4184 = vrot.slane %v4175, %v4183
          %v4186 = vunpack.c.l.s4 1966171168
          %v4187 = vunpack.c.0.s8 %v4186
          %v4188 = vlaneseq
          %v4189 = vshrl.u32 %v4188, 7
          %v4190 = vsub.s32 %v4187, %v4189
          %v4191 = vrot.slane %v4177, %v4190
          %v4192 = vcombine.high %v4184, %v4184
          %v4193 = vcombine.high %v4191, %v4191
          %v4195 = vunpack.c.l.s4 1966171168
          %v4196 = vunpack.c.0.s8 %v4195
          %v4197 = vlaneseq
          %v4198 = vshrl.u32 %v4197, 7
          %v4199 = vsub.s32 %v4196, %v4198
          %v4200 = vrot.slane %v4184, %v4199
          %v4202 = vunpack.c.l.s4 1966171168
          %v4203 = vunpack.c.0.s8 %v4202
          %v4204 = vlaneseq
          %v4205 = vshrl.u32 %v4204, 7
          %v4206 = vsub.s32 %v4203, %v4205
          %v4207 = vrot.slane %v4191, %v4206
          %v4209 = vunpack.c.l.s4 1966171168
          %v4210 = vunpack.c.0.s8 %v4209
          %v4211 = vlaneseq
          %v4212 = vshrl.u32 %v4211, 7
          %v4213 = vsub.s32 %v4210, %v4212
          %v4214 = vrot.slane %v4192, %v4213
          %v4216 = vunpack.c.l.s4 1966171168
          %v4217 = vunpack.c.0.s8 %v4216
          %v4218 = vlaneseq
          %v4219 = vshrl.u32 %v4218, 7
          %v4220 = vsub.s32 %v4217, %v4219
          %v4221 = vrot.slane %v4193, %v4220
          %v4222 = vcombine.high %v4200, %v4200
          %v4223 = vcombine.high %v4207, %v4207
          %v4224 = vcombine.high %v4214, %v4214
          %v4225 = vcombine.high %v4221, %v4221
          %4234 = vst [vmem:[#allocation2 + $0x4] sm:$0x1] %v4200
          %4235 = vst [vmem:[#allocation2 + $0xc] sm:$0x1] %v4214
          %4236 = vst [vmem:[#allocation2 + $0x14] sm:$0x1] %v4222
          %4237 = vst [vmem:[#allocation2 + $0x1c] sm:$0x1] %v4224
          %4238 = vst [vmem:[#allocation2 + $0x24] sm:$0x1] %v4207
          %4239 = vst [vmem:[#allocation2 + $0x2c] sm:$0x1] %v4221
          %4240 = vst [vmem:[#allocation2 + $0x34] sm:$0x1] %v4223
          %4241 = vst [vmem:[#allocation2 + $0x3c] sm:$0x1] %v4225
          %s4242 = scalar_lea.vmem [#allocation5], 20
          %v4243 = vld [vmem:[%s4242] sm:$0xf]
          %v4244 = vpack.c.bf16 %v4175, %v4175
          %v4245 = vld [vmem:[#allocation8] sm:$0xf]
          %v4246 = vld [vmem:[#allocation8 + $0x4] sm:$0xf]
          %v4247 = vld [vmem:[#allocation8 + $0x8] sm:$0xf]
          %v4248 = vld [vmem:[#allocation8 + $0xc] sm:$0xf]
          %v4249 = vld [vmem:[#allocation8 + $0x10] sm:$0xf]
          %v4250 = vld [vmem:[#allocation8 + $0x14] sm:$0xf]
          %v4251 = vld [vmem:[#allocation8 + $0x18] sm:$0xf]
          %v4252 = vld [vmem:[#allocation8 + $0x1c] sm:$0xf]
          %v4253 = vld [vmem:[#allocation8 + $0x20] sm:$0xf]
          %v4254 = vld [vmem:[#allocation8 + $0x24] sm:$0xf]
          %v4255 = vld [vmem:[#allocation8 + $0x28] sm:$0xf]
          %v4256 = vld [vmem:[#allocation8 + $0x2c] sm:$0xf]
          %v4257 = vld [vmem:[#allocation8 + $0x30] sm:$0xf]
          %v4258 = vld [vmem:[#allocation8 + $0x34] sm:$0xf]
          %v4259 = vld [vmem:[#allocation8 + $0x38] sm:$0xf]
          %v4260 = vld [vmem:[#allocation8 + $0x3c] sm:$0xf]
          %v4261 = vld [vmem:[#allocation10] sm:$0xf]
          %v4262 = vld [vmem:[#allocation10 + $0x4] sm:$0xf]
          %v4263 = vld [vmem:[#allocation10 + $0x8] sm:$0xf]
          %v4264 = vld [vmem:[#allocation10 + $0xc] sm:$0xf]
          %v4265 = vld [vmem:[#allocation10 + $0x10] sm:$0xf]
          %v4266 = vld [vmem:[#allocation10 + $0x14] sm:$0xf]
          %v4267 = vld [vmem:[#allocation10 + $0x18] sm:$0xf]
          %v4268 = vld [vmem:[#allocation10 + $0x1c] sm:$0xf]
          %v4269 = vld [vmem:[#allocation10 + $0x20] sm:$0xf]
          %v4270 = vld [vmem:[#allocation10 + $0x24] sm:$0xf]
          %v4271 = vld [vmem:[#allocation10 + $0x28] sm:$0xf]
          %v4272 = vld [vmem:[#allocation10 + $0x2c] sm:$0xf]
          %v4273 = vld [vmem:[#allocation10 + $0x30] sm:$0xf]
          %v4274 = vld [vmem:[#allocation10 + $0x34] sm:$0xf]
          %v4275 = vld [vmem:[#allocation10 + $0x38] sm:$0xf]
          %v4276 = vld [vmem:[#allocation10 + $0x3c] sm:$0xf]
          %v4293 = vunpack.c.l.b16 %v4261
          %v4294 = vunpack.c.l.b16 %v4262
          %v4295 = vunpack.c.l.b16 %v4263
          %v4296 = vunpack.c.l.b16 %v4264
          %v4297 = vunpack.c.l.b16 %v4265
          %v4298 = vunpack.c.l.b16 %v4266
          %v4299 = vunpack.c.l.b16 %v4267
          %v4300 = vunpack.c.l.b16 %v4268
          %v4301 = vunpack.c.l.b16 %v4269
          %v4302 = vunpack.c.l.b16 %v4270
          %v4303 = vunpack.c.l.b16 %v4271
          %v4304 = vunpack.c.l.b16 %v4272
          %v4305 = vunpack.c.l.b16 %v4273
          %v4306 = vunpack.c.l.b16 %v4274
          %v4307 = vunpack.c.l.b16 %v4275
          %v4308 = vunpack.c.l.b16 %v4276
          %v4309 = vpack.c.b16 %v4294, %v4293
          %v4310 = vpack.c.b16 %v4296, %v4295
          %v4311 = vpack.c.b16 %v4298, %v4297
          %v4312 = vpack.c.b16 %v4300, %v4299
          %v4313 = vpack.c.b16 %v4302, %v4301
          %v4314 = vpack.c.b16 %v4304, %v4303
          %v4315 = vpack.c.b16 %v4306, %v4305
          %v4316 = vpack.c.b16 %v4308, %v4307
          %4325 = vmatprep.subr.bf16.mxu0 0
          %4326 = vmatpush1.bf16.msra.mxu0 %v4309
          %4327 = vmatprep.subr.bf16.mxu0 0
          %4328 = vmatpush1.bf16.msra.mxu0 %v4310
          %4329 = vmatprep.subr.bf16.mxu0 0
          %4330 = vmatpush1.bf16.msra.mxu0 %v4311
          %4331 = vmatprep.subr.bf16.mxu0 0
          %4332 = vmatpush1.bf16.msra.mxu0 %v4312
          %4333 = vmatprep.subr.bf16.mxu0 0
          %4334 = vmatpush1.bf16.msra.mxu0 %v4313
          %4335 = vmatprep.subr.bf16.mxu0 0
          %4336 = vmatpush1.bf16.msra.mxu0 %v4314
          %4337 = vmatprep.subr.bf16.mxu0 0
          %4338 = vmatpush1.bf16.msra.mxu0 %v4315
          %4339 = vmatprep.subr.bf16.mxu0 0
          %4340 = vmatpush1.bf16.msra.mxu0 %v4316
          %4341 = vmatprep.subr.bf16.mxu0 0
          %4342 = vmatpush1.bf16.msra.mxu0 0
          %4343 = vmatprep.subr.bf16.mxu0 0
          %4344 = vmatpush1.bf16.msra.mxu0 0
          %4345 = vmatprep.subr.bf16.mxu0 0
          %4346 = vmatpush1.bf16.msra.mxu0 0
          %4347 = vmatprep.subr.bf16.mxu0 0
          %4348 = vmatpush1.bf16.msra.mxu0 0
          %4349 = vmatprep.subr.bf16.mxu0 0
          %4350 = vmatpush1.bf16.msra.mxu0 0
          %4351 = vmatprep.subr.bf16.mxu0 0
          %4352 = vmatpush1.bf16.msra.mxu0 0
          %4353 = vmatprep.subr.bf16.mxu0 0
          %4354 = vmatpush1.bf16.msra.mxu0 0
          %4355 = vmatprep.subr.bf16.mxu0 0
          %4356 = vmatpush1.bf16.msra.mxu0 0
          %4357 = vmatprep.mubr.bf16.mxu0 0
          %4358 = vmatmul.mubr.bf16.gmra.mrb[0].mxu0 %v4244
          %v4359 = vpop.f32.mrb[0].mxu0
          %v4360 = vadd.f32 0.0, %v4359
          %v4361 = vpop.f32.mrb[0].mxu0
          %v4362 = vpop.f32.mrb[0].mxu0
          %v4363 = vpop.f32.mrb[0].mxu0
          %4364 = vdwg.mxu0
          %v4381 = vunpack.c.l.b16 %v4245
          %v4382 = vunpack.c.l.b16 %v4246
          %v4383 = vunpack.c.l.b16 %v4247
          %v4384 = vunpack.c.l.b16 %v4248
          %v4385 = vunpack.c.l.b16 %v4249
          %v4386 = vunpack.c.l.b16 %v4250
          %v4387 = vunpack.c.l.b16 %v4251
          %v4388 = vunpack.c.l.b16 %v4252
          %v4389 = vunpack.c.l.b16 %v4253
          %v4390 = vunpack.c.l.b16 %v4254
          %v4391 = vunpack.c.l.b16 %v4255
          %v4392 = vunpack.c.l.b16 %v4256
          %v4393 = vunpack.c.l.b16 %v4257
          %v4394 = vunpack.c.l.b16 %v4258
          %v4395 = vunpack.c.l.b16 %v4259
          %v4396 = vunpack.c.l.b16 %v4260
          %v4397 = vpack.c.b16 %v4382, %v4381
          %v4398 = vpack.c.b16 %v4384, %v4383
          %v4399 = vpack.c.b16 %v4386, %v4385
          %v4400 = vpack.c.b16 %v4388, %v4387
          %v4401 = vpack.c.b16 %v4390, %v4389
          %v4402 = vpack.c.b16 %v4392, %v4391
          %v4403 = vpack.c.b16 %v4394, %v4393
          %v4404 = vpack.c.b16 %v4396, %v4395
          %4413 = vmatprep.subr.bf16.mxu0 0
          %4414 = vmatpush1.bf16.msra.mxu0 %v4397
          %4415 = vmatprep.subr.bf16.mxu0 0
          %4416 = vmatpush1.bf16.msra.mxu0 %v4398
          %4417 = vmatprep.subr.bf16.mxu0 0
          %4418 = vmatpush1.bf16.msra.mxu0 %v4399
          %4419 = vmatprep.subr.bf16.mxu0 0
          %4420 = vmatpush1.bf16.msra.mxu0 %v4400
          %4421 = vmatprep.subr.bf16.mxu0 0
          %4422 = vmatpush1.bf16.msra.mxu0 %v4401
          %4423 = vmatprep.subr.bf16.mxu0 0
          %4424 = vmatpush1.bf16.msra.mxu0 %v4402
          %4425 = vmatprep.subr.bf16.mxu0 0
          %4426 = vmatpush1.bf16.msra.mxu0 %v4403
          %4427 = vmatprep.subr.bf16.mxu0 0
          %4428 = vmatpush1.bf16.msra.mxu0 %v4404
          %4429 = vmatprep.subr.bf16.mxu0 0
          %4430 = vmatpush1.bf16.msra.mxu0 0
          %4431 = vmatprep.subr.bf16.mxu0 0
          %4432 = vmatpush1.bf16.msra.mxu0 0
          %4433 = vmatprep.subr.bf16.mxu0 0
          %4434 = vmatpush1.bf16.msra.mxu0 0
          %4435 = vmatprep.subr.bf16.mxu0 0
          %4436 = vmatpush1.bf16.msra.mxu0 0
          %4437 = vmatprep.subr.bf16.mxu0 0
          %4438 = vmatpush1.bf16.msra.mxu0 0
          %4439 = vmatprep.subr.bf16.mxu0 0
          %4440 = vmatpush1.bf16.msra.mxu0 0
          %4441 = vmatprep.subr.bf16.mxu0 0
          %4442 = vmatpush1.bf16.msra.mxu0 0
          %4443 = vmatprep.subr.bf16.mxu0 0
          %4444 = vmatpush1.bf16.msra.mxu0 0
          %4445 = vmatprep.mubr.bf16.mxu0 0
          %4446 = vmatmul.mubr.bf16.gmra.mrb[0].mxu0 %v4243
          %v4447 = vpop.f32.mrb[0].mxu0
          %v4448 = vadd.f32 %v4360, %v4447
          %v4449 = vpop.f32.mrb[0].mxu0
          %v4450 = vpop.f32.mrb[0].mxu0
          %v4451 = vpop.f32.mrb[0].mxu0
          %4452 = vdwg.mxu0
          %v4453 = vld [vmem:[#allocation11] sm:$0xff]
          %v4454 = vadd.f32 %v4448, %v4453
          %v4455 = vxor.u32 %v4454, 2147483648
          %v4456 = vmul.f32 %v4455, 1.442695
          %v4457 = vpow.pop %v4456
          %v4458 = vadd.f32 %v4457, 1.0
          %v4459 = vrcp.pop %v4458
          %v4460 = vmul.f32 1.0, %v4459
          %v4461 = vld [vmem:[%s864] sm:$0xf]
          %v4462 = vld [vmem:[%s864 + $0x4] sm:$0xf]
          %v4463 = vld [vmem:[%s864 + $0x8] sm:$0xf]
          %v4464 = vld [vmem:[%s864 + $0xc] sm:$0xf]
          %v4465 = vld [vmem:[%s864 + $0x10] sm:$0xf]
          %v4466 = vld [vmem:[%s864 + $0x14] sm:$0xf]
          %v4467 = vld [vmem:[%s864 + $0x18] sm:$0xf]
          %v4468 = vld [vmem:[%s864 + $0x1c] sm:$0xf]
          %v4469 = vld [vmem:[%s864 + $0x20] sm:$0xf]
          %v4470 = vld [vmem:[%s864 + $0x24] sm:$0xf]
          %v4471 = vld [vmem:[%s864 + $0x28] sm:$0xf]
          %v4472 = vld [vmem:[%s864 + $0x2c] sm:$0xf]
          %v4473 = vld [vmem:[%s864 + $0x30] sm:$0xf]
          %v4474 = vld [vmem:[%s864 + $0x34] sm:$0xf]
          %v4475 = vld [vmem:[%s864 + $0x38] sm:$0xf]
          %v4476 = vld [vmem:[%s864 + $0x3c] sm:$0xf]
          %v4477 = vld [vmem:[%s881] sm:$0xf]
          %v4478 = vld [vmem:[%s881 + $0x4] sm:$0xf]
          %v4479 = vld [vmem:[%s881 + $0x8] sm:$0xf]
          %v4480 = vld [vmem:[%s881 + $0xc] sm:$0xf]
          %v4481 = vld [vmem:[%s881 + $0x10] sm:$0xf]
          %v4482 = vld [vmem:[%s881 + $0x14] sm:$0xf]
          %v4483 = vld [vmem:[%s881 + $0x18] sm:$0xf]
          %v4484 = vld [vmem:[%s881 + $0x1c] sm:$0xf]
          %v4485 = vld [vmem:[%s881 + $0x20] sm:$0xf]
          %v4486 = vld [vmem:[%s881 + $0x24] sm:$0xf]
          %v4487 = vld [vmem:[%s881 + $0x28] sm:$0xf]
          %v4488 = vld [vmem:[%s881 + $0x2c] sm:$0xf]
          %v4489 = vld [vmem:[%s881 + $0x30] sm:$0xf]
          %v4490 = vld [vmem:[%s881 + $0x34] sm:$0xf]
          %v4491 = vld [vmem:[%s881 + $0x38] sm:$0xf]
          %v4492 = vld [vmem:[%s881 + $0x3c] sm:$0xf]
          %v4509 = vunpack.c.l.b16 %v4477
          %v4510 = vunpack.c.l.b16 %v4478
          %v4511 = vunpack.c.l.b16 %v4479
          %v4512 = vunpack.c.l.b16 %v4480
          %v4513 = vunpack.c.l.b16 %v4481
          %v4514 = vunpack.c.l.b16 %v4482
          %v4515 = vunpack.c.l.b16 %v4483
          %v4516 = vunpack.c.l.b16 %v4484
          %v4517 = vunpack.c.l.b16 %v4485
          %v4518 = vunpack.c.l.b16 %v4486
          %v4519 = vunpack.c.l.b16 %v4487
          %v4520 = vunpack.c.l.b16 %v4488
          %v4521 = vunpack.c.l.b16 %v4489
          %v4522 = vunpack.c.l.b16 %v4490
          %v4523 = vunpack.c.l.b16 %v4491
          %v4524 = vunpack.c.l.b16 %v4492
          %v4525 = vpack.c.b16 %v4510, %v4509
          %v4526 = vpack.c.b16 %v4512, %v4511
          %v4527 = vpack.c.b16 %v4514, %v4513
          %v4528 = vpack.c.b16 %v4516, %v4515
          %v4529 = vpack.c.b16 %v4518, %v4517
          %v4530 = vpack.c.b16 %v4520, %v4519
          %v4531 = vpack.c.b16 %v4522, %v4521
          %v4532 = vpack.c.b16 %v4524, %v4523
          %4541 = vmatprep.subr.bf16.mxu0 0
          %4542 = vmatpush1.bf16.msra.mxu0 %v4525
          %4543 = vmatprep.subr.bf16.mxu0 0
          %4544 = vmatpush1.bf16.msra.mxu0 %v4526
          %4545 = vmatprep.subr.bf16.mxu0 0
          %4546 = vmatpush1.bf16.msra.mxu0 %v4527
          %4547 = vmatprep.subr.bf16.mxu0 0
          %4548 = vmatpush1.bf16.msra.mxu0 %v4528
          %4549 = vmatprep.subr.bf16.mxu0 0
          %4550 = vmatpush1.bf16.msra.mxu0 %v4529
          %4551 = vmatprep.subr.bf16.mxu0 0
          %4552 = vmatpush1.bf16.msra.mxu0 %v4530
          %4553 = vmatprep.subr.bf16.mxu0 0
          %4554 = vmatpush1.bf16.msra.mxu0 %v4531
          %4555 = vmatprep.subr.bf16.mxu0 0
          %4556 = vmatpush1.bf16.msra.mxu0 %v4532
          %4557 = vmatprep.subr.bf16.mxu0 0
          %4558 = vmatpush1.bf16.msra.mxu0 0
          %4559 = vmatprep.subr.bf16.mxu0 0
          %4560 = vmatpush1.bf16.msra.mxu0 0
          %4561 = vmatprep.subr.bf16.mxu0 0
          %4562 = vmatpush1.bf16.msra.mxu0 0
          %4563 = vmatprep.subr.bf16.mxu0 0
          %4564 = vmatpush1.bf16.msra.mxu0 0
          %4565 = vmatprep.subr.bf16.mxu0 0
          %4566 = vmatpush1.bf16.msra.mxu0 0
          %4567 = vmatprep.subr.bf16.mxu0 0
          %4568 = vmatpush1.bf16.msra.mxu0 0
          %4569 = vmatprep.subr.bf16.mxu0 0
          %4570 = vmatpush1.bf16.msra.mxu0 0
          %4571 = vmatprep.subr.bf16.mxu0 0
          %4572 = vmatpush1.bf16.msra.mxu0 0
          %4573 = vmatprep.mubr.bf16.mxu0 0
          %4574 = vmatmul.mubr.bf16.gmra.mrb[0].mxu0 %v4244
          %v4575 = vpop.f32.mrb[0].mxu0
          %v4576 = vadd.f32 0.0, %v4575
          %v4577 = vpop.f32.mrb[0].mxu0
          %v4578 = vpop.f32.mrb[0].mxu0
          %v4579 = vpop.f32.mrb[0].mxu0
          %4580 = vdwg.mxu0
          %v4597 = vunpack.c.l.b16 %v4461
          %v4598 = vunpack.c.l.b16 %v4462
          %v4599 = vunpack.c.l.b16 %v4463
          %v4600 = vunpack.c.l.b16 %v4464
          %v4601 = vunpack.c.l.b16 %v4465
          %v4602 = vunpack.c.l.b16 %v4466
          %v4603 = vunpack.c.l.b16 %v4467
          %v4604 = vunpack.c.l.b16 %v4468
          %v4605 = vunpack.c.l.b16 %v4469
          %v4606 = vunpack.c.l.b16 %v4470
          %v4607 = vunpack.c.l.b16 %v4471
          %v4608 = vunpack.c.l.b16 %v4472
          %v4609 = vunpack.c.l.b16 %v4473
          %v4610 = vunpack.c.l.b16 %v4474
          %v4611 = vunpack.c.l.b16 %v4475
          %v4612 = vunpack.c.l.b16 %v4476
          %v4613 = vpack.c.b16 %v4598, %v4597
          %v4614 = vpack.c.b16 %v4600, %v4599
          %v4615 = vpack.c.b16 %v4602, %v4601
          %v4616 = vpack.c.b16 %v4604, %v4603
          %v4617 = vpack.c.b16 %v4606, %v4605
          %v4618 = vpack.c.b16 %v4608, %v4607
          %v4619 = vpack.c.b16 %v4610, %v4609
          %v4620 = vpack.c.b16 %v4612, %v4611
          %4629 = vmatprep.subr.bf16.mxu0 0
          %4630 = vmatpush1.bf16.msra.mxu0 %v4613
          %4631 = vmatprep.subr.bf16.mxu0 0
          %4632 = vmatpush1.bf16.msra.mxu0 %v4614
          %4633 = vmatprep.subr.bf16.mxu0 0
          %4634 = vmatpush1.bf16.msra.mxu0 %v4615
          %4635 = vmatprep.subr.bf16.mxu0 0
          %4636 = vmatpush1.bf16.msra.mxu0 %v4616
          %4637 = vmatprep.subr.bf16.mxu0 0
          %4638 = vmatpush1.bf16.msra.mxu0 %v4617
          %4639 = vmatprep.subr.bf16.mxu0 0
          %4640 = vmatpush1.bf16.msra.mxu0 %v4618
          %4641 = vmatprep.subr.bf16.mxu0 0
          %4642 = vmatpush1.bf16.msra.mxu0 %v4619
          %4643 = vmatprep.subr.bf16.mxu0 0
          %4644 = vmatpush1.bf16.msra.mxu0 %v4620
          %4645 = vmatprep.subr.bf16.mxu0 0
          %4646 = vmatpush1.bf16.msra.mxu0 0
          %4647 = vmatprep.subr.bf16.mxu0 0
          %4648 = vmatpush1.bf16.msra.mxu0 0
          %4649 = vmatprep.subr.bf16.mxu0 0
          %4650 = vmatpush1.bf16.msra.mxu0 0
          %4651 = vmatprep.subr.bf16.mxu0 0
          %4652 = vmatpush1.bf16.msra.mxu0 0
          %4653 = vmatprep.subr.bf16.mxu0 0
          %4654 = vmatpush1.bf16.msra.mxu0 0
          %4655 = vmatprep.subr.bf16.mxu0 0
          %4656 = vmatpush1.bf16.msra.mxu0 0
          %4657 = vmatprep.subr.bf16.mxu0 0
          %4658 = vmatpush1.bf16.msra.mxu0 0
          %4659 = vmatprep.subr.bf16.mxu0 0
          %4660 = vmatpush1.bf16.msra.mxu0 0
          %4661 = vmatprep.mubr.bf16.mxu0 0
          %4662 = vmatmul.mubr.bf16.gmra.mrb[0].mxu0 %v4243
          %v4663 = vpop.f32.mrb[0].mxu0
          %v4664 = vadd.f32 %v4576, %v4663
          %v4665 = vpop.f32.mrb[0].mxu0
          %v4666 = vpop.f32.mrb[0].mxu0
          %v4667 = vpop.f32.mrb[0].mxu0
          %4668 = vdwg.mxu0
          %v4669 = vld [vmem:[%s1074] sm:$0xff]
          %v4670 = vadd.f32 %v4664, %v4669
          %v4671 = vxor.u32 %v4670, 2147483648
          %v4672 = vmul.f32 %v4671, 1.442695
          %v4673 = vpow.pop %v4672
          %v4674 = vadd.f32 %v4673, 1.0
          %v4675 = vrcp.pop %v4674
          %v4676 = vmul.f32 1.0, %v4675
          %v4677 = vld [vmem:[%s1083] sm:$0xf]
          %v4678 = vld [vmem:[%s1083 + $0x4] sm:$0xf]
          %v4679 = vld [vmem:[%s1083 + $0x8] sm:$0xf]
          %v4680 = vld [vmem:[%s1083 + $0xc] sm:$0xf]
          %v4681 = vld [vmem:[%s1083 + $0x10] sm:$0xf]
          %v4682 = vld [vmem:[%s1083 + $0x14] sm:$0xf]
          %v4683 = vld [vmem:[%s1083 + $0x18] sm:$0xf]
          %v4684 = vld [vmem:[%s1083 + $0x1c] sm:$0xf]
          %v4685 = vld [vmem:[%s1083 + $0x20] sm:$0xf]
          %v4686 = vld [vmem:[%s1083 + $0x24] sm:$0xf]
          %v4687 = vld [vmem:[%s1083 + $0x28] sm:$0xf]
          %v4688 = vld [vmem:[%s1083 + $0x2c] sm:$0xf]
          %v4689 = vld [vmem:[%s1083 + $0x30] sm:$0xf]
          %v4690 = vld [vmem:[%s1083 + $0x34] sm:$0xf]
          %v4691 = vld [vmem:[%s1083 + $0x38] sm:$0xf]
          %v4692 = vld [vmem:[%s1083 + $0x3c] sm:$0xf]
          %v4693 = vld [vmem:[%s1100] sm:$0xff]
          %v4710 = vunpack.c.l.b16 %v4677
          %v4711 = vunpack.c.l.b16 %v4678
          %v4712 = vunpack.c.l.b16 %v4679
          %v4713 = vunpack.c.l.b16 %v4680
          %v4714 = vunpack.c.l.b16 %v4681
          %v4715 = vunpack.c.l.b16 %v4682
          %v4716 = vunpack.c.l.b16 %v4683
          %v4717 = vunpack.c.l.b16 %v4684
          %v4718 = vunpack.c.l.b16 %v4685
          %v4719 = vunpack.c.l.b16 %v4686
          %v4720 = vunpack.c.l.b16 %v4687
          %v4721 = vunpack.c.l.b16 %v4688
          %v4722 = vunpack.c.l.b16 %v4689
          %v4723 = vunpack.c.l.b16 %v4690
          %v4724 = vunpack.c.l.b16 %v4691
          %v4725 = vunpack.c.l.b16 %v4692
          %v4726 = vpack.c.b16 %v4711, %v4710
          %v4727 = vpack.c.b16 %v4713, %v4712
          %v4728 = vpack.c.b16 %v4715, %v4714
          %v4729 = vpack.c.b16 %v4717, %v4716
          %v4730 = vpack.c.b16 %v4719, %v4718
          %v4731 = vpack.c.b16 %v4721, %v4720
          %v4732 = vpack.c.b16 %v4723, %v4722
          %v4733 = vpack.c.b16 %v4725, %v4724
          %4742 = vmatprep.subr.bf16.mxu0 0
          %4743 = vmatpush1.bf16.msra.mxu0 %v4726
          %4744 = vmatprep.subr.bf16.mxu0 0
          %4745 = vmatpush1.bf16.msra.mxu0 %v4727
          %4746 = vmatprep.subr.bf16.mxu0 0
          %4747 = vmatpush1.bf16.msra.mxu0 %v4728
          %4748 = vmatprep.subr.bf16.mxu0 0
          %4749 = vmatpush1.bf16.msra.mxu0 %v4729
          %4750 = vmatprep.subr.bf16.mxu0 0
          %4751 = vmatpush1.bf16.msra.mxu0 %v4730
          %4752 = vmatprep.subr.bf16.mxu0 0
          %4753 = vmatpush1.bf16.msra.mxu0 %v4731
          %4754 = vmatprep.subr.bf16.mxu0 0
          %4755 = vmatpush1.bf16.msra.mxu0 %v4732
          %4756 = vmatprep.subr.bf16.mxu0 0
          %4757 = vmatpush1.bf16.msra.mxu0 %v4733
          %4758 = vmatprep.subr.bf16.mxu0 0
          %4759 = vmatpush1.bf16.msra.mxu0 0
          %4760 = vmatprep.subr.bf16.mxu0 0
          %4761 = vmatpush1.bf16.msra.mxu0 0
          %4762 = vmatprep.subr.bf16.mxu0 0
          %4763 = vmatpush1.bf16.msra.mxu0 0
          %4764 = vmatprep.subr.bf16.mxu0 0
          %4765 = vmatpush1.bf16.msra.mxu0 0
          %4766 = vmatprep.subr.bf16.mxu0 0
          %4767 = vmatpush1.bf16.msra.mxu0 0
          %4768 = vmatprep.subr.bf16.mxu0 0
          %4769 = vmatpush1.bf16.msra.mxu0 0
          %4770 = vmatprep.subr.bf16.mxu0 0
          %4771 = vmatpush1.bf16.msra.mxu0 0
          %4772 = vmatprep.subr.bf16.mxu0 0
          %4773 = vmatpush1.bf16.msra.mxu0 0
          %4774 = vmatprep.mubr.bf16.mxu0 0
          %4775 = vmatmul.mubr.bf16.gmra.mrb[0].mxu0 %v4243
          %v4776 = vpop.f32.mrb[0].mxu0
          %v4777 = vadd.f32 %v4693, %v4776
          %v4778 = vpop.f32.mrb[0].mxu0
          %v4779 = vpop.f32.mrb[0].mxu0
          %v4780 = vpop.f32.mrb[0].mxu0
          %4781 = vdwg.mxu0
          %v4782 = vld [vmem:[%s1190] sm:$0xf]
          %v4783 = vld [vmem:[%s1190 + $0x4] sm:$0xf]
          %v4784 = vld [vmem:[%s1190 + $0x8] sm:$0xf]
          %v4785 = vld [vmem:[%s1190 + $0xc] sm:$0xf]
          %v4786 = vld [vmem:[%s1190 + $0x10] sm:$0xf]
          %v4787 = vld [vmem:[%s1190 + $0x14] sm:$0xf]
          %v4788 = vld [vmem:[%s1190 + $0x18] sm:$0xf]
          %v4789 = vld [vmem:[%s1190 + $0x1c] sm:$0xf]
          %v4790 = vld [vmem:[%s1190 + $0x20] sm:$0xf]
          %v4791 = vld [vmem:[%s1190 + $0x24] sm:$0xf]
          %v4792 = vld [vmem:[%s1190 + $0x28] sm:$0xf]
          %v4793 = vld [vmem:[%s1190 + $0x2c] sm:$0xf]
          %v4794 = vld [vmem:[%s1190 + $0x30] sm:$0xf]
          %v4795 = vld [vmem:[%s1190 + $0x34] sm:$0xf]
          %v4796 = vld [vmem:[%s1190 + $0x38] sm:$0xf]
          %v4797 = vld [vmem:[%s1190 + $0x3c] sm:$0xf]
          %v4798 = vld [vmem:[%s1207] sm:$0xff]
          %v4815 = vunpack.c.l.b16 %v4782
          %v4816 = vunpack.c.l.b16 %v4783
          %v4817 = vunpack.c.l.b16 %v4784
          %v4818 = vunpack.c.l.b16 %v4785
          %v4819 = vunpack.c.l.b16 %v4786
          %v4820 = vunpack.c.l.b16 %v4787
          %v4821 = vunpack.c.l.b16 %v4788
          %v4822 = vunpack.c.l.b16 %v4789
          %v4823 = vunpack.c.l.b16 %v4790
          %v4824 = vunpack.c.l.b16 %v4791
          %v4825 = vunpack.c.l.b16 %v4792
          %v4826 = vunpack.c.l.b16 %v4793
          %v4827 = vunpack.c.l.b16 %v4794
          %v4828 = vunpack.c.l.b16 %v4795
          %v4829 = vunpack.c.l.b16 %v4796
          %v4830 = vunpack.c.l.b16 %v4797
          %v4831 = vpack.c.b16 %v4816, %v4815
          %v4832 = vpack.c.b16 %v4818, %v4817
          %v4833 = vpack.c.b16 %v4820, %v4819
          %v4834 = vpack.c.b16 %v4822, %v4821
          %v4835 = vpack.c.b16 %v4824, %v4823
          %v4836 = vpack.c.b16 %v4826, %v4825
          %v4837 = vpack.c.b16 %v4828, %v4827
          %v4838 = vpack.c.b16 %v4830, %v4829
          %4847 = vmatprep.subr.bf16.mxu0 0
          %4848 = vmatpush1.bf16.msra.mxu0 %v4831
          %4849 = vmatprep.subr.bf16.mxu0 0
          %4850 = vmatpush1.bf16.msra.mxu0 %v4832
          %4851 = vmatprep.subr.bf16.mxu0 0
          %4852 = vmatpush1.bf16.msra.mxu0 %v4833
          %4853 = vmatprep.subr.bf16.mxu0 0
          %4854 = vmatpush1.bf16.msra.mxu0 %v4834
          %4855 = vmatprep.subr.bf16.mxu0 0
          %4856 = vmatpush1.bf16.msra.mxu0 %v4835
          %4857 = vmatprep.subr.bf16.mxu0 0
          %4858 = vmatpush1.bf16.msra.mxu0 %v4836
          %4859 = vmatprep.subr.bf16.mxu0 0
          %4860 = vmatpush1.bf16.msra.mxu0 %v4837
          %4861 = vmatprep.subr.bf16.mxu0 0
          %4862 = vmatpush1.bf16.msra.mxu0 %v4838
          %4863 = vmatprep.subr.bf16.mxu0 0
          %4864 = vmatpush1.bf16.msra.mxu0 0
          %4865 = vmatprep.subr.bf16.mxu0 0
          %4866 = vmatpush1.bf16.msra.mxu0 0
          %4867 = vmatprep.subr.bf16.mxu0 0
          %4868 = vmatpush1.bf16.msra.mxu0 0
          %4869 = vmatprep.subr.bf16.mxu0 0
          %4870 = vmatpush1.bf16.msra.mxu0 0
          %4871 = vmatprep.subr.bf16.mxu0 0
          %4872 = vmatpush1.bf16.msra.mxu0 0
          %4873 = vmatprep.subr.bf16.mxu0 0
          %4874 = vmatpush1.bf16.msra.mxu0 0
          %4875 = vmatprep.subr.bf16.mxu0 0
          %4876 = vmatpush1.bf16.msra.mxu0 0
          %4877 = vmatprep.subr.bf16.mxu0 0
          %4878 = vmatpush1.bf16.msra.mxu0 0
          %4879 = vmatprep.mubr.bf16.mxu0 0
          %4880 = vmatmul.mubr.bf16.gmra.mrb[0].mxu0 %v4244
          %v4881 = vpop.f32.mrb[0].mxu0
          %v4882 = vadd.f32 %v4798, %v4881
          %v4883 = vpop.f32.mrb[0].mxu0
          %v4884 = vpop.f32.mrb[0].mxu0
          %v4885 = vpop.f32.mrb[0].mxu0
          %4886 = vdwg.mxu0
          %v4887 = vmul.f32 %v4460, %v4882
          %v4888 = vadd.f32 %v4777, %v4887
          %v4889 = vtanh.pop %v4888
          %v4890 = vsub.f32 1.0, %v4676
          %v4891 = vmul.f32 %v4890, %v4889
          %v4892 = vmul.f32 %v4676, %v4175
          %v4893 = vadd.f32 %v4891, %v4892
          %v4895 = vcombine.high %v4893, %v4893
          %v4897 = vunpack.c.l.s4 1966171168
          %v4898 = vunpack.c.0.s8 %v4897
          %v4899 = vlaneseq
          %v4900 = vshrl.u32 %v4899, 7
          %v4901 = vsub.s32 %v4898, %v4900
          %v4902 = vrot.slane %v4893, %v4901
          %v4904 = vunpack.c.l.s4 1966171168
          %v4905 = vunpack.c.0.s8 %v4904
          %v4906 = vlaneseq
          %v4907 = vshrl.u32 %v4906, 7
          %v4908 = vsub.s32 %v4905, %v4907
          %v4909 = vrot.slane %v4895, %v4908
          %v4910 = vcombine.high %v4902, %v4902
          %v4911 = vcombine.high %v4909, %v4909
          %v4913 = vunpack.c.l.s4 1966171168
          %v4914 = vunpack.c.0.s8 %v4913
          %v4915 = vlaneseq
          %v4916 = vshrl.u32 %v4915, 7
          %v4917 = vsub.s32 %v4914, %v4916
          %v4918 = vrot.slane %v4902, %v4917
          %v4920 = vunpack.c.l.s4 1966171168
          %v4921 = vunpack.c.0.s8 %v4920
          %v4922 = vlaneseq
          %v4923 = vshrl.u32 %v4922, 7
          %v4924 = vsub.s32 %v4921, %v4923
          %v4925 = vrot.slane %v4909, %v4924
          %v4927 = vunpack.c.l.s4 1966171168
          %v4928 = vunpack.c.0.s8 %v4927
          %v4929 = vlaneseq
          %v4930 = vshrl.u32 %v4929, 7
          %v4931 = vsub.s32 %v4928, %v4930
          %v4932 = vrot.slane %v4910, %v4931
          %v4934 = vunpack.c.l.s4 1966171168
          %v4935 = vunpack.c.0.s8 %v4934
          %v4936 = vlaneseq
          %v4937 = vshrl.u32 %v4936, 7
          %v4938 = vsub.s32 %v4935, %v4937
          %v4939 = vrot.slane %v4911, %v4938
          %v4940 = vcombine.high %v4918, %v4918
          %v4941 = vcombine.high %v4925, %v4925
          %v4942 = vcombine.high %v4932, %v4932
          %v4943 = vcombine.high %v4939, %v4939
          %4952 = vst [vmem:[#allocation2 + $0x5] sm:$0x1] %v4918
          %4953 = vst [vmem:[#allocation2 + $0xd] sm:$0x1] %v4932
          %4954 = vst [vmem:[#allocation2 + $0x15] sm:$0x1] %v4940
          %4955 = vst [vmem:[#allocation2 + $0x1d] sm:$0x1] %v4942
          %4956 = vst [vmem:[#allocation2 + $0x25] sm:$0x1] %v4925
          %4957 = vst [vmem:[#allocation2 + $0x2d] sm:$0x1] %v4939
          %4958 = vst [vmem:[#allocation2 + $0x35] sm:$0x1] %v4941
          %4959 = vst [vmem:[#allocation2 + $0x3d] sm:$0x1] %v4943
          %s4960 = scalar_lea.vmem [#allocation5], 24
          %v4961 = vld [vmem:[%s4960] sm:$0xf]
          %v4962 = vpack.c.bf16 %v4893, %v4893
          %v4963 = vld [vmem:[#allocation8] sm:$0xf]
          %v4964 = vld [vmem:[#allocation8 + $0x4] sm:$0xf]
          %v4965 = vld [vmem:[#allocation8 + $0x8] sm:$0xf]
          %v4966 = vld [vmem:[#allocation8 + $0xc] sm:$0xf]
          %v4967 = vld [vmem:[#allocation8 + $0x10] sm:$0xf]
          %v4968 = vld [vmem:[#allocation8 + $0x14] sm:$0xf]
          %v4969 = vld [vmem:[#allocation8 + $0x18] sm:$0xf]
          %v4970 = vld [vmem:[#allocation8 + $0x1c] sm:$0xf]
          %v4971 = vld [vmem:[#allocation8 + $0x20] sm:$0xf]
          %v4972 = vld [vmem:[#allocation8 + $0x24] sm:$0xf]
          %v4973 = vld [vmem:[#allocation8 + $0x28] sm:$0xf]
          %v4974 = vld [vmem:[#allocation8 + $0x2c] sm:$0xf]
          %v4975 = vld [vmem:[#allocation8 + $0x30] sm:$0xf]
          %v4976 = vld [vmem:[#allocation8 + $0x34] sm:$0xf]
          %v4977 = vld [vmem:[#allocation8 + $0x38] sm:$0xf]
          %v4978 = vld [vmem:[#allocation8 + $0x3c] sm:$0xf]
          %v4979 = vld [vmem:[#allocation10] sm:$0xf]
          %v4980 = vld [vmem:[#allocation10 + $0x4] sm:$0xf]
          %v4981 = vld [vmem:[#allocation10 + $0x8] sm:$0xf]
          %v4982 = vld [vmem:[#allocation10 + $0xc] sm:$0xf]
          %v4983 = vld [vmem:[#allocation10 + $0x10] sm:$0xf]
          %v4984 = vld [vmem:[#allocation10 + $0x14] sm:$0xf]
          %v4985 = vld [vmem:[#allocation10 + $0x18] sm:$0xf]
          %v4986 = vld [vmem:[#allocation10 + $0x1c] sm:$0xf]
          %v4987 = vld [vmem:[#allocation10 + $0x20] sm:$0xf]
          %v4988 = vld [vmem:[#allocation10 + $0x24] sm:$0xf]
          %v4989 = vld [vmem:[#allocation10 + $0x28] sm:$0xf]
          %v4990 = vld [vmem:[#allocation10 + $0x2c] sm:$0xf]
          %v4991 = vld [vmem:[#allocation10 + $0x30] sm:$0xf]
          %v4992 = vld [vmem:[#allocation10 + $0x34] sm:$0xf]
          %v4993 = vld [vmem:[#allocation10 + $0x38] sm:$0xf]
          %v4994 = vld [vmem:[#allocation10 + $0x3c] sm:$0xf]
          %v5011 = vunpack.c.l.b16 %v4979
          %v5012 = vunpack.c.l.b16 %v4980
          %v5013 = vunpack.c.l.b16 %v4981
          %v5014 = vunpack.c.l.b16 %v4982
          %v5015 = vunpack.c.l.b16 %v4983
          %v5016 = vunpack.c.l.b16 %v4984
          %v5017 = vunpack.c.l.b16 %v4985
          %v5018 = vunpack.c.l.b16 %v4986
          %v5019 = vunpack.c.l.b16 %v4987
          %v5020 = vunpack.c.l.b16 %v4988
          %v5021 = vunpack.c.l.b16 %v4989
          %v5022 = vunpack.c.l.b16 %v4990
          %v5023 = vunpack.c.l.b16 %v4991
          %v5024 = vunpack.c.l.b16 %v4992
          %v5025 = vunpack.c.l.b16 %v4993
          %v5026 = vunpack.c.l.b16 %v4994
          %v5027 = vpack.c.b16 %v5012, %v5011
          %v5028 = vpack.c.b16 %v5014, %v5013
          %v5029 = vpack.c.b16 %v5016, %v5015
          %v5030 = vpack.c.b16 %v5018, %v5017
          %v5031 = vpack.c.b16 %v5020, %v5019
          %v5032 = vpack.c.b16 %v5022, %v5021
          %v5033 = vpack.c.b16 %v5024, %v5023
          %v5034 = vpack.c.b16 %v5026, %v5025
          %5043 = vmatprep.subr.bf16.mxu0 0
          %5044 = vmatpush1.bf16.msra.mxu0 %v5027
          %5045 = vmatprep.subr.bf16.mxu0 0
          %5046 = vmatpush1.bf16.msra.mxu0 %v5028
          %5047 = vmatprep.subr.bf16.mxu0 0
          %5048 = vmatpush1.bf16.msra.mxu0 %v5029
          %5049 = vmatprep.subr.bf16.mxu0 0
          %5050 = vmatpush1.bf16.msra.mxu0 %v5030
          %5051 = vmatprep.subr.bf16.mxu0 0
          %5052 = vmatpush1.bf16.msra.mxu0 %v5031
          %5053 = vmatprep.subr.bf16.mxu0 0
          %5054 = vmatpush1.bf16.msra.mxu0 %v5032
          %5055 = vmatprep.subr.bf16.mxu0 0
          %5056 = vmatpush1.bf16.msra.mxu0 %v5033
          %5057 = vmatprep.subr.bf16.mxu0 0
          %5058 = vmatpush1.bf16.msra.mxu0 %v5034
          %5059 = vmatprep.subr.bf16.mxu0 0
          %5060 = vmatpush1.bf16.msra.mxu0 0
          %5061 = vmatprep.subr.bf16.mxu0 0
          %5062 = vmatpush1.bf16.msra.mxu0 0
          %5063 = vmatprep.subr.bf16.mxu0 0
          %5064 = vmatpush1.bf16.msra.mxu0 0
          %5065 = vmatprep.subr.bf16.mxu0 0
          %5066 = vmatpush1.bf16.msra.mxu0 0
          %5067 = vmatprep.subr.bf16.mxu0 0
          %5068 = vmatpush1.bf16.msra.mxu0 0
          %5069 = vmatprep.subr.bf16.mxu0 0
          %5070 = vmatpush1.bf16.msra.mxu0 0
          %5071 = vmatprep.subr.bf16.mxu0 0
          %5072 = vmatpush1.bf16.msra.mxu0 0
          %5073 = vmatprep.subr.bf16.mxu0 0
          %5074 = vmatpush1.bf16.msra.mxu0 0
          %5075 = vmatprep.mubr.bf16.mxu0 0
          %5076 = vmatmul.mubr.bf16.gmra.mrb[0].mxu0 %v4962
          %v5077 = vpop.f32.mrb[0].mxu0
          %v5078 = vadd.f32 0.0, %v5077
          %v5079 = vpop.f32.mrb[0].mxu0
          %v5080 = vpop.f32.mrb[0].mxu0
          %v5081 = vpop.f32.mrb[0].mxu0
          %5082 = vdwg.mxu0
          %v5099 = vunpack.c.l.b16 %v4963
          %v5100 = vunpack.c.l.b16 %v4964
          %v5101 = vunpack.c.l.b16 %v4965
          %v5102 = vunpack.c.l.b16 %v4966
          %v5103 = vunpack.c.l.b16 %v4967
          %v5104 = vunpack.c.l.b16 %v4968
          %v5105 = vunpack.c.l.b16 %v4969
          %v5106 = vunpack.c.l.b16 %v4970
          %v5107 = vunpack.c.l.b16 %v4971
          %v5108 = vunpack.c.l.b16 %v4972
          %v5109 = vunpack.c.l.b16 %v4973
          %v5110 = vunpack.c.l.b16 %v4974
          %v5111 = vunpack.c.l.b16 %v4975
          %v5112 = vunpack.c.l.b16 %v4976
          %v5113 = vunpack.c.l.b16 %v4977
          %v5114 = vunpack.c.l.b16 %v4978
          %v5115 = vpack.c.b16 %v5100, %v5099
          %v5116 = vpack.c.b16 %v5102, %v5101
          %v5117 = vpack.c.b16 %v5104, %v5103
          %v5118 = vpack.c.b16 %v5106, %v5105
          %v5119 = vpack.c.b16 %v5108, %v5107
          %v5120 = vpack.c.b16 %v5110, %v5109
          %v5121 = vpack.c.b16 %v5112, %v5111
          %v5122 = vpack.c.b16 %v5114, %v5113
          %5131 = vmatprep.subr.bf16.mxu0 0
          %5132 = vmatpush1.bf16.msra.mxu0 %v5115
          %5133 = vmatprep.subr.bf16.mxu0 0
          %5134 = vmatpush1.bf16.msra.mxu0 %v5116
          %5135 = vmatprep.subr.bf16.mxu0 0
          %5136 = vmatpush1.bf16.msra.mxu0 %v5117
          %5137 = vmatprep.subr.bf16.mxu0 0
          %5138 = vmatpush1.bf16.msra.mxu0 %v5118
          %5139 = vmatprep.subr.bf16.mxu0 0
          %5140 = vmatpush1.bf16.msra.mxu0 %v5119
          %5141 = vmatprep.subr.bf16.mxu0 0
          %5142 = vmatpush1.bf16.msra.mxu0 %v5120
          %5143 = vmatprep.subr.bf16.mxu0 0
          %5144 = vmatpush1.bf16.msra.mxu0 %v5121
          %5145 = vmatprep.subr.bf16.mxu0 0
          %5146 = vmatpush1.bf16.msra.mxu0 %v5122
          %5147 = vmatprep.subr.bf16.mxu0 0
          %5148 = vmatpush1.bf16.msra.mxu0 0
          %5149 = vmatprep.subr.bf16.mxu0 0
          %5150 = vmatpush1.bf16.msra.mxu0 0
          %5151 = vmatprep.subr.bf16.mxu0 0
          %5152 = vmatpush1.bf16.msra.mxu0 0
          %5153 = vmatprep.subr.bf16.mxu0 0
          %5154 = vmatpush1.bf16.msra.mxu0 0
          %5155 = vmatprep.subr.bf16.mxu0 0
          %5156 = vmatpush1.bf16.msra.mxu0 0
          %5157 = vmatprep.subr.bf16.mxu0 0
          %5158 = vmatpush1.bf16.msra.mxu0 0
          %5159 = vmatprep.subr.bf16.mxu0 0
          %5160 = vmatpush1.bf16.msra.mxu0 0
          %5161 = vmatprep.subr.bf16.mxu0 0
          %5162 = vmatpush1.bf16.msra.mxu0 0
          %5163 = vmatprep.mubr.bf16.mxu0 0
          %5164 = vmatmul.mubr.bf16.gmra.mrb[0].mxu0 %v4961
          %v5165 = vpop.f32.mrb[0].mxu0
          %v5166 = vadd.f32 %v5078, %v5165
          %v5167 = vpop.f32.mrb[0].mxu0
          %v5168 = vpop.f32.mrb[0].mxu0
          %v5169 = vpop.f32.mrb[0].mxu0
          %5170 = vdwg.mxu0
          %v5171 = vld [vmem:[#allocation11] sm:$0xff]
          %v5172 = vadd.f32 %v5166, %v5171
          %v5173 = vxor.u32 %v5172, 2147483648
          %v5174 = vmul.f32 %v5173, 1.442695
          %v5175 = vpow.pop %v5174
          %v5176 = vadd.f32 %v5175, 1.0
          %v5177 = vrcp.pop %v5176
          %v5178 = vmul.f32 1.0, %v5177
          %v5179 = vld [vmem:[%s864] sm:$0xf]
          %v5180 = vld [vmem:[%s864 + $0x4] sm:$0xf]
          %v5181 = vld [vmem:[%s864 + $0x8] sm:$0xf]
          %v5182 = vld [vmem:[%s864 + $0xc] sm:$0xf]
          %v5183 = vld [vmem:[%s864 + $0x10] sm:$0xf]
          %v5184 = vld [vmem:[%s864 + $0x14] sm:$0xf]
          %v5185 = vld [vmem:[%s864 + $0x18] sm:$0xf]
          %v5186 = vld [vmem:[%s864 + $0x1c] sm:$0xf]
          %v5187 = vld [vmem:[%s864 + $0x20] sm:$0xf]
          %v5188 = vld [vmem:[%s864 + $0x24] sm:$0xf]
          %v5189 = vld [vmem:[%s864 + $0x28] sm:$0xf]
          %v5190 = vld [vmem:[%s864 + $0x2c] sm:$0xf]
          %v5191 = vld [vmem:[%s864 + $0x30] sm:$0xf]
          %v5192 = vld [vmem:[%s864 + $0x34] sm:$0xf]
          %v5193 = vld [vmem:[%s864 + $0x38] sm:$0xf]
          %v5194 = vld [vmem:[%s864 + $0x3c] sm:$0xf]
          %v5195 = vld [vmem:[%s881] sm:$0xf]
          %v5196 = vld [vmem:[%s881 + $0x4] sm:$0xf]
          %v5197 = vld [vmem:[%s881 + $0x8] sm:$0xf]
          %v5198 = vld [vmem:[%s881 + $0xc] sm:$0xf]
          %v5199 = vld [vmem:[%s881 + $0x10] sm:$0xf]
          %v5200 = vld [vmem:[%s881 + $0x14] sm:$0xf]
          %v5201 = vld [vmem:[%s881 + $0x18] sm:$0xf]
          %v5202 = vld [vmem:[%s881 + $0x1c] sm:$0xf]
          %v5203 = vld [vmem:[%s881 + $0x20] sm:$0xf]
          %v5204 = vld [vmem:[%s881 + $0x24] sm:$0xf]
          %v5205 = vld [vmem:[%s881 + $0x28] sm:$0xf]
          %v5206 = vld [vmem:[%s881 + $0x2c] sm:$0xf]
          %v5207 = vld [vmem:[%s881 + $0x30] sm:$0xf]
          %v5208 = vld [vmem:[%s881 + $0x34] sm:$0xf]
          %v5209 = vld [vmem:[%s881 + $0x38] sm:$0xf]
          %v5210 = vld [vmem:[%s881 + $0x3c] sm:$0xf]
          %v5227 = vunpack.c.l.b16 %v5195
          %v5228 = vunpack.c.l.b16 %v5196
          %v5229 = vunpack.c.l.b16 %v5197
          %v5230 = vunpack.c.l.b16 %v5198
          %v5231 = vunpack.c.l.b16 %v5199
          %v5232 = vunpack.c.l.b16 %v5200
          %v5233 = vunpack.c.l.b16 %v5201
          %v5234 = vunpack.c.l.b16 %v5202
          %v5235 = vunpack.c.l.b16 %v5203
          %v5236 = vunpack.c.l.b16 %v5204
          %v5237 = vunpack.c.l.b16 %v5205
          %v5238 = vunpack.c.l.b16 %v5206
          %v5239 = vunpack.c.l.b16 %v5207
          %v5240 = vunpack.c.l.b16 %v5208
          %v5241 = vunpack.c.l.b16 %v5209
          %v5242 = vunpack.c.l.b16 %v5210
          %v5243 = vpack.c.b16 %v5228, %v5227
          %v5244 = vpack.c.b16 %v5230, %v5229
          %v5245 = vpack.c.b16 %v5232, %v5231
          %v5246 = vpack.c.b16 %v5234, %v5233
          %v5247 = vpack.c.b16 %v5236, %v5235
          %v5248 = vpack.c.b16 %v5238, %v5237
          %v5249 = vpack.c.b16 %v5240, %v5239
          %v5250 = vpack.c.b16 %v5242, %v5241
          %5259 = vmatprep.subr.bf16.mxu0 0
          %5260 = vmatpush1.bf16.msra.mxu0 %v5243
          %5261 = vmatprep.subr.bf16.mxu0 0
          %5262 = vmatpush1.bf16.msra.mxu0 %v5244
          %5263 = vmatprep.subr.bf16.mxu0 0
          %5264 = vmatpush1.bf16.msra.mxu0 %v5245
          %5265 = vmatprep.subr.bf16.mxu0 0
          %5266 = vmatpush1.bf16.msra.mxu0 %v5246
          %5267 = vmatprep.subr.bf16.mxu0 0
          %5268 = vmatpush1.bf16.msra.mxu0 %v5247
          %5269 = vmatprep.subr.bf16.mxu0 0
          %5270 = vmatpush1.bf16.msra.mxu0 %v5248
          %5271 = vmatprep.subr.bf16.mxu0 0
          %5272 = vmatpush1.bf16.msra.mxu0 %v5249
          %5273 = vmatprep.subr.bf16.mxu0 0
          %5274 = vmatpush1.bf16.msra.mxu0 %v5250
          %5275 = vmatprep.subr.bf16.mxu0 0
          %5276 = vmatpush1.bf16.msra.mxu0 0
          %5277 = vmatprep.subr.bf16.mxu0 0
          %5278 = vmatpush1.bf16.msra.mxu0 0
          %5279 = vmatprep.subr.bf16.mxu0 0
          %5280 = vmatpush1.bf16.msra.mxu0 0
          %5281 = vmatprep.subr.bf16.mxu0 0
          %5282 = vmatpush1.bf16.msra.mxu0 0
          %5283 = vmatprep.subr.bf16.mxu0 0
          %5284 = vmatpush1.bf16.msra.mxu0 0
          %5285 = vmatprep.subr.bf16.mxu0 0
          %5286 = vmatpush1.bf16.msra.mxu0 0
          %5287 = vmatprep.subr.bf16.mxu0 0
          %5288 = vmatpush1.bf16.msra.mxu0 0
          %5289 = vmatprep.subr.bf16.mxu0 0
          %5290 = vmatpush1.bf16.msra.mxu0 0
          %5291 = vmatprep.mubr.bf16.mxu0 0
          %5292 = vmatmul.mubr.bf16.gmra.mrb[0].mxu0 %v4962
          %v5293 = vpop.f32.mrb[0].mxu0
          %v5294 = vadd.f32 0.0, %v5293
          %v5295 = vpop.f32.mrb[0].mxu0
          %v5296 = vpop.f32.mrb[0].mxu0
          %v5297 = vpop.f32.mrb[0].mxu0
          %5298 = vdwg.mxu0
          %v5315 = vunpack.c.l.b16 %v5179
          %v5316 = vunpack.c.l.b16 %v5180
          %v5317 = vunpack.c.l.b16 %v5181
          %v5318 = vunpack.c.l.b16 %v5182
          %v5319 = vunpack.c.l.b16 %v5183
          %v5320 = vunpack.c.l.b16 %v5184
          %v5321 = vunpack.c.l.b16 %v5185
          %v5322 = vunpack.c.l.b16 %v5186
          %v5323 = vunpack.c.l.b16 %v5187
          %v5324 = vunpack.c.l.b16 %v5188
          %v5325 = vunpack.c.l.b16 %v5189
          %v5326 = vunpack.c.l.b16 %v5190
          %v5327 = vunpack.c.l.b16 %v5191
          %v5328 = vunpack.c.l.b16 %v5192
          %v5329 = vunpack.c.l.b16 %v5193
          %v5330 = vunpack.c.l.b16 %v5194
          %v5331 = vpack.c.b16 %v5316, %v5315
          %v5332 = vpack.c.b16 %v5318, %v5317
          %v5333 = vpack.c.b16 %v5320, %v5319
          %v5334 = vpack.c.b16 %v5322, %v5321
          %v5335 = vpack.c.b16 %v5324, %v5323
          %v5336 = vpack.c.b16 %v5326, %v5325
          %v5337 = vpack.c.b16 %v5328, %v5327
          %v5338 = vpack.c.b16 %v5330, %v5329
          %5347 = vmatprep.subr.bf16.mxu0 0
          %5348 = vmatpush1.bf16.msra.mxu0 %v5331
          %5349 = vmatprep.subr.bf16.mxu0 0
          %5350 = vmatpush1.bf16.msra.mxu0 %v5332
          %5351 = vmatprep.subr.bf16.mxu0 0
          %5352 = vmatpush1.bf16.msra.mxu0 %v5333
          %5353 = vmatprep.subr.bf16.mxu0 0
          %5354 = vmatpush1.bf16.msra.mxu0 %v5334
          %5355 = vmatprep.subr.bf16.mxu0 0
          %5356 = vmatpush1.bf16.msra.mxu0 %v5335
          %5357 = vmatprep.subr.bf16.mxu0 0
          %5358 = vmatpush1.bf16.msra.mxu0 %v5336
          %5359 = vmatprep.subr.bf16.mxu0 0
          %5360 = vmatpush1.bf16.msra.mxu0 %v5337
          %5361 = vmatprep.subr.bf16.mxu0 0
          %5362 = vmatpush1.bf16.msra.mxu0 %v5338
          %5363 = vmatprep.subr.bf16.mxu0 0
          %5364 = vmatpush1.bf16.msra.mxu0 0
          %5365 = vmatprep.subr.bf16.mxu0 0
          %5366 = vmatpush1.bf16.msra.mxu0 0
          %5367 = vmatprep.subr.bf16.mxu0 0
          %5368 = vmatpush1.bf16.msra.mxu0 0
          %5369 = vmatprep.subr.bf16.mxu0 0
          %5370 = vmatpush1.bf16.msra.mxu0 0
          %5371 = vmatprep.subr.bf16.mxu0 0
          %5372 = vmatpush1.bf16.msra.mxu0 0
          %5373 = vmatprep.subr.bf16.mxu0 0
          %5374 = vmatpush1.bf16.msra.mxu0 0
          %5375 = vmatprep.subr.bf16.mxu0 0
          %5376 = vmatpush1.bf16.msra.mxu0 0
          %5377 = vmatprep.subr.bf16.mxu0 0
          %5378 = vmatpush1.bf16.msra.mxu0 0
          %5379 = vmatprep.mubr.bf16.mxu0 0
          %5380 = vmatmul.mubr.bf16.gmra.mrb[0].mxu0 %v4961
          %v5381 = vpop.f32.mrb[0].mxu0
          %v5382 = vadd.f32 %v5294, %v5381
          %v5383 = vpop.f32.mrb[0].mxu0
          %v5384 = vpop.f32.mrb[0].mxu0
          %v5385 = vpop.f32.mrb[0].mxu0
          %5386 = vdwg.mxu0
          %v5387 = vld [vmem:[%s1074] sm:$0xff]
          %v5388 = vadd.f32 %v5382, %v5387
          %v5389 = vxor.u32 %v5388, 2147483648
          %v5390 = vmul.f32 %v5389, 1.442695
          %v5391 = vpow.pop %v5390
          %v5392 = vadd.f32 %v5391, 1.0
          %v5393 = vrcp.pop %v5392
          %v5394 = vmul.f32 1.0, %v5393
          %v5395 = vld [vmem:[%s1083] sm:$0xf]
          %v5396 = vld [vmem:[%s1083 + $0x4] sm:$0xf]
          %v5397 = vld [vmem:[%s1083 + $0x8] sm:$0xf]
          %v5398 = vld [vmem:[%s1083 + $0xc] sm:$0xf]
          %v5399 = vld [vmem:[%s1083 + $0x10] sm:$0xf]
          %v5400 = vld [vmem:[%s1083 + $0x14] sm:$0xf]
          %v5401 = vld [vmem:[%s1083 + $0x18] sm:$0xf]
          %v5402 = vld [vmem:[%s1083 + $0x1c] sm:$0xf]
          %v5403 = vld [vmem:[%s1083 + $0x20] sm:$0xf]
          %v5404 = vld [vmem:[%s1083 + $0x24] sm:$0xf]
          %v5405 = vld [vmem:[%s1083 + $0x28] sm:$0xf]
          %v5406 = vld [vmem:[%s1083 + $0x2c] sm:$0xf]
          %v5407 = vld [vmem:[%s1083 + $0x30] sm:$0xf]
          %v5408 = vld [vmem:[%s1083 + $0x34] sm:$0xf]
          %v5409 = vld [vmem:[%s1083 + $0x38] sm:$0xf]
          %v5410 = vld [vmem:[%s1083 + $0x3c] sm:$0xf]
          %v5411 = vld [vmem:[%s1100] sm:$0xff]
          %v5428 = vunpack.c.l.b16 %v5395
          %v5429 = vunpack.c.l.b16 %v5396
          %v5430 = vunpack.c.l.b16 %v5397
          %v5431 = vunpack.c.l.b16 %v5398
          %v5432 = vunpack.c.l.b16 %v5399
          %v5433 = vunpack.c.l.b16 %v5400
          %v5434 = vunpack.c.l.b16 %v5401
          %v5435 = vunpack.c.l.b16 %v5402
          %v5436 = vunpack.c.l.b16 %v5403
          %v5437 = vunpack.c.l.b16 %v5404
          %v5438 = vunpack.c.l.b16 %v5405
          %v5439 = vunpack.c.l.b16 %v5406
          %v5440 = vunpack.c.l.b16 %v5407
          %v5441 = vunpack.c.l.b16 %v5408
          %v5442 = vunpack.c.l.b16 %v5409
          %v5443 = vunpack.c.l.b16 %v5410
          %v5444 = vpack.c.b16 %v5429, %v5428
          %v5445 = vpack.c.b16 %v5431, %v5430
          %v5446 = vpack.c.b16 %v5433, %v5432
          %v5447 = vpack.c.b16 %v5435, %v5434
          %v5448 = vpack.c.b16 %v5437, %v5436
          %v5449 = vpack.c.b16 %v5439, %v5438
          %v5450 = vpack.c.b16 %v5441, %v5440
          %v5451 = vpack.c.b16 %v5443, %v5442
          %5460 = vmatprep.subr.bf16.mxu0 0
          %5461 = vmatpush1.bf16.msra.mxu0 %v5444
          %5462 = vmatprep.subr.bf16.mxu0 0
          %5463 = vmatpush1.bf16.msra.mxu0 %v5445
          %5464 = vmatprep.subr.bf16.mxu0 0
          %5465 = vmatpush1.bf16.msra.mxu0 %v5446
          %5466 = vmatprep.subr.bf16.mxu0 0
          %5467 = vmatpush1.bf16.msra.mxu0 %v5447
          %5468 = vmatprep.subr.bf16.mxu0 0
          %5469 = vmatpush1.bf16.msra.mxu0 %v5448
          %5470 = vmatprep.subr.bf16.mxu0 0
          %5471 = vmatpush1.bf16.msra.mxu0 %v5449
          %5472 = vmatprep.subr.bf16.mxu0 0
          %5473 = vmatpush1.bf16.msra.mxu0 %v5450
          %5474 = vmatprep.subr.bf16.mxu0 0
          %5475 = vmatpush1.bf16.msra.mxu0 %v5451
          %5476 = vmatprep.subr.bf16.mxu0 0
          %5477 = vmatpush1.bf16.msra.mxu0 0
          %5478 = vmatprep.subr.bf16.mxu0 0
          %5479 = vmatpush1.bf16.msra.mxu0 0
          %5480 = vmatprep.subr.bf16.mxu0 0
          %5481 = vmatpush1.bf16.msra.mxu0 0
          %5482 = vmatprep.subr.bf16.mxu0 0
          %5483 = vmatpush1.bf16.msra.mxu0 0
          %5484 = vmatprep.subr.bf16.mxu0 0
          %5485 = vmatpush1.bf16.msra.mxu0 0
          %5486 = vmatprep.subr.bf16.mxu0 0
          %5487 = vmatpush1.bf16.msra.mxu0 0
          %5488 = vmatprep.subr.bf16.mxu0 0
          %5489 = vmatpush1.bf16.msra.mxu0 0
          %5490 = vmatprep.subr.bf16.mxu0 0
          %5491 = vmatpush1.bf16.msra.mxu0 0
          %5492 = vmatprep.mubr.bf16.mxu0 0
          %5493 = vmatmul.mubr.bf16.gmra.mrb[0].mxu0 %v4961
          %v5494 = vpop.f32.mrb[0].mxu0
          %v5495 = vadd.f32 %v5411, %v5494
          %v5496 = vpop.f32.mrb[0].mxu0
          %v5497 = vpop.f32.mrb[0].mxu0
          %v5498 = vpop.f32.mrb[0].mxu0
          %5499 = vdwg.mxu0
          %v5500 = vld [vmem:[%s1190] sm:$0xf]
          %v5501 = vld [vmem:[%s1190 + $0x4] sm:$0xf]
          %v5502 = vld [vmem:[%s1190 + $0x8] sm:$0xf]
          %v5503 = vld [vmem:[%s1190 + $0xc] sm:$0xf]
          %v5504 = vld [vmem:[%s1190 + $0x10] sm:$0xf]
          %v5505 = vld [vmem:[%s1190 + $0x14] sm:$0xf]
          %v5506 = vld [vmem:[%s1190 + $0x18] sm:$0xf]
          %v5507 = vld [vmem:[%s1190 + $0x1c] sm:$0xf]
          %v5508 = vld [vmem:[%s1190 + $0x20] sm:$0xf]
          %v5509 = vld [vmem:[%s1190 + $0x24] sm:$0xf]
          %v5510 = vld [vmem:[%s1190 + $0x28] sm:$0xf]
          %v5511 = vld [vmem:[%s1190 + $0x2c] sm:$0xf]
          %v5512 = vld [vmem:[%s1190 + $0x30] sm:$0xf]
          %v5513 = vld [vmem:[%s1190 + $0x34] sm:$0xf]
          %v5514 = vld [vmem:[%s1190 + $0x38] sm:$0xf]
          %v5515 = vld [vmem:[%s1190 + $0x3c] sm:$0xf]
          %v5516 = vld [vmem:[%s1207] sm:$0xff]
          %v5533 = vunpack.c.l.b16 %v5500
          %v5534 = vunpack.c.l.b16 %v5501
          %v5535 = vunpack.c.l.b16 %v5502
          %v5536 = vunpack.c.l.b16 %v5503
          %v5537 = vunpack.c.l.b16 %v5504
          %v5538 = vunpack.c.l.b16 %v5505
          %v5539 = vunpack.c.l.b16 %v5506
          %v5540 = vunpack.c.l.b16 %v5507
          %v5541 = vunpack.c.l.b16 %v5508
          %v5542 = vunpack.c.l.b16 %v5509
          %v5543 = vunpack.c.l.b16 %v5510
          %v5544 = vunpack.c.l.b16 %v5511
          %v5545 = vunpack.c.l.b16 %v5512
          %v5546 = vunpack.c.l.b16 %v5513
          %v5547 = vunpack.c.l.b16 %v5514
          %v5548 = vunpack.c.l.b16 %v5515
          %v5549 = vpack.c.b16 %v5534, %v5533
          %v5550 = vpack.c.b16 %v5536, %v5535
          %v5551 = vpack.c.b16 %v5538, %v5537
          %v5552 = vpack.c.b16 %v5540, %v5539
          %v5553 = vpack.c.b16 %v5542, %v5541
          %v5554 = vpack.c.b16 %v5544, %v5543
          %v5555 = vpack.c.b16 %v5546, %v5545
          %v5556 = vpack.c.b16 %v5548, %v5547
          %5565 = vmatprep.subr.bf16.mxu0 0
          %5566 = vmatpush1.bf16.msra.mxu0 %v5549
          %5567 = vmatprep.subr.bf16.mxu0 0
          %5568 = vmatpush1.bf16.msra.mxu0 %v5550
          %5569 = vmatprep.subr.bf16.mxu0 0
          %5570 = vmatpush1.bf16.msra.mxu0 %v5551
          %5571 = vmatprep.subr.bf16.mxu0 0
          %5572 = vmatpush1.bf16.msra.mxu0 %v5552
          %5573 = vmatprep.subr.bf16.mxu0 0
          %5574 = vmatpush1.bf16.msra.mxu0 %v5553
          %5575 = vmatprep.subr.bf16.mxu0 0
          %5576 = vmatpush1.bf16.msra.mxu0 %v5554
          %5577 = vmatprep.subr.bf16.mxu0 0
          %5578 = vmatpush1.bf16.msra.mxu0 %v5555
          %5579 = vmatprep.subr.bf16.mxu0 0
          %5580 = vmatpush1.bf16.msra.mxu0 %v5556
          %5581 = vmatprep.subr.bf16.mxu0 0
          %5582 = vmatpush1.bf16.msra.mxu0 0
          %5583 = vmatprep.subr.bf16.mxu0 0
          %5584 = vmatpush1.bf16.msra.mxu0 0
          %5585 = vmatprep.subr.bf16.mxu0 0
          %5586 = vmatpush1.bf16.msra.mxu0 0
          %5587 = vmatprep.subr.bf16.mxu0 0
          %5588 = vmatpush1.bf16.msra.mxu0 0
          %5589 = vmatprep.subr.bf16.mxu0 0
          %5590 = vmatpush1.bf16.msra.mxu0 0
          %5591 = vmatprep.subr.bf16.mxu0 0
          %5592 = vmatpush1.bf16.msra.mxu0 0
          %5593 = vmatprep.subr.bf16.mxu0 0
          %5594 = vmatpush1.bf16.msra.mxu0 0
          %5595 = vmatprep.subr.bf16.mxu0 0
          %5596 = vmatpush1.bf16.msra.mxu0 0
          %5597 = vmatprep.mubr.bf16.mxu0 0
          %5598 = vmatmul.mubr.bf16.gmra.mrb[0].mxu0 %v4962
          %v5599 = vpop.f32.mrb[0].mxu0
          %v5600 = vadd.f32 %v5516, %v5599
          %v5601 = vpop.f32.mrb[0].mxu0
          %v5602 = vpop.f32.mrb[0].mxu0
          %v5603 = vpop.f32.mrb[0].mxu0
          %5604 = vdwg.mxu0
          %v5605 = vmul.f32 %v5178, %v5600
          %v5606 = vadd.f32 %v5495, %v5605
          %v5607 = vtanh.pop %v5606
          %v5608 = vsub.f32 1.0, %v5394
          %v5609 = vmul.f32 %v5608, %v5607
          %v5610 = vmul.f32 %v5394, %v4893
          %v5611 = vadd.f32 %v5609, %v5610
          %v5613 = vcombine.high %v5611, %v5611
          %v5615 = vunpack.c.l.s4 1966171168
          %v5616 = vunpack.c.0.s8 %v5615
          %v5617 = vlaneseq
          %v5618 = vshrl.u32 %v5617, 7
          %v5619 = vsub.s32 %v5616, %v5618
          %v5620 = vrot.slane %v5611, %v5619
          %v5622 = vunpack.c.l.s4 1966171168
          %v5623 = vunpack.c.0.s8 %v5622
          %v5624 = vlaneseq
          %v5625 = vshrl.u32 %v5624, 7
          %v5626 = vsub.s32 %v5623, %v5625
          %v5627 = vrot.slane %v5613, %v5626
          %v5628 = vcombine.high %v5620, %v5620
          %v5629 = vcombine.high %v5627, %v5627
          %v5631 = vunpack.c.l.s4 1966171168
          %v5632 = vunpack.c.0.s8 %v5631
          %v5633 = vlaneseq
          %v5634 = vshrl.u32 %v5633, 7
          %v5635 = vsub.s32 %v5632, %v5634
          %v5636 = vrot.slane %v5620, %v5635
          %v5638 = vunpack.c.l.s4 1966171168
          %v5639 = vunpack.c.0.s8 %v5638
          %v5640 = vlaneseq
          %v5641 = vshrl.u32 %v5640, 7
          %v5642 = vsub.s32 %v5639, %v5641
          %v5643 = vrot.slane %v5627, %v5642
          %v5645 = vunpack.c.l.s4 1966171168
          %v5646 = vunpack.c.0.s8 %v5645
          %v5647 = vlaneseq
          %v5648 = vshrl.u32 %v5647, 7
          %v5649 = vsub.s32 %v5646, %v5648
          %v5650 = vrot.slane %v5628, %v5649
          %v5652 = vunpack.c.l.s4 1966171168
          %v5653 = vunpack.c.0.s8 %v5652
          %v5654 = vlaneseq
          %v5655 = vshrl.u32 %v5654, 7
          %v5656 = vsub.s32 %v5653, %v5655
          %v5657 = vrot.slane %v5629, %v5656
          %v5658 = vcombine.high %v5636, %v5636
          %v5659 = vcombine.high %v5643, %v5643
          %v5660 = vcombine.high %v5650, %v5650
          %v5661 = vcombine.high %v5657, %v5657
          %5670 = vst [vmem:[#allocation2 + $0x6] sm:$0x1] %v5636
          %5671 = vst [vmem:[#allocation2 + $0xe] sm:$0x1] %v5650
          %5672 = vst [vmem:[#allocation2 + $0x16] sm:$0x1] %v5658
          %5673 = vst [vmem:[#allocation2 + $0x1e] sm:$0x1] %v5660
          %5674 = vst [vmem:[#allocation2 + $0x26] sm:$0x1] %v5643
          %5675 = vst [vmem:[#allocation2 + $0x2e] sm:$0x1] %v5657
          %5676 = vst [vmem:[#allocation2 + $0x36] sm:$0x1] %v5659
          %5677 = vst [vmem:[#allocation2 + $0x3e] sm:$0x1] %v5661
          %s5678 = scalar_lea.vmem [#allocation5], 28
          %v5679 = vld [vmem:[%s5678] sm:$0xf]
          %v5680 = vpack.c.bf16 %v5611, %v5611
          %v5681 = vld [vmem:[#allocation8] sm:$0xf]
          %v5682 = vld [vmem:[#allocation8 + $0x4] sm:$0xf]
          %v5683 = vld [vmem:[#allocation8 + $0x8] sm:$0xf]
          %v5684 = vld [vmem:[#allocation8 + $0xc] sm:$0xf]
          %v5685 = vld [vmem:[#allocation8 + $0x10] sm:$0xf]
          %v5686 = vld [vmem:[#allocation8 + $0x14] sm:$0xf]
          %v5687 = vld [vmem:[#allocation8 + $0x18] sm:$0xf]
          %v5688 = vld [vmem:[#allocation8 + $0x1c] sm:$0xf]
          %v5689 = vld [vmem:[#allocation8 + $0x20] sm:$0xf]
          %v5690 = vld [vmem:[#allocation8 + $0x24] sm:$0xf]
          %v5691 = vld [vmem:[#allocation8 + $0x28] sm:$0xf]
          %v5692 = vld [vmem:[#allocation8 + $0x2c] sm:$0xf]
          %v5693 = vld [vmem:[#allocation8 + $0x30] sm:$0xf]
          %v5694 = vld [vmem:[#allocation8 + $0x34] sm:$0xf]
          %v5695 = vld [vmem:[#allocation8 + $0x38] sm:$0xf]
          %v5696 = vld [vmem:[#allocation8 + $0x3c] sm:$0xf]
          %v5697 = vld [vmem:[#allocation10] sm:$0xf]
          %v5698 = vld [vmem:[#allocation10 + $0x4] sm:$0xf]
          %v5699 = vld [vmem:[#allocation10 + $0x8] sm:$0xf]
          %v5700 = vld [vmem:[#allocation10 + $0xc] sm:$0xf]
          %v5701 = vld [vmem:[#allocation10 + $0x10] sm:$0xf]
          %v5702 = vld [vmem:[#allocation10 + $0x14] sm:$0xf]
          %v5703 = vld [vmem:[#allocation10 + $0x18] sm:$0xf]
          %v5704 = vld [vmem:[#allocation10 + $0x1c] sm:$0xf]
          %v5705 = vld [vmem:[#allocation10 + $0x20] sm:$0xf]
          %v5706 = vld [vmem:[#allocation10 + $0x24] sm:$0xf]
          %v5707 = vld [vmem:[#allocation10 + $0x28] sm:$0xf]
          %v5708 = vld [vmem:[#allocation10 + $0x2c] sm:$0xf]
          %v5709 = vld [vmem:[#allocation10 + $0x30] sm:$0xf]
          %v5710 = vld [vmem:[#allocation10 + $0x34] sm:$0xf]
          %v5711 = vld [vmem:[#allocation10 + $0x38] sm:$0xf]
          %v5712 = vld [vmem:[#allocation10 + $0x3c] sm:$0xf]
          %v5729 = vunpack.c.l.b16 %v5697
          %v5730 = vunpack.c.l.b16 %v5698
          %v5731 = vunpack.c.l.b16 %v5699
          %v5732 = vunpack.c.l.b16 %v5700
          %v5733 = vunpack.c.l.b16 %v5701
          %v5734 = vunpack.c.l.b16 %v5702
          %v5735 = vunpack.c.l.b16 %v5703
          %v5736 = vunpack.c.l.b16 %v5704
          %v5737 = vunpack.c.l.b16 %v5705
          %v5738 = vunpack.c.l.b16 %v5706
          %v5739 = vunpack.c.l.b16 %v5707
          %v5740 = vunpack.c.l.b16 %v5708
          %v5741 = vunpack.c.l.b16 %v5709
          %v5742 = vunpack.c.l.b16 %v5710
          %v5743 = vunpack.c.l.b16 %v5711
          %v5744 = vunpack.c.l.b16 %v5712
          %v5745 = vpack.c.b16 %v5730, %v5729
          %v5746 = vpack.c.b16 %v5732, %v5731
          %v5747 = vpack.c.b16 %v5734, %v5733
          %v5748 = vpack.c.b16 %v5736, %v5735
          %v5749 = vpack.c.b16 %v5738, %v5737
          %v5750 = vpack.c.b16 %v5740, %v5739
          %v5751 = vpack.c.b16 %v5742, %v5741
          %v5752 = vpack.c.b16 %v5744, %v5743
          %5761 = vmatprep.subr.bf16.mxu0 0
          %5762 = vmatpush1.bf16.msra.mxu0 %v5745
          %5763 = vmatprep.subr.bf16.mxu0 0
          %5764 = vmatpush1.bf16.msra.mxu0 %v5746
          %5765 = vmatprep.subr.bf16.mxu0 0
          %5766 = vmatpush1.bf16.msra.mxu0 %v5747
          %5767 = vmatprep.subr.bf16.mxu0 0
          %5768 = vmatpush1.bf16.msra.mxu0 %v5748
          %5769 = vmatprep.subr.bf16.mxu0 0
          %5770 = vmatpush1.bf16.msra.mxu0 %v5749
          %5771 = vmatprep.subr.bf16.mxu0 0
          %5772 = vmatpush1.bf16.msra.mxu0 %v5750
          %5773 = vmatprep.subr.bf16.mxu0 0
          %5774 = vmatpush1.bf16.msra.mxu0 %v5751
          %5775 = vmatprep.subr.bf16.mxu0 0
          %5776 = vmatpush1.bf16.msra.mxu0 %v5752
          %5777 = vmatprep.subr.bf16.mxu0 0
          %5778 = vmatpush1.bf16.msra.mxu0 0
          %5779 = vmatprep.subr.bf16.mxu0 0
          %5780 = vmatpush1.bf16.msra.mxu0 0
          %5781 = vmatprep.subr.bf16.mxu0 0
          %5782 = vmatpush1.bf16.msra.mxu0 0
          %5783 = vmatprep.subr.bf16.mxu0 0
          %5784 = vmatpush1.bf16.msra.mxu0 0
          %5785 = vmatprep.subr.bf16.mxu0 0
          %5786 = vmatpush1.bf16.msra.mxu0 0
          %5787 = vmatprep.subr.bf16.mxu0 0
          %5788 = vmatpush1.bf16.msra.mxu0 0
          %5789 = vmatprep.subr.bf16.mxu0 0
          %5790 = vmatpush1.bf16.msra.mxu0 0
          %5791 = vmatprep.subr.bf16.mxu0 0
          %5792 = vmatpush1.bf16.msra.mxu0 0
          %5793 = vmatprep.mubr.bf16.mxu0 0
          %5794 = vmatmul.mubr.bf16.gmra.mrb[0].mxu0 %v5680
          %v5795 = vpop.f32.mrb[0].mxu0
          %v5796 = vadd.f32 0.0, %v5795
          %v5797 = vpop.f32.mrb[0].mxu0
          %v5798 = vpop.f32.mrb[0].mxu0
          %v5799 = vpop.f32.mrb[0].mxu0
          %5800 = vdwg.mxu0
          %v5817 = vunpack.c.l.b16 %v5681
          %v5818 = vunpack.c.l.b16 %v5682
          %v5819 = vunpack.c.l.b16 %v5683
          %v5820 = vunpack.c.l.b16 %v5684
          %v5821 = vunpack.c.l.b16 %v5685
          %v5822 = vunpack.c.l.b16 %v5686
          %v5823 = vunpack.c.l.b16 %v5687
          %v5824 = vunpack.c.l.b16 %v5688
          %v5825 = vunpack.c.l.b16 %v5689
          %v5826 = vunpack.c.l.b16 %v5690
          %v5827 = vunpack.c.l.b16 %v5691
          %v5828 = vunpack.c.l.b16 %v5692
          %v5829 = vunpack.c.l.b16 %v5693
          %v5830 = vunpack.c.l.b16 %v5694
          %v5831 = vunpack.c.l.b16 %v5695
          %v5832 = vunpack.c.l.b16 %v5696
          %v5833 = vpack.c.b16 %v5818, %v5817
          %v5834 = vpack.c.b16 %v5820, %v5819
          %v5835 = vpack.c.b16 %v5822, %v5821
          %v5836 = vpack.c.b16 %v5824, %v5823
          %v5837 = vpack.c.b16 %v5826, %v5825
          %v5838 = vpack.c.b16 %v5828, %v5827
          %v5839 = vpack.c.b16 %v5830, %v5829
          %v5840 = vpack.c.b16 %v5832, %v5831
          %5849 = vmatprep.subr.bf16.mxu0 0
          %5850 = vmatpush1.bf16.msra.mxu0 %v5833
          %5851 = vmatprep.subr.bf16.mxu0 0
          %5852 = vmatpush1.bf16.msra.mxu0 %v5834
          %5853 = vmatprep.subr.bf16.mxu0 0
          %5854 = vmatpush1.bf16.msra.mxu0 %v5835
          %5855 = vmatprep.subr.bf16.mxu0 0
          %5856 = vmatpush1.bf16.msra.mxu0 %v5836
          %5857 = vmatprep.subr.bf16.mxu0 0
          %5858 = vmatpush1.bf16.msra.mxu0 %v5837
          %5859 = vmatprep.subr.bf16.mxu0 0
          %5860 = vmatpush1.bf16.msra.mxu0 %v5838
          %5861 = vmatprep.subr.bf16.mxu0 0
          %5862 = vmatpush1.bf16.msra.mxu0 %v5839
          %5863 = vmatprep.subr.bf16.mxu0 0
          %5864 = vmatpush1.bf16.msra.mxu0 %v5840
          %5865 = vmatprep.subr.bf16.mxu0 0
          %5866 = vmatpush1.bf16.msra.mxu0 0
          %5867 = vmatprep.subr.bf16.mxu0 0
          %5868 = vmatpush1.bf16.msra.mxu0 0
          %5869 = vmatprep.subr.bf16.mxu0 0
          %5870 = vmatpush1.bf16.msra.mxu0 0
          %5871 = vmatprep.subr.bf16.mxu0 0
          %5872 = vmatpush1.bf16.msra.mxu0 0
          %5873 = vmatprep.subr.bf16.mxu0 0
          %5874 = vmatpush1.bf16.msra.mxu0 0
          %5875 = vmatprep.subr.bf16.mxu0 0
          %5876 = vmatpush1.bf16.msra.mxu0 0
          %5877 = vmatprep.subr.bf16.mxu0 0
          %5878 = vmatpush1.bf16.msra.mxu0 0
          %5879 = vmatprep.subr.bf16.mxu0 0
          %5880 = vmatpush1.bf16.msra.mxu0 0
          %5881 = vmatprep.mubr.bf16.mxu0 0
          %5882 = vmatmul.mubr.bf16.gmra.mrb[0].mxu0 %v5679
          %v5883 = vpop.f32.mrb[0].mxu0
          %v5884 = vadd.f32 %v5796, %v5883
          %v5885 = vpop.f32.mrb[0].mxu0
          %v5886 = vpop.f32.mrb[0].mxu0
          %v5887 = vpop.f32.mrb[0].mxu0
          %5888 = vdwg.mxu0
          %v5889 = vld [vmem:[#allocation11] sm:$0xff]
          %v5890 = vadd.f32 %v5884, %v5889
          %v5891 = vxor.u32 %v5890, 2147483648
          %v5892 = vmul.f32 %v5891, 1.442695
          %v5893 = vpow.pop %v5892
          %v5894 = vadd.f32 %v5893, 1.0
          %v5895 = vrcp.pop %v5894
          %v5896 = vmul.f32 1.0, %v5895
          %v5897 = vld [vmem:[%s864] sm:$0xf]
          %v5898 = vld [vmem:[%s864 + $0x4] sm:$0xf]
          %v5899 = vld [vmem:[%s864 + $0x8] sm:$0xf]
          %v5900 = vld [vmem:[%s864 + $0xc] sm:$0xf]
          %v5901 = vld [vmem:[%s864 + $0x10] sm:$0xf]
          %v5902 = vld [vmem:[%s864 + $0x14] sm:$0xf]
          %v5903 = vld [vmem:[%s864 + $0x18] sm:$0xf]
          %v5904 = vld [vmem:[%s864 + $0x1c] sm:$0xf]
          %v5905 = vld [vmem:[%s864 + $0x20] sm:$0xf]
          %v5906 = vld [vmem:[%s864 + $0x24] sm:$0xf]
          %v5907 = vld [vmem:[%s864 + $0x28] sm:$0xf]
          %v5908 = vld [vmem:[%s864 + $0x2c] sm:$0xf]
          %v5909 = vld [vmem:[%s864 + $0x30] sm:$0xf]
          %v5910 = vld [vmem:[%s864 + $0x34] sm:$0xf]
          %v5911 = vld [vmem:[%s864 + $0x38] sm:$0xf]
          %v5912 = vld [vmem:[%s864 + $0x3c] sm:$0xf]
          %v5913 = vld [vmem:[%s881] sm:$0xf]
          %v5914 = vld [vmem:[%s881 + $0x4] sm:$0xf]
          %v5915 = vld [vmem:[%s881 + $0x8] sm:$0xf]
          %v5916 = vld [vmem:[%s881 + $0xc] sm:$0xf]
          %v5917 = vld [vmem:[%s881 + $0x10] sm:$0xf]
          %v5918 = vld [vmem:[%s881 + $0x14] sm:$0xf]
          %v5919 = vld [vmem:[%s881 + $0x18] sm:$0xf]
          %v5920 = vld [vmem:[%s881 + $0x1c] sm:$0xf]
          %v5921 = vld [vmem:[%s881 + $0x20] sm:$0xf]
          %v5922 = vld [vmem:[%s881 + $0x24] sm:$0xf]
          %v5923 = vld [vmem:[%s881 + $0x28] sm:$0xf]
          %v5924 = vld [vmem:[%s881 + $0x2c] sm:$0xf]
          %v5925 = vld [vmem:[%s881 + $0x30] sm:$0xf]
          %v5926 = vld [vmem:[%s881 + $0x34] sm:$0xf]
          %v5927 = vld [vmem:[%s881 + $0x38] sm:$0xf]
          %v5928 = vld [vmem:[%s881 + $0x3c] sm:$0xf]
          %v5945 = vunpack.c.l.b16 %v5913
          %v5946 = vunpack.c.l.b16 %v5914
          %v5947 = vunpack.c.l.b16 %v5915
          %v5948 = vunpack.c.l.b16 %v5916
          %v5949 = vunpack.c.l.b16 %v5917
          %v5950 = vunpack.c.l.b16 %v5918
          %v5951 = vunpack.c.l.b16 %v5919
          %v5952 = vunpack.c.l.b16 %v5920
          %v5953 = vunpack.c.l.b16 %v5921
          %v5954 = vunpack.c.l.b16 %v5922
          %v5955 = vunpack.c.l.b16 %v5923
          %v5956 = vunpack.c.l.b16 %v5924
          %v5957 = vunpack.c.l.b16 %v5925
          %v5958 = vunpack.c.l.b16 %v5926
          %v5959 = vunpack.c.l.b16 %v5927
          %v5960 = vunpack.c.l.b16 %v5928
          %v5961 = vpack.c.b16 %v5946, %v5945
          %v5962 = vpack.c.b16 %v5948, %v5947
          %v5963 = vpack.c.b16 %v5950, %v5949
          %v5964 = vpack.c.b16 %v5952, %v5951
          %v5965 = vpack.c.b16 %v5954, %v5953
          %v5966 = vpack.c.b16 %v5956, %v5955
          %v5967 = vpack.c.b16 %v5958, %v5957
          %v5968 = vpack.c.b16 %v5960, %v5959
          %5977 = vmatprep.subr.bf16.mxu0 0
          %5978 = vmatpush1.bf16.msra.mxu0 %v5961
          %5979 = vmatprep.subr.bf16.mxu0 0
          %5980 = vmatpush1.bf16.msra.mxu0 %v5962
          %5981 = vmatprep.subr.bf16.mxu0 0
          %5982 = vmatpush1.bf16.msra.mxu0 %v5963
          %5983 = vmatprep.subr.bf16.mxu0 0
          %5984 = vmatpush1.bf16.msra.mxu0 %v5964
          %5985 = vmatprep.subr.bf16.mxu0 0
          %5986 = vmatpush1.bf16.msra.mxu0 %v5965
          %5987 = vmatprep.subr.bf16.mxu0 0
          %5988 = vmatpush1.bf16.msra.mxu0 %v5966
          %5989 = vmatprep.subr.bf16.mxu0 0
          %5990 = vmatpush1.bf16.msra.mxu0 %v5967
          %5991 = vmatprep.subr.bf16.mxu0 0
          %5992 = vmatpush1.bf16.msra.mxu0 %v5968
          %5993 = vmatprep.subr.bf16.mxu0 0
          %5994 = vmatpush1.bf16.msra.mxu0 0
          %5995 = vmatprep.subr.bf16.mxu0 0
          %5996 = vmatpush1.bf16.msra.mxu0 0
          %5997 = vmatprep.subr.bf16.mxu0 0
          %5998 = vmatpush1.bf16.msra.mxu0 0
          %5999 = vmatprep.subr.bf16.mxu0 0
          %6000 = vmatpush1.bf16.msra.mxu0 0
          %6001 = vmatprep.subr.bf16.mxu0 0
          %6002 = vmatpush1.bf16.msra.mxu0 0
          %6003 = vmatprep.subr.bf16.mxu0 0
          %6004 = vmatpush1.bf16.msra.mxu0 0
          %6005 = vmatprep.subr.bf16.mxu0 0
          %6006 = vmatpush1.bf16.msra.mxu0 0
          %6007 = vmatprep.subr.bf16.mxu0 0
          %6008 = vmatpush1.bf16.msra.mxu0 0
          %6009 = vmatprep.mubr.bf16.mxu0 0
          %6010 = vmatmul.mubr.bf16.gmra.mrb[0].mxu0 %v5680
          %v6011 = vpop.f32.mrb[0].mxu0
          %v6012 = vadd.f32 0.0, %v6011
          %v6013 = vpop.f32.mrb[0].mxu0
          %v6014 = vpop.f32.mrb[0].mxu0
          %v6015 = vpop.f32.mrb[0].mxu0
          %6016 = vdwg.mxu0
          %v6033 = vunpack.c.l.b16 %v5897
          %v6034 = vunpack.c.l.b16 %v5898
          %v6035 = vunpack.c.l.b16 %v5899
          %v6036 = vunpack.c.l.b16 %v5900
          %v6037 = vunpack.c.l.b16 %v5901
          %v6038 = vunpack.c.l.b16 %v5902
          %v6039 = vunpack.c.l.b16 %v5903
          %v6040 = vunpack.c.l.b16 %v5904
          %v6041 = vunpack.c.l.b16 %v5905
          %v6042 = vunpack.c.l.b16 %v5906
          %v6043 = vunpack.c.l.b16 %v5907
          %v6044 = vunpack.c.l.b16 %v5908
          %v6045 = vunpack.c.l.b16 %v5909
          %v6046 = vunpack.c.l.b16 %v5910
          %v6047 = vunpack.c.l.b16 %v5911
          %v6048 = vunpack.c.l.b16 %v5912
          %v6049 = vpack.c.b16 %v6034, %v6033
          %v6050 = vpack.c.b16 %v6036, %v6035
          %v6051 = vpack.c.b16 %v6038, %v6037
          %v6052 = vpack.c.b16 %v6040, %v6039
          %v6053 = vpack.c.b16 %v6042, %v6041
          %v6054 = vpack.c.b16 %v6044, %v6043
          %v6055 = vpack.c.b16 %v6046, %v6045
          %v6056 = vpack.c.b16 %v6048, %v6047
          %6065 = vmatprep.subr.bf16.mxu0 0
          %6066 = vmatpush1.bf16.msra.mxu0 %v6049
          %6067 = vmatprep.subr.bf16.mxu0 0
          %6068 = vmatpush1.bf16.msra.mxu0 %v6050
          %6069 = vmatprep.subr.bf16.mxu0 0
          %6070 = vmatpush1.bf16.msra.mxu0 %v6051
          %6071 = vmatprep.subr.bf16.mxu0 0
          %6072 = vmatpush1.bf16.msra.mxu0 %v6052
          %6073 = vmatprep.subr.bf16.mxu0 0
          %6074 = vmatpush1.bf16.msra.mxu0 %v6053
          %6075 = vmatprep.subr.bf16.mxu0 0
          %6076 = vmatpush1.bf16.msra.mxu0 %v6054
          %6077 = vmatprep.subr.bf16.mxu0 0
          %6078 = vmatpush1.bf16.msra.mxu0 %v6055
          %6079 = vmatprep.subr.bf16.mxu0 0
          %6080 = vmatpush1.bf16.msra.mxu0 %v6056
          %6081 = vmatprep.subr.bf16.mxu0 0
          %6082 = vmatpush1.bf16.msra.mxu0 0
          %6083 = vmatprep.subr.bf16.mxu0 0
          %6084 = vmatpush1.bf16.msra.mxu0 0
          %6085 = vmatprep.subr.bf16.mxu0 0
          %6086 = vmatpush1.bf16.msra.mxu0 0
          %6087 = vmatprep.subr.bf16.mxu0 0
          %6088 = vmatpush1.bf16.msra.mxu0 0
          %6089 = vmatprep.subr.bf16.mxu0 0
          %6090 = vmatpush1.bf16.msra.mxu0 0
          %6091 = vmatprep.subr.bf16.mxu0 0
          %6092 = vmatpush1.bf16.msra.mxu0 0
          %6093 = vmatprep.subr.bf16.mxu0 0
          %6094 = vmatpush1.bf16.msra.mxu0 0
          %6095 = vmatprep.subr.bf16.mxu0 0
          %6096 = vmatpush1.bf16.msra.mxu0 0
          %6097 = vmatprep.mubr.bf16.mxu0 0
          %6098 = vmatmul.mubr.bf16.gmra.mrb[0].mxu0 %v5679
          %v6099 = vpop.f32.mrb[0].mxu0
          %v6100 = vadd.f32 %v6012, %v6099
          %v6101 = vpop.f32.mrb[0].mxu0
          %v6102 = vpop.f32.mrb[0].mxu0
          %v6103 = vpop.f32.mrb[0].mxu0
          %6104 = vdwg.mxu0
          %v6105 = vld [vmem:[%s1074] sm:$0xff]
          %v6106 = vadd.f32 %v6100, %v6105
          %v6107 = vxor.u32 %v6106, 2147483648
          %v6108 = vmul.f32 %v6107, 1.442695
          %v6109 = vpow.pop %v6108
          %v6110 = vadd.f32 %v6109, 1.0
          %v6111 = vrcp.pop %v6110
          %v6112 = vmul.f32 1.0, %v6111
          %v6113 = vld [vmem:[%s1083] sm:$0xf]
          %v6114 = vld [vmem:[%s1083 + $0x4] sm:$0xf]
          %v6115 = vld [vmem:[%s1083 + $0x8] sm:$0xf]
          %v6116 = vld [vmem:[%s1083 + $0xc] sm:$0xf]
          %v6117 = vld [vmem:[%s1083 + $0x10] sm:$0xf]
          %v6118 = vld [vmem:[%s1083 + $0x14] sm:$0xf]
          %v6119 = vld [vmem:[%s1083 + $0x18] sm:$0xf]
          %v6120 = vld [vmem:[%s1083 + $0x1c] sm:$0xf]
          %v6121 = vld [vmem:[%s1083 + $0x20] sm:$0xf]
          %v6122 = vld [vmem:[%s1083 + $0x24] sm:$0xf]
          %v6123 = vld [vmem:[%s1083 + $0x28] sm:$0xf]
          %v6124 = vld [vmem:[%s1083 + $0x2c] sm:$0xf]
          %v6125 = vld [vmem:[%s1083 + $0x30] sm:$0xf]
          %v6126 = vld [vmem:[%s1083 + $0x34] sm:$0xf]
          %v6127 = vld [vmem:[%s1083 + $0x38] sm:$0xf]
          %v6128 = vld [vmem:[%s1083 + $0x3c] sm:$0xf]
          %v6129 = vld [vmem:[%s1100] sm:$0xff]
          %v6146 = vunpack.c.l.b16 %v6113
          %v6147 = vunpack.c.l.b16 %v6114
          %v6148 = vunpack.c.l.b16 %v6115
          %v6149 = vunpack.c.l.b16 %v6116
          %v6150 = vunpack.c.l.b16 %v6117
          %v6151 = vunpack.c.l.b16 %v6118
          %v6152 = vunpack.c.l.b16 %v6119
          %v6153 = vunpack.c.l.b16 %v6120
          %v6154 = vunpack.c.l.b16 %v6121
          %v6155 = vunpack.c.l.b16 %v6122
          %v6156 = vunpack.c.l.b16 %v6123
          %v6157 = vunpack.c.l.b16 %v6124
          %v6158 = vunpack.c.l.b16 %v6125
          %v6159 = vunpack.c.l.b16 %v6126
          %v6160 = vunpack.c.l.b16 %v6127
          %v6161 = vunpack.c.l.b16 %v6128
          %v6162 = vpack.c.b16 %v6147, %v6146
          %v6163 = vpack.c.b16 %v6149, %v6148
          %v6164 = vpack.c.b16 %v6151, %v6150
          %v6165 = vpack.c.b16 %v6153, %v6152
          %v6166 = vpack.c.b16 %v6155, %v6154
          %v6167 = vpack.c.b16 %v6157, %v6156
          %v6168 = vpack.c.b16 %v6159, %v6158
          %v6169 = vpack.c.b16 %v6161, %v6160
          %6178 = vmatprep.subr.bf16.mxu0 0
          %6179 = vmatpush1.bf16.msra.mxu0 %v6162
          %6180 = vmatprep.subr.bf16.mxu0 0
          %6181 = vmatpush1.bf16.msra.mxu0 %v6163
          %6182 = vmatprep.subr.bf16.mxu0 0
          %6183 = vmatpush1.bf16.msra.mxu0 %v6164
          %6184 = vmatprep.subr.bf16.mxu0 0
          %6185 = vmatpush1.bf16.msra.mxu0 %v6165
          %6186 = vmatprep.subr.bf16.mxu0 0
          %6187 = vmatpush1.bf16.msra.mxu0 %v6166
          %6188 = vmatprep.subr.bf16.mxu0 0
          %6189 = vmatpush1.bf16.msra.mxu0 %v6167
          %6190 = vmatprep.subr.bf16.mxu0 0
          %6191 = vmatpush1.bf16.msra.mxu0 %v6168
          %6192 = vmatprep.subr.bf16.mxu0 0
          %6193 = vmatpush1.bf16.msra.mxu0 %v6169
          %6194 = vmatprep.subr.bf16.mxu0 0
          %6195 = vmatpush1.bf16.msra.mxu0 0
          %6196 = vmatprep.subr.bf16.mxu0 0
          %6197 = vmatpush1.bf16.msra.mxu0 0
          %6198 = vmatprep.subr.bf16.mxu0 0
          %6199 = vmatpush1.bf16.msra.mxu0 0
          %6200 = vmatprep.subr.bf16.mxu0 0
          %6201 = vmatpush1.bf16.msra.mxu0 0
          %6202 = vmatprep.subr.bf16.mxu0 0
          %6203 = vmatpush1.bf16.msra.mxu0 0
          %6204 = vmatprep.subr.bf16.mxu0 0
          %6205 = vmatpush1.bf16.msra.mxu0 0
          %6206 = vmatprep.subr.bf16.mxu0 0
          %6207 = vmatpush1.bf16.msra.mxu0 0
          %6208 = vmatprep.subr.bf16.mxu0 0
          %6209 = vmatpush1.bf16.msra.mxu0 0
          %6210 = vmatprep.mubr.bf16.mxu0 0
          %6211 = vmatmul.mubr.bf16.gmra.mrb[0].mxu0 %v5679
          %v6212 = vpop.f32.mrb[0].mxu0
          %v6213 = vadd.f32 %v6129, %v6212
          %v6214 = vpop.f32.mrb[0].mxu0
          %v6215 = vpop.f32.mrb[0].mxu0
          %v6216 = vpop.f32.mrb[0].mxu0
          %6217 = vdwg.mxu0
          %v6218 = vld [vmem:[%s1190] sm:$0xf]
          %v6219 = vld [vmem:[%s1190 + $0x4] sm:$0xf]
          %v6220 = vld [vmem:[%s1190 + $0x8] sm:$0xf]
          %v6221 = vld [vmem:[%s1190 + $0xc] sm:$0xf]
          %v6222 = vld [vmem:[%s1190 + $0x10] sm:$0xf]
          %v6223 = vld [vmem:[%s1190 + $0x14] sm:$0xf]
          %v6224 = vld [vmem:[%s1190 + $0x18] sm:$0xf]
          %v6225 = vld [vmem:[%s1190 + $0x1c] sm:$0xf]
          %v6226 = vld [vmem:[%s1190 + $0x20] sm:$0xf]
          %v6227 = vld [vmem:[%s1190 + $0x24] sm:$0xf]
          %v6228 = vld [vmem:[%s1190 + $0x28] sm:$0xf]
          %v6229 = vld [vmem:[%s1190 + $0x2c] sm:$0xf]
          %v6230 = vld [vmem:[%s1190 + $0x30] sm:$0xf]
          %v6231 = vld [vmem:[%s1190 + $0x34] sm:$0xf]
          %v6232 = vld [vmem:[%s1190 + $0x38] sm:$0xf]
          %v6233 = vld [vmem:[%s1190 + $0x3c] sm:$0xf]
          %v6234 = vld [vmem:[%s1207] sm:$0xff]
          %v6251 = vunpack.c.l.b16 %v6218
          %v6252 = vunpack.c.l.b16 %v6219
          %v6253 = vunpack.c.l.b16 %v6220
          %v6254 = vunpack.c.l.b16 %v6221
          %v6255 = vunpack.c.l.b16 %v6222
          %v6256 = vunpack.c.l.b16 %v6223
          %v6257 = vunpack.c.l.b16 %v6224
          %v6258 = vunpack.c.l.b16 %v6225
          %v6259 = vunpack.c.l.b16 %v6226
          %v6260 = vunpack.c.l.b16 %v6227
          %v6261 = vunpack.c.l.b16 %v6228
          %v6262 = vunpack.c.l.b16 %v6229
          %v6263 = vunpack.c.l.b16 %v6230
          %v6264 = vunpack.c.l.b16 %v6231
          %v6265 = vunpack.c.l.b16 %v6232
          %v6266 = vunpack.c.l.b16 %v6233
          %v6267 = vpack.c.b16 %v6252, %v6251
          %v6268 = vpack.c.b16 %v6254, %v6253
          %v6269 = vpack.c.b16 %v6256, %v6255
          %v6270 = vpack.c.b16 %v6258, %v6257
          %v6271 = vpack.c.b16 %v6260, %v6259
          %v6272 = vpack.c.b16 %v6262, %v6261
          %v6273 = vpack.c.b16 %v6264, %v6263
          %v6274 = vpack.c.b16 %v6266, %v6265
          %6283 = vmatprep.subr.bf16.mxu0 0
          %6284 = vmatpush1.bf16.msra.mxu0 %v6267
          %6285 = vmatprep.subr.bf16.mxu0 0
          %6286 = vmatpush1.bf16.msra.mxu0 %v6268
          %6287 = vmatprep.subr.bf16.mxu0 0
          %6288 = vmatpush1.bf16.msra.mxu0 %v6269
          %6289 = vmatprep.subr.bf16.mxu0 0
          %6290 = vmatpush1.bf16.msra.mxu0 %v6270
          %6291 = vmatprep.subr.bf16.mxu0 0
          %6292 = vmatpush1.bf16.msra.mxu0 %v6271
          %6293 = vmatprep.subr.bf16.mxu0 0
          %6294 = vmatpush1.bf16.msra.mxu0 %v6272
          %6295 = vmatprep.subr.bf16.mxu0 0
          %6296 = vmatpush1.bf16.msra.mxu0 %v6273
          %6297 = vmatprep.subr.bf16.mxu0 0
          %6298 = vmatpush1.bf16.msra.mxu0 %v6274
          %6299 = vmatprep.subr.bf16.mxu0 0
          %6300 = vmatpush1.bf16.msra.mxu0 0
          %6301 = vmatprep.subr.bf16.mxu0 0
          %6302 = vmatpush1.bf16.msra.mxu0 0
          %6303 = vmatprep.subr.bf16.mxu0 0
          %6304 = vmatpush1.bf16.msra.mxu0 0
          %6305 = vmatprep.subr.bf16.mxu0 0
          %6306 = vmatpush1.bf16.msra.mxu0 0
          %6307 = vmatprep.subr.bf16.mxu0 0
          %6308 = vmatpush1.bf16.msra.mxu0 0
          %6309 = vmatprep.subr.bf16.mxu0 0
          %6310 = vmatpush1.bf16.msra.mxu0 0
          %6311 = vmatprep.subr.bf16.mxu0 0
          %6312 = vmatpush1.bf16.msra.mxu0 0
          %6313 = vmatprep.subr.bf16.mxu0 0
          %6314 = vmatpush1.bf16.msra.mxu0 0
          %6315 = vmatprep.mubr.bf16.mxu0 0
          %6316 = vmatmul.mubr.bf16.gmra.mrb[0].mxu0 %v5680
          %v6317 = vpop.f32.mrb[0].mxu0
          %v6318 = vadd.f32 %v6234, %v6317
          %v6319 = vpop.f32.mrb[0].mxu0
          %v6320 = vpop.f32.mrb[0].mxu0
          %v6321 = vpop.f32.mrb[0].mxu0
          %6322 = vdwg.mxu0
          %v6323 = vmul.f32 %v5896, %v6318
          %v6324 = vadd.f32 %v6213, %v6323
          %v6325 = vtanh.pop %v6324
          %v6326 = vsub.f32 1.0, %v6112
          %v6327 = vmul.f32 %v6326, %v6325
          %v6328 = vmul.f32 %v6112, %v5611
          %v6329 = vadd.f32 %v6327, %v6328
          %v6331 = vcombine.high %v6329, %v6329
          %v6333 = vunpack.c.l.s4 1966171168
          %v6334 = vunpack.c.0.s8 %v6333
          %v6335 = vlaneseq
          %v6336 = vshrl.u32 %v6335, 7
          %v6337 = vsub.s32 %v6334, %v6336
          %v6338 = vrot.slane %v6329, %v6337
          %v6340 = vunpack.c.l.s4 1966171168
          %v6341 = vunpack.c.0.s8 %v6340
          %v6342 = vlaneseq
          %v6343 = vshrl.u32 %v6342, 7
          %v6344 = vsub.s32 %v6341, %v6343
          %v6345 = vrot.slane %v6331, %v6344
          %v6346 = vcombine.high %v6338, %v6338
          %v6347 = vcombine.high %v6345, %v6345
          %v6349 = vunpack.c.l.s4 1966171168
          %v6350 = vunpack.c.0.s8 %v6349
          %v6351 = vlaneseq
          %v6352 = vshrl.u32 %v6351, 7
          %v6353 = vsub.s32 %v6350, %v6352
          %v6354 = vrot.slane %v6338, %v6353
          %v6356 = vunpack.c.l.s4 1966171168
          %v6357 = vunpack.c.0.s8 %v6356
          %v6358 = vlaneseq
          %v6359 = vshrl.u32 %v6358, 7
          %v6360 = vsub.s32 %v6357, %v6359
          %v6361 = vrot.slane %v6345, %v6360
          %v6363 = vunpack.c.l.s4 1966171168
          %v6364 = vunpack.c.0.s8 %v6363
          %v6365 = vlaneseq
          %v6366 = vshrl.u32 %v6365, 7
          %v6367 = vsub.s32 %v6364, %v6366
          %v6368 = vrot.slane %v6346, %v6367
          %v6370 = vunpack.c.l.s4 1966171168
          %v6371 = vunpack.c.0.s8 %v6370
          %v6372 = vlaneseq
          %v6373 = vshrl.u32 %v6372, 7
          %v6374 = vsub.s32 %v6371, %v6373
          %v6375 = vrot.slane %v6347, %v6374
          %v6376 = vcombine.high %v6354, %v6354
          %v6377 = vcombine.high %v6361, %v6361
          %v6378 = vcombine.high %v6368, %v6368
          %v6379 = vcombine.high %v6375, %v6375
          %6388 = vst [vmem:[#allocation2 + $0x7] sm:$0x1] %v6354
          %6389 = vst [vmem:[#allocation2 + $0xf] sm:$0x1] %v6368
          %6390 = vst [vmem:[#allocation2 + $0x17] sm:$0x1] %v6376
          %6391 = vst [vmem:[#allocation2 + $0x1f] sm:$0x1] %v6378
          %6392 = vst [vmem:[#allocation2 + $0x27] sm:$0x1] %v6361
          %6393 = vst [vmem:[#allocation2 + $0x2f] sm:$0x1] %v6375
          %6394 = vst [vmem:[#allocation2 + $0x37] sm:$0x1] %v6377
          %6395 = vst [vmem:[#allocation2 + $0x3f] sm:$0x1] %v6379
          %6396 = vst [vmem:[#allocation3] sm:$0xff] %v6329
          %vm6397 = vcmask 7168
          %6398 = vst.msk [vmem:[#allocation4] sm:$0xff] %vm6397, 1
        $region120: #{tpu_custom_call.1} parent=71 // pred_fallthru
          _
        %v6399 = vld [vmem:[#allocation3] sm:$0xff]
        %v6400 = vld [vmem:[#allocation4] sm:$0xff]
        %v6401 = vlaneseq
        %v6402 = vand.u32 %v6401, 127
        %6403 = vset.pattern.permute.xlu0 0
        %6404 = vperm.xlu0 %6403, %v6400
        %v6405 = vpop.permute.xlu0 %6404
        %vm6406 = vcmp.eq.s32.totalorder %v6402, %v6405
        %v6407 = vsel %vm6406, 1, 0
        %v6408 = vcvt.s32.f32 %v6407
        %v6409 = vpack.c.bf16 %v6408, %v6408
        %v6410 = vld [vmem:[#allocation13] sm:$0xf]
        %v6411 = vld [vmem:[#allocation13 + $0x4] sm:$0xf]
        %v6412 = vld [vmem:[#allocation13 + $0x8] sm:$0xf]
        %v6413 = vld [vmem:[#allocation13 + $0xc] sm:$0xf]
        %v6414 = vld [vmem:[#allocation13 + $0x10] sm:$0xf]
        %v6415 = vld [vmem:[#allocation13 + $0x14] sm:$0xf]
        %v6416 = vld [vmem:[#allocation13 + $0x18] sm:$0xf]
        %v6417 = vld [vmem:[#allocation13 + $0x1c] sm:$0xf]
        %v6418 = vld [vmem:[#allocation13 + $0x20] sm:$0xf]
        %v6419 = vld [vmem:[#allocation13 + $0x24] sm:$0xf]
        %v6420 = vld [vmem:[#allocation13 + $0x28] sm:$0xf]
        %v6421 = vld [vmem:[#allocation13 + $0x2c] sm:$0xf]
        %v6422 = vld [vmem:[#allocation13 + $0x30] sm:$0xf]
        %v6423 = vld [vmem:[#allocation13 + $0x34] sm:$0xf]
        %v6424 = vld [vmem:[#allocation13 + $0x38] sm:$0xf]
        %v6425 = vld [vmem:[#allocation13 + $0x3c] sm:$0xf]
        %v6442 = vunpack.c.l.b16 %v6410
        %v6443 = vunpack.c.l.b16 %v6411
        %v6444 = vunpack.c.l.b16 %v6412
        %v6445 = vunpack.c.l.b16 %v6413
        %v6446 = vunpack.c.l.b16 %v6414
        %v6447 = vunpack.c.l.b16 %v6415
        %v6448 = vunpack.c.l.b16 %v6416
        %v6449 = vunpack.c.l.b16 %v6417
        %v6450 = vunpack.c.l.b16 %v6418
        %v6451 = vunpack.c.l.b16 %v6419
        %v6452 = vunpack.c.l.b16 %v6420
        %v6453 = vunpack.c.l.b16 %v6421
        %v6454 = vunpack.c.l.b16 %v6422
        %v6455 = vunpack.c.l.b16 %v6423
        %v6456 = vunpack.c.l.b16 %v6424
        %v6457 = vunpack.c.l.b16 %v6425
        %v6458 = vpack.c.b16 %v6443, %v6442
        %v6459 = vpack.c.b16 %v6445, %v6444
        %v6460 = vpack.c.b16 %v6447, %v6446
        %v6461 = vpack.c.b16 %v6449, %v6448
        %v6462 = vpack.c.b16 %v6451, %v6450
        %v6463 = vpack.c.b16 %v6453, %v6452
        %v6464 = vpack.c.b16 %v6455, %v6454
        %v6465 = vpack.c.b16 %v6457, %v6456
        %6474 = vmatprep.subr.bf16.mxu0 0
        %6475 = vmatpush1.bf16.msra.mxu0 %v6458
        %6476 = vmatprep.subr.bf16.mxu0 0
        %6477 = vmatpush1.bf16.msra.mxu0 %v6459
        %6478 = vmatprep.subr.bf16.mxu0 0
        %6479 = vmatpush1.bf16.msra.mxu0 %v6460
        %6480 = vmatprep.subr.bf16.mxu0 0
        %6481 = vmatpush1.bf16.msra.mxu0 %v6461
        %6482 = vmatprep.subr.bf16.mxu0 0
        %6483 = vmatpush1.bf16.msra.mxu0 %v6462
        %6484 = vmatprep.subr.bf16.mxu0 0
        %6485 = vmatpush1.bf16.msra.mxu0 %v6463
        %6486 = vmatprep.subr.bf16.mxu0 0
        %6487 = vmatpush1.bf16.msra.mxu0 %v6464
        %6488 = vmatprep.subr.bf16.mxu0 0
        %6489 = vmatpush1.bf16.msra.mxu0 %v6465
        %6490 = vmatprep.subr.bf16.mxu0 0
        %6491 = vmatpush1.bf16.msra.mxu0 0
        %6492 = vmatprep.subr.bf16.mxu0 0
        %6493 = vmatpush1.bf16.msra.mxu0 0
        %6494 = vmatprep.subr.bf16.mxu0 0
        %6495 = vmatpush1.bf16.msra.mxu0 0
        %6496 = vmatprep.subr.bf16.mxu0 0
        %6497 = vmatpush1.bf16.msra.mxu0 0
        %6498 = vmatprep.subr.bf16.mxu0 0
        %6499 = vmatpush1.bf16.msra.mxu0 0
        %6500 = vmatprep.subr.bf16.mxu0 0
        %6501 = vmatpush1.bf16.msra.mxu0 0
        %6502 = vmatprep.subr.bf16.mxu0 0
        %6503 = vmatpush1.bf16.msra.mxu0 0
        %6504 = vmatprep.subr.bf16.mxu0 0
        %6505 = vmatpush1.bf16.msra.mxu0 0
        %6506 = vmatprep.mubr.bf16.mxu0 0
        %6507 = vmatmul.mubr.bf16.gmra.mrb[0].mxu0 %v6409
        %v6508 = vpop.f32.mrb[0].mxu0
        %v6509 = vadd.f32 0.0, %v6508
        %v6510 = vpop.f32.mrb[0].mxu0
        %v6511 = vpop.f32.mrb[0].mxu0
        %v6512 = vpop.f32.mrb[0].mxu0
        %6513 = vdwg.mxu0
        %v6514 = vpack.c.bf16 %v6509, %v6509
        %v6515 = vpack.c.bf16 %v6399, %v6399
        %v6516 = vld [vmem:[#allocation14] sm:$0xf]
        %v6517 = vld [vmem:[#allocation14 + $0x4] sm:$0xf]
        %v6518 = vld [vmem:[#allocation14 + $0x8] sm:$0xf]
        %v6519 = vld [vmem:[#allocation14 + $0xc] sm:$0xf]
        %v6520 = vld [vmem:[#allocation14 + $0x10] sm:$0xf]
        %v6521 = vld [vmem:[#allocation14 + $0x14] sm:$0xf]
        %v6522 = vld [vmem:[#allocation14 + $0x18] sm:$0xf]
        %v6523 = vld [vmem:[#allocation14 + $0x1c] sm:$0xf]
        %v6524 = vld [vmem:[#allocation14 + $0x20] sm:$0xf]
        %v6525 = vld [vmem:[#allocation14 + $0x24] sm:$0xf]
        %v6526 = vld [vmem:[#allocation14 + $0x28] sm:$0xf]
        %v6527 = vld [vmem:[#allocation14 + $0x2c] sm:$0xf]
        %v6528 = vld [vmem:[#allocation14 + $0x30] sm:$0xf]
        %v6529 = vld [vmem:[#allocation14 + $0x34] sm:$0xf]
        %v6530 = vld [vmem:[#allocation14 + $0x38] sm:$0xf]
        %v6531 = vld [vmem:[#allocation14 + $0x3c] sm:$0xf]
        %v6532 = vld [vmem:[#allocation16] sm:$0xf]
        %v6533 = vld [vmem:[#allocation16 + $0x4] sm:$0xf]
        %v6534 = vld [vmem:[#allocation16 + $0x8] sm:$0xf]
        %v6535 = vld [vmem:[#allocation16 + $0xc] sm:$0xf]
        %v6536 = vld [vmem:[#allocation16 + $0x10] sm:$0xf]
        %v6537 = vld [vmem:[#allocation16 + $0x14] sm:$0xf]
        %v6538 = vld [vmem:[#allocation16 + $0x18] sm:$0xf]
        %v6539 = vld [vmem:[#allocation16 + $0x1c] sm:$0xf]
        %v6540 = vld [vmem:[#allocation16 + $0x20] sm:$0xf]
        %v6541 = vld [vmem:[#allocation16 + $0x24] sm:$0xf]
        %v6542 = vld [vmem:[#allocation16 + $0x28] sm:$0xf]
        %v6543 = vld [vmem:[#allocation16 + $0x2c] sm:$0xf]
        %v6544 = vld [vmem:[#allocation16 + $0x30] sm:$0xf]
        %v6545 = vld [vmem:[#allocation16 + $0x34] sm:$0xf]
        %v6546 = vld [vmem:[#allocation16 + $0x38] sm:$0xf]
        %v6547 = vld [vmem:[#allocation16 + $0x3c] sm:$0xf]
        %v6564 = vunpack.c.l.b16 %v6532
        %v6565 = vunpack.c.l.b16 %v6533
        %v6566 = vunpack.c.l.b16 %v6534
        %v6567 = vunpack.c.l.b16 %v6535
        %v6568 = vunpack.c.l.b16 %v6536
        %v6569 = vunpack.c.l.b16 %v6537
        %v6570 = vunpack.c.l.b16 %v6538
        %v6571 = vunpack.c.l.b16 %v6539
        %v6572 = vunpack.c.l.b16 %v6540
        %v6573 = vunpack.c.l.b16 %v6541
        %v6574 = vunpack.c.l.b16 %v6542
        %v6575 = vunpack.c.l.b16 %v6543
        %v6576 = vunpack.c.l.b16 %v6544
        %v6577 = vunpack.c.l.b16 %v6545
        %v6578 = vunpack.c.l.b16 %v6546
        %v6579 = vunpack.c.l.b16 %v6547
        %v6580 = vpack.c.b16 %v6565, %v6564
        %v6581 = vpack.c.b16 %v6567, %v6566
        %v6582 = vpack.c.b16 %v6569, %v6568
        %v6583 = vpack.c.b16 %v6571, %v6570
        %v6584 = vpack.c.b16 %v6573, %v6572
        %v6585 = vpack.c.b16 %v6575, %v6574
        %v6586 = vpack.c.b16 %v6577, %v6576
        %v6587 = vpack.c.b16 %v6579, %v6578
        %6596 = vmatprep.subr.bf16.mxu0 0
        %6597 = vmatpush1.bf16.msra.mxu0 %v6580
        %6598 = vmatprep.subr.bf16.mxu0 0
        %6599 = vmatpush1.bf16.msra.mxu0 %v6581
        %6600 = vmatprep.subr.bf16.mxu0 0
        %6601 = vmatpush1.bf16.msra.mxu0 %v6582
        %6602 = vmatprep.subr.bf16.mxu0 0
        %6603 = vmatpush1.bf16.msra.mxu0 %v6583
        %6604 = vmatprep.subr.bf16.mxu0 0
        %6605 = vmatpush1.bf16.msra.mxu0 %v6584
        %6606 = vmatprep.subr.bf16.mxu0 0
        %6607 = vmatpush1.bf16.msra.mxu0 %v6585
        %6608 = vmatprep.subr.bf16.mxu0 0
        %6609 = vmatpush1.bf16.msra.mxu0 %v6586
        %6610 = vmatprep.subr.bf16.mxu0 0
        %6611 = vmatpush1.bf16.msra.mxu0 %v6587
        %6612 = vmatprep.subr.bf16.mxu0 0
        %6613 = vmatpush1.bf16.msra.mxu0 0
        %6614 = vmatprep.subr.bf16.mxu0 0
        %6615 = vmatpush1.bf16.msra.mxu0 0
        %6616 = vmatprep.subr.bf16.mxu0 0
        %6617 = vmatpush1.bf16.msra.mxu0 0
        %6618 = vmatprep.subr.bf16.mxu0 0
        %6619 = vmatpush1.bf16.msra.mxu0 0
        %6620 = vmatprep.subr.bf16.mxu0 0
        %6621 = vmatpush1.bf16.msra.mxu0 0
        %6622 = vmatprep.subr.bf16.mxu0 0
        %6623 = vmatpush1.bf16.msra.mxu0 0
        %6624 = vmatprep.subr.bf16.mxu0 0
        %6625 = vmatpush1.bf16.msra.mxu0 0
        %6626 = vmatprep.subr.bf16.mxu0 0
        %6627 = vmatpush1.bf16.msra.mxu0 0
        %6628 = vmatprep.mubr.bf16.mxu0 0
        %6629 = vmatmul.mubr.bf16.gmra.mrb[0].mxu0 %v6515
        %v6630 = vpop.f32.mrb[0].mxu0
        %v6631 = vadd.f32 0.0, %v6630
        %v6632 = vpop.f32.mrb[0].mxu0
        %v6633 = vpop.f32.mrb[0].mxu0
        %v6634 = vpop.f32.mrb[0].mxu0
        %6635 = vdwg.mxu0
        %v6652 = vunpack.c.l.b16 %v6516
        %v6653 = vunpack.c.l.b16 %v6517
        %v6654 = vunpack.c.l.b16 %v6518
        %v6655 = vunpack.c.l.b16 %v6519
        %v6656 = vunpack.c.l.b16 %v6520
        %v6657 = vunpack.c.l.b16 %v6521
        %v6658 = vunpack.c.l.b16 %v6522
        %v6659 = vunpack.c.l.b16 %v6523
        %v6660 = vunpack.c.l.b16 %v6524
        %v6661 = vunpack.c.l.b16 %v6525
        %v6662 = vunpack.c.l.b16 %v6526
        %v6663 = vunpack.c.l.b16 %v6527
        %v6664 = vunpack.c.l.b16 %v6528
        %v6665 = vunpack.c.l.b16 %v6529
        %v6666 = vunpack.c.l.b16 %v6530
        %v6667 = vunpack.c.l.b16 %v6531
        %v6668 = vpack.c.b16 %v6653, %v6652
        %v6669 = vpack.c.b16 %v6655, %v6654
        %v6670 = vpack.c.b16 %v6657, %v6656
        %v6671 = vpack.c.b16 %v6659, %v6658
        %v6672 = vpack.c.b16 %v6661, %v6660
        %v6673 = vpack.c.b16 %v6663, %v6662
        %v6674 = vpack.c.b16 %v6665, %v6664
        %v6675 = vpack.c.b16 %v6667, %v6666
        %6684 = vmatprep.subr.bf16.mxu0 0
        %6685 = vmatpush1.bf16.msra.mxu0 %v6668
        %6686 = vmatprep.subr.bf16.mxu0 0
        %6687 = vmatpush1.bf16.msra.mxu0 %v6669
        %6688 = vmatprep.subr.bf16.mxu0 0
        %6689 = vmatpush1.bf16.msra.mxu0 %v6670
        %6690 = vmatprep.subr.bf16.mxu0 0
        %6691 = vmatpush1.bf16.msra.mxu0 %v6671
        %6692 = vmatprep.subr.bf16.mxu0 0
        %6693 = vmatpush1.bf16.msra.mxu0 %v6672
        %6694 = vmatprep.subr.bf16.mxu0 0
        %6695 = vmatpush1.bf16.msra.mxu0 %v6673
        %6696 = vmatprep.subr.bf16.mxu0 0
        %6697 = vmatpush1.bf16.msra.mxu0 %v6674
        %6698 = vmatprep.subr.bf16.mxu0 0
        %6699 = vmatpush1.bf16.msra.mxu0 %v6675
        %6700 = vmatprep.subr.bf16.mxu0 0
        %6701 = vmatpush1.bf16.msra.mxu0 0
        %6702 = vmatprep.subr.bf16.mxu0 0
        %6703 = vmatpush1.bf16.msra.mxu0 0
        %6704 = vmatprep.subr.bf16.mxu0 0
        %6705 = vmatpush1.bf16.msra.mxu0 0
        %6706 = vmatprep.subr.bf16.mxu0 0
        %6707 = vmatpush1.bf16.msra.mxu0 0
        %6708 = vmatprep.subr.bf16.mxu0 0
        %6709 = vmatpush1.bf16.msra.mxu0 0
        %6710 = vmatprep.subr.bf16.mxu0 0
        %6711 = vmatpush1.bf16.msra.mxu0 0
        %6712 = vmatprep.subr.bf16.mxu0 0
        %6713 = vmatpush1.bf16.msra.mxu0 0
        %6714 = vmatprep.subr.bf16.mxu0 0
        %6715 = vmatpush1.bf16.msra.mxu0 0
        %6716 = vmatprep.mubr.bf16.mxu0 0
        %6717 = vmatmul.mubr.bf16.gmra.mrb[0].mxu0 %v6514
        %v6718 = vpop.f32.mrb[0].mxu0
        %v6719 = vadd.f32 %v6631, %v6718
        %v6720 = vpop.f32.mrb[0].mxu0
        %v6721 = vpop.f32.mrb[0].mxu0
        %v6722 = vpop.f32.mrb[0].mxu0
        %6723 = vdwg.mxu0
        %v6724 = vld [vmem:[#allocation17] sm:$0xff]
        %v6725 = vadd.f32 %v6719, %v6724
        %v6726 = vxor.u32 %v6725, 2147483648
        %v6727 = vmul.f32 %v6726, 1.442695
        %v6728 = vpow.pop %v6727
        %v6729 = vadd.f32 %v6728, 1.0
        %v6730 = vrcp.pop %v6729
        %v6731 = vmul.f32 1.0, %v6730
        %s6732 = scalar_lea.vmem [#allocation14], 64
        %v6733 = vld [vmem:[%s6732] sm:$0xf]
        %v6734 = vld [vmem:[%s6732 + $0x4] sm:$0xf]
        %v6735 = vld [vmem:[%s6732 + $0x8] sm:$0xf]
        %v6736 = vld [vmem:[%s6732 + $0xc] sm:$0xf]
        %v6737 = vld [vmem:[%s6732 + $0x10] sm:$0xf]
        %v6738 = vld [vmem:[%s6732 + $0x14] sm:$0xf]
        %v6739 = vld [vmem:[%s6732 + $0x18] sm:$0xf]
        %v6740 = vld [vmem:[%s6732 + $0x1c] sm:$0xf]
        %v6741 = vld [vmem:[%s6732 + $0x20] sm:$0xf]
        %v6742 = vld [vmem:[%s6732 + $0x24] sm:$0xf]
        %v6743 = vld [vmem:[%s6732 + $0x28] sm:$0xf]
        %v6744 = vld [vmem:[%s6732 + $0x2c] sm:$0xf]
        %v6745 = vld [vmem:[%s6732 + $0x30] sm:$0xf]
        %v6746 = vld [vmem:[%s6732 + $0x34] sm:$0xf]
        %v6747 = vld [vmem:[%s6732 + $0x38] sm:$0xf]
        %v6748 = vld [vmem:[%s6732 + $0x3c] sm:$0xf]
        %s6749 = scalar_lea.vmem [#allocation16], 64
        %v6750 = vld [vmem:[%s6749] sm:$0xf]
        %v6751 = vld [vmem:[%s6749 + $0x4] sm:$0xf]
        %v6752 = vld [vmem:[%s6749 + $0x8] sm:$0xf]
        %v6753 = vld [vmem:[%s6749 + $0xc] sm:$0xf]
        %v6754 = vld [vmem:[%s6749 + $0x10] sm:$0xf]
        %v6755 = vld [vmem:[%s6749 + $0x14] sm:$0xf]
        %v6756 = vld [vmem:[%s6749 + $0x18] sm:$0xf]
        %v6757 = vld [vmem:[%s6749 + $0x1c] sm:$0xf]
        %v6758 = vld [vmem:[%s6749 + $0x20] sm:$0xf]
        %v6759 = vld [vmem:[%s6749 + $0x24] sm:$0xf]
        %v6760 = vld [vmem:[%s6749 + $0x28] sm:$0xf]
        %v6761 = vld [vmem:[%s6749 + $0x2c] sm:$0xf]
        %v6762 = vld [vmem:[%s6749 + $0x30] sm:$0xf]
        %v6763 = vld [vmem:[%s6749 + $0x34] sm:$0xf]
        %v6764 = vld [vmem:[%s6749 + $0x38] sm:$0xf]
        %v6765 = vld [vmem:[%s6749 + $0x3c] sm:$0xf]
        %v6782 = vunpack.c.l.b16 %v6750
        %v6783 = vunpack.c.l.b16 %v6751
        %v6784 = vunpack.c.l.b16 %v6752
        %v6785 = vunpack.c.l.b16 %v6753
        %v6786 = vunpack.c.l.b16 %v6754
        %v6787 = vunpack.c.l.b16 %v6755
        %v6788 = vunpack.c.l.b16 %v6756
        %v6789 = vunpack.c.l.b16 %v6757
        %v6790 = vunpack.c.l.b16 %v6758
        %v6791 = vunpack.c.l.b16 %v6759
        %v6792 = vunpack.c.l.b16 %v6760
        %v6793 = vunpack.c.l.b16 %v6761
        %v6794 = vunpack.c.l.b16 %v6762
        %v6795 = vunpack.c.l.b16 %v6763
        %v6796 = vunpack.c.l.b16 %v6764
        %v6797 = vunpack.c.l.b16 %v6765
        %v6798 = vpack.c.b16 %v6783, %v6782
        %v6799 = vpack.c.b16 %v6785, %v6784
        %v6800 = vpack.c.b16 %v6787, %v6786
        %v6801 = vpack.c.b16 %v6789, %v6788
        %v6802 = vpack.c.b16 %v6791, %v6790
        %v6803 = vpack.c.b16 %v6793, %v6792
        %v6804 = vpack.c.b16 %v6795, %v6794
        %v6805 = vpack.c.b16 %v6797, %v6796
        %6814 = vmatprep.subr.bf16.mxu0 0
        %6815 = vmatpush1.bf16.msra.mxu0 %v6798
        %6816 = vmatprep.subr.bf16.mxu0 0
        %6817 = vmatpush1.bf16.msra.mxu0 %v6799
        %6818 = vmatprep.subr.bf16.mxu0 0
        %6819 = vmatpush1.bf16.msra.mxu0 %v6800
        %6820 = vmatprep.subr.bf16.mxu0 0
        %6821 = vmatpush1.bf16.msra.mxu0 %v6801
        %6822 = vmatprep.subr.bf16.mxu0 0
        %6823 = vmatpush1.bf16.msra.mxu0 %v6802
        %6824 = vmatprep.subr.bf16.mxu0 0
        %6825 = vmatpush1.bf16.msra.mxu0 %v6803
        %6826 = vmatprep.subr.bf16.mxu0 0
        %6827 = vmatpush1.bf16.msra.mxu0 %v6804
        %6828 = vmatprep.subr.bf16.mxu0 0
        %6829 = vmatpush1.bf16.msra.mxu0 %v6805
        %6830 = vmatprep.subr.bf16.mxu0 0
        %6831 = vmatpush1.bf16.msra.mxu0 0
        %6832 = vmatprep.subr.bf16.mxu0 0
        %6833 = vmatpush1.bf16.msra.mxu0 0
        %6834 = vmatprep.subr.bf16.mxu0 0
        %6835 = vmatpush1.bf16.msra.mxu0 0
        %6836 = vmatprep.subr.bf16.mxu0 0
        %6837 = vmatpush1.bf16.msra.mxu0 0
        %6838 = vmatprep.subr.bf16.mxu0 0
        %6839 = vmatpush1.bf16.msra.mxu0 0
        %6840 = vmatprep.subr.bf16.mxu0 0
        %6841 = vmatpush1.bf16.msra.mxu0 0
        %6842 = vmatprep.subr.bf16.mxu0 0
        %6843 = vmatpush1.bf16.msra.mxu0 0
        %6844 = vmatprep.subr.bf16.mxu0 0
        %6845 = vmatpush1.bf16.msra.mxu0 0
        %6846 = vmatprep.mubr.bf16.mxu0 0
        %6847 = vmatmul.mubr.bf16.gmra.mrb[0].mxu0 %v6515
        %v6848 = vpop.f32.mrb[0].mxu0
        %v6849 = vadd.f32 0.0, %v6848
        %v6850 = vpop.f32.mrb[0].mxu0
        %v6851 = vpop.f32.mrb[0].mxu0
        %v6852 = vpop.f32.mrb[0].mxu0
        %6853 = vdwg.mxu0
        %v6870 = vunpack.c.l.b16 %v6733
        %v6871 = vunpack.c.l.b16 %v6734
        %v6872 = vunpack.c.l.b16 %v6735
        %v6873 = vunpack.c.l.b16 %v6736
        %v6874 = vunpack.c.l.b16 %v6737
        %v6875 = vunpack.c.l.b16 %v6738
        %v6876 = vunpack.c.l.b16 %v6739
        %v6877 = vunpack.c.l.b16 %v6740
        %v6878 = vunpack.c.l.b16 %v6741
        %v6879 = vunpack.c.l.b16 %v6742
        %v6880 = vunpack.c.l.b16 %v6743
        %v6881 = vunpack.c.l.b16 %v6744
        %v6882 = vunpack.c.l.b16 %v6745
        %v6883 = vunpack.c.l.b16 %v6746
        %v6884 = vunpack.c.l.b16 %v6747
        %v6885 = vunpack.c.l.b16 %v6748
        %v6886 = vpack.c.b16 %v6871, %v6870
        %v6887 = vpack.c.b16 %v6873, %v6872
        %v6888 = vpack.c.b16 %v6875, %v6874
        %v6889 = vpack.c.b16 %v6877, %v6876
        %v6890 = vpack.c.b16 %v6879, %v6878
        %v6891 = vpack.c.b16 %v6881, %v6880
        %v6892 = vpack.c.b16 %v6883, %v6882
        %v6893 = vpack.c.b16 %v6885, %v6884
        %6902 = vmatprep.subr.bf16.mxu0 0
        %6903 = vmatpush1.bf16.msra.mxu0 %v6886
        %6904 = vmatprep.subr.bf16.mxu0 0
        %6905 = vmatpush1.bf16.msra.mxu0 %v6887
        %6906 = vmatprep.subr.bf16.mxu0 0
        %6907 = vmatpush1.bf16.msra.mxu0 %v6888
        %6908 = vmatprep.subr.bf16.mxu0 0
        %6909 = vmatpush1.bf16.msra.mxu0 %v6889
        %6910 = vmatprep.subr.bf16.mxu0 0
        %6911 = vmatpush1.bf16.msra.mxu0 %v6890
        %6912 = vmatprep.subr.bf16.mxu0 0
        %6913 = vmatpush1.bf16.msra.mxu0 %v6891
        %6914 = vmatprep.subr.bf16.mxu0 0
        %6915 = vmatpush1.bf16.msra.mxu0 %v6892
        %6916 = vmatprep.subr.bf16.mxu0 0
        %6917 = vmatpush1.bf16.msra.mxu0 %v6893
        %6918 = vmatprep.subr.bf16.mxu0 0
        %6919 = vmatpush1.bf16.msra.mxu0 0
        %6920 = vmatprep.subr.bf16.mxu0 0
        %6921 = vmatpush1.bf16.msra.mxu0 0
        %6922 = vmatprep.subr.bf16.mxu0 0
        %6923 = vmatpush1.bf16.msra.mxu0 0
        %6924 = vmatprep.subr.bf16.mxu0 0
        %6925 = vmatpush1.bf16.msra.mxu0 0
        %6926 = vmatprep.subr.bf16.mxu0 0
        %6927 = vmatpush1.bf16.msra.mxu0 0
        %6928 = vmatprep.subr.bf16.mxu0 0
        %6929 = vmatpush1.bf16.msra.mxu0 0
        %6930 = vmatprep.subr.bf16.mxu0 0
        %6931 = vmatpush1.bf16.msra.mxu0 0
        %6932 = vmatprep.subr.bf16.mxu0 0
        %6933 = vmatpush1.bf16.msra.mxu0 0
        %6934 = vmatprep.mubr.bf16.mxu0 0
        %6935 = vmatmul.mubr.bf16.gmra.mrb[0].mxu0 %v6514
        %v6936 = vpop.f32.mrb[0].mxu0
        %v6937 = vadd.f32 %v6849, %v6936
        %v6938 = vpop.f32.mrb[0].mxu0
        %v6939 = vpop.f32.mrb[0].mxu0
        %v6940 = vpop.f32.mrb[0].mxu0
        %6941 = vdwg.mxu0
        %s6942 = scalar_lea.vmem [#allocation17], 8
        %v6943 = vld [vmem:[%s6942] sm:$0xff]
        %v6944 = vadd.f32 %v6937, %v6943
        %v6945 = vxor.u32 %v6944, 2147483648
        %v6946 = vmul.f32 %v6945, 1.442695
        %v6947 = vpow.pop %v6946
        %v6948 = vadd.f32 %v6947, 1.0
        %v6949 = vrcp.pop %v6948
        %v6950 = vmul.f32 1.0, %v6949
        %s6951 = scalar_lea.vmem [#allocation14], 128
        %v6952 = vld [vmem:[%s6951] sm:$0xf]
        %v6953 = vld [vmem:[%s6951 + $0x4] sm:$0xf]
        %v6954 = vld [vmem:[%s6951 + $0x8] sm:$0xf]
        %v6955 = vld [vmem:[%s6951 + $0xc] sm:$0xf]
        %v6956 = vld [vmem:[%s6951 + $0x10] sm:$0xf]
        %v6957 = vld [vmem:[%s6951 + $0x14] sm:$0xf]
        %v6958 = vld [vmem:[%s6951 + $0x18] sm:$0xf]
        %v6959 = vld [vmem:[%s6951 + $0x1c] sm:$0xf]
        %v6960 = vld [vmem:[%s6951 + $0x20] sm:$0xf]
        %v6961 = vld [vmem:[%s6951 + $0x24] sm:$0xf]
        %v6962 = vld [vmem:[%s6951 + $0x28] sm:$0xf]
        %v6963 = vld [vmem:[%s6951 + $0x2c] sm:$0xf]
        %v6964 = vld [vmem:[%s6951 + $0x30] sm:$0xf]
        %v6965 = vld [vmem:[%s6951 + $0x34] sm:$0xf]
        %v6966 = vld [vmem:[%s6951 + $0x38] sm:$0xf]
        %v6967 = vld [vmem:[%s6951 + $0x3c] sm:$0xf]
        %s6968 = scalar_lea.vmem [#allocation17], 16
        %v6969 = vld [vmem:[%s6968] sm:$0xff]
        %v6986 = vunpack.c.l.b16 %v6952
        %v6987 = vunpack.c.l.b16 %v6953
        %v6988 = vunpack.c.l.b16 %v6954
        %v6989 = vunpack.c.l.b16 %v6955
        %v6990 = vunpack.c.l.b16 %v6956
        %v6991 = vunpack.c.l.b16 %v6957
        %v6992 = vunpack.c.l.b16 %v6958
        %v6993 = vunpack.c.l.b16 %v6959
        %v6994 = vunpack.c.l.b16 %v6960
        %v6995 = vunpack.c.l.b16 %v6961
        %v6996 = vunpack.c.l.b16 %v6962
        %v6997 = vunpack.c.l.b16 %v6963
        %v6998 = vunpack.c.l.b16 %v6964
        %v6999 = vunpack.c.l.b16 %v6965
        %v7000 = vunpack.c.l.b16 %v6966
        %v7001 = vunpack.c.l.b16 %v6967
        %v7002 = vpack.c.b16 %v6987, %v6986
        %v7003 = vpack.c.b16 %v6989, %v6988
        %v7004 = vpack.c.b16 %v6991, %v6990
        %v7005 = vpack.c.b16 %v6993, %v6992
        %v7006 = vpack.c.b16 %v6995, %v6994
        %v7007 = vpack.c.b16 %v6997, %v6996
        %v7008 = vpack.c.b16 %v6999, %v6998
        %v7009 = vpack.c.b16 %v7001, %v7000
        %7018 = vmatprep.subr.bf16.mxu0 0
        %7019 = vmatpush1.bf16.msra.mxu0 %v7002
        %7020 = vmatprep.subr.bf16.mxu0 0
        %7021 = vmatpush1.bf16.msra.mxu0 %v7003
        %7022 = vmatprep.subr.bf16.mxu0 0
        %7023 = vmatpush1.bf16.msra.mxu0 %v7004
        %7024 = vmatprep.subr.bf16.mxu0 0
        %7025 = vmatpush1.bf16.msra.mxu0 %v7005
        %7026 = vmatprep.subr.bf16.mxu0 0
        %7027 = vmatpush1.bf16.msra.mxu0 %v7006
        %7028 = vmatprep.subr.bf16.mxu0 0
        %7029 = vmatpush1.bf16.msra.mxu0 %v7007
        %7030 = vmatprep.subr.bf16.mxu0 0
        %7031 = vmatpush1.bf16.msra.mxu0 %v7008
        %7032 = vmatprep.subr.bf16.mxu0 0
        %7033 = vmatpush1.bf16.msra.mxu0 %v7009
        %7034 = vmatprep.subr.bf16.mxu0 0
        %7035 = vmatpush1.bf16.msra.mxu0 0
        %7036 = vmatprep.subr.bf16.mxu0 0
        %7037 = vmatpush1.bf16.msra.mxu0 0
        %7038 = vmatprep.subr.bf16.mxu0 0
        %7039 = vmatpush1.bf16.msra.mxu0 0
        %7040 = vmatprep.subr.bf16.mxu0 0
        %7041 = vmatpush1.bf16.msra.mxu0 0
        %7042 = vmatprep.subr.bf16.mxu0 0
        %7043 = vmatpush1.bf16.msra.mxu0 0
        %7044 = vmatprep.subr.bf16.mxu0 0
        %7045 = vmatpush1.bf16.msra.mxu0 0
        %7046 = vmatprep.subr.bf16.mxu0 0
        %7047 = vmatpush1.bf16.msra.mxu0 0
        %7048 = vmatprep.subr.bf16.mxu0 0
        %7049 = vmatpush1.bf16.msra.mxu0 0
        %7050 = vmatprep.mubr.bf16.mxu0 0
        %7051 = vmatmul.mubr.bf16.gmra.mrb[0].mxu0 %v6514
        %v7052 = vpop.f32.mrb[0].mxu0
        %v7053 = vadd.f32 %v6969, %v7052
        %v7054 = vpop.f32.mrb[0].mxu0
        %v7055 = vpop.f32.mrb[0].mxu0
        %v7056 = vpop.f32.mrb[0].mxu0
        %7057 = vdwg.mxu0
        %s7058 = scalar_lea.vmem [#allocation16], 128
        %v7059 = vld [vmem:[%s7058] sm:$0xf]
        %v7060 = vld [vmem:[%s7058 + $0x4] sm:$0xf]
        %v7061 = vld [vmem:[%s7058 + $0x8] sm:$0xf]
        %v7062 = vld [vmem:[%s7058 + $0xc] sm:$0xf]
        %v7063 = vld [vmem:[%s7058 + $0x10] sm:$0xf]
        %v7064 = vld [vmem:[%s7058 + $0x14] sm:$0xf]
        %v7065 = vld [vmem:[%s7058 + $0x18] sm:$0xf]
        %v7066 = vld [vmem:[%s7058 + $0x1c] sm:$0xf]
        %v7067 = vld [vmem:[%s7058 + $0x20] sm:$0xf]
        %v7068 = vld [vmem:[%s7058 + $0x24] sm:$0xf]
        %v7069 = vld [vmem:[%s7058 + $0x28] sm:$0xf]
        %v7070 = vld [vmem:[%s7058 + $0x2c] sm:$0xf]
        %v7071 = vld [vmem:[%s7058 + $0x30] sm:$0xf]
        %v7072 = vld [vmem:[%s7058 + $0x34] sm:$0xf]
        %v7073 = vld [vmem:[%s7058 + $0x38] sm:$0xf]
        %v7074 = vld [vmem:[%s7058 + $0x3c] sm:$0xf]
        %s7075 = scalar_lea.vmem [#allocation17], 24
        %v7076 = vld [vmem:[%s7075] sm:$0xff]
        %v7093 = vunpack.c.l.b16 %v7059
        %v7094 = vunpack.c.l.b16 %v7060
        %v7095 = vunpack.c.l.b16 %v7061
        %v7096 = vunpack.c.l.b16 %v7062
        %v7097 = vunpack.c.l.b16 %v7063
        %v7098 = vunpack.c.l.b16 %v7064
        %v7099 = vunpack.c.l.b16 %v7065
        %v7100 = vunpack.c.l.b16 %v7066
        %v7101 = vunpack.c.l.b16 %v7067
        %v7102 = vunpack.c.l.b16 %v7068
        %v7103 = vunpack.c.l.b16 %v7069
        %v7104 = vunpack.c.l.b16 %v7070
        %v7105 = vunpack.c.l.b16 %v7071
        %v7106 = vunpack.c.l.b16 %v7072
        %v7107 = vunpack.c.l.b16 %v7073
        %v7108 = vunpack.c.l.b16 %v7074
        %v7109 = vpack.c.b16 %v7094, %v7093
        %v7110 = vpack.c.b16 %v7096, %v7095
        %v7111 = vpack.c.b16 %v7098, %v7097
        %v7112 = vpack.c.b16 %v7100, %v7099
        %v7113 = vpack.c.b16 %v7102, %v7101
        %v7114 = vpack.c.b16 %v7104, %v7103
        %v7115 = vpack.c.b16 %v7106, %v7105
        %v7116 = vpack.c.b16 %v7108, %v7107
        %7125 = vmatprep.subr.bf16.mxu0 0
        %7126 = vmatpush1.bf16.msra.mxu0 %v7109
        %7127 = vmatprep.subr.bf16.mxu0 0
        %7128 = vmatpush1.bf16.msra.mxu0 %v7110
        %7129 = vmatprep.subr.bf16.mxu0 0
        %7130 = vmatpush1.bf16.msra.mxu0 %v7111
        %7131 = vmatprep.subr.bf16.mxu0 0
        %7132 = vmatpush1.bf16.msra.mxu0 %v7112
        %7133 = vmatprep.subr.bf16.mxu0 0
        %7134 = vmatpush1.bf16.msra.mxu0 %v7113
        %7135 = vmatprep.subr.bf16.mxu0 0
        %7136 = vmatpush1.bf16.msra.mxu0 %v7114
        %7137 = vmatprep.subr.bf16.mxu0 0
        %7138 = vmatpush1.bf16.msra.mxu0 %v7115
        %7139 = vmatprep.subr.bf16.mxu0 0
        %7140 = vmatpush1.bf16.msra.mxu0 %v7116
        %7141 = vmatprep.subr.bf16.mxu0 0
        %7142 = vmatpush1.bf16.msra.mxu0 0
        %7143 = vmatprep.subr.bf16.mxu0 0
        %7144 = vmatpush1.bf16.msra.mxu0 0
        %7145 = vmatprep.subr.bf16.mxu0 0
        %7146 = vmatpush1.bf16.msra.mxu0 0
        %7147 = vmatprep.subr.bf16.mxu0 0
        %7148 = vmatpush1.bf16.msra.mxu0 0
        %7149 = vmatprep.subr.bf16.mxu0 0
        %7150 = vmatpush1.bf16.msra.mxu0 0
        %7151 = vmatprep.subr.bf16.mxu0 0
        %7152 = vmatpush1.bf16.msra.mxu0 0
        %7153 = vmatprep.subr.bf16.mxu0 0
        %7154 = vmatpush1.bf16.msra.mxu0 0
        %7155 = vmatprep.subr.bf16.mxu0 0
        %7156 = vmatpush1.bf16.msra.mxu0 0
        %7157 = vmatprep.mubr.bf16.mxu0 0
        %7158 = vmatmul.mubr.bf16.gmra.mrb[0].mxu0 %v6515
        %v7159 = vpop.f32.mrb[0].mxu0
        %v7160 = vadd.f32 %v7076, %v7159
        %v7161 = vpop.f32.mrb[0].mxu0
        %v7162 = vpop.f32.mrb[0].mxu0
        %v7163 = vpop.f32.mrb[0].mxu0
        %7164 = vdwg.mxu0
        %v7165 = vmul.f32 %v6731, %v7160
        %v7166 = vadd.f32 %v7053, %v7165
        %v7167 = vtanh.pop %v7166
        %v7168 = vsub.f32 1.0, %v6950
        %v7169 = vmul.f32 %v7168, %v7167
        %v7170 = vmul.f32 %v6950, %v6399
        %v7171 = vadd.f32 %v7169, %v7170
        %v7172 = vpack.c.bf16 %v7171, %v7171
        %v7173 = vld [vmem:[#allocation2] sm:$0xff]
        %v7174 = vld [vmem:[#allocation2 + $0x8] sm:$0xff]
        %v7175 = vld [vmem:[#allocation2 + $0x10] sm:$0xff]
        %v7176 = vld [vmem:[#allocation2 + $0x18] sm:$0xff]
        %v7177 = vld [vmem:[#allocation2 + $0x20] sm:$0xff]
        %v7178 = vld [vmem:[#allocation2 + $0x28] sm:$0xff]
        %v7179 = vld [vmem:[#allocation2 + $0x30] sm:$0xff]
        %v7180 = vld [vmem:[#allocation2 + $0x38] sm:$0xff]
        %v7181 = vpack.c.bf16 %v7173, %v7173
        %v7182 = vpack.c.bf16 %v7174, %v7174
        %v7183 = vpack.c.bf16 %v7175, %v7175
        %v7184 = vpack.c.bf16 %v7176, %v7176
        %v7185 = vpack.c.bf16 %v7177, %v7177
        %v7186 = vpack.c.bf16 %v7178, %v7178
        %v7187 = vpack.c.bf16 %v7179, %v7179
        %v7188 = vpack.c.bf16 %v7180, %v7180
        %v7191 = vunpack.c.l.s4 1966171168
        %v7192 = vunpack.c.0.s8 %v7191
        %v7193 = vlaneseq
        %v7194 = vshrl.u32 %v7193, 7
        %v7195 = vsub.s32 %v7192, %v7194
        %v7196 = vrot.slane %v7172, %v7195
        %v7197 = vcombine.high %v7196, %v7196
        %v7199 = vunpack.c.l.s4 1966171168
        %v7200 = vunpack.c.0.s8 %v7199
        %v7201 = vlaneseq
        %v7202 = vshrl.u32 %v7201, 7
        %v7203 = vsub.s32 %v7200, %v7202
        %v7204 = vrot.slane %v7196, %v7203
        %v7206 = vunpack.c.l.s4 1966171168
        %v7207 = vunpack.c.0.s8 %v7206
        %v7208 = vlaneseq
        %v7209 = vshrl.u32 %v7208, 7
        %v7210 = vsub.s32 %v7207, %v7209
        %v7211 = vrot.slane %v7197, %v7210
        %v7212 = vcombine.high %v7204, %v7204
        %v7213 = vcombine.high %v7211, %v7211
        %v7214 = vunpack.i.l.s16 %v7204
        %v7215 = vunpack.i.h.s16 %v7204
        %v7216 = vunpack.i.l.s16 %v7211
        %v7217 = vunpack.i.h.s16 %v7211
        %v7218 = vunpack.i.l.s16 %v7212
        %v7219 = vunpack.i.h.s16 %v7212
        %v7220 = vunpack.i.l.s16 %v7213
        %v7221 = vunpack.i.h.s16 %v7213
        %v7222 = vpack.i.b16 %v7214, %v7214
        %v7223 = vlaneseq
        %v7224 = vshrl.u32 %v7223, 7
        %v7225 = vsub.s32 0, %v7224
        %v7226 = vrot.slane %v7222, %v7225
        %7228 = vmatprep.subr.bf16.mxu0 0
        %7229 = vmatpush1.bf16.xpose.msra.mxu0 %v7181
        %7230 = vmatprep.subr.bf16.mxu0 0
        %7231 = vmatpush1.bf16.xpose.msra.mxu0 0
        %7232 = vmatprep.subr.bf16.mxu0 0
        %7233 = vmatpush1.bf16.xpose.msra.mxu0 0
        %7234 = vmatprep.subr.bf16.mxu0 0
        %7235 = vmatpush1.bf16.xpose.msra.mxu0 0
        %7236 = vmatprep.subr.bf16.mxu0 0
        %7237 = vmatpush1.bf16.xpose.msra.mxu0 0
        %7238 = vmatprep.subr.bf16.mxu0 0
        %7239 = vmatpush1.bf16.xpose.msra.mxu0 0
        %7240 = vmatprep.subr.bf16.mxu0 0
        %7241 = vmatpush1.bf16.xpose.msra.mxu0 0
        %7242 = vmatprep.subr.bf16.mxu0 0
        %7243 = vmatpush1.bf16.xpose.msra.mxu0 0
        %7244 = vmatprep.subr.bf16.mxu0 0
        %7245 = vmatpush1.bf16.xpose.msra.mxu0 0
        %7246 = vmatprep.subr.bf16.mxu0 0
        %7247 = vmatpush1.bf16.xpose.msra.mxu0 0
        %7248 = vmatprep.subr.bf16.mxu0 0
        %7249 = vmatpush1.bf16.xpose.msra.mxu0 0
        %7250 = vmatprep.subr.bf16.mxu0 0
        %7251 = vmatpush1.bf16.xpose.msra.mxu0 0
        %7252 = vmatprep.subr.bf16.mxu0 0
        %7253 = vmatpush1.bf16.xpose.msra.mxu0 0
        %7254 = vmatprep.subr.bf16.mxu0 0
        %7255 = vmatpush1.bf16.xpose.msra.mxu0 0
        %7256 = vmatprep.subr.bf16.mxu0 0
        %7257 = vmatpush1.bf16.xpose.msra.mxu0 0
        %7258 = vmatprep.subr.bf16.mxu0 0
        %7259 = vmatpush1.bf16.xpose.msra.mxu0 0
        %7260 = vmatprep.mubr.bf16.mxu0 0
        %7261 = vmatmul.mubr.bf16.gmra.mrb[0].mxu0 %v7226
        %v7262 = vpop.f32.mrb[0].mxu0
        %v7263 = vadd.f32 0.0, %v7262
        %v7264 = vpop.f32.mrb[0].mxu0
        %v7265 = vpop.f32.mrb[0].mxu0
        %v7266 = vpop.f32.mrb[0].mxu0
        %7267 = vdwg.mxu0
        %v7268 = vpack.i.b16 %v7215, %v7215
        %v7269 = vlaneseq
        %v7270 = vshrl.u32 %v7269, 7
        %v7271 = vsub.s32 0, %v7270
        %v7272 = vrot.slane %v7268, %v7271
        %7274 = vmatprep.subr.bf16.mxu0 0
        %7275 = vmatpush1.bf16.xpose.msra.mxu0 %v7182
        %7276 = vmatprep.subr.bf16.mxu0 0
        %7277 = vmatpush1.bf16.xpose.msra.mxu0 0
        %7278 = vmatprep.subr.bf16.mxu0 0
        %7279 = vmatpush1.bf16.xpose.msra.mxu0 0
        %7280 = vmatprep.subr.bf16.mxu0 0
        %7281 = vmatpush1.bf16.xpose.msra.mxu0 0
        %7282 = vmatprep.subr.bf16.mxu0 0
        %7283 = vmatpush1.bf16.xpose.msra.mxu0 0
        %7284 = vmatprep.subr.bf16.mxu0 0
        %7285 = vmatpush1.bf16.xpose.msra.mxu0 0
        %7286 = vmatprep.subr.bf16.mxu0 0
        %7287 = vmatpush1.bf16.xpose.msra.mxu0 0
        %7288 = vmatprep.subr.bf16.mxu0 0
        %7289 = vmatpush1.bf16.xpose.msra.mxu0 0
        %7290 = vmatprep.subr.bf16.mxu0 0
        %7291 = vmatpush1.bf16.xpose.msra.mxu0 0
        %7292 = vmatprep.subr.bf16.mxu0 0
        %7293 = vmatpush1.bf16.xpose.msra.mxu0 0
        %7294 = vmatprep.subr.bf16.mxu0 0
        %7295 = vmatpush1.bf16.xpose.msra.mxu0 0
        %7296 = vmatprep.subr.bf16.mxu0 0
        %7297 = vmatpush1.bf16.xpose.msra.mxu0 0
        %7298 = vmatprep.subr.bf16.mxu0 0
        %7299 = vmatpush1.bf16.xpose.msra.mxu0 0
        %7300 = vmatprep.subr.bf16.mxu0 0
        %7301 = vmatpush1.bf16.xpose.msra.mxu0 0
        %7302 = vmatprep.subr.bf16.mxu0 0
        %7303 = vmatpush1.bf16.xpose.msra.mxu0 0
        %7304 = vmatprep.subr.bf16.mxu0 0
        %7305 = vmatpush1.bf16.xpose.msra.mxu0 0
        %7306 = vmatprep.mubr.bf16.mxu0 0
        %7307 = vmatmul.mubr.bf16.gmra.mrb[0].mxu0 %v7272
        %v7308 = vpop.f32.mrb[0].mxu0
        %v7309 = vadd.f32 0.0, %v7308
        %v7310 = vpop.f32.mrb[0].mxu0
        %v7311 = vpop.f32.mrb[0].mxu0
        %v7312 = vpop.f32.mrb[0].mxu0
        %7313 = vdwg.mxu0
        %v7314 = vpack.i.b16 %v7216, %v7216
        %v7315 = vlaneseq
        %v7316 = vshrl.u32 %v7315, 7
        %v7317 = vsub.s32 0, %v7316
        %v7318 = vrot.slane %v7314, %v7317
        %7320 = vmatprep.subr.bf16.mxu0 0
        %7321 = vmatpush1.bf16.xpose.msra.mxu0 %v7183
        %7322 = vmatprep.subr.bf16.mxu0 0
        %7323 = vmatpush1.bf16.xpose.msra.mxu0 0
        %7324 = vmatprep.subr.bf16.mxu0 0
        %7325 = vmatpush1.bf16.xpose.msra.mxu0 0
        %7326 = vmatprep.subr.bf16.mxu0 0
        %7327 = vmatpush1.bf16.xpose.msra.mxu0 0
        %7328 = vmatprep.subr.bf16.mxu0 0
        %7329 = vmatpush1.bf16.xpose.msra.mxu0 0
        %7330 = vmatprep.subr.bf16.mxu0 0
        %7331 = vmatpush1.bf16.xpose.msra.mxu0 0
        %7332 = vmatprep.subr.bf16.mxu0 0
        %7333 = vmatpush1.bf16.xpose.msra.mxu0 0
        %7334 = vmatprep.subr.bf16.mxu0 0
        %7335 = vmatpush1.bf16.xpose.msra.mxu0 0
        %7336 = vmatprep.subr.bf16.mxu0 0
        %7337 = vmatpush1.bf16.xpose.msra.mxu0 0
        %7338 = vmatprep.subr.bf16.mxu0 0
        %7339 = vmatpush1.bf16.xpose.msra.mxu0 0
        %7340 = vmatprep.subr.bf16.mxu0 0
        %7341 = vmatpush1.bf16.xpose.msra.mxu0 0
        %7342 = vmatprep.subr.bf16.mxu0 0
        %7343 = vmatpush1.bf16.xpose.msra.mxu0 0
        %7344 = vmatprep.subr.bf16.mxu0 0
        %7345 = vmatpush1.bf16.xpose.msra.mxu0 0
        %7346 = vmatprep.subr.bf16.mxu0 0
        %7347 = vmatpush1.bf16.xpose.msra.mxu0 0
        %7348 = vmatprep.subr.bf16.mxu0 0
        %7349 = vmatpush1.bf16.xpose.msra.mxu0 0
        %7350 = vmatprep.subr.bf16.mxu0 0
        %7351 = vmatpush1.bf16.xpose.msra.mxu0 0
        %7352 = vmatprep.mubr.bf16.mxu0 0
        %7353 = vmatmul.mubr.bf16.gmra.mrb[0].mxu0 %v7318
        %v7354 = vpop.f32.mrb[0].mxu0
        %v7355 = vadd.f32 0.0, %v7354
        %v7356 = vpop.f32.mrb[0].mxu0
        %v7357 = vpop.f32.mrb[0].mxu0
        %v7358 = vpop.f32.mrb[0].mxu0
        %7359 = vdwg.mxu0
        %v7360 = vpack.i.b16 %v7217, %v7217
        %v7361 = vlaneseq
        %v7362 = vshrl.u32 %v7361, 7
        %v7363 = vsub.s32 0, %v7362
        %v7364 = vrot.slane %v7360, %v7363
        %7366 = vmatprep.subr.bf16.mxu0 0
        %7367 = vmatpush1.bf16.xpose.msra.mxu0 %v7184
        %7368 = vmatprep.subr.bf16.mxu0 0
        %7369 = vmatpush1.bf16.xpose.msra.mxu0 0
        %7370 = vmatprep.subr.bf16.mxu0 0
        %7371 = vmatpush1.bf16.xpose.msra.mxu0 0
        %7372 = vmatprep.subr.bf16.mxu0 0
        %7373 = vmatpush1.bf16.xpose.msra.mxu0 0
        %7374 = vmatprep.subr.bf16.mxu0 0
        %7375 = vmatpush1.bf16.xpose.msra.mxu0 0
        %7376 = vmatprep.subr.bf16.mxu0 0
        %7377 = vmatpush1.bf16.xpose.msra.mxu0 0
        %7378 = vmatprep.subr.bf16.mxu0 0
        %7379 = vmatpush1.bf16.xpose.msra.mxu0 0
        %7380 = vmatprep.subr.bf16.mxu0 0
        %7381 = vmatpush1.bf16.xpose.msra.mxu0 0
        %7382 = vmatprep.subr.bf16.mxu0 0
        %7383 = vmatpush1.bf16.xpose.msra.mxu0 0
        %7384 = vmatprep.subr.bf16.mxu0 0
        %7385 = vmatpush1.bf16.xpose.msra.mxu0 0
        %7386 = vmatprep.subr.bf16.mxu0 0
        %7387 = vmatpush1.bf16.xpose.msra.mxu0 0
        %7388 = vmatprep.subr.bf16.mxu0 0
        %7389 = vmatpush1.bf16.xpose.msra.mxu0 0
        %7390 = vmatprep.subr.bf16.mxu0 0
        %7391 = vmatpush1.bf16.xpose.msra.mxu0 0
        %7392 = vmatprep.subr.bf16.mxu0 0
        %7393 = vmatpush1.bf16.xpose.msra.mxu0 0
        %7394 = vmatprep.subr.bf16.mxu0 0
        %7395 = vmatpush1.bf16.xpose.msra.mxu0 0
        %7396 = vmatprep.subr.bf16.mxu0 0
        %7397 = vmatpush1.bf16.xpose.msra.mxu0 0
        %7398 = vmatprep.mubr.bf16.mxu0 0
        %7399 = vmatmul.mubr.bf16.gmra.mrb[0].mxu0 %v7364
        %v7400 = vpop.f32.mrb[0].mxu0
        %v7401 = vadd.f32 0.0, %v7400
        %v7402 = vpop.f32.mrb[0].mxu0
        %v7403 = vpop.f32.mrb[0].mxu0
        %v7404 = vpop.f32.mrb[0].mxu0
        %7405 = vdwg.mxu0
        %v7406 = vpack.i.b16 %v7218, %v7218
        %v7407 = vlaneseq
        %v7408 = vshrl.u32 %v7407, 7
        %v7409 = vsub.s32 0, %v7408
        %v7410 = vrot.slane %v7406, %v7409
        %7412 = vmatprep.subr.bf16.mxu0 0
        %7413 = vmatpush1.bf16.xpose.msra.mxu0 %v7185
        %7414 = vmatprep.subr.bf16.mxu0 0
        %7415 = vmatpush1.bf16.xpose.msra.mxu0 0
        %7416 = vmatprep.subr.bf16.mxu0 0
        %7417 = vmatpush1.bf16.xpose.msra.mxu0 0
        %7418 = vmatprep.subr.bf16.mxu0 0
        %7419 = vmatpush1.bf16.xpose.msra.mxu0 0
        %7420 = vmatprep.subr.bf16.mxu0 0
        %7421 = vmatpush1.bf16.xpose.msra.mxu0 0
        %7422 = vmatprep.subr.bf16.mxu0 0
        %7423 = vmatpush1.bf16.xpose.msra.mxu0 0
        %7424 = vmatprep.subr.bf16.mxu0 0
        %7425 = vmatpush1.bf16.xpose.msra.mxu0 0
        %7426 = vmatprep.subr.bf16.mxu0 0
        %7427 = vmatpush1.bf16.xpose.msra.mxu0 0
        %7428 = vmatprep.subr.bf16.mxu0 0
        %7429 = vmatpush1.bf16.xpose.msra.mxu0 0
        %7430 = vmatprep.subr.bf16.mxu0 0
        %7431 = vmatpush1.bf16.xpose.msra.mxu0 0
        %7432 = vmatprep.subr.bf16.mxu0 0
        %7433 = vmatpush1.bf16.xpose.msra.mxu0 0
        %7434 = vmatprep.subr.bf16.mxu0 0
        %7435 = vmatpush1.bf16.xpose.msra.mxu0 0
        %7436 = vmatprep.subr.bf16.mxu0 0
        %7437 = vmatpush1.bf16.xpose.msra.mxu0 0
        %7438 = vmatprep.subr.bf16.mxu0 0
        %7439 = vmatpush1.bf16.xpose.msra.mxu0 0
        %7440 = vmatprep.subr.bf16.mxu0 0
        %7441 = vmatpush1.bf16.xpose.msra.mxu0 0
        %7442 = vmatprep.subr.bf16.mxu0 0
        %7443 = vmatpush1.bf16.xpose.msra.mxu0 0
        %7444 = vmatprep.mubr.bf16.mxu0 0
        %7445 = vmatmul.mubr.bf16.gmra.mrb[0].mxu0 %v7410
        %v7446 = vpop.f32.mrb[0].mxu0
        %v7447 = vadd.f32 0.0, %v7446
        %v7448 = vpop.f32.mrb[0].mxu0
        %v7449 = vpop.f32.mrb[0].mxu0
        %v7450 = vpop.f32.mrb[0].mxu0
        %7451 = vdwg.mxu0
        %v7452 = vpack.i.b16 %v7219, %v7219
        %v7453 = vlaneseq
        %v7454 = vshrl.u32 %v7453, 7
        %v7455 = vsub.s32 0, %v7454
        %v7456 = vrot.slane %v7452, %v7455
        %7458 = vmatprep.subr.bf16.mxu0 0
        %7459 = vmatpush1.bf16.xpose.msra.mxu0 %v7186
        %7460 = vmatprep.subr.bf16.mxu0 0
        %7461 = vmatpush1.bf16.xpose.msra.mxu0 0
        %7462 = vmatprep.subr.bf16.mxu0 0
        %7463 = vmatpush1.bf16.xpose.msra.mxu0 0
        %7464 = vmatprep.subr.bf16.mxu0 0
        %7465 = vmatpush1.bf16.xpose.msra.mxu0 0
        %7466 = vmatprep.subr.bf16.mxu0 0
        %7467 = vmatpush1.bf16.xpose.msra.mxu0 0
        %7468 = vmatprep.subr.bf16.mxu0 0
        %7469 = vmatpush1.bf16.xpose.msra.mxu0 0
        %7470 = vmatprep.subr.bf16.mxu0 0
        %7471 = vmatpush1.bf16.xpose.msra.mxu0 0
        %7472 = vmatprep.subr.bf16.mxu0 0
        %7473 = vmatpush1.bf16.xpose.msra.mxu0 0
        %7474 = vmatprep.subr.bf16.mxu0 0
        %7475 = vmatpush1.bf16.xpose.msra.mxu0 0
        %7476 = vmatprep.subr.bf16.mxu0 0
        %7477 = vmatpush1.bf16.xpose.msra.mxu0 0
        %7478 = vmatprep.subr.bf16.mxu0 0
        %7479 = vmatpush1.bf16.xpose.msra.mxu0 0
        %7480 = vmatprep.subr.bf16.mxu0 0
        %7481 = vmatpush1.bf16.xpose.msra.mxu0 0
        %7482 = vmatprep.subr.bf16.mxu0 0
        %7483 = vmatpush1.bf16.xpose.msra.mxu0 0
        %7484 = vmatprep.subr.bf16.mxu0 0
        %7485 = vmatpush1.bf16.xpose.msra.mxu0 0
        %7486 = vmatprep.subr.bf16.mxu0 0
        %7487 = vmatpush1.bf16.xpose.msra.mxu0 0
        %7488 = vmatprep.subr.bf16.mxu0 0
        %7489 = vmatpush1.bf16.xpose.msra.mxu0 0
        %7490 = vmatprep.mubr.bf16.mxu0 0
        %7491 = vmatmul.mubr.bf16.gmra.mrb[0].mxu0 %v7456
        %v7492 = vpop.f32.mrb[0].mxu0
        %v7493 = vadd.f32 0.0, %v7492
        %v7494 = vpop.f32.mrb[0].mxu0
        %v7495 = vpop.f32.mrb[0].mxu0
        %v7496 = vpop.f32.mrb[0].mxu0
        %7497 = vdwg.mxu0
        %v7498 = vpack.i.b16 %v7220, %v7220
        %v7499 = vlaneseq
        %v7500 = vshrl.u32 %v7499, 7
        %v7501 = vsub.s32 0, %v7500
        %v7502 = vrot.slane %v7498, %v7501
        %7504 = vmatprep.subr.bf16.mxu0 0
        %7505 = vmatpush1.bf16.xpose.msra.mxu0 %v7187
        %7506 = vmatprep.subr.bf16.mxu0 0
        %7507 = vmatpush1.bf16.xpose.msra.mxu0 0
        %7508 = vmatprep.subr.bf16.mxu0 0
        %7509 = vmatpush1.bf16.xpose.msra.mxu0 0
        %7510 = vmatprep.subr.bf16.mxu0 0
        %7511 = vmatpush1.bf16.xpose.msra.mxu0 0
        %7512 = vmatprep.subr.bf16.mxu0 0
        %7513 = vmatpush1.bf16.xpose.msra.mxu0 0
        %7514 = vmatprep.subr.bf16.mxu0 0
        %7515 = vmatpush1.bf16.xpose.msra.mxu0 0
        %7516 = vmatprep.subr.bf16.mxu0 0
        %7517 = vmatpush1.bf16.xpose.msra.mxu0 0
        %7518 = vmatprep.subr.bf16.mxu0 0
        %7519 = vmatpush1.bf16.xpose.msra.mxu0 0
        %7520 = vmatprep.subr.bf16.mxu0 0
        %7521 = vmatpush1.bf16.xpose.msra.mxu0 0
        %7522 = vmatprep.subr.bf16.mxu0 0
        %7523 = vmatpush1.bf16.xpose.msra.mxu0 0
        %7524 = vmatprep.subr.bf16.mxu0 0
        %7525 = vmatpush1.bf16.xpose.msra.mxu0 0
        %7526 = vmatprep.subr.bf16.mxu0 0
        %7527 = vmatpush1.bf16.xpose.msra.mxu0 0
        %7528 = vmatprep.subr.bf16.mxu0 0
        %7529 = vmatpush1.bf16.xpose.msra.mxu0 0
        %7530 = vmatprep.subr.bf16.mxu0 0
        %7531 = vmatpush1.bf16.xpose.msra.mxu0 0
        %7532 = vmatprep.subr.bf16.mxu0 0
        %7533 = vmatpush1.bf16.xpose.msra.mxu0 0
        %7534 = vmatprep.subr.bf16.mxu0 0
        %7535 = vmatpush1.bf16.xpose.msra.mxu0 0
        %7536 = vmatprep.mubr.bf16.mxu0 0
        %7537 = vmatmul.mubr.bf16.gmra.mrb[0].mxu0 %v7502
        %v7538 = vpop.f32.mrb[0].mxu0
        %v7539 = vadd.f32 0.0, %v7538
        %v7540 = vpop.f32.mrb[0].mxu0
        %v7541 = vpop.f32.mrb[0].mxu0
        %v7542 = vpop.f32.mrb[0].mxu0
        %7543 = vdwg.mxu0
        %v7544 = vpack.i.b16 %v7221, %v7221
        %v7545 = vlaneseq
        %v7546 = vshrl.u32 %v7545, 7
        %v7547 = vsub.s32 0, %v7546
        %v7548 = vrot.slane %v7544, %v7547
        %7550 = vmatprep.subr.bf16.mxu0 0
        %7551 = vmatpush1.bf16.xpose.msra.mxu0 %v7188
        %7552 = vmatprep.subr.bf16.mxu0 0
        %7553 = vmatpush1.bf16.xpose.msra.mxu0 0
        %7554 = vmatprep.subr.bf16.mxu0 0
        %7555 = vmatpush1.bf16.xpose.msra.mxu0 0
        %7556 = vmatprep.subr.bf16.mxu0 0
        %7557 = vmatpush1.bf16.xpose.msra.mxu0 0
        %7558 = vmatprep.subr.bf16.mxu0 0
        %7559 = vmatpush1.bf16.xpose.msra.mxu0 0
        %7560 = vmatprep.subr.bf16.mxu0 0
        %7561 = vmatpush1.bf16.xpose.msra.mxu0 0
        %7562 = vmatprep.subr.bf16.mxu0 0
        %7563 = vmatpush1.bf16.xpose.msra.mxu0 0
        %7564 = vmatprep.subr.bf16.mxu0 0
        %7565 = vmatpush1.bf16.xpose.msra.mxu0 0
        %7566 = vmatprep.subr.bf16.mxu0 0
        %7567 = vmatpush1.bf16.xpose.msra.mxu0 0
        %7568 = vmatprep.subr.bf16.mxu0 0
        %7569 = vmatpush1.bf16.xpose.msra.mxu0 0
        %7570 = vmatprep.subr.bf16.mxu0 0
        %7571 = vmatpush1.bf16.xpose.msra.mxu0 0
        %7572 = vmatprep.subr.bf16.mxu0 0
        %7573 = vmatpush1.bf16.xpose.msra.mxu0 0
        %7574 = vmatprep.subr.bf16.mxu0 0
        %7575 = vmatpush1.bf16.xpose.msra.mxu0 0
        %7576 = vmatprep.subr.bf16.mxu0 0
        %7577 = vmatpush1.bf16.xpose.msra.mxu0 0
        %7578 = vmatprep.subr.bf16.mxu0 0
        %7579 = vmatpush1.bf16.xpose.msra.mxu0 0
        %7580 = vmatprep.subr.bf16.mxu0 0
        %7581 = vmatpush1.bf16.xpose.msra.mxu0 0
        %7582 = vmatprep.mubr.bf16.mxu0 0
        %7583 = vmatmul.mubr.bf16.gmra.mrb[0].mxu0 %v7548
        %v7584 = vpop.f32.mrb[0].mxu0
        %v7585 = vadd.f32 0.0, %v7584
        %v7586 = vpop.f32.mrb[0].mxu0
        %v7587 = vpop.f32.mrb[0].mxu0
        %v7588 = vpop.f32.mrb[0].mxu0
        %7589 = vdwg.mxu0
        %v7598 = vrot.slane %v7309, 7
        %vm7599 = vcmask 1041409
        %v7600 = vsel %vm7599, %v7598, %v7263
        %v7601 = vrot.slane %v7355, 6
        %vm7602 = vcmask 1042434
        %v7603 = vsel %vm7602, %v7601, %v7600
        %v7604 = vrot.slane %v7401, 5
        %vm7605 = vcmask 1043459
        %v7606 = vsel %vm7605, %v7604, %v7603
        %v7607 = vrot.slane %v7447, 4
        %vm7608 = vcmask 1044484
        %v7609 = vsel %vm7608, %v7607, %v7606
        %v7610 = vrot.slane %v7493, 3
        %vm7611 = vcmask 1045509
        %v7612 = vsel %vm7611, %v7610, %v7609
        %v7613 = vrot.slane %v7539, 2
        %vm7614 = vcmask 1046534
        %v7615 = vsel %vm7614, %v7613, %v7612
        %v7616 = vrot.slane %v7585, 1
        %vm7617 = vcmask 1047559
        %v7618 = vsel %vm7617, %v7616, %v7615
        %vm7620 = vcmask 64512
        %v7621 = vsel %vm7620, %v7618, -inf
        %7622 = vmax.xlane.f32.xlu0 %v7621
        %v7623 = vpop.xlane.xlu0 %7622
        %v7625 = vrot.slane %v7623, 1
        %v7626 = vrot.slane %v7623, 2
        %v7627 = vrot.slane %v7623, 3
        %v7628 = vrot.slane %v7623, 4
        %v7629 = vrot.slane %v7623, 5
        %v7630 = vrot.slane %v7623, 6
        %v7631 = vrot.slane %v7623, 7
        %v7640 = vsub.f32 %v7263, %v7623
        %v7641 = vsub.f32 %v7309, %v7625
        %v7642 = vsub.f32 %v7355, %v7626
        %v7643 = vsub.f32 %v7401, %v7627
        %v7644 = vsub.f32 %v7447, %v7628
        %v7645 = vsub.f32 %v7493, %v7629
        %v7646 = vsub.f32 %v7539, %v7630
        %v7647 = vsub.f32 %v7585, %v7631
        %v7648 = vmul.f32 %v7640, 1.442695
        %v7649 = vpow.pop %v7648
        %v7650 = vmul.f32 %v7641, 1.442695
        %v7651 = vpow.pop %v7650
        %v7652 = vmul.f32 %v7642, 1.442695
        %v7653 = vpow.pop %v7652
        %v7654 = vmul.f32 %v7643, 1.442695
        %v7655 = vpow.pop %v7654
        %v7656 = vmul.f32 %v7644, 1.442695
        %v7657 = vpow.pop %v7656
        %v7658 = vmul.f32 %v7645, 1.442695
        %v7659 = vpow.pop %v7658
        %v7660 = vmul.f32 %v7646, 1.442695
        %v7661 = vpow.pop %v7660
        %v7662 = vmul.f32 %v7647, 1.442695
        %v7663 = vpow.pop %v7662
        %v7672 = vrot.slane %v7651, 7
        %v7673 = vsel %vm7599, %v7672, %v7649
        %v7674 = vrot.slane %v7653, 6
        %v7675 = vsel %vm7602, %v7674, %v7673
        %v7676 = vrot.slane %v7655, 5
        %v7677 = vsel %vm7605, %v7676, %v7675
        %v7678 = vrot.slane %v7657, 4
        %v7679 = vsel %vm7608, %v7678, %v7677
        %v7680 = vrot.slane %v7659, 3
        %v7681 = vsel %vm7611, %v7680, %v7679
        %v7682 = vrot.slane %v7661, 2
        %v7683 = vsel %vm7614, %v7682, %v7681
        %v7684 = vrot.slane %v7663, 1
        %v7685 = vsel %vm7617, %v7684, %v7683
        %v7687 = vsel %vm7620, %v7685, 0.0
        %7688 = vadd.xlane.f32.xlu0 %v7687
        %v7689 = vpop.xlane.xlu0 %7688
        %v7690 = vrcp.pop %v7689
        %v7692 = vrot.slane %v7690, 1
        %v7693 = vrot.slane %v7690, 2
        %v7694 = vrot.slane %v7690, 3
        %v7695 = vrot.slane %v7690, 4
        %v7696 = vrot.slane %v7690, 5
        %v7697 = vrot.slane %v7690, 6
        %v7698 = vrot.slane %v7690, 7
        %v7707 = vmul.f32 %v7649, %v7690
        %v7708 = vmul.f32 %v7651, %v7692
        %v7709 = vmul.f32 %v7653, %v7693
        %v7710 = vmul.f32 %v7655, %v7694
        %v7711 = vmul.f32 %v7657, %v7695
        %v7712 = vmul.f32 %v7659, %v7696
        %v7713 = vmul.f32 %v7661, %v7697
        %v7714 = vmul.f32 %v7663, %v7698
        %v7715 = vpack.c.bf16 %v7707, %v7707
        %v7716 = vpack.c.bf16 %v7708, %v7708
        %v7717 = vpack.c.bf16 %v7709, %v7709
        %v7718 = vpack.c.bf16 %v7710, %v7710
        %v7719 = vpack.c.bf16 %v7711, %v7711
        %v7720 = vpack.c.bf16 %v7712, %v7712
        %v7721 = vpack.c.bf16 %v7713, %v7713
        %v7722 = vpack.c.bf16 %v7714, %v7714
        %v7724 = vsel %vm7620, %v7715, 0
        %vm7726 = vcmask 1043456
        %v7728 = vsel %vm7726, %v7181, 0
        %7730 = vmatprep.subr.bf16.mxu0 0
        %7731 = vmatpush1.bf16.msra.mxu0 %v7728
        %7732 = vmatprep.subr.bf16.mxu0 0
        %7733 = vmatpush1.bf16.msra.mxu0 0
        %7734 = vmatprep.subr.bf16.mxu0 0
        %7735 = vmatpush1.bf16.msra.mxu0 0
        %7736 = vmatprep.subr.bf16.mxu0 0
        %7737 = vmatpush1.bf16.msra.mxu0 0
        %7738 = vmatprep.subr.bf16.mxu0 0
        %7739 = vmatpush1.bf16.msra.mxu0 0
        %7740 = vmatprep.subr.bf16.mxu0 0
        %7741 = vmatpush1.bf16.msra.mxu0 0
        %7742 = vmatprep.subr.bf16.mxu0 0
        %7743 = vmatpush1.bf16.msra.mxu0 0
        %7744 = vmatprep.subr.bf16.mxu0 0
        %7745 = vmatpush1.bf16.msra.mxu0 0
        %7746 = vmatprep.subr.bf16.mxu0 0
        %7747 = vmatpush1.bf16.msra.mxu0 0
        %7748 = vmatprep.subr.bf16.mxu0 0
        %7749 = vmatpush1.bf16.msra.mxu0 0
        %7750 = vmatprep.subr.bf16.mxu0 0
        %7751 = vmatpush1.bf16.msra.mxu0 0
        %7752 = vmatprep.subr.bf16.mxu0 0
        %7753 = vmatpush1.bf16.msra.mxu0 0
        %7754 = vmatprep.subr.bf16.mxu0 0
        %7755 = vmatpush1.bf16.msra.mxu0 0
        %7756 = vmatprep.subr.bf16.mxu0 0
        %7757 = vmatpush1.bf16.msra.mxu0 0
        %7758 = vmatprep.subr.bf16.mxu0 0
        %7759 = vmatpush1.bf16.msra.mxu0 0
        %7760 = vmatprep.subr.bf16.mxu0 0
        %7761 = vmatpush1.bf16.msra.mxu0 0
        %7762 = vmatprep.mubr.bf16.mxu0 0
        %7763 = vmatmul.mubr.bf16.gmra.mrb[0].mxu0 %v7724
        %v7764 = vpop.f32.mrb[0].mxu0
        %v7765 = vadd.f32 0.0, %v7764
        %v7766 = vpop.f32.mrb[0].mxu0
        %v7767 = vpop.f32.mrb[0].mxu0
        %v7768 = vpop.f32.mrb[0].mxu0
        %7769 = vdwg.mxu0
        %v7771 = vsel %vm7620, %v7716, 0
        %v7774 = vsel %vm7726, %v7182, 0
        %7776 = vmatprep.subr.bf16.mxu0 0
        %7777 = vmatpush1.bf16.msra.mxu0 %v7774
        %7778 = vmatprep.subr.bf16.mxu0 0
        %7779 = vmatpush1.bf16.msra.mxu0 0
        %7780 = vmatprep.subr.bf16.mxu0 0
        %7781 = vmatpush1.bf16.msra.mxu0 0
        %7782 = vmatprep.subr.bf16.mxu0 0
        %7783 = vmatpush1.bf16.msra.mxu0 0
        %7784 = vmatprep.subr.bf16.mxu0 0
        %7785 = vmatpush1.bf16.msra.mxu0 0
        %7786 = vmatprep.subr.bf16.mxu0 0
        %7787 = vmatpush1.bf16.msra.mxu0 0
        %7788 = vmatprep.subr.bf16.mxu0 0
        %7789 = vmatpush1.bf16.msra.mxu0 0
        %7790 = vmatprep.subr.bf16.mxu0 0
        %7791 = vmatpush1.bf16.msra.mxu0 0
        %7792 = vmatprep.subr.bf16.mxu0 0
        %7793 = vmatpush1.bf16.msra.mxu0 0
        %7794 = vmatprep.subr.bf16.mxu0 0
        %7795 = vmatpush1.bf16.msra.mxu0 0
        %7796 = vmatprep.subr.bf16.mxu0 0
        %7797 = vmatpush1.bf16.msra.mxu0 0
        %7798 = vmatprep.subr.bf16.mxu0 0
        %7799 = vmatpush1.bf16.msra.mxu0 0
        %7800 = vmatprep.subr.bf16.mxu0 0
        %7801 = vmatpush1.bf16.msra.mxu0 0
        %7802 = vmatprep.subr.bf16.mxu0 0
        %7803 = vmatpush1.bf16.msra.mxu0 0
        %7804 = vmatprep.subr.bf16.mxu0 0
        %7805 = vmatpush1.bf16.msra.mxu0 0
        %7806 = vmatprep.subr.bf16.mxu0 0
        %7807 = vmatpush1.bf16.msra.mxu0 0
        %7808 = vmatprep.mubr.bf16.mxu0 0
        %7809 = vmatmul.mubr.bf16.gmra.mrb[0].mxu0 %v7771
        %v7810 = vpop.f32.mrb[0].mxu0
        %v7811 = vadd.f32 0.0, %v7810
        %v7812 = vpop.f32.mrb[0].mxu0
        %v7813 = vpop.f32.mrb[0].mxu0
        %v7814 = vpop.f32.mrb[0].mxu0
        %7815 = vdwg.mxu0
        %v7817 = vsel %vm7620, %v7717, 0
        %v7820 = vsel %vm7726, %v7183, 0
        %7822 = vmatprep.subr.bf16.mxu0 0
        %7823 = vmatpush1.bf16.msra.mxu0 %v7820
        %7824 = vmatprep.subr.bf16.mxu0 0
        %7825 = vmatpush1.bf16.msra.mxu0 0
        %7826 = vmatprep.subr.bf16.mxu0 0
        %7827 = vmatpush1.bf16.msra.mxu0 0
        %7828 = vmatprep.subr.bf16.mxu0 0
        %7829 = vmatpush1.bf16.msra.mxu0 0
        %7830 = vmatprep.subr.bf16.mxu0 0
        %7831 = vmatpush1.bf16.msra.mxu0 0
        %7832 = vmatprep.subr.bf16.mxu0 0
        %7833 = vmatpush1.bf16.msra.mxu0 0
        %7834 = vmatprep.subr.bf16.mxu0 0
        %7835 = vmatpush1.bf16.msra.mxu0 0
        %7836 = vmatprep.subr.bf16.mxu0 0
        %7837 = vmatpush1.bf16.msra.mxu0 0
        %7838 = vmatprep.subr.bf16.mxu0 0
        %7839 = vmatpush1.bf16.msra.mxu0 0
        %7840 = vmatprep.subr.bf16.mxu0 0
        %7841 = vmatpush1.bf16.msra.mxu0 0
        %7842 = vmatprep.subr.bf16.mxu0 0
        %7843 = vmatpush1.bf16.msra.mxu0 0
        %7844 = vmatprep.subr.bf16.mxu0 0
        %7845 = vmatpush1.bf16.msra.mxu0 0
        %7846 = vmatprep.subr.bf16.mxu0 0
        %7847 = vmatpush1.bf16.msra.mxu0 0
        %7848 = vmatprep.subr.bf16.mxu0 0
        %7849 = vmatpush1.bf16.msra.mxu0 0
        %7850 = vmatprep.subr.bf16.mxu0 0
        %7851 = vmatpush1.bf16.msra.mxu0 0
        %7852 = vmatprep.subr.bf16.mxu0 0
        %7853 = vmatpush1.bf16.msra.mxu0 0
        %7854 = vmatprep.mubr.bf16.mxu0 0
        %7855 = vmatmul.mubr.bf16.gmra.mrb[0].mxu0 %v7817
        %v7856 = vpop.f32.mrb[0].mxu0
        %v7857 = vadd.f32 0.0, %v7856
        %v7858 = vpop.f32.mrb[0].mxu0
        %v7859 = vpop.f32.mrb[0].mxu0
        %v7860 = vpop.f32.mrb[0].mxu0
        %7861 = vdwg.mxu0
        %v7863 = vsel %vm7620, %v7718, 0
        %v7866 = vsel %vm7726, %v7184, 0
        %7868 = vmatprep.subr.bf16.mxu0 0
        %7869 = vmatpush1.bf16.msra.mxu0 %v7866
        %7870 = vmatprep.subr.bf16.mxu0 0
        %7871 = vmatpush1.bf16.msra.mxu0 0
        %7872 = vmatprep.subr.bf16.mxu0 0
        %7873 = vmatpush1.bf16.msra.mxu0 0
        %7874 = vmatprep.subr.bf16.mxu0 0
        %7875 = vmatpush1.bf16.msra.mxu0 0
        %7876 = vmatprep.subr.bf16.mxu0 0
        %7877 = vmatpush1.bf16.msra.mxu0 0
        %7878 = vmatprep.subr.bf16.mxu0 0
        %7879 = vmatpush1.bf16.msra.mxu0 0
        %7880 = vmatprep.subr.bf16.mxu0 0
        %7881 = vmatpush1.bf16.msra.mxu0 0
        %7882 = vmatprep.subr.bf16.mxu0 0
        %7883 = vmatpush1.bf16.msra.mxu0 0
        %7884 = vmatprep.subr.bf16.mxu0 0
        %7885 = vmatpush1.bf16.msra.mxu0 0
        %7886 = vmatprep.subr.bf16.mxu0 0
        %7887 = vmatpush1.bf16.msra.mxu0 0
        %7888 = vmatprep.subr.bf16.mxu0 0
        %7889 = vmatpush1.bf16.msra.mxu0 0
        %7890 = vmatprep.subr.bf16.mxu0 0
        %7891 = vmatpush1.bf16.msra.mxu0 0
        %7892 = vmatprep.subr.bf16.mxu0 0
        %7893 = vmatpush1.bf16.msra.mxu0 0
        %7894 = vmatprep.subr.bf16.mxu0 0
        %7895 = vmatpush1.bf16.msra.mxu0 0
        %7896 = vmatprep.subr.bf16.mxu0 0
        %7897 = vmatpush1.bf16.msra.mxu0 0
        %7898 = vmatprep.subr.bf16.mxu0 0
        %7899 = vmatpush1.bf16.msra.mxu0 0
        %7900 = vmatprep.mubr.bf16.mxu0 0
        %7901 = vmatmul.mubr.bf16.gmra.mrb[0].mxu0 %v7863
        %v7902 = vpop.f32.mrb[0].mxu0
        %v7903 = vadd.f32 0.0, %v7902
        %v7904 = vpop.f32.mrb[0].mxu0
        %v7905 = vpop.f32.mrb[0].mxu0
        %v7906 = vpop.f32.mrb[0].mxu0
        %7907 = vdwg.mxu0
        %v7909 = vsel %vm7620, %v7719, 0
        %v7912 = vsel %vm7726, %v7185, 0
        %7914 = vmatprep.subr.bf16.mxu0 0
        %7915 = vmatpush1.bf16.msra.mxu0 %v7912
        %7916 = vmatprep.subr.bf16.mxu0 0
        %7917 = vmatpush1.bf16.msra.mxu0 0
        %7918 = vmatprep.subr.bf16.mxu0 0
        %7919 = vmatpush1.bf16.msra.mxu0 0
        %7920 = vmatprep.subr.bf16.mxu0 0
        %7921 = vmatpush1.bf16.msra.mxu0 0
        %7922 = vmatprep.subr.bf16.mxu0 0
        %7923 = vmatpush1.bf16.msra.mxu0 0
        %7924 = vmatprep.subr.bf16.mxu0 0
        %7925 = vmatpush1.bf16.msra.mxu0 0
        %7926 = vmatprep.subr.bf16.mxu0 0
        %7927 = vmatpush1.bf16.msra.mxu0 0
        %7928 = vmatprep.subr.bf16.mxu0 0
        %7929 = vmatpush1.bf16.msra.mxu0 0
        %7930 = vmatprep.subr.bf16.mxu0 0
        %7931 = vmatpush1.bf16.msra.mxu0 0
        %7932 = vmatprep.subr.bf16.mxu0 0
        %7933 = vmatpush1.bf16.msra.mxu0 0
        %7934 = vmatprep.subr.bf16.mxu0 0
        %7935 = vmatpush1.bf16.msra.mxu0 0
        %7936 = vmatprep.subr.bf16.mxu0 0
        %7937 = vmatpush1.bf16.msra.mxu0 0
        %7938 = vmatprep.subr.bf16.mxu0 0
        %7939 = vmatpush1.bf16.msra.mxu0 0
        %7940 = vmatprep.subr.bf16.mxu0 0
        %7941 = vmatpush1.bf16.msra.mxu0 0
        %7942 = vmatprep.subr.bf16.mxu0 0
        %7943 = vmatpush1.bf16.msra.mxu0 0
        %7944 = vmatprep.subr.bf16.mxu0 0
        %7945 = vmatpush1.bf16.msra.mxu0 0
        %7946 = vmatprep.mubr.bf16.mxu0 0
        %7947 = vmatmul.mubr.bf16.gmra.mrb[0].mxu0 %v7909
        %v7948 = vpop.f32.mrb[0].mxu0
        %v7949 = vadd.f32 0.0, %v7948
        %v7950 = vpop.f32.mrb[0].mxu0
        %v7951 = vpop.f32.mrb[0].mxu0
        %v7952 = vpop.f32.mrb[0].mxu0
        %7953 = vdwg.mxu0
        %v7955 = vsel %vm7620, %v7720, 0
        %v7958 = vsel %vm7726, %v7186, 0
        %7960 = vmatprep.subr.bf16.mxu0 0
        %7961 = vmatpush1.bf16.msra.mxu0 %v7958
        %7962 = vmatprep.subr.bf16.mxu0 0
        %7963 = vmatpush1.bf16.msra.mxu0 0
        %7964 = vmatprep.subr.bf16.mxu0 0
        %7965 = vmatpush1.bf16.msra.mxu0 0
        %7966 = vmatprep.subr.bf16.mxu0 0
        %7967 = vmatpush1.bf16.msra.mxu0 0
        %7968 = vmatprep.subr.bf16.mxu0 0
        %7969 = vmatpush1.bf16.msra.mxu0 0
        %7970 = vmatprep.subr.bf16.mxu0 0
        %7971 = vmatpush1.bf16.msra.mxu0 0
        %7972 = vmatprep.subr.bf16.mxu0 0
        %7973 = vmatpush1.bf16.msra.mxu0 0
        %7974 = vmatprep.subr.bf16.mxu0 0
        %7975 = vmatpush1.bf16.msra.mxu0 0
        %7976 = vmatprep.subr.bf16.mxu0 0
        %7977 = vmatpush1.bf16.msra.mxu0 0
        %7978 = vmatprep.subr.bf16.mxu0 0
        %7979 = vmatpush1.bf16.msra.mxu0 0
        %7980 = vmatprep.subr.bf16.mxu0 0
        %7981 = vmatpush1.bf16.msra.mxu0 0
        %7982 = vmatprep.subr.bf16.mxu0 0
        %7983 = vmatpush1.bf16.msra.mxu0 0
        %7984 = vmatprep.subr.bf16.mxu0 0
        %7985 = vmatpush1.bf16.msra.mxu0 0
        %7986 = vmatprep.subr.bf16.mxu0 0
        %7987 = vmatpush1.bf16.msra.mxu0 0
        %7988 = vmatprep.subr.bf16.mxu0 0
        %7989 = vmatpush1.bf16.msra.mxu0 0
        %7990 = vmatprep.subr.bf16.mxu0 0
        %7991 = vmatpush1.bf16.msra.mxu0 0
        %7992 = vmatprep.mubr.bf16.mxu0 0
        %7993 = vmatmul.mubr.bf16.gmra.mrb[0].mxu0 %v7955
        %v7994 = vpop.f32.mrb[0].mxu0
        %v7995 = vadd.f32 0.0, %v7994
        %v7996 = vpop.f32.mrb[0].mxu0
        %v7997 = vpop.f32.mrb[0].mxu0
        %v7998 = vpop.f32.mrb[0].mxu0
        %7999 = vdwg.mxu0
        %v8001 = vsel %vm7620, %v7721, 0
        %v8004 = vsel %vm7726, %v7187, 0
        %8006 = vmatprep.subr.bf16.mxu0 0
        %8007 = vmatpush1.bf16.msra.mxu0 %v8004
        %8008 = vmatprep.subr.bf16.mxu0 0
        %8009 = vmatpush1.bf16.msra.mxu0 0
        %8010 = vmatprep.subr.bf16.mxu0 0
        %8011 = vmatpush1.bf16.msra.mxu0 0
        %8012 = vmatprep.subr.bf16.mxu0 0
        %8013 = vmatpush1.bf16.msra.mxu0 0
        %8014 = vmatprep.subr.bf16.mxu0 0
        %8015 = vmatpush1.bf16.msra.mxu0 0
        %8016 = vmatprep.subr.bf16.mxu0 0
        %8017 = vmatpush1.bf16.msra.mxu0 0
        %8018 = vmatprep.subr.bf16.mxu0 0
        %8019 = vmatpush1.bf16.msra.mxu0 0
        %8020 = vmatprep.subr.bf16.mxu0 0
        %8021 = vmatpush1.bf16.msra.mxu0 0
        %8022 = vmatprep.subr.bf16.mxu0 0
        %8023 = vmatpush1.bf16.msra.mxu0 0
        %8024 = vmatprep.subr.bf16.mxu0 0
        %8025 = vmatpush1.bf16.msra.mxu0 0
        %8026 = vmatprep.subr.bf16.mxu0 0
        %8027 = vmatpush1.bf16.msra.mxu0 0
        %8028 = vmatprep.subr.bf16.mxu0 0
        %8029 = vmatpush1.bf16.msra.mxu0 0
        %8030 = vmatprep.subr.bf16.mxu0 0
        %8031 = vmatpush1.bf16.msra.mxu0 0
        %8032 = vmatprep.subr.bf16.mxu0 0
        %8033 = vmatpush1.bf16.msra.mxu0 0
        %8034 = vmatprep.subr.bf16.mxu0 0
        %8035 = vmatpush1.bf16.msra.mxu0 0
        %8036 = vmatprep.subr.bf16.mxu0 0
        %8037 = vmatpush1.bf16.msra.mxu0 0
        %8038 = vmatprep.mubr.bf16.mxu0 0
        %8039 = vmatmul.mubr.bf16.gmra.mrb[0].mxu0 %v8001
        %v8040 = vpop.f32.mrb[0].mxu0
        %v8041 = vadd.f32 0.0, %v8040
        %v8042 = vpop.f32.mrb[0].mxu0
        %v8043 = vpop.f32.mrb[0].mxu0
        %v8044 = vpop.f32.mrb[0].mxu0
        %8045 = vdwg.mxu0
        %v8047 = vsel %vm7620, %v7722, 0
        %v8050 = vsel %vm7726, %v7188, 0
        %8052 = vmatprep.subr.bf16.mxu0 0
        %8053 = vmatpush1.bf16.msra.mxu0 %v8050
        %8054 = vmatprep.subr.bf16.mxu0 0
        %8055 = vmatpush1.bf16.msra.mxu0 0
        %8056 = vmatprep.subr.bf16.mxu0 0
        %8057 = vmatpush1.bf16.msra.mxu0 0
        %8058 = vmatprep.subr.bf16.mxu0 0
        %8059 = vmatpush1.bf16.msra.mxu0 0
        %8060 = vmatprep.subr.bf16.mxu0 0
        %8061 = vmatpush1.bf16.msra.mxu0 0
        %8062 = vmatprep.subr.bf16.mxu0 0
        %8063 = vmatpush1.bf16.msra.mxu0 0
        %8064 = vmatprep.subr.bf16.mxu0 0
        %8065 = vmatpush1.bf16.msra.mxu0 0
        %8066 = vmatprep.subr.bf16.mxu0 0
        %8067 = vmatpush1.bf16.msra.mxu0 0
        %8068 = vmatprep.subr.bf16.mxu0 0
        %8069 = vmatpush1.bf16.msra.mxu0 0
        %8070 = vmatprep.subr.bf16.mxu0 0
        %8071 = vmatpush1.bf16.msra.mxu0 0
        %8072 = vmatprep.subr.bf16.mxu0 0
        %8073 = vmatpush1.bf16.msra.mxu0 0
        %8074 = vmatprep.subr.bf16.mxu0 0
        %8075 = vmatpush1.bf16.msra.mxu0 0
        %8076 = vmatprep.subr.bf16.mxu0 0
        %8077 = vmatpush1.bf16.msra.mxu0 0
        %8078 = vmatprep.subr.bf16.mxu0 0
        %8079 = vmatpush1.bf16.msra.mxu0 0
        %8080 = vmatprep.subr.bf16.mxu0 0
        %8081 = vmatpush1.bf16.msra.mxu0 0
        %8082 = vmatprep.subr.bf16.mxu0 0
        %8083 = vmatpush1.bf16.msra.mxu0 0
        %8084 = vmatprep.mubr.bf16.mxu0 0
        %8085 = vmatmul.mubr.bf16.gmra.mrb[0].mxu0 %v8047
        %v8086 = vpop.f32.mrb[0].mxu0
        %v8087 = vadd.f32 0.0, %v8086
        %v8088 = vpop.f32.mrb[0].mxu0
        %v8089 = vpop.f32.mrb[0].mxu0
        %v8090 = vpop.f32.mrb[0].mxu0
        %8091 = vdwg.mxu0
        %v8092 = vpack.c.bf16 %v7765, %v7765
        %v8093 = vpack.c.bf16 %v7811, %v7811
        %v8094 = vpack.c.bf16 %v7857, %v7857
        %v8095 = vpack.c.bf16 %v7903, %v7903
        %v8096 = vpack.c.bf16 %v7949, %v7949
        %v8097 = vpack.c.bf16 %v7995, %v7995
        %v8098 = vpack.c.bf16 %v8041, %v8041
        %v8099 = vpack.c.bf16 %v8087, %v8087
        %v8100 = vld [vmem:[#allocation19] sm:$0xf]
        %v8101 = vld [vmem:[#allocation19 + $0x4] sm:$0xf]
        %v8102 = vld [vmem:[#allocation19 + $0x8] sm:$0xf]
        %v8103 = vld [vmem:[#allocation19 + $0xc] sm:$0xf]
        %v8104 = vld [vmem:[#allocation19 + $0x10] sm:$0xf]
        %v8105 = vld [vmem:[#allocation19 + $0x14] sm:$0xf]
        %v8106 = vld [vmem:[#allocation19 + $0x18] sm:$0xf]
        %v8107 = vld [vmem:[#allocation19 + $0x1c] sm:$0xf]
        %v8108 = vld [vmem:[#allocation19 + $0x20] sm:$0xf]
        %v8109 = vld [vmem:[#allocation19 + $0x24] sm:$0xf]
        %v8110 = vld [vmem:[#allocation19 + $0x28] sm:$0xf]
        %v8111 = vld [vmem:[#allocation19 + $0x2c] sm:$0xf]
        %v8112 = vld [vmem:[#allocation19 + $0x30] sm:$0xf]
        %v8113 = vld [vmem:[#allocation19 + $0x34] sm:$0xf]
        %v8114 = vld [vmem:[#allocation19 + $0x38] sm:$0xf]
        %v8115 = vld [vmem:[#allocation19 + $0x3c] sm:$0xf]
        %v8116 = vld [vmem:[#allocation20] sm:$0xf]
        %v8117 = vld [vmem:[#allocation20 + $0x4] sm:$0xf]
        %v8118 = vld [vmem:[#allocation20 + $0x8] sm:$0xf]
        %v8119 = vld [vmem:[#allocation20 + $0xc] sm:$0xf]
        %v8120 = vld [vmem:[#allocation20 + $0x10] sm:$0xf]
        %v8121 = vld [vmem:[#allocation20 + $0x14] sm:$0xf]
        %v8122 = vld [vmem:[#allocation20 + $0x18] sm:$0xf]
        %v8123 = vld [vmem:[#allocation20 + $0x1c] sm:$0xf]
        %v8124 = vld [vmem:[#allocation20 + $0x20] sm:$0xf]
        %v8125 = vld [vmem:[#allocation20 + $0x24] sm:$0xf]
        %v8126 = vld [vmem:[#allocation20 + $0x28] sm:$0xf]
        %v8127 = vld [vmem:[#allocation20 + $0x2c] sm:$0xf]
        %v8128 = vld [vmem:[#allocation20 + $0x30] sm:$0xf]
        %v8129 = vld [vmem:[#allocation20 + $0x34] sm:$0xf]
        %v8130 = vld [vmem:[#allocation20 + $0x38] sm:$0xf]
        %v8131 = vld [vmem:[#allocation20 + $0x3c] sm:$0xf]
        %v8148 = vunpack.c.l.b16 %v8116
        %v8149 = vunpack.c.l.b16 %v8117
        %v8150 = vunpack.c.l.b16 %v8118
        %v8151 = vunpack.c.l.b16 %v8119
        %v8152 = vunpack.c.l.b16 %v8120
        %v8153 = vunpack.c.l.b16 %v8121
        %v8154 = vunpack.c.l.b16 %v8122
        %v8155 = vunpack.c.l.b16 %v8123
        %v8156 = vunpack.c.l.b16 %v8124
        %v8157 = vunpack.c.l.b16 %v8125
        %v8158 = vunpack.c.l.b16 %v8126
        %v8159 = vunpack.c.l.b16 %v8127
        %v8160 = vunpack.c.l.b16 %v8128
        %v8161 = vunpack.c.l.b16 %v8129
        %v8162 = vunpack.c.l.b16 %v8130
        %v8163 = vunpack.c.l.b16 %v8131
        %v8164 = vpack.c.b16 %v8149, %v8148
        %v8165 = vpack.c.b16 %v8151, %v8150
        %v8166 = vpack.c.b16 %v8153, %v8152
        %v8167 = vpack.c.b16 %v8155, %v8154
        %v8168 = vpack.c.b16 %v8157, %v8156
        %v8169 = vpack.c.b16 %v8159, %v8158
        %v8170 = vpack.c.b16 %v8161, %v8160
        %v8171 = vpack.c.b16 %v8163, %v8162
        %8180 = vmatprep.subr.bf16.mxu0 0
        %8181 = vmatpush1.bf16.msra.mxu0 %v8164
        %8182 = vmatprep.subr.bf16.mxu0 0
        %8183 = vmatpush1.bf16.msra.mxu0 %v8165
        %8184 = vmatprep.subr.bf16.mxu0 0
        %8185 = vmatpush1.bf16.msra.mxu0 %v8166
        %8186 = vmatprep.subr.bf16.mxu0 0
        %8187 = vmatpush1.bf16.msra.mxu0 %v8167
        %8188 = vmatprep.subr.bf16.mxu0 0
        %8189 = vmatpush1.bf16.msra.mxu0 %v8168
        %8190 = vmatprep.subr.bf16.mxu0 0
        %8191 = vmatpush1.bf16.msra.mxu0 %v8169
        %8192 = vmatprep.subr.bf16.mxu0 0
        %8193 = vmatpush1.bf16.msra.mxu0 %v8170
        %8194 = vmatprep.subr.bf16.mxu0 0
        %8195 = vmatpush1.bf16.msra.mxu0 %v8171
        %8196 = vmatprep.subr.bf16.mxu0 0
        %8197 = vmatpush1.bf16.msra.mxu0 0
        %8198 = vmatprep.subr.bf16.mxu0 0
        %8199 = vmatpush1.bf16.msra.mxu0 0
        %8200 = vmatprep.subr.bf16.mxu0 0
        %8201 = vmatpush1.bf16.msra.mxu0 0
        %8202 = vmatprep.subr.bf16.mxu0 0
        %8203 = vmatpush1.bf16.msra.mxu0 0
        %8204 = vmatprep.subr.bf16.mxu0 0
        %8205 = vmatpush1.bf16.msra.mxu0 0
        %8206 = vmatprep.subr.bf16.mxu0 0
        %8207 = vmatpush1.bf16.msra.mxu0 0
        %8208 = vmatprep.subr.bf16.mxu0 0
        %8209 = vmatpush1.bf16.msra.mxu0 0
        %8210 = vmatprep.subr.bf16.mxu0 0
        %8211 = vmatpush1.bf16.msra.mxu0 0
        %8212 = vmatprep.mubr.bf16.mxu0 0
        %8213 = vmatmul.mubr.bf16.gmra.mrb[0].mxu0 %v7172
        %v8214 = vpop.f32.mrb[0].mxu0
        %v8215 = vadd.f32 0.0, %v8214
        %v8216 = vpop.f32.mrb[0].mxu0
        %v8217 = vpop.f32.mrb[0].mxu0
        %v8218 = vpop.f32.mrb[0].mxu0
        %8219 = vdwg.mxu0
        %v8228 = vunpack.c.l.b16 %v8092
        %v8229 = vunpack.c.l.b16 %v8093
        %v8230 = vunpack.c.l.b16 %v8094
        %v8231 = vunpack.c.l.b16 %v8095
        %v8232 = vunpack.c.l.b16 %v8096
        %v8233 = vunpack.c.l.b16 %v8097
        %v8234 = vunpack.c.l.b16 %v8098
        %v8235 = vunpack.c.l.b16 %v8099
        %v8236 = vrot.slane %v8229, 7
        %v8237 = vsel %vm7599, %v8236, %v8228
        %v8238 = vrot.slane %v8230, 6
        %v8239 = vsel %vm7602, %v8238, %v8237
        %v8240 = vrot.slane %v8231, 5
        %v8241 = vsel %vm7605, %v8240, %v8239
        %v8242 = vrot.slane %v8232, 4
        %v8243 = vsel %vm7608, %v8242, %v8241
        %v8244 = vrot.slane %v8233, 3
        %v8245 = vsel %vm7611, %v8244, %v8243
        %v8246 = vrot.slane %v8234, 2
        %v8247 = vsel %vm7614, %v8246, %v8245
        %v8248 = vrot.slane %v8235, 1
        %v8249 = vsel %vm7617, %v8248, %v8247
        %v8250 = vpack.c.b16 %v8249, %v8249
        %v8268 = vunpack.c.l.b16 %v8100
        %v8269 = vunpack.c.l.b16 %v8101
        %v8270 = vunpack.c.l.b16 %v8102
        %v8271 = vunpack.c.l.b16 %v8103
        %v8272 = vunpack.c.l.b16 %v8104
        %v8273 = vunpack.c.l.b16 %v8105
        %v8274 = vunpack.c.l.b16 %v8106
        %v8275 = vunpack.c.l.b16 %v8107
        %v8276 = vunpack.c.l.b16 %v8108
        %v8277 = vunpack.c.l.b16 %v8109
        %v8278 = vunpack.c.l.b16 %v8110
        %v8279 = vunpack.c.l.b16 %v8111
        %v8280 = vunpack.c.l.b16 %v8112
        %v8281 = vunpack.c.l.b16 %v8113
        %v8282 = vunpack.c.l.b16 %v8114
        %v8283 = vunpack.c.l.b16 %v8115
        %v8284 = vpack.c.b16 %v8269, %v8268
        %v8285 = vpack.c.b16 %v8271, %v8270
        %v8286 = vpack.c.b16 %v8273, %v8272
        %v8287 = vpack.c.b16 %v8275, %v8274
        %v8288 = vpack.c.b16 %v8277, %v8276
        %v8289 = vpack.c.b16 %v8279, %v8278
        %v8290 = vpack.c.b16 %v8281, %v8280
        %v8291 = vpack.c.b16 %v8283, %v8282
        %8300 = vmatprep.subr.bf16.mxu0 0
        %8301 = vmatpush1.bf16.msra.mxu0 %v8284
        %8302 = vmatprep.subr.bf16.mxu0 0
        %8303 = vmatpush1.bf16.msra.mxu0 %v8285
        %8304 = vmatprep.subr.bf16.mxu0 0
        %8305 = vmatpush1.bf16.msra.mxu0 %v8286
        %8306 = vmatprep.subr.bf16.mxu0 0
        %8307 = vmatpush1.bf16.msra.mxu0 %v8287
        %8308 = vmatprep.subr.bf16.mxu0 0
        %8309 = vmatpush1.bf16.msra.mxu0 %v8288
        %8310 = vmatprep.subr.bf16.mxu0 0
        %8311 = vmatpush1.bf16.msra.mxu0 %v8289
        %8312 = vmatprep.subr.bf16.mxu0 0
        %8313 = vmatpush1.bf16.msra.mxu0 %v8290
        %8314 = vmatprep.subr.bf16.mxu0 0
        %8315 = vmatpush1.bf16.msra.mxu0 %v8291
        %8316 = vmatprep.subr.bf16.mxu0 0
        %8317 = vmatpush1.bf16.msra.mxu0 0
        %8318 = vmatprep.subr.bf16.mxu0 0
        %8319 = vmatpush1.bf16.msra.mxu0 0
        %8320 = vmatprep.subr.bf16.mxu0 0
        %8321 = vmatpush1.bf16.msra.mxu0 0
        %8322 = vmatprep.subr.bf16.mxu0 0
        %8323 = vmatpush1.bf16.msra.mxu0 0
        %8324 = vmatprep.subr.bf16.mxu0 0
        %8325 = vmatpush1.bf16.msra.mxu0 0
        %8326 = vmatprep.subr.bf16.mxu0 0
        %8327 = vmatpush1.bf16.msra.mxu0 0
        %8328 = vmatprep.subr.bf16.mxu0 0
        %8329 = vmatpush1.bf16.msra.mxu0 0
        %8330 = vmatprep.subr.bf16.mxu0 0
        %8331 = vmatpush1.bf16.msra.mxu0 0
        %8332 = vmatprep.mubr.bf16.mxu0 0
        %8333 = vmatmul.mubr.bf16.gmra.mrb[0].mxu0 %v8250
        %v8334 = vpop.f32.mrb[0].mxu0
        %v8335 = vadd.f32 %v8215, %v8334
        %v8336 = vpop.f32.mrb[0].mxu0
        %v8337 = vpop.f32.mrb[0].mxu0
        %v8338 = vpop.f32.mrb[0].mxu0
        %8339 = vdwg.mxu0
        %v8340 = vld [vmem:[%s10] sm:$0xff]
        %v8341 = vadd.f32 %v8335, %v8340
        %v8342 = vtanh.pop %v8341
        %v8343 = vpack.c.bf16 %v8342, %v8342
        %v8344 = vld [vmem:[#allocation22] sm:$0xf]
        %v8345 = vld [vmem:[#allocation22 + $0x4] sm:$0xf]
        %v8346 = vld [vmem:[#allocation22 + $0x8] sm:$0xf]
        %v8347 = vld [vmem:[#allocation22 + $0xc] sm:$0xf]
        %v8348 = vld [vmem:[#allocation22 + $0x10] sm:$0xf]
        %v8349 = vld [vmem:[#allocation22 + $0x14] sm:$0xf]
        %v8350 = vld [vmem:[#allocation22 + $0x18] sm:$0xf]
        %v8351 = vld [vmem:[#allocation22 + $0x1c] sm:$0xf]
        %v8352 = vld [vmem:[#allocation22 + $0x20] sm:$0xf]
        %v8353 = vld [vmem:[#allocation22 + $0x24] sm:$0xf]
        %v8354 = vld [vmem:[#allocation22 + $0x28] sm:$0xf]
        %v8355 = vld [vmem:[#allocation22 + $0x2c] sm:$0xf]
        %v8356 = vld [vmem:[#allocation22 + $0x30] sm:$0xf]
        %v8357 = vld [vmem:[#allocation22 + $0x34] sm:$0xf]
        %v8358 = vld [vmem:[#allocation22 + $0x38] sm:$0xf]
        %v8359 = vld [vmem:[#allocation22 + $0x3c] sm:$0xf]
        %v8360 = vld [vmem:[%s12] sm:$0xff]
        %v8377 = vunpack.c.l.b16 %v8344
        %v8378 = vunpack.c.l.b16 %v8345
        %v8379 = vunpack.c.l.b16 %v8346
        %v8380 = vunpack.c.l.b16 %v8347
        %v8381 = vunpack.c.l.b16 %v8348
        %v8382 = vunpack.c.l.b16 %v8349
        %v8383 = vunpack.c.l.b16 %v8350
        %v8384 = vunpack.c.l.b16 %v8351
        %v8385 = vunpack.c.l.b16 %v8352
        %v8386 = vunpack.c.l.b16 %v8353
        %v8387 = vunpack.c.l.b16 %v8354
        %v8388 = vunpack.c.l.b16 %v8355
        %v8389 = vunpack.c.l.b16 %v8356
        %v8390 = vunpack.c.l.b16 %v8357
        %v8391 = vunpack.c.l.b16 %v8358
        %v8392 = vunpack.c.l.b16 %v8359
        %v8393 = vpack.c.b16 %v8378, %v8377
        %v8394 = vpack.c.b16 %v8380, %v8379
        %v8395 = vpack.c.b16 %v8382, %v8381
        %v8396 = vpack.c.b16 %v8384, %v8383
        %v8397 = vpack.c.b16 %v8386, %v8385
        %v8398 = vpack.c.b16 %v8388, %v8387
        %v8399 = vpack.c.b16 %v8390, %v8389
        %v8400 = vpack.c.b16 %v8392, %v8391
        %8409 = vmatprep.subr.bf16.mxu0 0
        %8410 = vmatpush1.bf16.msra.mxu0 %v8393
        %8411 = vmatprep.subr.bf16.mxu0 0
        %8412 = vmatpush1.bf16.msra.mxu0 %v8394
        %8413 = vmatprep.subr.bf16.mxu0 0
        %8414 = vmatpush1.bf16.msra.mxu0 %v8395
        %8415 = vmatprep.subr.bf16.mxu0 0
        %8416 = vmatpush1.bf16.msra.mxu0 %v8396
        %8417 = vmatprep.subr.bf16.mxu0 0
        %8418 = vmatpush1.bf16.msra.mxu0 %v8397
        %8419 = vmatprep.subr.bf16.mxu0 0
        %8420 = vmatpush1.bf16.msra.mxu0 %v8398
        %8421 = vmatprep.subr.bf16.mxu0 0
        %8422 = vmatpush1.bf16.msra.mxu0 %v8399
        %8423 = vmatprep.subr.bf16.mxu0 0
        %8424 = vmatpush1.bf16.msra.mxu0 %v8400
        %8425 = vmatprep.subr.bf16.mxu0 0
        %8426 = vmatpush1.bf16.msra.mxu0 0
        %8427 = vmatprep.subr.bf16.mxu0 0
        %8428 = vmatpush1.bf16.msra.mxu0 0
        %8429 = vmatprep.subr.bf16.mxu0 0
        %8430 = vmatpush1.bf16.msra.mxu0 0
        %8431 = vmatprep.subr.bf16.mxu0 0
        %8432 = vmatpush1.bf16.msra.mxu0 0
        %8433 = vmatprep.subr.bf16.mxu0 0
        %8434 = vmatpush1.bf16.msra.mxu0 0
        %8435 = vmatprep.subr.bf16.mxu0 0
        %8436 = vmatpush1.bf16.msra.mxu0 0
        %8437 = vmatprep.subr.bf16.mxu0 0
        %8438 = vmatpush1.bf16.msra.mxu0 0
        %8439 = vmatprep.subr.bf16.mxu0 0
        %8440 = vmatpush1.bf16.msra.mxu0 0
        %8441 = vmatprep.mubr.bf16.mxu0 0
        %8442 = vmatmul.mubr.bf16.gmra.mrb[0].mxu0 %v8343
        %v8443 = vpop.f32.mrb[0].mxu0
        %v8444 = vadd.f32 %v8360, %v8443
        %v8445 = vpop.f32.mrb[0].mxu0
        %v8446 = vpop.f32.mrb[0].mxu0
        %v8447 = vpop.f32.mrb[0].mxu0
        %8448 = vdwg.mxu0
        %vm8449 = vcmp.lt.s32.totalorder %v6402, 20
        %v8450 = vsel %vm8449, %v8444, -1e+30
        %8451 = vmax.xlane.f32.xlu0 %v8450
        %v8452 = vpop.xlane.xlu0 %8451
        %v8453 = vsub.f32 %v8450, %v8452
        %v8454 = vmul.f32 %v8453, 1.442695
        %v8455 = vpow.pop %v8454
        %8456 = vadd.xlane.f32.xlu0 %v8455
        %v8457 = vpop.xlane.xlu0 %8456
        %v8458 = vlog2.pop %v8457
        %v8459 = vmul.f32 %v8458, 0.6931472
        %v8460 = vsub.f32 %v8453, %v8459
        %8461 = vst [vmem:[%s629] sm:$0xff] %v8460
        %vm8462 = vcmp.ge.f32.partialorder %v8450, %v8452
        %v8463 = vsel %vm8462, %v6402, 128
        %v8464 = vand.u32 %v8463, 65535
        %v8465 = vshra.s32 %v8463, 16
        %v8466 = vcvt.s32.f32 %v8464
        %v8467 = vcvt.s32.f32 %v8465
        %8468 = vmin.xlane.f32.xlu0 %v8467
        %v8469 = vpop.xlane.xlu0 %8468
        %vm8470 = vcmp.eq.f32.partialorder %v8467, %v8469
        %v8471 = vsel %vm8470, %v8466, inf
        %8472 = vmin.xlane.f32.xlu0 %v8471
        %v8473 = vpop.xlane.xlu0 %8472
        %v8474 = vcvt.f32.s32 %v8473
        %v8475 = vcvt.f32.s32 %v8469
        %v8476 = vshll.u32 %v8475, 16
        %v8477 = vadd.s32 %v8476, %v8474
        %vm8478 = vcmask 7168
        %8479 = vst.msk [vmem:[%s641] sm:$0xff] %vm8478, %v8477
        %8480 = vst [vmem:[#allocation3] sm:$0xff] %v7171
        %8481 = vst.msk [vmem:[#allocation4] sm:$0xff] %vm8478, %v8477
        %8482 = vst [vmem:[#allocation24] sm:$0xff] %v7171
        %s8483 = sand.u32 %s318, 1
        %s8484 = scalar_lea.sflag [#allocation7], %s8483
        %s8485 = sand.u32 %s318, 1
        %s8486 = smul.addr %s8485, 8
        %s8487 = scalar_lea.vmem [#allocation23], %s8486
        %p8488 = scmp.lt.s32.totalorder %s37, 7
        %s8489 = scalar_select %p8488, %s37, 7
        %s8490 = smul.addr %s8489, 8
        %s8491 = scalar_lea.vmem %s14, %s8490
        // Predicated region
        $region121: #{tpu_custom_call.1} parent=71 // pred_check
          %p8492 = pneg %p328
        $region122: #{tpu_custom_call.1} parent=71 // pred_check_branch
          %8494 = sbr.rel (%p8492) target = $region124
        $region123: #{tpu_custom_call.1} parent=71 // pred_region
          %s8496 = ssub.s32 128, 128
          %8497 = vsyncadd %s8484, %s8496
          %s8498 = smul.addr %s37, 128
          %s8499 = scalar_lea.hbm %s13, %s8498
          %s8501 = sshll.u32 %s8487, 4
          %s8502 = int_to_ptr.vmem [resolvable:$true] %s8501
          %8504 = dma.vmem_to_hbm [thread:$0]  %s8502, 128, %s8499, %s8484
        $region124: #{tpu_custom_call.1} parent=71 // pred_fallthru
          _
        // Predicated region
        $region125: #{tpu_custom_call.1} parent=71 // pred_check
          %p8505 = pneg %p354
        $region126: #{tpu_custom_call.1} parent=71 // pred_check_branch
          %8507 = sbr.rel (%p8505) target = $region128
        $region127: #{tpu_custom_call.1} parent=71 // pred_region
          _
        $region128: #{tpu_custom_call.1} parent=71 // pred_fallthru
          _
        // Predicated region
        $region129: #{tpu_custom_call.1} parent=71 // pred_check
          %p8508 = pneg %p375
        $region130: #{tpu_custom_call.1} parent=71 // pred_check_branch
          %8510 = sbr.rel (%p8508) target = $region132
        $region131: #{tpu_custom_call.1} parent=71 // pred_region
          %s8512 = ssub.s32 128, 128
          %8513 = vsyncadd [#allocation25], %s8512
          %s8515 = sshll.u32 [#allocation24], 4
          %s8516 = int_to_ptr.vmem [resolvable:$true] %s8515
          %8518 = dma.vmem_to_hbm [thread:$0]  %s8516, 128, %s15, [#allocation25]
        $region132: #{tpu_custom_call.1} parent=71 // pred_fallthru
          _
        // Predicated region
        $region133: #{tpu_custom_call.1} parent=71 // pred_check
          %p8519 = pneg %p375
        $region134: #{tpu_custom_call.1} parent=71 // pred_check_branch
          %8521 = sbr.rel (%p8519) target = $region136
        $region135: #{tpu_custom_call.1} parent=71 // pred_region
          %8522 = dma.done [#allocation25], 128
        $region136: #{tpu_custom_call.1} parent=71 // pred_fallthru
          _
      $region72: #{tpu_custom_call.1} parent=5 // pred_fallthru
        _
      %p8523 = scmp.le.s32.totalorder 2, %s32
      // Predicated region
      $region137: #{tpu_custom_call.1} parent=5 // pred_check
        %p8524 = pneg %p8523
      $region138: #{tpu_custom_call.1} parent=5 // pred_check_branch
        %8526 = sbr.rel (%p8524) target = $region140
      $region139: #{tpu_custom_call.1} parent=5 // pred_region
        %s8527 = ssub.s32 %s32, 2
        // Predicated region
        $region141: #{tpu_custom_call.1} parent=139 // pred_check
          %p8528 = pneg %p334
        $region142: #{tpu_custom_call.1} parent=139 // pred_check_branch
          %8530 = sbr.rel (%p8528) target = $region144
        $region143: #{tpu_custom_call.1} parent=139 // pred_region
          %s8531 = sand.u32 %s319, 1
          %s8532 = scalar_lea.sflag [#allocation7], %s8531
          %s8533 = sand.u32 %s319, 1
          %s8534 = smul.addr %s8533, 8
          %s8535 = scalar_lea.vmem [#allocation23], %s8534
          %8536 = dma.done %s8532, 128
        $region144: #{tpu_custom_call.1} parent=139 // pred_fallthru
          _
        // Predicated region
        $region145: #{tpu_custom_call.1} parent=139 // pred_check
          %p8537 = pneg %p360
        $region146: #{tpu_custom_call.1} parent=139 // pred_check_branch
          %8539 = sbr.rel (%p8537) target = $region148
        $region147: #{tpu_custom_call.1} parent=139 // pred_region
          %p8540 = scmp.lt.s32.totalorder %s38, 7
          %s8541 = scalar_select %p8540, %s38, 7
          %s8542 = smul.addr %s8541, 8
          %s8543 = scalar_lea.vmem %s14, %s8542
        $region148: #{tpu_custom_call.1} parent=139 // pred_fallthru
          _
      $region140: #{tpu_custom_call.1} parent=5 // pred_fallthru
        _
    $region6: #{tpu_custom_call.1} parent=1 // loop_footer
      %s36 = sadd.s32 1, %s32
    $region7: #{tpu_custom_call.1} parent=1 // loop_footer_branch
      %31 = sbr.rel target = $region3
    $region8: #{tpu_custom_call.1} parent=1 // loop_exit
      _
    %8544 = vsyncpa [#allocation6], 1
    %s8545 = scalar_lea.sflag [#allocation6], 1
    %8546 = vsyncpa %s8545, 1
    %8547 = vsyncpa [#allocation9], 1
    %8548 = vsyncpa [#allocation12], 1
    %8549 = vsyncpa [#allocation15], 1
    %8550 = vsyncpa [#allocation18], 1
    %8551 = vsyncpa [#allocation21], 1
    %8552 = vsyncpa [#allocation7], 1
    %s8553 = scalar_lea.sflag [#allocation7], 1
    %8554 = vsyncpa %s8553, 1
    %8555 = vsyncpa [#allocation25], 1

</llo_original>
